<compile_context>
chip_gen: v6e
topology: v6e:2x2x1
jax: 0.10.0
libtpu: 0.0.40
codegen_flags: <defaults>
</compile_context>

<pallas_src>
import numpy as np

import jax
import jax.numpy as jnp
from jax import lax
from jax.experimental import pallas as pl
from jax.experimental.pallas import tpu as pltpu

P = 28          # per-image row period inside the batched slab
TILE_B = 8      # images per grid step  -> matmul M = TILE_B * 28 = 224


# ------------------------------ fused kernel --------------------------------

def _shift_up(v, k, axis):
    """out[i] = v[i+k] along `axis` (wrap-rotate via two static slices).

    Wrapped garbage only ever lands in per-image tail rows / odd "stretched"
    pooled columns, which are never read downstream (weights have zero rows
    there and the wrapper only keeps row 0 of each image slab)."""
    if k == 0:
        return v
    if axis == 0:
        return jnp.concatenate([v[k:, :], v[:k, :]], axis=0)
    return jnp.concatenate([v[:, k:], v[:, :k]], axis=1)


def _net_kernel(x_ref, w1t_ref, b1_ref, w2s_ref, b2_ref, wfs_ref, bf_ref, o_ref):
    f32, bf16 = jnp.float32, jnp.bfloat16

    x = x_ref[...]                                            # [L, 28] f32

    # conv1 (row-Toeplitz matmuls): C1[b*28+y, c*24+x], valid y,x in [0,24)
    c1 = b1_ref[...]                                          # [1, 384]
    for ki in range(5):
        c1 = c1 + jnp.dot(_shift_up(x, ki, 0), w1t_ref[ki],
                          preferred_element_type=f32)         # [L, 384]

    # 2x2 maxpool kept "stretched" in place (valid at even rows / even x), tanh
    h = jnp.maximum(c1, _shift_up(c1, 1, 0))                  # row pairs
    h = jnp.maximum(h, _shift_up(h, 1, 1))                    # col pairs
    a1 = jnp.tanh(h).astype(bf16)                             # [L, 384]

    # conv2: pooled-column selection folded into w2s (zero rows at odd cols)
    c2 = b2_ref[...]                                          # [1, 256]
    for ki in range(5):
        c2 = c2 + jnp.dot(_shift_up(a1, 2 * ki, 0), w2s_ref[ki],
                          preferred_element_type=f32)         # [L, 256]

    # 2x2 maxpool (stretched) + tanh
    g = jnp.maximum(c2, _shift_up(c2, 2, 0))
    g = jnp.maximum(g, _shift_up(g, 1, 1))
    a2 = jnp.tanh(g).astype(bf16)                             # [L, 256]

    # fc: torch NCHW flatten + pooled row/col selection folded into wfs
    logits = bf_ref[...]                                      # [1, 10]
    for yk in range(4):
        logits = logits + jnp.dot(_shift_up(a2, 4 * yk, 0), wfs_ref[yk],
                                  preferred_element_type=f32)  # [L, 10]

    # softmax(dim=1): numerically stable, EUP reciprocal + one Newton step
    mx = jnp.max(logits, axis=-1, keepdims=True)
    e = jnp.exp(logits - mx)
    s = jnp.sum(e, axis=-1, keepdims=True)
    r = pl.reciprocal(s, approx=True)
    r = r * (2.0 - s * r)
    o_ref[...] = e * r                                        # [L, 10]


# ------------------------------- wrapper -------------------------------------

def net_forward(x_nchw, params, tile_b=TILE_B):
    """x_nchw: [B, 1, 28, 28] float32 -> softmax probabilities [B, 10]."""
    B = x_nchw.shape[0]
    bp = ((B + tile_b - 1) // tile_b) * tile_b
    x = x_nchw.reshape(B, P, P).astype(jnp.float32)
    if bp != B:
        x = jnp.concatenate([x, jnp.zeros((bp - B, P, P), jnp.float32)], axis=0)
    x2d = x.reshape(bp * P, P)                   # batched row slab (free reshape)

    L = tile_b * P

    def const_spec(shape):
        return pl.BlockSpec(shape, lambda i, _n=len(shape): (0,) * _n)

    out = pl.pallas_call(
        _net_kernel,
        out_shape=jax.ShapeDtypeStruct((bp * P, 10), jnp.float32),
        grid=(bp // tile_b,),
        in_specs=[
            pl.BlockSpec((L, P), lambda i: (i, 0)),   # TILE_B images per step
            const_spec((5, 28, 384)),                 # w1t : conv1 Toeplitz (f32)
            const_spec((1, 384)),                     # b1
            const_spec((5, 384, 256)),                # w2s : conv2 Toeplitz (bf16)
            const_spec((1, 256)),                     # b2
            const_spec((4, 256, 10)),                 # wfs : fc, flatten folded (bf16)
            const_spec((1, 10)),                      # bf
        ],
        out_specs=pl.BlockSpec((L, 10), lambda i: (i, 0)),
        compiler_params=pltpu.CompilerParams(
            dimension_semantics=("parallel",),        # shard batch tiles (v7x TCs)
            vmem_limit_bytes=32 * 1024 * 1024,
        ),
    )(x2d, params["w1t"], params["b1"], params["w2s"], params["b2"],
      params["wfs"], params["bf"])

    # per-image results live at row 0 of each 28-row slab
    return out.reshape(bp, P, 10)[:B, 0, :]


# ------------------- one-time parameter packing (host side) ------------------

def pack_params(conv1_w, conv1_b, conv2_w, conv2_b, fc_w, fc_b):
    """Torch-layout weights -> VMEM-resident packed Toeplitz matrices."""
    w1 = np.asarray(conv1_w, np.float32)     # [16, 1, 5, 5]
    b1 = np.asarray(conv1_b, np.float32)     # [16]
    w2 = np.asarray(conv2_w, np.float32)     # [32, 16, 5, 5]
    b2 = np.asarray(conv2_b, np.float32)     # [32]
    wf = np.asarray(fc_w, np.float32)        # [10, 512]
    bf = np.asarray(fc_b, np.float32)        # [10]
    C1, C2 = 16, 32

    # conv1 row-Toeplitz: w1t[ki, j, c*24 + x] = w1[c, 0, ki, j-x], 0 <= j-x <= 4
    w1t = np.zeros((5, 28, C1 * 24), np.float32)
    for ki in range(5):
        for x in range(24):
            for kj in range(5):
                w1t[ki, x + kj, np.arange(C1) * 24 + x] = w1[:, 0, ki, kj]
    b1r = np.repeat(b1, 24)[None, :]                        # [1, 384]

    # conv2 over the stretched pooled layout (valid cols are c*24 + 2*x'):
    #   w2s[ki, c*24 + 2*(x'' + kj), o*8 + x''] = w2[o, c, ki, kj]
    w2s = np.zeros((5, C1 * 24, C2 * 8), np.float32)
    for ki in range(5):
        for kj in range(5):
            for xo in range(8):
                rows = np.arange(C1) * 24 + 2 * (xo + kj)
                cols = np.arange(C2) * 8 + xo
                w2s[ki, rows[:, None], cols[None, :]] = w2[:, :, ki, kj].T
    b2r = np.repeat(b2, 8)[None, :]                         # [1, 256]

    # fc over the stretched pool2 layout (valid cols o*8 + 2*x'''), with the
    # torch NCHW flatten (idx = o*16 + y'''*4 + x''') folded in:
    #   wfs[y''', o*8 + 2*x''', k] = wf[k, o*16 + y'''*4 + x''']
    wfs = np.zeros((4, C2 * 8, 10), np.float32)
    for yk in range(4):
        for xk in range(4):
            rows = np.arange(C2) * 8 + 2 * xk
            wfs[yk, rows, :] = wf[:, np.arange(C2) * 16 + yk * 4 + xk].T
    bfr = bf[None, :]                                       # [1, 10]

    return dict(
        w1t=jnp.asarray(w1t, jnp.float32),      # K=28 matmul kept f32
        b1=jnp.asarray(b1r, jnp.float32),
        w2s=jnp.asarray(w2s, jnp.bfloat16),     # bf16 MXU operands
        b2=jnp.asarray(b2r, jnp.float32),
        wfs=jnp.asarray(wfs, jnp.bfloat16),
        bf=jnp.asarray(bfr, jnp.float32),
    )


# --------------------------- pure-JAX reference ------------------------------

def reference_forward(x_nchw, raw):
    w1, b1, w2, b2, wf, bf = raw
    dn = ("NCHW", "OIHW", "NCHW")
    hp = lax.Precision.HIGHEST
    y = lax.conv_general_dilated(x_nchw, w1, (1, 1), "VALID",
                                 dimension_numbers=dn, precision=hp)
    y = y + b1[None, :, None, None]
    y = lax.reduce_window(y, -jnp.inf, lax.max, (1, 1, 2, 2), (1, 1, 2, 2), "VALID")
    y = jnp.tanh(y)
    y = lax.conv_general_dilated(y, w2, (1, 1), "VALID",
                                 dimension_numbers=dn, precision=hp)
    y = y + b2[None, :, None, None]
    y = lax.reduce_window(y, -jnp.inf, lax.max, (1, 1, 2, 2), (1, 1, 2, 2), "VALID")
    y = jnp.tanh(y)
    flat = y.reshape(y.shape[0], -1)                        # torch flatten (NCHW)
    logits = jnp.dot(flat, wf.T, precision=hp) + bf[None, :]
    return jax.nn.softmax(logits, axis=1)


# --------------------------------- main ---------------------------------------

if __name__ == "__main__":
    key = jax.random.PRNGKey(0)
    kx, k1, k2, k3, k4, k5, k6 = jax.random.split(key, 7)

    B = 16   # 2 grid steps of TILE_B=8 images
    x = jax.random.normal(kx, (B, 1, 28, 28), jnp.float32)
    conv1_w = jax.random.normal(k1, (16, 1, 5, 5), jnp.float32) * 0.1
    conv1_b = jax.random.normal(k2, (16,), jnp.float32) * 0.1
    conv2_w = jax.random.normal(k3, (32, 16, 5, 5), jnp.float32) * 0.05
    conv2_b = jax.random.normal(k4, (32,), jnp.float32) * 0.05
    fc_w = jax.random.normal(k5, (10, 32 * 4 * 4), jnp.float32) * 0.05
    fc_b = jax.random.normal(k6, (10,), jnp.float32) * 0.05

    params = pack_params(conv1_w, conv1_b, conv2_w, conv2_b, fc_w, fc_b)

    out = jax.jit(net_forward)(x, params)
    out = jax.block_until_ready(out)

    assert out.shape == (B, 10)
    assert out.dtype == jnp.float32
    # softmax rows must sum to 1
    assert bool(jnp.allclose(jnp.sum(out, axis=1), 1.0, atol=1e-4))
    # end-to-end check against a pure-JAX reference of the PyTorch module
    ref = reference_forward(x, (conv1_w, conv1_b, conv2_w, conv2_b, fc_w, fc_b))
    err = float(jnp.max(jnp.abs(out - ref)))
    assert err < 2e-2, err

    print("KERNEL_OK")
</pallas_src>

<mosaic_0001>
module attributes {stable_mosaic.version = 11 : i64} {
  func.func @_net_kernel(%arg0: i32, %arg1: memref<224x28xf32, #tpu.memory_space<vmem>>, %arg2: memref<5x28x384xf32, #tpu.memory_space<vmem>>, %arg3: memref<1x384xf32, #tpu.memory_space<vmem>>, %arg4: memref<5x384x256xbf16, #tpu.memory_space<vmem>>, %arg5: memref<1x256xf32, #tpu.memory_space<vmem>>, %arg6: memref<4x256x10xbf16, #tpu.memory_space<vmem>>, %arg7: memref<1x10xf32, #tpu.memory_space<vmem>>, %arg8: memref<224x10xf32, #tpu.memory_space<vmem>>) attributes {dimension_semantics = [#tpu.dimension_semantics<parallel>], iteration_bounds = array<i64: 2>, scalar_prefetch = 0 : i64, scratch_operands = 0 : i64, tpu.core_type = #tpu.core_type<tc>, window_params = [{transform_indices = @transform_0, window_bounds = array<i64: 224, 28>}, {pipeline_mode = #tpu.pipeline_mode<synchronous>, transform_indices = @transform_1, window_bounds = array<i64: 5, 28, 384>}, {pipeline_mode = #tpu.pipeline_mode<synchronous>, transform_indices = @transform_2, window_bounds = array<i64: 1, 384>}, {pipeline_mode = #tpu.pipeline_mode<synchronous>, transform_indices = @transform_3, window_bounds = array<i64: 5, 384, 256>}, {pipeline_mode = #tpu.pipeline_mode<synchronous>, transform_indices = @transform_4, window_bounds = array<i64: 1, 256>}, {pipeline_mode = #tpu.pipeline_mode<synchronous>, transform_indices = @transform_5, window_bounds = array<i64: 4, 256, 10>}, {pipeline_mode = #tpu.pipeline_mode<synchronous>, transform_indices = @transform_6, window_bounds = array<i64: 1, 10>}, {transform_indices = @transform_7, window_bounds = array<i64: 224, 10>}]} {
    %c0 = arith.constant 0 : index
    %c0_0 = arith.constant 0 : index
    %0 = vector.load %arg1[%c0, %c0_0] : memref<224x28xf32, #tpu.memory_space<vmem>>, vector<224x28xf32>
    %c0_1 = arith.constant 0 : index
    %c0_2 = arith.constant 0 : index
    %1 = vector.load %arg3[%c0_1, %c0_2] : memref<1x384xf32, #tpu.memory_space<vmem>>, vector<1x384xf32>
    %c0_3 = arith.constant 0 : index
    %c0_4 = arith.constant 0 : index
    %c0_5 = arith.constant 0 : index
    %2 = vector.load %arg2[%c0_3, %c0_4, %c0_5] : memref<5x28x384xf32, #tpu.memory_space<vmem>>, vector<1x28x384xf32>
    %3 = vector.shape_cast %2 : vector<1x28x384xf32> to vector<28x384xf32>
    %cst = arith.constant dense<0.000000e+00> : vector<224x384xf32>
    %4 = tpu.matmul %0, %3, %cst {dimension_numbers = #tpu.dot_dimension_numbers<[1], [0], [0], [1], [0, 0, 1, 1], [], []>} : vector<224x28xf32>, vector<28x384xf32>, vector<224x384xf32> -> vector<224x384xf32>
    %5 = vector.broadcast %1 : vector<1x384xf32> to vector<224x384xf32>
    %6 = arith.addf %5, %4 : vector<224x384xf32>
    %7 = vector.extract_strided_slice %0 {offsets = [1, 0], sizes = [223, 28], strides = [1, 1]} : vector<224x28xf32> to vector<223x28xf32>
    %8 = vector.extract_strided_slice %0 {offsets = [0, 0], sizes = [1, 28], strides = [1, 1]} : vector<224x28xf32> to vector<1x28xf32>
    %9 = tpu.concatenate %7, %8 in 0 : vector<223x28xf32>, vector<1x28xf32> -> vector<224x28xf32>
    %c1 = arith.constant 1 : index
    %c0_6 = arith.constant 0 : index
    %c0_7 = arith.constant 0 : index
    %10 = vector.load %arg2[%c1, %c0_6, %c0_7] : memref<5x28x384xf32, #tpu.memory_space<vmem>>, vector<1x28x384xf32>
    %11 = vector.shape_cast %10 : vector<1x28x384xf32> to vector<28x384xf32>
    %cst_8 = arith.constant dense<0.000000e+00> : vector<224x384xf32>
    %12 = tpu.matmul %9, %11, %cst_8 {dimension_numbers = #tpu.dot_dimension_numbers<[1], [0], [0], [1], [0, 0, 1, 1], [], []>} : vector<224x28xf32>, vector<28x384xf32>, vector<224x384xf32> -> vector<224x384xf32>
    %13 = arith.addf %6, %12 : vector<224x384xf32>
    %14 = vector.extract_strided_slice %0 {offsets = [2, 0], sizes = [222, 28], strides = [1, 1]} : vector<224x28xf32> to vector<222x28xf32>
    %15 = vector.extract_strided_slice %0 {offsets = [0, 0], sizes = [2, 28], strides = [1, 1]} : vector<224x28xf32> to vector<2x28xf32>
    %16 = tpu.concatenate %14, %15 in 0 : vector<222x28xf32>, vector<2x28xf32> -> vector<224x28xf32>
    %c2 = arith.constant 2 : index
    %c0_9 = arith.constant 0 : index
    %c0_10 = arith.constant 0 : index
    %17 = vector.load %arg2[%c2, %c0_9, %c0_10] : memref<5x28x384xf32, #tpu.memory_space<vmem>>, vector<1x28x384xf32>
    %18 = vector.shape_cast %17 : vector<1x28x384xf32> to vector<28x384xf32>
    %cst_11 = arith.constant dense<0.000000e+00> : vector<224x384xf32>
    %19 = tpu.matmul %16, %18, %cst_11 {dimension_numbers = #tpu.dot_dimension_numbers<[1], [0], [0], [1], [0, 0, 1, 1], [], []>} : vector<224x28xf32>, vector<28x384xf32>, vector<224x384xf32> -> vector<224x384xf32>
    %20 = arith.addf %13, %19 : vector<224x384xf32>
    %21 = vector.extract_strided_slice %0 {offsets = [3, 0], sizes = [221, 28], strides = [1, 1]} : vector<224x28xf32> to vector<221x28xf32>
    %22 = vector.extract_strided_slice %0 {offsets = [0, 0], sizes = [3, 28], strides = [1, 1]} : vector<224x28xf32> to vector<3x28xf32>
    %23 = tpu.concatenate %21, %22 in 0 : vector<221x28xf32>, vector<3x28xf32> -> vector<224x28xf32>
    %c3 = arith.constant 3 : index
    %c0_12 = arith.constant 0 : index
    %c0_13 = arith.constant 0 : index
    %24 = vector.load %arg2[%c3, %c0_12, %c0_13] : memref<5x28x384xf32, #tpu.memory_space<vmem>>, vector<1x28x384xf32>
    %25 = vector.shape_cast %24 : vector<1x28x384xf32> to vector<28x384xf32>
    %cst_14 = arith.constant dense<0.000000e+00> : vector<224x384xf32>
    %26 = tpu.matmul %23, %25, %cst_14 {dimension_numbers = #tpu.dot_dimension_numbers<[1], [0], [0], [1], [0, 0, 1, 1], [], []>} : vector<224x28xf32>, vector<28x384xf32>, vector<224x384xf32> -> vector<224x384xf32>
    %27 = arith.addf %20, %26 : vector<224x384xf32>
    %28 = vector.extract_strided_slice %0 {offsets = [4, 0], sizes = [220, 28], strides = [1, 1]} : vector<224x28xf32> to vector<220x28xf32>
    %29 = vector.extract_strided_slice %0 {offsets = [0, 0], sizes = [4, 28], strides = [1, 1]} : vector<224x28xf32> to vector<4x28xf32>
    %30 = tpu.concatenate %28, %29 in 0 : vector<220x28xf32>, vector<4x28xf32> -> vector<224x28xf32>
    %c4 = arith.constant 4 : index
    %c0_15 = arith.constant 0 : index
    %c0_16 = arith.constant 0 : index
    %31 = vector.load %arg2[%c4, %c0_15, %c0_16] : memref<5x28x384xf32, #tpu.memory_space<vmem>>, vector<1x28x384xf32>
    %32 = vector.shape_cast %31 : vector<1x28x384xf32> to vector<28x384xf32>
    %cst_17 = arith.constant dense<0.000000e+00> : vector<224x384xf32>
    %33 = tpu.matmul %30, %32, %cst_17 {dimension_numbers = #tpu.dot_dimension_numbers<[1], [0], [0], [1], [0, 0, 1, 1], [], []>} : vector<224x28xf32>, vector<28x384xf32>, vector<224x384xf32> -> vector<224x384xf32>
    %34 = arith.addf %27, %33 : vector<224x384xf32>
    %35 = vector.extract_strided_slice %34 {offsets = [1, 0], sizes = [223, 384], strides = [1, 1]} : vector<224x384xf32> to vector<223x384xf32>
    %36 = vector.extract_strided_slice %34 {offsets = [0, 0], sizes = [1, 384], strides = [1, 1]} : vector<224x384xf32> to vector<1x384xf32>
    %37 = tpu.concatenate %35, %36 in 0 : vector<223x384xf32>, vector<1x384xf32> -> vector<224x384xf32>
    %38 = arith.maximumf %34, %37 : vector<224x384xf32>
    %39 = vector.extract_strided_slice %38 {offsets = [0, 1], sizes = [224, 383], strides = [1, 1]} : vector<224x384xf32> to vector<224x383xf32>
    %40 = vector.extract_strided_slice %38 {offsets = [0, 0], sizes = [224, 1], strides = [1, 1]} : vector<224x384xf32> to vector<224x1xf32>
    %41 = tpu.concatenate %39, %40 in 1 : vector<224x383xf32>, vector<224x1xf32> -> vector<224x384xf32>
    %42 = arith.maximumf %38, %41 : vector<224x384xf32>
    %43 = math.tanh %42 : vector<224x384xf32>
    %44 = arith.truncf %43 : vector<224x384xf32> to vector<224x384xbf16>
    %c0_18 = arith.constant 0 : index
    %c0_19 = arith.constant 0 : index
    %45 = vector.load %arg5[%c0_18, %c0_19] : memref<1x256xf32, #tpu.memory_space<vmem>>, vector<1x256xf32>
    %c0_20 = arith.constant 0 : index
    %c0_21 = arith.constant 0 : index
    %c0_22 = arith.constant 0 : index
    %46 = vector.load %arg4[%c0_20, %c0_21, %c0_22] : memref<5x384x256xbf16, #tpu.memory_space<vmem>>, vector<1x384x256xbf16>
    %47 = vector.shape_cast %46 : vector<1x384x256xbf16> to vector<384x256xbf16>
    %cst_23 = arith.constant dense<0.000000e+00> : vector<224x256xf32>
    %48 = tpu.matmul %44, %47, %cst_23 {dimension_numbers = #tpu.dot_dimension_numbers<[1], [0], [0], [1], [0, 0, 1, 1], [], []>} : vector<224x384xbf16>, vector<384x256xbf16>, vector<224x256xf32> -> vector<224x256xf32>
    %49 = vector.broadcast %45 : vector<1x256xf32> to vector<224x256xf32>
    %50 = arith.addf %49, %48 : vector<224x256xf32>
    %51 = vector.extract_strided_slice %44 {offsets = [2, 0], sizes = [222, 384], strides = [1, 1]} : vector<224x384xbf16> to vector<222x384xbf16>
    %52 = vector.extract_strided_slice %44 {offsets = [0, 0], sizes = [2, 384], strides = [1, 1]} : vector<224x384xbf16> to vector<2x384xbf16>
    %53 = tpu.concatenate %51, %52 in 0 : vector<222x384xbf16>, vector<2x384xbf16> -> vector<224x384xbf16>
    %c1_24 = arith.constant 1 : index
    %c0_25 = arith.constant 0 : index
    %c0_26 = arith.constant 0 : index
    %54 = vector.load %arg4[%c1_24, %c0_25, %c0_26] : memref<5x384x256xbf16, #tpu.memory_space<vmem>>, vector<1x384x256xbf16>
    %55 = vector.shape_cast %54 : vector<1x384x256xbf16> to vector<384x256xbf16>
    %cst_27 = arith.constant dense<0.000000e+00> : vector<224x256xf32>
    %56 = tpu.matmul %53, %55, %cst_27 {dimension_numbers = #tpu.dot_dimension_numbers<[1], [0], [0], [1], [0, 0, 1, 1], [], []>} : vector<224x384xbf16>, vector<384x256xbf16>, vector<224x256xf32> -> vector<224x256xf32>
    %57 = arith.addf %50, %56 : vector<224x256xf32>
    %58 = vector.extract_strided_slice %44 {offsets = [4, 0], sizes = [220, 384], strides = [1, 1]} : vector<224x384xbf16> to vector<220x384xbf16>
    %59 = vector.extract_strided_slice %44 {offsets = [0, 0], sizes = [4, 384], strides = [1, 1]} : vector<224x384xbf16> to vector<4x384xbf16>
    %60 = tpu.concatenate %58, %59 in 0 : vector<220x384xbf16>, vector<4x384xbf16> -> vector<224x384xbf16>
    %c2_28 = arith.constant 2 : index
    %c0_29 = arith.constant 0 : index
    %c0_30 = arith.constant 0 : index
    %61 = vector.load %arg4[%c2_28, %c0_29, %c0_30] : memref<5x384x256xbf16, #tpu.memory_space<vmem>>, vector<1x384x256xbf16>
    %62 = vector.shape_cast %61 : vector<1x384x256xbf16> to vector<384x256xbf16>
    %cst_31 = arith.constant dense<0.000000e+00> : vector<224x256xf32>
    %63 = tpu.matmul %60, %62, %cst_31 {dimension_numbers = #tpu.dot_dimension_numbers<[1], [0], [0], [1], [0, 0, 1, 1], [], []>} : vector<224x384xbf16>, vector<384x256xbf16>, vector<224x256xf32> -> vector<224x256xf32>
    %64 = arith.addf %57, %63 : vector<224x256xf32>
    %65 = vector.extract_strided_slice %44 {offsets = [6, 0], sizes = [218, 384], strides = [1, 1]} : vector<224x384xbf16> to vector<218x384xbf16>
    %66 = vector.extract_strided_slice %44 {offsets = [0, 0], sizes = [6, 384], strides = [1, 1]} : vector<224x384xbf16> to vector<6x384xbf16>
    %67 = tpu.concatenate %65, %66 in 0 : vector<218x384xbf16>, vector<6x384xbf16> -> vector<224x384xbf16>
    %c3_32 = arith.constant 3 : index
    %c0_33 = arith.constant 0 : index
    %c0_34 = arith.constant 0 : index
    %68 = vector.load %arg4[%c3_32, %c0_33, %c0_34] : memref<5x384x256xbf16, #tpu.memory_space<vmem>>, vector<1x384x256xbf16>
    %69 = vector.shape_cast %68 : vector<1x384x256xbf16> to vector<384x256xbf16>
    %cst_35 = arith.constant dense<0.000000e+00> : vector<224x256xf32>
    %70 = tpu.matmul %67, %69, %cst_35 {dimension_numbers = #tpu.dot_dimension_numbers<[1], [0], [0], [1], [0, 0, 1, 1], [], []>} : vector<224x384xbf16>, vector<384x256xbf16>, vector<224x256xf32> -> vector<224x256xf32>
    %71 = arith.addf %64, %70 : vector<224x256xf32>
    %72 = vector.extract_strided_slice %44 {offsets = [8, 0], sizes = [216, 384], strides = [1, 1]} : vector<224x384xbf16> to vector<216x384xbf16>
    %73 = vector.extract_strided_slice %44 {offsets = [0, 0], sizes = [8, 384], strides = [1, 1]} : vector<224x384xbf16> to vector<8x384xbf16>
    %74 = tpu.concatenate %72, %73 in 0 : vector<216x384xbf16>, vector<8x384xbf16> -> vector<224x384xbf16>
    %c4_36 = arith.constant 4 : index
    %c0_37 = arith.constant 0 : index
    %c0_38 = arith.constant 0 : index
    %75 = vector.load %arg4[%c4_36, %c0_37, %c0_38] : memref<5x384x256xbf16, #tpu.memory_space<vmem>>, vector<1x384x256xbf16>
    %76 = vector.shape_cast %75 : vector<1x384x256xbf16> to vector<384x256xbf16>
    %cst_39 = arith.constant dense<0.000000e+00> : vector<224x256xf32>
    %77 = tpu.matmul %74, %76, %cst_39 {dimension_numbers = #tpu.dot_dimension_numbers<[1], [0], [0], [1], [0, 0, 1, 1], [], []>} : vector<224x384xbf16>, vector<384x256xbf16>, vector<224x256xf32> -> vector<224x256xf32>
    %78 = arith.addf %71, %77 : vector<224x256xf32>
    %79 = vector.extract_strided_slice %78 {offsets = [2, 0], sizes = [222, 256], strides = [1, 1]} : vector<224x256xf32> to vector<222x256xf32>
    %80 = vector.extract_strided_slice %78 {offsets = [0, 0], sizes = [2, 256], strides = [1, 1]} : vector<224x256xf32> to vector<2x256xf32>
    %81 = tpu.concatenate %79, %80 in 0 : vector<222x256xf32>, vector<2x256xf32> -> vector<224x256xf32>
    %82 = arith.maximumf %78, %81 : vector<224x256xf32>
    %83 = vector.extract_strided_slice %82 {offsets = [0, 1], sizes = [224, 255], strides = [1, 1]} : vector<224x256xf32> to vector<224x255xf32>
    %84 = vector.extract_strided_slice %82 {offsets = [0, 0], sizes = [224, 1], strides = [1, 1]} : vector<224x256xf32> to vector<224x1xf32>
    %85 = tpu.concatenate %83, %84 in 1 : vector<224x255xf32>, vector<224x1xf32> -> vector<224x256xf32>
    %86 = arith.maximumf %82, %85 : vector<224x256xf32>
    %87 = math.tanh %86 : vector<224x256xf32>
    %88 = arith.truncf %87 : vector<224x256xf32> to vector<224x256xbf16>
    %c0_40 = arith.constant 0 : index
    %c0_41 = arith.constant 0 : index
    %89 = vector.load %arg7[%c0_40, %c0_41] : memref<1x10xf32, #tpu.memory_space<vmem>>, vector<1x10xf32>
    %c0_42 = arith.constant 0 : index
    %c0_43 = arith.constant 0 : index
    %c0_44 = arith.constant 0 : index
    %90 = vector.load %arg6[%c0_42, %c0_43, %c0_44] : memref<4x256x10xbf16, #tpu.memory_space<vmem>>, vector<1x256x10xbf16>
    %91 = vector.shape_cast %90 : vector<1x256x10xbf16> to vector<256x10xbf16>
    %cst_45 = arith.constant dense<0.000000e+00> : vector<224x10xf32>
    %92 = tpu.matmul %88, %91, %cst_45 {dimension_numbers = #tpu.dot_dimension_numbers<[1], [0], [0], [1], [0, 0, 1, 1], [], []>} : vector<224x256xbf16>, vector<256x10xbf16>, vector<224x10xf32> -> vector<224x10xf32>
    %93 = vector.broadcast %89 : vector<1x10xf32> to vector<224x10xf32>
    %94 = arith.addf %93, %92 : vector<224x10xf32>
    %95 = vector.extract_strided_slice %88 {offsets = [4, 0], sizes = [220, 256], strides = [1, 1]} : vector<224x256xbf16> to vector<220x256xbf16>
    %96 = vector.extract_strided_slice %88 {offsets = [0, 0], sizes = [4, 256], strides = [1, 1]} : vector<224x256xbf16> to vector<4x256xbf16>
    %97 = tpu.concatenate %95, %96 in 0 : vector<220x256xbf16>, vector<4x256xbf16> -> vector<224x256xbf16>
    %c1_46 = arith.constant 1 : index
    %c0_47 = arith.constant 0 : index
    %c0_48 = arith.constant 0 : index
    %98 = vector.load %arg6[%c1_46, %c0_47, %c0_48] : memref<4x256x10xbf16, #tpu.memory_space<vmem>>, vector<1x256x10xbf16>
    %99 = vector.shape_cast %98 : vector<1x256x10xbf16> to vector<256x10xbf16>
    %cst_49 = arith.constant dense<0.000000e+00> : vector<224x10xf32>
    %100 = tpu.matmul %97, %99, %cst_49 {dimension_numbers = #tpu.dot_dimension_numbers<[1], [0], [0], [1], [0, 0, 1, 1], [], []>} : vector<224x256xbf16>, vector<256x10xbf16>, vector<224x10xf32> -> vector<224x10xf32>
    %101 = arith.addf %94, %100 : vector<224x10xf32>
    %102 = vector.extract_strided_slice %88 {offsets = [8, 0], sizes = [216, 256], strides = [1, 1]} : vector<224x256xbf16> to vector<216x256xbf16>
    %103 = vector.extract_strided_slice %88 {offsets = [0, 0], sizes = [8, 256], strides = [1, 1]} : vector<224x256xbf16> to vector<8x256xbf16>
    %104 = tpu.concatenate %102, %103 in 0 : vector<216x256xbf16>, vector<8x256xbf16> -> vector<224x256xbf16>
    %c2_50 = arith.constant 2 : index
    %c0_51 = arith.constant 0 : index
    %c0_52 = arith.constant 0 : index
    %105 = vector.load %arg6[%c2_50, %c0_51, %c0_52] : memref<4x256x10xbf16, #tpu.memory_space<vmem>>, vector<1x256x10xbf16>
    %106 = vector.shape_cast %105 : vector<1x256x10xbf16> to vector<256x10xbf16>
    %cst_53 = arith.constant dense<0.000000e+00> : vector<224x10xf32>
    %107 = tpu.matmul %104, %106, %cst_53 {dimension_numbers = #tpu.dot_dimension_numbers<[1], [0], [0], [1], [0, 0, 1, 1], [], []>} : vector<224x256xbf16>, vector<256x10xbf16>, vector<224x10xf32> -> vector<224x10xf32>
    %108 = arith.addf %101, %107 : vector<224x10xf32>
    %109 = vector.extract_strided_slice %88 {offsets = [12, 0], sizes = [212, 256], strides = [1, 1]} : vector<224x256xbf16> to vector<212x256xbf16>
    %110 = vector.extract_strided_slice %88 {offsets = [0, 0], sizes = [12, 256], strides = [1, 1]} : vector<224x256xbf16> to vector<12x256xbf16>
    %111 = tpu.concatenate %109, %110 in 0 : vector<212x256xbf16>, vector<12x256xbf16> -> vector<224x256xbf16>
    %c3_54 = arith.constant 3 : index
    %c0_55 = arith.constant 0 : index
    %c0_56 = arith.constant 0 : index
    %112 = vector.load %arg6[%c3_54, %c0_55, %c0_56] : memref<4x256x10xbf16, #tpu.memory_space<vmem>>, vector<1x256x10xbf16>
    %113 = vector.shape_cast %112 : vector<1x256x10xbf16> to vector<256x10xbf16>
    %cst_57 = arith.constant dense<0.000000e+00> : vector<224x10xf32>
    %114 = tpu.matmul %111, %113, %cst_57 {dimension_numbers = #tpu.dot_dimension_numbers<[1], [0], [0], [1], [0, 0, 1, 1], [], []>} : vector<224x256xbf16>, vector<256x10xbf16>, vector<224x10xf32> -> vector<224x10xf32>
    %115 = arith.addf %108, %114 : vector<224x10xf32>
    %cst_58 = arith.constant dense<0xFF800000> : vector<224xf32>
    %116 = vector.multi_reduction <maximumf>, %115, %cst_58 [1] : vector<224x10xf32> to vector<224xf32>
    %117 = vector.shape_cast %116 : vector<224xf32> to vector<224x1xf32>
    %118 = vector.broadcast %117 : vector<224x1xf32> to vector<224x10xf32>
    %119 = arith.subf %115, %118 : vector<224x10xf32>
    %120 = math.exp %119 : vector<224x10xf32>
    %cst_59 = arith.constant dense<0.000000e+00> : vector<224xf32>
    %121 = vector.multi_reduction <add>, %120, %cst_59 [1] : vector<224x10xf32> to vector<224xf32>
    %122 = vector.shape_cast %121 : vector<224xf32> to vector<224x1xf32>
    %123 = tpu.reciprocal %122 {approx = true} : vector<224x1xf32> -> vector<224x1xf32>
    %124 = arith.mulf %122, %123 : vector<224x1xf32>
    %cst_60 = arith.constant 2.000000e+00 : f32
    %125 = vector.broadcast %cst_60 : f32 to vector<224x1xf32>
    %126 = arith.subf %125, %124 : vector<224x1xf32>
    %127 = arith.mulf %123, %126 : vector<224x1xf32>
    %128 = vector.broadcast %127 : vector<224x1xf32> to vector<224x10xf32>
    %129 = arith.mulf %120, %128 : vector<224x10xf32>
    %c0_61 = arith.constant 0 : index
    %c0_62 = arith.constant 0 : index
    %130 = vector.load %arg8[%c0_61, %c0_62] : memref<224x10xf32, #tpu.memory_space<vmem>>, vector<224x10xf32>
    tpu.vector_store %arg8[%c0_61, %c0_62], %129 {strides = array<i32>} : memref<224x10xf32, #tpu.memory_space<vmem>>, vector<224x10xf32>,
    return
  }
  func.func @transform_0(%arg0: i32) -> (i32, i32) {
    %c0_i32 = arith.constant 0 : i32
    %c0_i32_0 = arith.constant 0 : i32
    return %arg0, %c0_i32 : i32, i32
  }
  func.func @transform_1(%arg0: i32) -> (i32, i32, i32) {
    %c0_i32 = arith.constant 0 : i32
    %c0_i32_0 = arith.constant 0 : i32
    %c0_i32_1 = arith.constant 0 : i32
    %c0_i32_2 = arith.constant 0 : i32
    return %c0_i32, %c0_i32_0, %c0_i32_1 : i32, i32, i32
  }
  func.func @transform_2(%arg0: i32) -> (i32, i32) {
    %c0_i32 = arith.constant 0 : i32
    %c0_i32_0 = arith.constant 0 : i32
    %c0_i32_1 = arith.constant 0 : i32
    return %c0_i32, %c0_i32_0 : i32, i32
  }
  func.func @transform_3(%arg0: i32) -> (i32, i32, i32) {
    %c0_i32 = arith.constant 0 : i32
    %c0_i32_0 = arith.constant 0 : i32
    %c0_i32_1 = arith.constant 0 : i32
    %c0_i32_2 = arith.constant 0 : i32
    return %c0_i32, %c0_i32_0, %c0_i32_1 : i32, i32, i32
  }
  func.func @transform_4(%arg0: i32) -> (i32, i32) {
    %c0_i32 = arith.constant 0 : i32
    %c0_i32_0 = arith.constant 0 : i32
    %c0_i32_1 = arith.constant 0 : i32
    return %c0_i32, %c0_i32_0 : i32, i32
  }
  func.func @transform_5(%arg0: i32) -> (i32, i32, i32) {
    %c0_i32 = arith.constant 0 : i32
    %c0_i32_0 = arith.constant 0 : i32
    %c0_i32_1 = arith.constant 0 : i32
    %c0_i32_2 = arith.constant 0 : i32
    return %c0_i32, %c0_i32_0, %c0_i32_1 : i32, i32, i32
  }
  func.func @transform_6(%arg0: i32) -> (i32, i32) {
    %c0_i32 = arith.constant 0 : i32
    %c0_i32_0 = arith.constant 0 : i32
    %c0_i32_1 = arith.constant 0 : i32
    return %c0_i32, %c0_i32_0 : i32, i32
  }
  func.func @transform_7(%arg0: i32) -> (i32, i32) {
    %c0_i32 = arith.constant 0 : i32
    %c0_i32_0 = arith.constant 0 : i32
    return %arg0, %c0_i32 : i32, i32
  }
}

</mosaic_0001>

<llo_original>
// kernel: net_forward.1
$region0: #{net_forward.1}
  #allocation0 [shape = 'u32[]', space=smem, size = 0x4, offset = 0x4, fixed_abs, tag = 'smem constant byte address 0x4 - core index']
  #allocation1 [shape = 'u32[144,128]{1,0:T(1,128)}', space=vmem, size = 0x12000, scoped, tag = 'internal scratch']
  %s0 = inlined_call_operand.hbm [shape: f32[448,28], index: 0, kind: input, shape index: {}]
  %s1 = inlined_call_operand.vmem [shape: f32[5,28,384], index: 1, kind: input, shape index: {}]
  %s2 = inlined_call_operand.vmem [shape: f32[1,384], index: 2, kind: input, shape index: {}]
  %s3 = inlined_call_operand.hbm [shape: bf16[5,384,256], index: 3, kind: input, shape index: {}]
  %s4 = inlined_call_operand.vmem [shape: f32[1,256], index: 4, kind: input, shape index: {}]
  %s5 = inlined_call_operand.vmem [shape: bf16[4,256,10], index: 5, kind: input, shape index: {}]
  %s6 = inlined_call_operand.vmem [shape: f32[1,10], index: 6, kind: input, shape index: {}]
  %s7 = inlined_call_operand.vmem [shape: f32[448,10], index: 7, kind: output, shape index: {}]
  %s8 = sld [smem:[#allocation0]]
  $region69: #{net_forward.1} parent=0
    _
  %s10 = ssub.s32 1, %s8
  %s11 = scalar_select 0, %s10, %s8
  $region1: #{net_forward.1} parent=0
    #allocation2 [shape = 'u8[229376]{0}', space=vmem, size = 0x38000, scoped, tag = 'input window, operand 0']
    #allocation3 [shape = 's32[2]{0}', space=sflag, size = 0x8, scoped, tag = 'scoped memory for net_forward.1']
    #allocation4 [shape = 'u8[983040]{0}', space=vmem, size = 0xf0000, scoped, tag = 'input window, operand 3, single buffered']
    #allocation5 [shape = 's32[1]{0}', space=sflag, size = 0x4, scoped, tag = 'scoped memory for net_forward.1']
    %12 = vsyncpa [#allocation3], 0
    %s13 = scalar_lea.sflag [#allocation3], 1
    %14 = vsyncpa %s13, 0
    %15 = vsyncpa [#allocation5], 0
    loop: start=0, step=1, limit=4
    $region2: #{net_forward.1} parent=1 // loop_pre_header
      _
    $region3: #{net_forward.1} parent=1 // loop_header
      %s17 = sphi 0, %s21
      %p18 = scmp.ge.s32.totalorder %s17, 4
      %s27 = sphi 0, %s29
      %s30 = sphi 0, %s27
      %s31 = sphi 0, %s30
      %s47 = sphi 0, %s31
      %s51 = sphi 0, %s51
      %s53 = sphi 0, %s51
      %s54 = sphi 0, %s53
      %s68 = sphi 0, %s54
      %s72 = sphi 0, %s72
      %s74 = sphi 0, %s72
      %s75 = sphi 0, %s74
      %s89 = sphi 0, %s75
      %s93 = sphi 0, %s93
      %s95 = sphi 0, %s93
      %s96 = sphi 0, %s95
      %s110 = sphi 0, %s96
      %s114 = sphi 0, %s114
      %s116 = sphi 0, %s114
      %s117 = sphi 0, %s116
      %s131 = sphi 0, %s117
      %s135 = sphi 0, %s135
      %s137 = sphi 0, %s135
      %s138 = sphi 0, %s137
      %s152 = sphi 0, %s138
      %s156 = sphi 0, %s156
      %s158 = sphi 0, %s156
      %s159 = sphi 0, %s158
      %s173 = sphi 0, %s159
      %s179 = sphi 0, %s181
      %s182 = sphi 0, %s179
      %s183 = sphi 0, %s182
      %s199 = sphi 0, %s183
    $region4: #{net_forward.1} parent=1 // loop_header_branch
      %20 = sbr.rel (%p18) target = $region8
    $region5: #{net_forward.1} parent=1 // loop_body
      %s22 = ssub.s32 %s17, 1
      %s23 = ssub.s32 %s17, 2
      %s24 = sadd.s32 %s17, 1
      %s25 = ssub.s32 %s17, %s24
      %p26 = scmp.eq.s32.totalorder %s25, 0
      %s28 = sadd.s32 %s27, 1
      %s29 = scalar_select %p26, %s27, %s28
      %p32 = pneg %p26
      %p33 = scmp.eq.s32.totalorder %s17, 1
      %p34 = por %p32, %p33
      %p35 = scmp.ne.s32.totalorder %s27, %s30
      %p36 = scmp.eq.s32.totalorder %s17, 0
      %p37 = por %p35, %p36
      %p38 = scmp.ne.s32.totalorder %s27, %s30
      %p39 = scmp.eq.s32.totalorder %s22, 1
      %p40 = por %p38, %p39
      %p41 = scmp.ne.s32.totalorder %s30, %s31
      %p42 = scmp.eq.s32.totalorder %s22, 0
      %p43 = por %p41, %p42
      %p44 = scmp.ne.s32.totalorder %s30, %s31
      %p45 = scmp.eq.s32.totalorder %s23, 1
      %p46 = por %p44, %p45
      %p48 = scmp.ne.s32.totalorder %s31, %s47
      %p49 = scmp.eq.s32.totalorder %s23, 0
      %p50 = por %p48, %p49
      %s52 = sadd.s32 %s51, 1
      %p55 = scmp.eq.s32.totalorder %s17, 1
      %p56 = scmp.ne.s32.totalorder %s51, %s53
      %p57 = scmp.eq.s32.totalorder %s17, 0
      %p58 = por %p56, %p57
      %p59 = scmp.ne.s32.totalorder %s51, %s53
      %p60 = scmp.eq.s32.totalorder %s22, 1
      %p61 = por %p59, %p60
      %p62 = scmp.ne.s32.totalorder %s53, %s54
      %p63 = scmp.eq.s32.totalorder %s22, 0
      %p64 = por %p62, %p63
      %p65 = scmp.ne.s32.totalorder %s53, %s54
      %p66 = scmp.eq.s32.totalorder %s23, 1
      %p67 = por %p65, %p66
      %p69 = scmp.ne.s32.totalorder %s54, %s68
      %p70 = scmp.eq.s32.totalorder %s23, 0
      %p71 = por %p69, %p70
      %s73 = sadd.s32 %s72, 1
      %p76 = scmp.eq.s32.totalorder %s17, 1
      %p77 = scmp.ne.s32.totalorder %s72, %s74
      %p78 = scmp.eq.s32.totalorder %s17, 0
      %p79 = por %p77, %p78
      %p80 = scmp.ne.s32.totalorder %s72, %s74
      %p81 = scmp.eq.s32.totalorder %s22, 1
      %p82 = por %p80, %p81
      %p83 = scmp.ne.s32.totalorder %s74, %s75
      %p84 = scmp.eq.s32.totalorder %s22, 0
      %p85 = por %p83, %p84
      %p86 = scmp.ne.s32.totalorder %s74, %s75
      %p87 = scmp.eq.s32.totalorder %s23, 1
      %p88 = por %p86, %p87
      %p90 = scmp.ne.s32.totalorder %s75, %s89
      %p91 = scmp.eq.s32.totalorder %s23, 0
      %p92 = por %p90, %p91
      %s94 = sadd.s32 %s93, 1
      %p97 = scmp.eq.s32.totalorder %s17, 1
      %p98 = scmp.ne.s32.totalorder %s93, %s95
      %p99 = scmp.eq.s32.totalorder %s17, 0
      %p100 = por %p98, %p99
      %p101 = scmp.ne.s32.totalorder %s93, %s95
      %p102 = scmp.eq.s32.totalorder %s22, 1
      %p103 = por %p101, %p102
      %p104 = scmp.ne.s32.totalorder %s95, %s96
      %p105 = scmp.eq.s32.totalorder %s22, 0
      %p106 = por %p104, %p105
      %p107 = scmp.ne.s32.totalorder %s95, %s96
      %p108 = scmp.eq.s32.totalorder %s23, 1
      %p109 = por %p107, %p108
      %p111 = scmp.ne.s32.totalorder %s96, %s110
      %p112 = scmp.eq.s32.totalorder %s23, 0
      %p113 = por %p111, %p112
      %s115 = sadd.s32 %s114, 1
      %p118 = scmp.eq.s32.totalorder %s17, 1
      %p119 = scmp.ne.s32.totalorder %s114, %s116
      %p120 = scmp.eq.s32.totalorder %s17, 0
      %p121 = por %p119, %p120
      %p122 = scmp.ne.s32.totalorder %s114, %s116
      %p123 = scmp.eq.s32.totalorder %s22, 1
      %p124 = por %p122, %p123
      %p125 = scmp.ne.s32.totalorder %s116, %s117
      %p126 = scmp.eq.s32.totalorder %s22, 0
      %p127 = por %p125, %p126
      %p128 = scmp.ne.s32.totalorder %s116, %s117
      %p129 = scmp.eq.s32.totalorder %s23, 1
      %p130 = por %p128, %p129
      %p132 = scmp.ne.s32.totalorder %s117, %s131
      %p133 = scmp.eq.s32.totalorder %s23, 0
      %p134 = por %p132, %p133
      %s136 = sadd.s32 %s135, 1
      %p139 = scmp.eq.s32.totalorder %s17, 1
      %p140 = scmp.ne.s32.totalorder %s135, %s137
      %p141 = scmp.eq.s32.totalorder %s17, 0
      %p142 = por %p140, %p141
      %p143 = scmp.ne.s32.totalorder %s135, %s137
      %p144 = scmp.eq.s32.totalorder %s22, 1
      %p145 = por %p143, %p144
      %p146 = scmp.ne.s32.totalorder %s137, %s138
      %p147 = scmp.eq.s32.totalorder %s22, 0
      %p148 = por %p146, %p147
      %p149 = scmp.ne.s32.totalorder %s137, %s138
      %p150 = scmp.eq.s32.totalorder %s23, 1
      %p151 = por %p149, %p150
      %p153 = scmp.ne.s32.totalorder %s138, %s152
      %p154 = scmp.eq.s32.totalorder %s23, 0
      %p155 = por %p153, %p154
      %s157 = sadd.s32 %s156, 1
      %p160 = scmp.eq.s32.totalorder %s17, 1
      %p161 = scmp.ne.s32.totalorder %s156, %s158
      %p162 = scmp.eq.s32.totalorder %s17, 0
      %p163 = por %p161, %p162
      %p164 = scmp.ne.s32.totalorder %s156, %s158
      %p165 = scmp.eq.s32.totalorder %s22, 1
      %p166 = por %p164, %p165
      %p167 = scmp.ne.s32.totalorder %s158, %s159
      %p168 = scmp.eq.s32.totalorder %s22, 0
      %p169 = por %p167, %p168
      %p170 = scmp.ne.s32.totalorder %s158, %s159
      %p171 = scmp.eq.s32.totalorder %s23, 1
      %p172 = por %p170, %p171
      %p174 = scmp.ne.s32.totalorder %s159, %s173
      %p175 = scmp.eq.s32.totalorder %s23, 0
      %p176 = por %p174, %p175
      %s177 = ssub.s32 %s17, %s24
      %p178 = scmp.eq.s32.totalorder %s177, 0
      %s180 = sadd.s32 %s179, 1
      %s181 = scalar_select %p178, %s179, %s180
      %p184 = pneg %p178
      %p185 = scmp.eq.s32.totalorder %s17, 1
      %p186 = por %p184, %p185
      %p187 = scmp.ne.s32.totalorder %s179, %s182
      %p188 = scmp.eq.s32.totalorder %s17, 0
      %p189 = por %p187, %p188
      %p190 = scmp.ne.s32.totalorder %s179, %s182
      %p191 = scmp.eq.s32.totalorder %s22, 1
      %p192 = por %p190, %p191
      %p193 = scmp.ne.s32.totalorder %s182, %s183
      %p194 = scmp.eq.s32.totalorder %s22, 0
      %p195 = por %p193, %p194
      %p196 = scmp.ne.s32.totalorder %s182, %s183
      %p197 = scmp.eq.s32.totalorder %s23, 1
      %p198 = por %p196, %p197
      %p200 = scmp.ne.s32.totalorder %s183, %s199
      %p201 = scmp.eq.s32.totalorder %s23, 0
      %p202 = por %p200, %p201
      %p203 = scmp.le.s32.totalorder 1, %s17
      %p204 = scmp.lt.s32.totalorder %s17, 3
      %p205 = pnand %p203, %p204
      %p206 = pneg %p205
      // Predicated region
      $region9: #{net_forward.1} parent=5 // pred_check
        _
      $region10: #{net_forward.1} parent=5 // pred_check_branch
        %208 = sbr.rel (%p205) target = $region12
      $region11: #{net_forward.1} parent=5 // pred_region
        %s209 = ssub.s32 %s17, 1
        // Predicated region
        $region13: #{net_forward.1} parent=11 // pred_check
          %p210 = pneg %p64
        $region14: #{net_forward.1} parent=11 // pred_check_branch
          %212 = sbr.rel (%p210) target = $region16
        $region15: #{net_forward.1} parent=11 // pred_region
          _
        $region16: #{net_forward.1} parent=11 // pred_fallthru
          _
        // Predicated region
        $region17: #{net_forward.1} parent=11 // pred_check
          %p213 = pneg %p85
        $region18: #{net_forward.1} parent=11 // pred_check_branch
          %215 = sbr.rel (%p213) target = $region20
        $region19: #{net_forward.1} parent=11 // pred_region
          _
        $region20: #{net_forward.1} parent=11 // pred_fallthru
          _
        // Predicated region
        $region21: #{net_forward.1} parent=11 // pred_check
          %p216 = pneg %p106
        $region22: #{net_forward.1} parent=11 // pred_check_branch
          %218 = sbr.rel (%p216) target = $region24
        $region23: #{net_forward.1} parent=11 // pred_region
          %s220 = ssub.s32 30720, 30720
          %221 = vsyncadd [#allocation5], %s220
          %s222 = sshll.u32 [#allocation4], 4
          %s223 = int_to_ptr.vmem [resolvable:$true] %s222
          %228 = dma.hbm_to_vmem [thread:$0]  %s3, 30720, %s223, [#allocation5], 128, 128, 8
        $region24: #{net_forward.1} parent=11 // pred_fallthru
          _
        // Predicated region
        $region25: #{net_forward.1} parent=11 // pred_check
          %p229 = pneg %p127
        $region26: #{net_forward.1} parent=11 // pred_check_branch
          %231 = sbr.rel (%p229) target = $region28
        $region27: #{net_forward.1} parent=11 // pred_region
          _
        $region28: #{net_forward.1} parent=11 // pred_fallthru
          _
        // Predicated region
        $region29: #{net_forward.1} parent=11 // pred_check
          %p232 = pneg %p148
        $region30: #{net_forward.1} parent=11 // pred_check_branch
          %234 = sbr.rel (%p232) target = $region32
        $region31: #{net_forward.1} parent=11 // pred_region
          _
        $region32: #{net_forward.1} parent=11 // pred_fallthru
          _
        // Predicated region
        $region33: #{net_forward.1} parent=11 // pred_check
          %p235 = pneg %p169
        $region34: #{net_forward.1} parent=11 // pred_check_branch
          %237 = sbr.rel (%p235) target = $region36
        $region35: #{net_forward.1} parent=11 // pred_region
          _
        $region36: #{net_forward.1} parent=11 // pred_fallthru
          _
      $region12: #{net_forward.1} parent=5 // pred_fallthru
        _
      %p238 = scmp.lt.s32.totalorder %s17, 2
      // Predicated region
      $region37: #{net_forward.1} parent=5 // pred_check
        %p239 = pneg %p238
      $region38: #{net_forward.1} parent=5 // pred_check_branch
        %241 = sbr.rel (%p239) target = $region40
      $region39: #{net_forward.1} parent=5 // pred_region
        // Predicated region
        $region41: #{net_forward.1} parent=39 // pred_check
          %p242 = pneg %p37
        $region42: #{net_forward.1} parent=39 // pred_check_branch
          %244 = sbr.rel (%p242) target = $region44
        $region43: #{net_forward.1} parent=39 // pred_region
          %s245 = sand.u32 %s27, 1
          %s246 = scalar_lea.sflag [#allocation3], %s245
          %s247 = sand.u32 %s27, 1
          %s248 = smul.addr %s247, 224
          %s249 = scalar_lea.vmem [#allocation2], %s248
          %s250 = smul.u32 28, %s17
          %s252 = ssub.s32 3584, 3584
          %253 = vsyncadd %s246, %s252
          %s254 = smul.addr %s250, 128
          %s255 = scalar_lea.hbm %s0, %s254
          %s256 = sshll.u32 %s249, 4
          %s257 = int_to_ptr.vmem [resolvable:$true] %s256
          %262 = dma.hbm_to_vmem [thread:$0]  %s255, 3584, %s257, %s246, 128, 128, 8
        $region44: #{net_forward.1} parent=39 // pred_fallthru
          _
      $region40: #{net_forward.1} parent=5 // pred_fallthru
        _
      %p263 = scmp.le.s32.totalorder 1, %s17
      %p264 = scmp.lt.s32.totalorder %s17, 3
      %p265 = pnand %p263, %p264
      %p266 = pneg %p265
      // Predicated region
      $region45: #{net_forward.1} parent=5 // pred_check
        _
      $region46: #{net_forward.1} parent=5 // pred_check_branch
        %268 = sbr.rel (%p265) target = $region48
      $region47: #{net_forward.1} parent=5 // pred_region
        %s269 = ssub.s32 %s17, 1
        %s270 = sand.u32 %s30, 1
        %s271 = scalar_lea.sflag [#allocation3], %s270
        %s272 = sand.u32 %s30, 1
        %s273 = smul.addr %s272, 224
        %s274 = scalar_lea.vmem [#allocation2], %s273
        // Predicated region
        $region49: #{net_forward.1} parent=47 // pred_check
          %p275 = pneg %p43
        $region50: #{net_forward.1} parent=47 // pred_check_branch
          %277 = sbr.rel (%p275) target = $region52
        $region51: #{net_forward.1} parent=47 // pred_region
          %278 = dma.done %s271, 3584
        $region52: #{net_forward.1} parent=47 // pred_fallthru
          _
        // Predicated region
        $region53: #{net_forward.1} parent=47 // pred_check
          %p279 = pneg %p106
        $region54: #{net_forward.1} parent=47 // pred_check_branch
          %281 = sbr.rel (%p279) target = $region56
        $region55: #{net_forward.1} parent=47 // pred_region
          %282 = dma.done [#allocation5], 30720
        $region56: #{net_forward.1} parent=47 // pred_fallthru
          _
        %s283 = sand.u32 %s30, 1
        %s284 = scalar_lea.sflag [#allocation3], %s283
        %s285 = sand.u32 %s30, 1
        %s286 = smul.addr %s285, 224
        %s287 = scalar_lea.vmem [#allocation2], %s286
        %p288 = pneg %p43
        %p289 = pneg %p40
        %p290 = pneg %p64
        %p291 = pneg %p61
        %p292 = pneg %p85
        %p293 = pneg %p82
        %p294 = pneg %p106
        %p295 = pneg %p103
        %p296 = pneg %p127
        %p297 = pneg %p124
        %p298 = pneg %p148
        %p299 = pneg %p145
        %p300 = pneg %p169
        %p301 = pneg %p166
        %p302 = pneg %p195
        %p303 = pneg %p192
        %s304 = smul.u32 28, %s22
        %p305 = scmp.lt.s32.totalorder %s304, 55
        %s306 = scalar_select %p305, %s304, 55
        %s307 = smul.addr %s306, 8
        %s308 = scalar_lea.vmem %s7, %s307
        %s309 = smul.u32 28, %s22
        %s310 = smul.u32 28, %s22
        %p311 = scmp.lt.s32.totalorder %s310, 55
        %s312 = scalar_select %p311, %s310, 55
        %s313 = smul.addr %s312, 8
        %s314 = scalar_lea.vmem %s7, %s313
        %s315 = smul.u32 28, %s22
        %v317 = vld [vmem:[%s274] sm:$0xff]
        %v318 = vld [vmem:[%s274 + $0x8] sm:$0xff]
        %v319 = vld [vmem:[%s274 + $0x10] sm:$0xff]
        %v320 = vld [vmem:[%s274 + $0x18] sm:$0xff]
        %v321 = vld [vmem:[%s274 + $0x20] sm:$0xff]
        %v322 = vld [vmem:[%s274 + $0x28] sm:$0xff]
        %v323 = vld [vmem:[%s274 + $0x30] sm:$0xff]
        %v324 = vld [vmem:[%s274 + $0x38] sm:$0xff]
        %v325 = vld [vmem:[%s274 + $0x40] sm:$0xff]
        %v326 = vld [vmem:[%s274 + $0x48] sm:$0xff]
        %v327 = vld [vmem:[%s274 + $0x50] sm:$0xff]
        %v328 = vld [vmem:[%s274 + $0x58] sm:$0xff]
        %v329 = vld [vmem:[%s274 + $0x60] sm:$0xff]
        %v330 = vld [vmem:[%s274 + $0x68] sm:$0xff]
        %v331 = vld [vmem:[%s274 + $0x70] sm:$0xff]
        %v332 = vld [vmem:[%s274 + $0x78] sm:$0xff]
        %v333 = vld [vmem:[%s274 + $0x80] sm:$0xff]
        %v334 = vld [vmem:[%s274 + $0x88] sm:$0xff]
        %v335 = vld [vmem:[%s274 + $0x90] sm:$0xff]
        %v336 = vld [vmem:[%s274 + $0x98] sm:$0xff]
        %v337 = vld [vmem:[%s274 + $0xa0] sm:$0xff]
        %v338 = vld [vmem:[%s274 + $0xa8] sm:$0xff]
        %v339 = vld [vmem:[%s274 + $0xb0] sm:$0xff]
        %v340 = vld [vmem:[%s274 + $0xb8] sm:$0xff]
        %v341 = vld [vmem:[%s274 + $0xc0] sm:$0xff]
        %v342 = vld [vmem:[%s274 + $0xc8] sm:$0xff]
        %v343 = vld [vmem:[%s274 + $0xd0] sm:$0xff]
        %v344 = vld [vmem:[%s274 + $0xd8] sm:$0xff]
        %v345 = vld [vmem:[%s2] sm:$0x7]
        %v346 = vld [vmem:[%s1] sm:$0xff]
        %v347 = vld [vmem:[%s1 + $0x8] sm:$0xff]
        %v348 = vld [vmem:[%s1 + $0x10] sm:$0xff]
        %v349 = vld [vmem:[%s1 + $0x18] sm:$0xff]
        %v350 = vld [vmem:[%s1 + $0x20] sm:$0xff]
        %v351 = vld [vmem:[%s1 + $0x28] sm:$0xff]
        %v352 = vld [vmem:[%s1 + $0x30] sm:$0xff]
        %v353 = vld [vmem:[%s1 + $0x38] sm:$0xff]
        %v354 = vld [vmem:[%s1 + $0x40] sm:$0xff]
        %v355 = vld [vmem:[%s1 + $0x48] sm:$0xf]
        %v356 = vld [vmem:[%s1 + $0x50] sm:$0xf]
        %v357 = vld [vmem:[%s1 + $0x58] sm:$0xf]
        %vm358 = vcmask 228352
        %v360 = vsel %vm358, %v317, 0
        %v363 = vsel %vm358, %v318, 0
        %v366 = vsel %vm358, %v319, 0
        %v369 = vsel %vm358, %v320, 0
        %v372 = vsel %vm358, %v321, 0
        %v375 = vsel %vm358, %v322, 0
        %v378 = vsel %vm358, %v323, 0
        %v381 = vsel %vm358, %v324, 0
        %v384 = vsel %vm358, %v325, 0
        %v387 = vsel %vm358, %v326, 0
        %v390 = vsel %vm358, %v327, 0
        %v393 = vsel %vm358, %v328, 0
        %v396 = vsel %vm358, %v329, 0
        %v399 = vsel %vm358, %v330, 0
        %v402 = vsel %vm358, %v331, 0
        %v405 = vsel %vm358, %v332, 0
        %v408 = vsel %vm358, %v333, 0
        %v411 = vsel %vm358, %v334, 0
        %v414 = vsel %vm358, %v335, 0
        %v417 = vsel %vm358, %v336, 0
        %v420 = vsel %vm358, %v337, 0
        %v423 = vsel %vm358, %v338, 0
        %v426 = vsel %vm358, %v339, 0
        %v429 = vsel %vm358, %v340, 0
        %v432 = vsel %vm358, %v341, 0
        %v435 = vsel %vm358, %v342, 0
        %v438 = vsel %vm358, %v343, 0
        %v441 = vsel %vm358, %v344, 0
        %vm443 = vcmask 1043456
        %v445 = vsel %vm443, %v355, 0
        %v448 = vsel %vm443, %v356, 0
        %v451 = vsel %vm443, %v357, 0
        %453 = vmatprep.subr.mxu0 0.0
        %454 = vmatpush1.msra.mxu0 0.0
        %455 = vmatprep.subr.mxu0 0.0
        %456 = vmatpush1.msra.mxu0 0.0
        %457 = vmatprep.subr.mxu0 0.0
        %458 = vmatpush1.msra.mxu0 0.0
        %459 = vmatprep.subr.mxu0 0.0
        %460 = vmatpush1.msra.mxu0 0.0
        %461 = vmatprep.subr.mxu0 0.0
        %462 = vmatpush1.msra.mxu0 0.0
        %463 = vmatprep.subr.mxu0 0.0
        %464 = vmatpush1.msra.mxu0 0.0
        %465 = vmatprep.subr.mxu0 0.0
        %466 = vmatpush1.msra.mxu0 0.0
        %467 = vmatprep.subr.mxu0 0.0
        %468 = vmatpush1.msra.mxu0 0.0
        %469 = vmatprep.subr.mxu0 0.0
        %470 = vmatpush1.msra.mxu0 0.0
        %471 = vmatprep.subr.mxu0 0.0
        %472 = vmatpush1.msra.mxu0 0.0
        %473 = vmatprep.subr.mxu0 0.0
        %474 = vmatpush1.msra.mxu0 0.0
        %475 = vmatprep.subr.mxu0 0.0
        %476 = vmatpush1.msra.mxu0 0.0
        %477 = vmatprep.subr.mxu0 %v448
        %478 = vmatpush1.msra.mxu0 %v445
        %479 = vmatprep.subr.mxu0 %v353
        %480 = vmatpush1.msra.mxu0 %v352
        %481 = vmatprep.subr.mxu0 %v350
        %482 = vmatpush1.msra.mxu0 %v349
        %483 = vmatprep.subr.mxu0 %v347
        %484 = vmatpush1.msra.mxu0 %v346
        %485 = vmatprep.subr.mxu0 0.0
        %486 = vmatpush2.msra.mxu0 0.0
        %487 = vmatprep.subr.mxu0 0.0
        %488 = vmatpush2.msra.mxu0 0.0
        %489 = vmatprep.subr.mxu0 0.0
        %490 = vmatpush2.msra.mxu0 0.0
        %491 = vmatprep.subr.mxu0 0.0
        %492 = vmatpush2.msra.mxu0 0.0
        %493 = vmatprep.subr.mxu0 0.0
        %494 = vmatpush2.msra.mxu0 0.0
        %495 = vmatprep.subr.mxu0 0.0
        %496 = vmatpush2.msra.mxu0 0.0
        %497 = vmatprep.subr.mxu0 0.0
        %498 = vmatpush2.msra.mxu0 0.0
        %499 = vmatprep.subr.mxu0 0.0
        %500 = vmatpush2.msra.mxu0 0.0
        %501 = vmatprep.subr.mxu0 0.0
        %502 = vmatpush2.msra.mxu0 0.0
        %503 = vmatprep.subr.mxu0 0.0
        %504 = vmatpush2.msra.mxu0 0.0
        %505 = vmatprep.subr.mxu0 0.0
        %506 = vmatpush2.msra.mxu0 0.0
        %507 = vmatprep.subr.mxu0 0.0
        %508 = vmatpush2.msra.mxu0 0.0
        %509 = vmatprep.subr.mxu0 0.0
        %510 = vmatpush2.msra.mxu0 0.0
        %511 = vmatprep.subr.mxu0 0.0
        %512 = vmatpush2.msra.mxu0 0.0
        %513 = vmatprep.subr.mxu0 0.0
        %514 = vmatpush2.msra.mxu0 0.0
        %515 = vmatprep.subr.mxu0 0.0
        %516 = vmatpush2.msra.mxu0 0.0
        %517 = vmatprep.mubr.f32.mxu0 0.0
        %518 = vmatmul.mubr.f32.gmra.mxu0 %v360
        %v519 = vpop.f32.mrf.mxu0
        %v520 = vadd.f32 0.0, %v519
        %v521 = vpop.f32.mrf.mxu0
        %v522 = vadd.f32 0.0, %v521
        %523 = vmatprep.mubr.f32.mxu0 0.0
        %524 = vmatmul.mubr.f32.gmra.mxu0 %v363
        %v525 = vpop.f32.mrf.mxu0
        %v526 = vadd.f32 0.0, %v525
        %v527 = vpop.f32.mrf.mxu0
        %v528 = vadd.f32 0.0, %v527
        %529 = vmatprep.mubr.f32.mxu0 0.0
        %530 = vmatmul.mubr.f32.gmra.mxu0 %v366
        %v531 = vpop.f32.mrf.mxu0
        %v532 = vadd.f32 0.0, %v531
        %v533 = vpop.f32.mrf.mxu0
        %v534 = vadd.f32 0.0, %v533
        %535 = vmatprep.mubr.f32.mxu0 0.0
        %536 = vmatmul.mubr.f32.gmra.mxu0 %v369
        %v537 = vpop.f32.mrf.mxu0
        %v538 = vadd.f32 0.0, %v537
        %v539 = vpop.f32.mrf.mxu0
        %v540 = vadd.f32 0.0, %v539
        %541 = vmatprep.mubr.f32.mxu0 0.0
        %542 = vmatmul.mubr.f32.gmra.mxu0 %v372
        %v543 = vpop.f32.mrf.mxu0
        %v544 = vadd.f32 0.0, %v543
        %v545 = vpop.f32.mrf.mxu0
        %v546 = vadd.f32 0.0, %v545
        %547 = vmatprep.mubr.f32.mxu0 0.0
        %548 = vmatmul.mubr.f32.gmra.mxu0 %v375
        %v549 = vpop.f32.mrf.mxu0
        %v550 = vadd.f32 0.0, %v549
        %v551 = vpop.f32.mrf.mxu0
        %v552 = vadd.f32 0.0, %v551
        %553 = vmatprep.mubr.f32.mxu0 0.0
        %554 = vmatmul.mubr.f32.gmra.mxu0 %v378
        %v555 = vpop.f32.mrf.mxu0
        %v556 = vadd.f32 0.0, %v555
        %v557 = vpop.f32.mrf.mxu0
        %v558 = vadd.f32 0.0, %v557
        %559 = vmatprep.mubr.f32.mxu0 0.0
        %560 = vmatmul.mubr.f32.gmra.mxu0 %v381
        %v561 = vpop.f32.mrf.mxu0
        %v562 = vadd.f32 0.0, %v561
        %v563 = vpop.f32.mrf.mxu0
        %v564 = vadd.f32 0.0, %v563
        %565 = vmatprep.mubr.f32.mxu0 0.0
        %566 = vmatmul.mubr.f32.gmra.mxu0 %v384
        %v567 = vpop.f32.mrf.mxu0
        %v568 = vadd.f32 0.0, %v567
        %v569 = vpop.f32.mrf.mxu0
        %v570 = vadd.f32 0.0, %v569
        %571 = vmatprep.mubr.f32.mxu0 0.0
        %572 = vmatmul.mubr.f32.gmra.mxu0 %v387
        %v573 = vpop.f32.mrf.mxu0
        %v574 = vadd.f32 0.0, %v573
        %v575 = vpop.f32.mrf.mxu0
        %v576 = vadd.f32 0.0, %v575
        %577 = vmatprep.mubr.f32.mxu0 0.0
        %578 = vmatmul.mubr.f32.gmra.mxu0 %v390
        %v579 = vpop.f32.mrf.mxu0
        %v580 = vadd.f32 0.0, %v579
        %v581 = vpop.f32.mrf.mxu0
        %v582 = vadd.f32 0.0, %v581
        %583 = vmatprep.mubr.f32.mxu0 0.0
        %584 = vmatmul.mubr.f32.gmra.mxu0 %v393
        %v585 = vpop.f32.mrf.mxu0
        %v586 = vadd.f32 0.0, %v585
        %v587 = vpop.f32.mrf.mxu0
        %v588 = vadd.f32 0.0, %v587
        %589 = vmatprep.mubr.f32.mxu0 0.0
        %590 = vmatmul.mubr.f32.gmra.mxu0 %v396
        %v591 = vpop.f32.mrf.mxu0
        %v592 = vadd.f32 0.0, %v591
        %v593 = vpop.f32.mrf.mxu0
        %v594 = vadd.f32 0.0, %v593
        %595 = vmatprep.mubr.f32.mxu0 0.0
        %596 = vmatmul.mubr.f32.gmra.mxu0 %v399
        %v597 = vpop.f32.mrf.mxu0
        %v598 = vadd.f32 0.0, %v597
        %v599 = vpop.f32.mrf.mxu0
        %v600 = vadd.f32 0.0, %v599
        %601 = vmatprep.mubr.f32.mxu0 0.0
        %602 = vmatmul.mubr.f32.gmra.mxu0 %v402
        %v603 = vpop.f32.mrf.mxu0
        %v604 = vadd.f32 0.0, %v603
        %v605 = vpop.f32.mrf.mxu0
        %v606 = vadd.f32 0.0, %v605
        %607 = vmatprep.mubr.f32.mxu0 0.0
        %608 = vmatmul.mubr.f32.gmra.mxu0 %v405
        %v609 = vpop.f32.mrf.mxu0
        %v610 = vadd.f32 0.0, %v609
        %v611 = vpop.f32.mrf.mxu0
        %v612 = vadd.f32 0.0, %v611
        %613 = vmatprep.mubr.f32.mxu0 0.0
        %614 = vmatmul.mubr.f32.gmra.mxu0 %v408
        %v615 = vpop.f32.mrf.mxu0
        %v616 = vadd.f32 0.0, %v615
        %v617 = vpop.f32.mrf.mxu0
        %v618 = vadd.f32 0.0, %v617
        %619 = vmatprep.mubr.f32.mxu0 0.0
        %620 = vmatmul.mubr.f32.gmra.mxu0 %v411
        %v621 = vpop.f32.mrf.mxu0
        %v622 = vadd.f32 0.0, %v621
        %v623 = vpop.f32.mrf.mxu0
        %v624 = vadd.f32 0.0, %v623
        %625 = vmatprep.mubr.f32.mxu0 0.0
        %626 = vmatmul.mubr.f32.gmra.mxu0 %v414
        %v627 = vpop.f32.mrf.mxu0
        %v628 = vadd.f32 0.0, %v627
        %v629 = vpop.f32.mrf.mxu0
        %v630 = vadd.f32 0.0, %v629
        %631 = vmatprep.mubr.f32.mxu0 0.0
        %632 = vmatmul.mubr.f32.gmra.mxu0 %v417
        %v633 = vpop.f32.mrf.mxu0
        %v634 = vadd.f32 0.0, %v633
        %v635 = vpop.f32.mrf.mxu0
        %v636 = vadd.f32 0.0, %v635
        %637 = vmatprep.mubr.f32.mxu0 0.0
        %638 = vmatmul.mubr.f32.gmra.mxu0 %v420
        %v639 = vpop.f32.mrf.mxu0
        %v640 = vadd.f32 0.0, %v639
        %v641 = vpop.f32.mrf.mxu0
        %v642 = vadd.f32 0.0, %v641
        %643 = vmatprep.mubr.f32.mxu0 0.0
        %644 = vmatmul.mubr.f32.gmra.mxu0 %v423
        %v645 = vpop.f32.mrf.mxu0
        %v646 = vadd.f32 0.0, %v645
        %v647 = vpop.f32.mrf.mxu0
        %v648 = vadd.f32 0.0, %v647
        %649 = vmatprep.mubr.f32.mxu0 0.0
        %650 = vmatmul.mubr.f32.gmra.mxu0 %v426
        %v651 = vpop.f32.mrf.mxu0
        %v652 = vadd.f32 0.0, %v651
        %v653 = vpop.f32.mrf.mxu0
        %v654 = vadd.f32 0.0, %v653
        %655 = vmatprep.mubr.f32.mxu0 0.0
        %656 = vmatmul.mubr.f32.gmra.mxu0 %v429
        %v657 = vpop.f32.mrf.mxu0
        %v658 = vadd.f32 0.0, %v657
        %v659 = vpop.f32.mrf.mxu0
        %v660 = vadd.f32 0.0, %v659
        %661 = vmatprep.mubr.f32.mxu0 0.0
        %662 = vmatmul.mubr.f32.gmra.mxu0 %v432
        %v663 = vpop.f32.mrf.mxu0
        %v664 = vadd.f32 0.0, %v663
        %v665 = vpop.f32.mrf.mxu0
        %v666 = vadd.f32 0.0, %v665
        %667 = vmatprep.mubr.f32.mxu0 0.0
        %668 = vmatmul.mubr.f32.gmra.mxu0 %v435
        %v669 = vpop.f32.mrf.mxu0
        %v670 = vadd.f32 0.0, %v669
        %v671 = vpop.f32.mrf.mxu0
        %v672 = vadd.f32 0.0, %v671
        %673 = vmatprep.mubr.f32.mxu0 0.0
        %674 = vmatmul.mubr.f32.gmra.mxu0 %v438
        %v675 = vpop.f32.mrf.mxu0
        %v676 = vadd.f32 0.0, %v675
        %v677 = vpop.f32.mrf.mxu0
        %v678 = vadd.f32 0.0, %v677
        %679 = vmatprep.mubr.f32.mxu0 0.0
        %680 = vmatmul.mubr.f32.gmra.mxu0 %v441
        %v681 = vpop.f32.mrf.mxu0
        %v682 = vadd.f32 0.0, %v681
        %v683 = vpop.f32.mrf.mxu0
        %v684 = vadd.f32 0.0, %v683
        %685 = vdwg.mxu0
        %686 = vmatprep.subr.mxu0 0.0
        %687 = vmatpush1.msra.mxu0 0.0
        %688 = vmatprep.subr.mxu0 0.0
        %689 = vmatpush1.msra.mxu0 0.0
        %690 = vmatprep.subr.mxu0 0.0
        %691 = vmatpush1.msra.mxu0 0.0
        %692 = vmatprep.subr.mxu0 0.0
        %693 = vmatpush1.msra.mxu0 0.0
        %694 = vmatprep.subr.mxu0 0.0
        %695 = vmatpush1.msra.mxu0 0.0
        %696 = vmatprep.subr.mxu0 0.0
        %697 = vmatpush1.msra.mxu0 0.0
        %698 = vmatprep.subr.mxu0 0.0
        %699 = vmatpush1.msra.mxu0 0.0
        %700 = vmatprep.subr.mxu0 0.0
        %701 = vmatpush1.msra.mxu0 0.0
        %702 = vmatprep.subr.mxu0 0.0
        %703 = vmatpush1.msra.mxu0 0.0
        %704 = vmatprep.subr.mxu0 0.0
        %705 = vmatpush1.msra.mxu0 0.0
        %706 = vmatprep.subr.mxu0 0.0
        %707 = vmatpush1.msra.mxu0 0.0
        %708 = vmatprep.subr.mxu0 0.0
        %709 = vmatpush1.msra.mxu0 0.0
        %710 = vmatprep.subr.mxu0 0.0
        %711 = vmatpush1.msra.mxu0 %v451
        %712 = vmatprep.subr.mxu0 0.0
        %713 = vmatpush1.msra.mxu0 %v354
        %714 = vmatprep.subr.mxu0 0.0
        %715 = vmatpush1.msra.mxu0 %v351
        %716 = vmatprep.subr.mxu0 0.0
        %717 = vmatpush1.msra.mxu0 %v348
        %718 = vmatprep.subr.mxu0 0.0
        %719 = vmatpush2.msra.mxu0 0.0
        %720 = vmatprep.subr.mxu0 0.0
        %721 = vmatpush2.msra.mxu0 0.0
        %722 = vmatprep.subr.mxu0 0.0
        %723 = vmatpush2.msra.mxu0 0.0
        %724 = vmatprep.subr.mxu0 0.0
        %725 = vmatpush2.msra.mxu0 0.0
        %726 = vmatprep.subr.mxu0 0.0
        %727 = vmatpush2.msra.mxu0 0.0
        %728 = vmatprep.subr.mxu0 0.0
        %729 = vmatpush2.msra.mxu0 0.0
        %730 = vmatprep.subr.mxu0 0.0
        %731 = vmatpush2.msra.mxu0 0.0
        %732 = vmatprep.subr.mxu0 0.0
        %733 = vmatpush2.msra.mxu0 0.0
        %734 = vmatprep.subr.mxu0 0.0
        %735 = vmatpush2.msra.mxu0 0.0
        %736 = vmatprep.subr.mxu0 0.0
        %737 = vmatpush2.msra.mxu0 0.0
        %738 = vmatprep.subr.mxu0 0.0
        %739 = vmatpush2.msra.mxu0 0.0
        %740 = vmatprep.subr.mxu0 0.0
        %741 = vmatpush2.msra.mxu0 0.0
        %742 = vmatprep.subr.mxu0 0.0
        %743 = vmatpush2.msra.mxu0 0.0
        %744 = vmatprep.subr.mxu0 0.0
        %745 = vmatpush2.msra.mxu0 0.0
        %746 = vmatprep.subr.mxu0 0.0
        %747 = vmatpush2.msra.mxu0 0.0
        %748 = vmatprep.subr.mxu0 0.0
        %749 = vmatpush2.msra.mxu0 0.0
        %750 = vmatprep.mubr.f32.mxu0 0.0
        %751 = vmatmul.mubr.f32.gmra.mxu0 %v360
        %v752 = vpop.f32.mrf.mxu0
        %v753 = vadd.f32 0.0, %v752
        %v754 = vpop.f32.mrf.mxu0
        %755 = vmatprep.mubr.f32.mxu0 0.0
        %756 = vmatmul.mubr.f32.gmra.mxu0 %v363
        %v757 = vpop.f32.mrf.mxu0
        %v758 = vadd.f32 0.0, %v757
        %v759 = vpop.f32.mrf.mxu0
        %760 = vmatprep.mubr.f32.mxu0 0.0
        %761 = vmatmul.mubr.f32.gmra.mxu0 %v366
        %v762 = vpop.f32.mrf.mxu0
        %v763 = vadd.f32 0.0, %v762
        %v764 = vpop.f32.mrf.mxu0
        %765 = vmatprep.mubr.f32.mxu0 0.0
        %766 = vmatmul.mubr.f32.gmra.mxu0 %v369
        %v767 = vpop.f32.mrf.mxu0
        %v768 = vadd.f32 0.0, %v767
        %v769 = vpop.f32.mrf.mxu0
        %770 = vmatprep.mubr.f32.mxu0 0.0
        %771 = vmatmul.mubr.f32.gmra.mxu0 %v372
        %v772 = vpop.f32.mrf.mxu0
        %v773 = vadd.f32 0.0, %v772
        %v774 = vpop.f32.mrf.mxu0
        %775 = vmatprep.mubr.f32.mxu0 0.0
        %776 = vmatmul.mubr.f32.gmra.mxu0 %v375
        %v777 = vpop.f32.mrf.mxu0
        %v778 = vadd.f32 0.0, %v777
        %v779 = vpop.f32.mrf.mxu0
        %780 = vmatprep.mubr.f32.mxu0 0.0
        %781 = vmatmul.mubr.f32.gmra.mxu0 %v378
        %v782 = vpop.f32.mrf.mxu0
        %v783 = vadd.f32 0.0, %v782
        %v784 = vpop.f32.mrf.mxu0
        %785 = vmatprep.mubr.f32.mxu0 0.0
        %786 = vmatmul.mubr.f32.gmra.mxu0 %v381
        %v787 = vpop.f32.mrf.mxu0
        %v788 = vadd.f32 0.0, %v787
        %v789 = vpop.f32.mrf.mxu0
        %790 = vmatprep.mubr.f32.mxu0 0.0
        %791 = vmatmul.mubr.f32.gmra.mxu0 %v384
        %v792 = vpop.f32.mrf.mxu0
        %v793 = vadd.f32 0.0, %v792
        %v794 = vpop.f32.mrf.mxu0
        %795 = vmatprep.mubr.f32.mxu0 0.0
        %796 = vmatmul.mubr.f32.gmra.mxu0 %v387
        %v797 = vpop.f32.mrf.mxu0
        %v798 = vadd.f32 0.0, %v797
        %v799 = vpop.f32.mrf.mxu0
        %800 = vmatprep.mubr.f32.mxu0 0.0
        %801 = vmatmul.mubr.f32.gmra.mxu0 %v390
        %v802 = vpop.f32.mrf.mxu0
        %v803 = vadd.f32 0.0, %v802
        %v804 = vpop.f32.mrf.mxu0
        %805 = vmatprep.mubr.f32.mxu0 0.0
        %806 = vmatmul.mubr.f32.gmra.mxu0 %v393
        %v807 = vpop.f32.mrf.mxu0
        %v808 = vadd.f32 0.0, %v807
        %v809 = vpop.f32.mrf.mxu0
        %810 = vmatprep.mubr.f32.mxu0 0.0
        %811 = vmatmul.mubr.f32.gmra.mxu0 %v396
        %v812 = vpop.f32.mrf.mxu0
        %v813 = vadd.f32 0.0, %v812
        %v814 = vpop.f32.mrf.mxu0
        %815 = vmatprep.mubr.f32.mxu0 0.0
        %816 = vmatmul.mubr.f32.gmra.mxu0 %v399
        %v817 = vpop.f32.mrf.mxu0
        %v818 = vadd.f32 0.0, %v817
        %v819 = vpop.f32.mrf.mxu0
        %820 = vmatprep.mubr.f32.mxu0 0.0
        %821 = vmatmul.mubr.f32.gmra.mxu0 %v402
        %v822 = vpop.f32.mrf.mxu0
        %v823 = vadd.f32 0.0, %v822
        %v824 = vpop.f32.mrf.mxu0
        %825 = vmatprep.mubr.f32.mxu0 0.0
        %826 = vmatmul.mubr.f32.gmra.mxu0 %v405
        %v827 = vpop.f32.mrf.mxu0
        %v828 = vadd.f32 0.0, %v827
        %v829 = vpop.f32.mrf.mxu0
        %830 = vmatprep.mubr.f32.mxu0 0.0
        %831 = vmatmul.mubr.f32.gmra.mxu0 %v408
        %v832 = vpop.f32.mrf.mxu0
        %v833 = vadd.f32 0.0, %v832
        %v834 = vpop.f32.mrf.mxu0
        %835 = vmatprep.mubr.f32.mxu0 0.0
        %836 = vmatmul.mubr.f32.gmra.mxu0 %v411
        %v837 = vpop.f32.mrf.mxu0
        %v838 = vadd.f32 0.0, %v837
        %v839 = vpop.f32.mrf.mxu0
        %840 = vmatprep.mubr.f32.mxu0 0.0
        %841 = vmatmul.mubr.f32.gmra.mxu0 %v414
        %v842 = vpop.f32.mrf.mxu0
        %v843 = vadd.f32 0.0, %v842
        %v844 = vpop.f32.mrf.mxu0
        %845 = vmatprep.mubr.f32.mxu0 0.0
        %846 = vmatmul.mubr.f32.gmra.mxu0 %v417
        %v847 = vpop.f32.mrf.mxu0
        %v848 = vadd.f32 0.0, %v847
        %v849 = vpop.f32.mrf.mxu0
        %850 = vmatprep.mubr.f32.mxu0 0.0
        %851 = vmatmul.mubr.f32.gmra.mxu0 %v420
        %v852 = vpop.f32.mrf.mxu0
        %v853 = vadd.f32 0.0, %v852
        %v854 = vpop.f32.mrf.mxu0
        %855 = vmatprep.mubr.f32.mxu0 0.0
        %856 = vmatmul.mubr.f32.gmra.mxu0 %v423
        %v857 = vpop.f32.mrf.mxu0
        %v858 = vadd.f32 0.0, %v857
        %v859 = vpop.f32.mrf.mxu0
        %860 = vmatprep.mubr.f32.mxu0 0.0
        %861 = vmatmul.mubr.f32.gmra.mxu0 %v426
        %v862 = vpop.f32.mrf.mxu0
        %v863 = vadd.f32 0.0, %v862
        %v864 = vpop.f32.mrf.mxu0
        %865 = vmatprep.mubr.f32.mxu0 0.0
        %866 = vmatmul.mubr.f32.gmra.mxu0 %v429
        %v867 = vpop.f32.mrf.mxu0
        %v868 = vadd.f32 0.0, %v867
        %v869 = vpop.f32.mrf.mxu0
        %870 = vmatprep.mubr.f32.mxu0 0.0
        %871 = vmatmul.mubr.f32.gmra.mxu0 %v432
        %v872 = vpop.f32.mrf.mxu0
        %v873 = vadd.f32 0.0, %v872
        %v874 = vpop.f32.mrf.mxu0
        %875 = vmatprep.mubr.f32.mxu0 0.0
        %876 = vmatmul.mubr.f32.gmra.mxu0 %v435
        %v877 = vpop.f32.mrf.mxu0
        %v878 = vadd.f32 0.0, %v877
        %v879 = vpop.f32.mrf.mxu0
        %880 = vmatprep.mubr.f32.mxu0 0.0
        %881 = vmatmul.mubr.f32.gmra.mxu0 %v438
        %v882 = vpop.f32.mrf.mxu0
        %v883 = vadd.f32 0.0, %v882
        %v884 = vpop.f32.mrf.mxu0
        %885 = vmatprep.mubr.f32.mxu0 0.0
        %886 = vmatmul.mubr.f32.gmra.mxu0 %v441
        %v887 = vpop.f32.mrf.mxu0
        %v888 = vadd.f32 0.0, %v887
        %v889 = vpop.f32.mrf.mxu0
        %890 = vdwg.mxu0
        %v892 = vlaneseq
        %v893 = vshrl.u32 %v892, 7
        %v894 = vsub.s32 0, %v893
        %v895 = vrot.slane %v345, %v894
        %v896 = vlaneseq
        %v897 = vshrl.u32 %v896, 7
        %v898 = vsub.s32 1, %v897
        %v899 = vrot.slane %v345, %v898
        %v900 = vlaneseq
        %v901 = vshrl.u32 %v900, 7
        %v902 = vsub.s32 2, %v901
        %v903 = vrot.slane %v345, %v902
        %v907 = vadd.f32 %v895, %v520
        %v908 = vadd.f32 %v899, %v522
        %v909 = vadd.f32 %v903, %v753
        %v910 = vadd.f32 %v895, %v526
        %v911 = vadd.f32 %v899, %v528
        %v912 = vadd.f32 %v903, %v758
        %v913 = vadd.f32 %v895, %v532
        %v914 = vadd.f32 %v899, %v534
        %v915 = vadd.f32 %v903, %v763
        %v916 = vadd.f32 %v895, %v538
        %v917 = vadd.f32 %v899, %v540
        %v918 = vadd.f32 %v903, %v768
        %v919 = vadd.f32 %v895, %v544
        %v920 = vadd.f32 %v899, %v546
        %v921 = vadd.f32 %v903, %v773
        %v922 = vadd.f32 %v895, %v550
        %v923 = vadd.f32 %v899, %v552
        %v924 = vadd.f32 %v903, %v778
        %v925 = vadd.f32 %v895, %v556
        %v926 = vadd.f32 %v899, %v558
        %v927 = vadd.f32 %v903, %v783
        %v928 = vadd.f32 %v895, %v562
        %v929 = vadd.f32 %v899, %v564
        %v930 = vadd.f32 %v903, %v788
        %v931 = vadd.f32 %v895, %v568
        %v932 = vadd.f32 %v899, %v570
        %v933 = vadd.f32 %v903, %v793
        %v934 = vadd.f32 %v895, %v574
        %v935 = vadd.f32 %v899, %v576
        %v936 = vadd.f32 %v903, %v798
        %v937 = vadd.f32 %v895, %v580
        %v938 = vadd.f32 %v899, %v582
        %v939 = vadd.f32 %v903, %v803
        %v940 = vadd.f32 %v895, %v586
        %v941 = vadd.f32 %v899, %v588
        %v942 = vadd.f32 %v903, %v808
        %v943 = vadd.f32 %v895, %v592
        %v944 = vadd.f32 %v899, %v594
        %v945 = vadd.f32 %v903, %v813
        %v946 = vadd.f32 %v895, %v598
        %v947 = vadd.f32 %v899, %v600
        %v948 = vadd.f32 %v903, %v818
        %v949 = vadd.f32 %v895, %v604
        %v950 = vadd.f32 %v899, %v606
        %v951 = vadd.f32 %v903, %v823
        %v952 = vadd.f32 %v895, %v610
        %v953 = vadd.f32 %v899, %v612
        %v954 = vadd.f32 %v903, %v828
        %v955 = vadd.f32 %v895, %v616
        %v956 = vadd.f32 %v899, %v618
        %v957 = vadd.f32 %v903, %v833
        %v958 = vadd.f32 %v895, %v622
        %v959 = vadd.f32 %v899, %v624
        %v960 = vadd.f32 %v903, %v838
        %v961 = vadd.f32 %v895, %v628
        %v962 = vadd.f32 %v899, %v630
        %v963 = vadd.f32 %v903, %v843
        %v964 = vadd.f32 %v895, %v634
        %v965 = vadd.f32 %v899, %v636
        %v966 = vadd.f32 %v903, %v848
        %v967 = vadd.f32 %v895, %v640
        %v968 = vadd.f32 %v899, %v642
        %v969 = vadd.f32 %v903, %v853
        %v970 = vadd.f32 %v895, %v646
        %v971 = vadd.f32 %v899, %v648
        %v972 = vadd.f32 %v903, %v858
        %v973 = vadd.f32 %v895, %v652
        %v974 = vadd.f32 %v899, %v654
        %v975 = vadd.f32 %v903, %v863
        %v976 = vadd.f32 %v895, %v658
        %v977 = vadd.f32 %v899, %v660
        %v978 = vadd.f32 %v903, %v868
        %v979 = vadd.f32 %v895, %v664
        %v980 = vadd.f32 %v899, %v666
        %v981 = vadd.f32 %v903, %v873
        %v982 = vadd.f32 %v895, %v670
        %v983 = vadd.f32 %v899, %v672
        %v984 = vadd.f32 %v903, %v878
        %v985 = vadd.f32 %v895, %v676
        %v986 = vadd.f32 %v899, %v678
        %v987 = vadd.f32 %v903, %v883
        %v988 = vadd.f32 %v895, %v682
        %v989 = vadd.f32 %v899, %v684
        %v990 = vadd.f32 %v903, %v888
        %vm991 = vcmask 1046528
        %v992 = vrot.slane %v317, 1
        %v993 = vrot.slane %v318, 1
        %v994 = vsel %vm991, %v992, %v993
        %v995 = vrot.slane %v319, 1
        %v996 = vsel %vm991, %v993, %v995
        %v997 = vrot.slane %v320, 1
        %v998 = vsel %vm991, %v995, %v997
        %v999 = vrot.slane %v321, 1
        %v1000 = vsel %vm991, %v997, %v999
        %v1001 = vrot.slane %v322, 1
        %v1002 = vsel %vm991, %v999, %v1001
        %v1003 = vrot.slane %v323, 1
        %v1004 = vsel %vm991, %v1001, %v1003
        %v1005 = vrot.slane %v324, 1
        %v1006 = vsel %vm991, %v1003, %v1005
        %v1007 = vrot.slane %v325, 1
        %v1008 = vsel %vm991, %v1005, %v1007
        %v1009 = vrot.slane %v326, 1
        %v1010 = vsel %vm991, %v1007, %v1009
        %v1011 = vrot.slane %v327, 1
        %v1012 = vsel %vm991, %v1009, %v1011
        %v1013 = vrot.slane %v328, 1
        %v1014 = vsel %vm991, %v1011, %v1013
        %v1015 = vrot.slane %v329, 1
        %v1016 = vsel %vm991, %v1013, %v1015
        %v1017 = vrot.slane %v330, 1
        %v1018 = vsel %vm991, %v1015, %v1017
        %v1019 = vrot.slane %v331, 1
        %v1020 = vsel %vm991, %v1017, %v1019
        %v1021 = vrot.slane %v332, 1
        %v1022 = vsel %vm991, %v1019, %v1021
        %v1023 = vrot.slane %v333, 1
        %v1024 = vsel %vm991, %v1021, %v1023
        %v1025 = vrot.slane %v334, 1
        %v1026 = vsel %vm991, %v1023, %v1025
        %v1027 = vrot.slane %v335, 1
        %v1028 = vsel %vm991, %v1025, %v1027
        %v1029 = vrot.slane %v336, 1
        %v1030 = vsel %vm991, %v1027, %v1029
        %v1031 = vrot.slane %v337, 1
        %v1032 = vsel %vm991, %v1029, %v1031
        %v1033 = vrot.slane %v338, 1
        %v1034 = vsel %vm991, %v1031, %v1033
        %v1035 = vrot.slane %v339, 1
        %v1036 = vsel %vm991, %v1033, %v1035
        %v1037 = vrot.slane %v340, 1
        %v1038 = vsel %vm991, %v1035, %v1037
        %v1039 = vrot.slane %v341, 1
        %v1040 = vsel %vm991, %v1037, %v1039
        %v1041 = vrot.slane %v342, 1
        %v1042 = vsel %vm991, %v1039, %v1041
        %v1043 = vrot.slane %v343, 1
        %v1044 = vsel %vm991, %v1041, %v1043
        %v1045 = vrot.slane %v344, 1
        %v1046 = vsel %vm991, %v1043, %v1045
        %v1049 = vsel %vm991, %v1045, %v992
        %s1050 = scalar_lea.vmem %s1, 96
        %v1051 = vld [vmem:[%s1050] sm:$0xff]
        %v1052 = vld [vmem:[%s1050 + $0x8] sm:$0xff]
        %v1053 = vld [vmem:[%s1050 + $0x10] sm:$0xff]
        %v1054 = vld [vmem:[%s1050 + $0x18] sm:$0xff]
        %v1055 = vld [vmem:[%s1050 + $0x20] sm:$0xff]
        %v1056 = vld [vmem:[%s1050 + $0x28] sm:$0xff]
        %v1057 = vld [vmem:[%s1050 + $0x30] sm:$0xff]
        %v1058 = vld [vmem:[%s1050 + $0x38] sm:$0xff]
        %v1059 = vld [vmem:[%s1050 + $0x40] sm:$0xff]
        %v1060 = vld [vmem:[%s1050 + $0x48] sm:$0xf]
        %v1061 = vld [vmem:[%s1050 + $0x50] sm:$0xf]
        %v1062 = vld [vmem:[%s1050 + $0x58] sm:$0xf]
        %v1063 = vsel %vm358, %v994, 0
        %v1065 = vsel %vm358, %v996, 0
        %v1067 = vsel %vm358, %v998, 0
        %v1069 = vsel %vm358, %v1000, 0
        %v1071 = vsel %vm358, %v1002, 0
        %v1073 = vsel %vm358, %v1004, 0
        %v1075 = vsel %vm358, %v1006, 0
        %v1077 = vsel %vm358, %v1008, 0
        %v1079 = vsel %vm358, %v1010, 0
        %v1081 = vsel %vm358, %v1012, 0
        %v1083 = vsel %vm358, %v1014, 0
        %v1085 = vsel %vm358, %v1016, 0
        %v1087 = vsel %vm358, %v1018, 0
        %v1089 = vsel %vm358, %v1020, 0
        %v1091 = vsel %vm358, %v1022, 0
        %v1093 = vsel %vm358, %v1024, 0
        %v1095 = vsel %vm358, %v1026, 0
        %v1097 = vsel %vm358, %v1028, 0
        %v1099 = vsel %vm358, %v1030, 0
        %v1101 = vsel %vm358, %v1032, 0
        %v1103 = vsel %vm358, %v1034, 0
        %v1105 = vsel %vm358, %v1036, 0
        %v1107 = vsel %vm358, %v1038, 0
        %v1109 = vsel %vm358, %v1040, 0
        %v1111 = vsel %vm358, %v1042, 0
        %v1113 = vsel %vm358, %v1044, 0
        %v1115 = vsel %vm358, %v1046, 0
        %v1118 = vsel %vm358, %v1049, 0
        %v1121 = vsel %vm443, %v1060, 0
        %v1124 = vsel %vm443, %v1061, 0
        %v1127 = vsel %vm443, %v1062, 0
        %1129 = vmatprep.subr.mxu0 0.0
        %1130 = vmatpush1.msra.mxu0 0.0
        %1131 = vmatprep.subr.mxu0 0.0
        %1132 = vmatpush1.msra.mxu0 0.0
        %1133 = vmatprep.subr.mxu0 0.0
        %1134 = vmatpush1.msra.mxu0 0.0
        %1135 = vmatprep.subr.mxu0 0.0
        %1136 = vmatpush1.msra.mxu0 0.0
        %1137 = vmatprep.subr.mxu0 0.0
        %1138 = vmatpush1.msra.mxu0 0.0
        %1139 = vmatprep.subr.mxu0 0.0
        %1140 = vmatpush1.msra.mxu0 0.0
        %1141 = vmatprep.subr.mxu0 0.0
        %1142 = vmatpush1.msra.mxu0 0.0
        %1143 = vmatprep.subr.mxu0 0.0
        %1144 = vmatpush1.msra.mxu0 0.0
        %1145 = vmatprep.subr.mxu0 0.0
        %1146 = vmatpush1.msra.mxu0 0.0
        %1147 = vmatprep.subr.mxu0 0.0
        %1148 = vmatpush1.msra.mxu0 0.0
        %1149 = vmatprep.subr.mxu0 0.0
        %1150 = vmatpush1.msra.mxu0 0.0
        %1151 = vmatprep.subr.mxu0 0.0
        %1152 = vmatpush1.msra.mxu0 0.0
        %1153 = vmatprep.subr.mxu0 %v1124
        %1154 = vmatpush1.msra.mxu0 %v1121
        %1155 = vmatprep.subr.mxu0 %v1058
        %1156 = vmatpush1.msra.mxu0 %v1057
        %1157 = vmatprep.subr.mxu0 %v1055
        %1158 = vmatpush1.msra.mxu0 %v1054
        %1159 = vmatprep.subr.mxu0 %v1052
        %1160 = vmatpush1.msra.mxu0 %v1051
        %1161 = vmatprep.subr.mxu0 0.0
        %1162 = vmatpush2.msra.mxu0 0.0
        %1163 = vmatprep.subr.mxu0 0.0
        %1164 = vmatpush2.msra.mxu0 0.0
        %1165 = vmatprep.subr.mxu0 0.0
        %1166 = vmatpush2.msra.mxu0 0.0
        %1167 = vmatprep.subr.mxu0 0.0
        %1168 = vmatpush2.msra.mxu0 0.0
        %1169 = vmatprep.subr.mxu0 0.0
        %1170 = vmatpush2.msra.mxu0 0.0
        %1171 = vmatprep.subr.mxu0 0.0
        %1172 = vmatpush2.msra.mxu0 0.0
        %1173 = vmatprep.subr.mxu0 0.0
        %1174 = vmatpush2.msra.mxu0 0.0
        %1175 = vmatprep.subr.mxu0 0.0
        %1176 = vmatpush2.msra.mxu0 0.0
        %1177 = vmatprep.subr.mxu0 0.0
        %1178 = vmatpush2.msra.mxu0 0.0
        %1179 = vmatprep.subr.mxu0 0.0
        %1180 = vmatpush2.msra.mxu0 0.0
        %1181 = vmatprep.subr.mxu0 0.0
        %1182 = vmatpush2.msra.mxu0 0.0
        %1183 = vmatprep.subr.mxu0 0.0
        %1184 = vmatpush2.msra.mxu0 0.0
        %1185 = vmatprep.subr.mxu0 0.0
        %1186 = vmatpush2.msra.mxu0 0.0
        %1187 = vmatprep.subr.mxu0 0.0
        %1188 = vmatpush2.msra.mxu0 0.0
        %1189 = vmatprep.subr.mxu0 0.0
        %1190 = vmatpush2.msra.mxu0 0.0
        %1191 = vmatprep.subr.mxu0 0.0
        %1192 = vmatpush2.msra.mxu0 0.0
        %1193 = vmatprep.mubr.f32.mxu0 0.0
        %1194 = vmatmul.mubr.f32.gmra.mxu0 %v1063
        %v1195 = vpop.f32.mrf.mxu0
        %v1196 = vadd.f32 0.0, %v1195
        %v1197 = vpop.f32.mrf.mxu0
        %v1198 = vadd.f32 0.0, %v1197
        %1199 = vmatprep.mubr.f32.mxu0 0.0
        %1200 = vmatmul.mubr.f32.gmra.mxu0 %v1065
        %v1201 = vpop.f32.mrf.mxu0
        %v1202 = vadd.f32 0.0, %v1201
        %v1203 = vpop.f32.mrf.mxu0
        %v1204 = vadd.f32 0.0, %v1203
        %1205 = vmatprep.mubr.f32.mxu0 0.0
        %1206 = vmatmul.mubr.f32.gmra.mxu0 %v1067
        %v1207 = vpop.f32.mrf.mxu0
        %v1208 = vadd.f32 0.0, %v1207
        %v1209 = vpop.f32.mrf.mxu0
        %v1210 = vadd.f32 0.0, %v1209
        %1211 = vmatprep.mubr.f32.mxu0 0.0
        %1212 = vmatmul.mubr.f32.gmra.mxu0 %v1069
        %v1213 = vpop.f32.mrf.mxu0
        %v1214 = vadd.f32 0.0, %v1213
        %v1215 = vpop.f32.mrf.mxu0
        %v1216 = vadd.f32 0.0, %v1215
        %1217 = vmatprep.mubr.f32.mxu0 0.0
        %1218 = vmatmul.mubr.f32.gmra.mxu0 %v1071
        %v1219 = vpop.f32.mrf.mxu0
        %v1220 = vadd.f32 0.0, %v1219
        %v1221 = vpop.f32.mrf.mxu0
        %v1222 = vadd.f32 0.0, %v1221
        %1223 = vmatprep.mubr.f32.mxu0 0.0
        %1224 = vmatmul.mubr.f32.gmra.mxu0 %v1073
        %v1225 = vpop.f32.mrf.mxu0
        %v1226 = vadd.f32 0.0, %v1225
        %v1227 = vpop.f32.mrf.mxu0
        %v1228 = vadd.f32 0.0, %v1227
        %1229 = vmatprep.mubr.f32.mxu0 0.0
        %1230 = vmatmul.mubr.f32.gmra.mxu0 %v1075
        %v1231 = vpop.f32.mrf.mxu0
        %v1232 = vadd.f32 0.0, %v1231
        %v1233 = vpop.f32.mrf.mxu0
        %v1234 = vadd.f32 0.0, %v1233
        %1235 = vmatprep.mubr.f32.mxu0 0.0
        %1236 = vmatmul.mubr.f32.gmra.mxu0 %v1077
        %v1237 = vpop.f32.mrf.mxu0
        %v1238 = vadd.f32 0.0, %v1237
        %v1239 = vpop.f32.mrf.mxu0
        %v1240 = vadd.f32 0.0, %v1239
        %1241 = vmatprep.mubr.f32.mxu0 0.0
        %1242 = vmatmul.mubr.f32.gmra.mxu0 %v1079
        %v1243 = vpop.f32.mrf.mxu0
        %v1244 = vadd.f32 0.0, %v1243
        %v1245 = vpop.f32.mrf.mxu0
        %v1246 = vadd.f32 0.0, %v1245
        %1247 = vmatprep.mubr.f32.mxu0 0.0
        %1248 = vmatmul.mubr.f32.gmra.mxu0 %v1081
        %v1249 = vpop.f32.mrf.mxu0
        %v1250 = vadd.f32 0.0, %v1249
        %v1251 = vpop.f32.mrf.mxu0
        %v1252 = vadd.f32 0.0, %v1251
        %1253 = vmatprep.mubr.f32.mxu0 0.0
        %1254 = vmatmul.mubr.f32.gmra.mxu0 %v1083
        %v1255 = vpop.f32.mrf.mxu0
        %v1256 = vadd.f32 0.0, %v1255
        %v1257 = vpop.f32.mrf.mxu0
        %v1258 = vadd.f32 0.0, %v1257
        %1259 = vmatprep.mubr.f32.mxu0 0.0
        %1260 = vmatmul.mubr.f32.gmra.mxu0 %v1085
        %v1261 = vpop.f32.mrf.mxu0
        %v1262 = vadd.f32 0.0, %v1261
        %v1263 = vpop.f32.mrf.mxu0
        %v1264 = vadd.f32 0.0, %v1263
        %1265 = vmatprep.mubr.f32.mxu0 0.0
        %1266 = vmatmul.mubr.f32.gmra.mxu0 %v1087
        %v1267 = vpop.f32.mrf.mxu0
        %v1268 = vadd.f32 0.0, %v1267
        %v1269 = vpop.f32.mrf.mxu0
        %v1270 = vadd.f32 0.0, %v1269
        %1271 = vmatprep.mubr.f32.mxu0 0.0
        %1272 = vmatmul.mubr.f32.gmra.mxu0 %v1089
        %v1273 = vpop.f32.mrf.mxu0
        %v1274 = vadd.f32 0.0, %v1273
        %v1275 = vpop.f32.mrf.mxu0
        %v1276 = vadd.f32 0.0, %v1275
        %1277 = vmatprep.mubr.f32.mxu0 0.0
        %1278 = vmatmul.mubr.f32.gmra.mxu0 %v1091
        %v1279 = vpop.f32.mrf.mxu0
        %v1280 = vadd.f32 0.0, %v1279
        %v1281 = vpop.f32.mrf.mxu0
        %v1282 = vadd.f32 0.0, %v1281
        %1283 = vmatprep.mubr.f32.mxu0 0.0
        %1284 = vmatmul.mubr.f32.gmra.mxu0 %v1093
        %v1285 = vpop.f32.mrf.mxu0
        %v1286 = vadd.f32 0.0, %v1285
        %v1287 = vpop.f32.mrf.mxu0
        %v1288 = vadd.f32 0.0, %v1287
        %1289 = vmatprep.mubr.f32.mxu0 0.0
        %1290 = vmatmul.mubr.f32.gmra.mxu0 %v1095
        %v1291 = vpop.f32.mrf.mxu0
        %v1292 = vadd.f32 0.0, %v1291
        %v1293 = vpop.f32.mrf.mxu0
        %v1294 = vadd.f32 0.0, %v1293
        %1295 = vmatprep.mubr.f32.mxu0 0.0
        %1296 = vmatmul.mubr.f32.gmra.mxu0 %v1097
        %v1297 = vpop.f32.mrf.mxu0
        %v1298 = vadd.f32 0.0, %v1297
        %v1299 = vpop.f32.mrf.mxu0
        %v1300 = vadd.f32 0.0, %v1299
        %1301 = vmatprep.mubr.f32.mxu0 0.0
        %1302 = vmatmul.mubr.f32.gmra.mxu0 %v1099
        %v1303 = vpop.f32.mrf.mxu0
        %v1304 = vadd.f32 0.0, %v1303
        %v1305 = vpop.f32.mrf.mxu0
        %v1306 = vadd.f32 0.0, %v1305
        %1307 = vmatprep.mubr.f32.mxu0 0.0
        %1308 = vmatmul.mubr.f32.gmra.mxu0 %v1101
        %v1309 = vpop.f32.mrf.mxu0
        %v1310 = vadd.f32 0.0, %v1309
        %v1311 = vpop.f32.mrf.mxu0
        %v1312 = vadd.f32 0.0, %v1311
        %1313 = vmatprep.mubr.f32.mxu0 0.0
        %1314 = vmatmul.mubr.f32.gmra.mxu0 %v1103
        %v1315 = vpop.f32.mrf.mxu0
        %v1316 = vadd.f32 0.0, %v1315
        %v1317 = vpop.f32.mrf.mxu0
        %v1318 = vadd.f32 0.0, %v1317
        %1319 = vmatprep.mubr.f32.mxu0 0.0
        %1320 = vmatmul.mubr.f32.gmra.mxu0 %v1105
        %v1321 = vpop.f32.mrf.mxu0
        %v1322 = vadd.f32 0.0, %v1321
        %v1323 = vpop.f32.mrf.mxu0
        %v1324 = vadd.f32 0.0, %v1323
        %1325 = vmatprep.mubr.f32.mxu0 0.0
        %1326 = vmatmul.mubr.f32.gmra.mxu0 %v1107
        %v1327 = vpop.f32.mrf.mxu0
        %v1328 = vadd.f32 0.0, %v1327
        %v1329 = vpop.f32.mrf.mxu0
        %v1330 = vadd.f32 0.0, %v1329
        %1331 = vmatprep.mubr.f32.mxu0 0.0
        %1332 = vmatmul.mubr.f32.gmra.mxu0 %v1109
        %v1333 = vpop.f32.mrf.mxu0
        %v1334 = vadd.f32 0.0, %v1333
        %v1335 = vpop.f32.mrf.mxu0
        %v1336 = vadd.f32 0.0, %v1335
        %1337 = vmatprep.mubr.f32.mxu0 0.0
        %1338 = vmatmul.mubr.f32.gmra.mxu0 %v1111
        %v1339 = vpop.f32.mrf.mxu0
        %v1340 = vadd.f32 0.0, %v1339
        %v1341 = vpop.f32.mrf.mxu0
        %v1342 = vadd.f32 0.0, %v1341
        %1343 = vmatprep.mubr.f32.mxu0 0.0
        %1344 = vmatmul.mubr.f32.gmra.mxu0 %v1113
        %v1345 = vpop.f32.mrf.mxu0
        %v1346 = vadd.f32 0.0, %v1345
        %v1347 = vpop.f32.mrf.mxu0
        %v1348 = vadd.f32 0.0, %v1347
        %1349 = vmatprep.mubr.f32.mxu0 0.0
        %1350 = vmatmul.mubr.f32.gmra.mxu0 %v1115
        %v1351 = vpop.f32.mrf.mxu0
        %v1352 = vadd.f32 0.0, %v1351
        %v1353 = vpop.f32.mrf.mxu0
        %v1354 = vadd.f32 0.0, %v1353
        %1355 = vmatprep.mubr.f32.mxu0 0.0
        %1356 = vmatmul.mubr.f32.gmra.mxu0 %v1118
        %v1357 = vpop.f32.mrf.mxu0
        %v1358 = vadd.f32 0.0, %v1357
        %v1359 = vpop.f32.mrf.mxu0
        %v1360 = vadd.f32 0.0, %v1359
        %1361 = vdwg.mxu0
        %1362 = vmatprep.subr.mxu0 0.0
        %1363 = vmatpush1.msra.mxu0 0.0
        %1364 = vmatprep.subr.mxu0 0.0
        %1365 = vmatpush1.msra.mxu0 0.0
        %1366 = vmatprep.subr.mxu0 0.0
        %1367 = vmatpush1.msra.mxu0 0.0
        %1368 = vmatprep.subr.mxu0 0.0
        %1369 = vmatpush1.msra.mxu0 0.0
        %1370 = vmatprep.subr.mxu0 0.0
        %1371 = vmatpush1.msra.mxu0 0.0
        %1372 = vmatprep.subr.mxu0 0.0
        %1373 = vmatpush1.msra.mxu0 0.0
        %1374 = vmatprep.subr.mxu0 0.0
        %1375 = vmatpush1.msra.mxu0 0.0
        %1376 = vmatprep.subr.mxu0 0.0
        %1377 = vmatpush1.msra.mxu0 0.0
        %1378 = vmatprep.subr.mxu0 0.0
        %1379 = vmatpush1.msra.mxu0 0.0
        %1380 = vmatprep.subr.mxu0 0.0
        %1381 = vmatpush1.msra.mxu0 0.0
        %1382 = vmatprep.subr.mxu0 0.0
        %1383 = vmatpush1.msra.mxu0 0.0
        %1384 = vmatprep.subr.mxu0 0.0
        %1385 = vmatpush1.msra.mxu0 0.0
        %1386 = vmatprep.subr.mxu0 0.0
        %1387 = vmatpush1.msra.mxu0 %v1127
        %1388 = vmatprep.subr.mxu0 0.0
        %1389 = vmatpush1.msra.mxu0 %v1059
        %1390 = vmatprep.subr.mxu0 0.0
        %1391 = vmatpush1.msra.mxu0 %v1056
        %1392 = vmatprep.subr.mxu0 0.0
        %1393 = vmatpush1.msra.mxu0 %v1053
        %1394 = vmatprep.subr.mxu0 0.0
        %1395 = vmatpush2.msra.mxu0 0.0
        %1396 = vmatprep.subr.mxu0 0.0
        %1397 = vmatpush2.msra.mxu0 0.0
        %1398 = vmatprep.subr.mxu0 0.0
        %1399 = vmatpush2.msra.mxu0 0.0
        %1400 = vmatprep.subr.mxu0 0.0
        %1401 = vmatpush2.msra.mxu0 0.0
        %1402 = vmatprep.subr.mxu0 0.0
        %1403 = vmatpush2.msra.mxu0 0.0
        %1404 = vmatprep.subr.mxu0 0.0
        %1405 = vmatpush2.msra.mxu0 0.0
        %1406 = vmatprep.subr.mxu0 0.0
        %1407 = vmatpush2.msra.mxu0 0.0
        %1408 = vmatprep.subr.mxu0 0.0
        %1409 = vmatpush2.msra.mxu0 0.0
        %1410 = vmatprep.subr.mxu0 0.0
        %1411 = vmatpush2.msra.mxu0 0.0
        %1412 = vmatprep.subr.mxu0 0.0
        %1413 = vmatpush2.msra.mxu0 0.0
        %1414 = vmatprep.subr.mxu0 0.0
        %1415 = vmatpush2.msra.mxu0 0.0
        %1416 = vmatprep.subr.mxu0 0.0
        %1417 = vmatpush2.msra.mxu0 0.0
        %1418 = vmatprep.subr.mxu0 0.0
        %1419 = vmatpush2.msra.mxu0 0.0
        %1420 = vmatprep.subr.mxu0 0.0
        %1421 = vmatpush2.msra.mxu0 0.0
        %1422 = vmatprep.subr.mxu0 0.0
        %1423 = vmatpush2.msra.mxu0 0.0
        %1424 = vmatprep.subr.mxu0 0.0
        %1425 = vmatpush2.msra.mxu0 0.0
        %1426 = vmatprep.mubr.f32.mxu0 0.0
        %1427 = vmatmul.mubr.f32.gmra.mxu0 %v1063
        %v1428 = vpop.f32.mrf.mxu0
        %v1429 = vadd.f32 0.0, %v1428
        %v1430 = vpop.f32.mrf.mxu0
        %1431 = vmatprep.mubr.f32.mxu0 0.0
        %1432 = vmatmul.mubr.f32.gmra.mxu0 %v1065
        %v1433 = vpop.f32.mrf.mxu0
        %v1434 = vadd.f32 0.0, %v1433
        %v1435 = vpop.f32.mrf.mxu0
        %1436 = vmatprep.mubr.f32.mxu0 0.0
        %1437 = vmatmul.mubr.f32.gmra.mxu0 %v1067
        %v1438 = vpop.f32.mrf.mxu0
        %v1439 = vadd.f32 0.0, %v1438
        %v1440 = vpop.f32.mrf.mxu0
        %1441 = vmatprep.mubr.f32.mxu0 0.0
        %1442 = vmatmul.mubr.f32.gmra.mxu0 %v1069
        %v1443 = vpop.f32.mrf.mxu0
        %v1444 = vadd.f32 0.0, %v1443
        %v1445 = vpop.f32.mrf.mxu0
        %1446 = vmatprep.mubr.f32.mxu0 0.0
        %1447 = vmatmul.mubr.f32.gmra.mxu0 %v1071
        %v1448 = vpop.f32.mrf.mxu0
        %v1449 = vadd.f32 0.0, %v1448
        %v1450 = vpop.f32.mrf.mxu0
        %1451 = vmatprep.mubr.f32.mxu0 0.0
        %1452 = vmatmul.mubr.f32.gmra.mxu0 %v1073
        %v1453 = vpop.f32.mrf.mxu0
        %v1454 = vadd.f32 0.0, %v1453
        %v1455 = vpop.f32.mrf.mxu0
        %1456 = vmatprep.mubr.f32.mxu0 0.0
        %1457 = vmatmul.mubr.f32.gmra.mxu0 %v1075
        %v1458 = vpop.f32.mrf.mxu0
        %v1459 = vadd.f32 0.0, %v1458
        %v1460 = vpop.f32.mrf.mxu0
        %1461 = vmatprep.mubr.f32.mxu0 0.0
        %1462 = vmatmul.mubr.f32.gmra.mxu0 %v1077
        %v1463 = vpop.f32.mrf.mxu0
        %v1464 = vadd.f32 0.0, %v1463
        %v1465 = vpop.f32.mrf.mxu0
        %1466 = vmatprep.mubr.f32.mxu0 0.0
        %1467 = vmatmul.mubr.f32.gmra.mxu0 %v1079
        %v1468 = vpop.f32.mrf.mxu0
        %v1469 = vadd.f32 0.0, %v1468
        %v1470 = vpop.f32.mrf.mxu0
        %1471 = vmatprep.mubr.f32.mxu0 0.0
        %1472 = vmatmul.mubr.f32.gmra.mxu0 %v1081
        %v1473 = vpop.f32.mrf.mxu0
        %v1474 = vadd.f32 0.0, %v1473
        %v1475 = vpop.f32.mrf.mxu0
        %1476 = vmatprep.mubr.f32.mxu0 0.0
        %1477 = vmatmul.mubr.f32.gmra.mxu0 %v1083
        %v1478 = vpop.f32.mrf.mxu0
        %v1479 = vadd.f32 0.0, %v1478
        %v1480 = vpop.f32.mrf.mxu0
        %1481 = vmatprep.mubr.f32.mxu0 0.0
        %1482 = vmatmul.mubr.f32.gmra.mxu0 %v1085
        %v1483 = vpop.f32.mrf.mxu0
        %v1484 = vadd.f32 0.0, %v1483
        %v1485 = vpop.f32.mrf.mxu0
        %1486 = vmatprep.mubr.f32.mxu0 0.0
        %1487 = vmatmul.mubr.f32.gmra.mxu0 %v1087
        %v1488 = vpop.f32.mrf.mxu0
        %v1489 = vadd.f32 0.0, %v1488
        %v1490 = vpop.f32.mrf.mxu0
        %1491 = vmatprep.mubr.f32.mxu0 0.0
        %1492 = vmatmul.mubr.f32.gmra.mxu0 %v1089
        %v1493 = vpop.f32.mrf.mxu0
        %v1494 = vadd.f32 0.0, %v1493
        %v1495 = vpop.f32.mrf.mxu0
        %1496 = vmatprep.mubr.f32.mxu0 0.0
        %1497 = vmatmul.mubr.f32.gmra.mxu0 %v1091
        %v1498 = vpop.f32.mrf.mxu0
        %v1499 = vadd.f32 0.0, %v1498
        %v1500 = vpop.f32.mrf.mxu0
        %1501 = vmatprep.mubr.f32.mxu0 0.0
        %1502 = vmatmul.mubr.f32.gmra.mxu0 %v1093
        %v1503 = vpop.f32.mrf.mxu0
        %v1504 = vadd.f32 0.0, %v1503
        %v1505 = vpop.f32.mrf.mxu0
        %1506 = vmatprep.mubr.f32.mxu0 0.0
        %1507 = vmatmul.mubr.f32.gmra.mxu0 %v1095
        %v1508 = vpop.f32.mrf.mxu0
        %v1509 = vadd.f32 0.0, %v1508
        %v1510 = vpop.f32.mrf.mxu0
        %1511 = vmatprep.mubr.f32.mxu0 0.0
        %1512 = vmatmul.mubr.f32.gmra.mxu0 %v1097
        %v1513 = vpop.f32.mrf.mxu0
        %v1514 = vadd.f32 0.0, %v1513
        %v1515 = vpop.f32.mrf.mxu0
        %1516 = vmatprep.mubr.f32.mxu0 0.0
        %1517 = vmatmul.mubr.f32.gmra.mxu0 %v1099
        %v1518 = vpop.f32.mrf.mxu0
        %v1519 = vadd.f32 0.0, %v1518
        %v1520 = vpop.f32.mrf.mxu0
        %1521 = vmatprep.mubr.f32.mxu0 0.0
        %1522 = vmatmul.mubr.f32.gmra.mxu0 %v1101
        %v1523 = vpop.f32.mrf.mxu0
        %v1524 = vadd.f32 0.0, %v1523
        %v1525 = vpop.f32.mrf.mxu0
        %1526 = vmatprep.mubr.f32.mxu0 0.0
        %1527 = vmatmul.mubr.f32.gmra.mxu0 %v1103
        %v1528 = vpop.f32.mrf.mxu0
        %v1529 = vadd.f32 0.0, %v1528
        %v1530 = vpop.f32.mrf.mxu0
        %1531 = vmatprep.mubr.f32.mxu0 0.0
        %1532 = vmatmul.mubr.f32.gmra.mxu0 %v1105
        %v1533 = vpop.f32.mrf.mxu0
        %v1534 = vadd.f32 0.0, %v1533
        %v1535 = vpop.f32.mrf.mxu0
        %1536 = vmatprep.mubr.f32.mxu0 0.0
        %1537 = vmatmul.mubr.f32.gmra.mxu0 %v1107
        %v1538 = vpop.f32.mrf.mxu0
        %v1539 = vadd.f32 0.0, %v1538
        %v1540 = vpop.f32.mrf.mxu0
        %1541 = vmatprep.mubr.f32.mxu0 0.0
        %1542 = vmatmul.mubr.f32.gmra.mxu0 %v1109
        %v1543 = vpop.f32.mrf.mxu0
        %v1544 = vadd.f32 0.0, %v1543
        %v1545 = vpop.f32.mrf.mxu0
        %1546 = vmatprep.mubr.f32.mxu0 0.0
        %1547 = vmatmul.mubr.f32.gmra.mxu0 %v1111
        %v1548 = vpop.f32.mrf.mxu0
        %v1549 = vadd.f32 0.0, %v1548
        %v1550 = vpop.f32.mrf.mxu0
        %1551 = vmatprep.mubr.f32.mxu0 0.0
        %1552 = vmatmul.mubr.f32.gmra.mxu0 %v1113
        %v1553 = vpop.f32.mrf.mxu0
        %v1554 = vadd.f32 0.0, %v1553
        %v1555 = vpop.f32.mrf.mxu0
        %1556 = vmatprep.mubr.f32.mxu0 0.0
        %1557 = vmatmul.mubr.f32.gmra.mxu0 %v1115
        %v1558 = vpop.f32.mrf.mxu0
        %v1559 = vadd.f32 0.0, %v1558
        %v1560 = vpop.f32.mrf.mxu0
        %1561 = vmatprep.mubr.f32.mxu0 0.0
        %1562 = vmatmul.mubr.f32.gmra.mxu0 %v1118
        %v1563 = vpop.f32.mrf.mxu0
        %v1564 = vadd.f32 0.0, %v1563
        %v1565 = vpop.f32.mrf.mxu0
        %1566 = vdwg.mxu0
        %v1567 = vadd.f32 %v907, %v1196
        %v1568 = vadd.f32 %v908, %v1198
        %v1569 = vadd.f32 %v909, %v1429
        %v1570 = vadd.f32 %v910, %v1202
        %v1571 = vadd.f32 %v911, %v1204
        %v1572 = vadd.f32 %v912, %v1434
        %v1573 = vadd.f32 %v913, %v1208
        %v1574 = vadd.f32 %v914, %v1210
        %v1575 = vadd.f32 %v915, %v1439
        %v1576 = vadd.f32 %v916, %v1214
        %v1577 = vadd.f32 %v917, %v1216
        %v1578 = vadd.f32 %v918, %v1444
        %v1579 = vadd.f32 %v919, %v1220
        %v1580 = vadd.f32 %v920, %v1222
        %v1581 = vadd.f32 %v921, %v1449
        %v1582 = vadd.f32 %v922, %v1226
        %v1583 = vadd.f32 %v923, %v1228
        %v1584 = vadd.f32 %v924, %v1454
        %v1585 = vadd.f32 %v925, %v1232
        %v1586 = vadd.f32 %v926, %v1234
        %v1587 = vadd.f32 %v927, %v1459
        %v1588 = vadd.f32 %v928, %v1238
        %v1589 = vadd.f32 %v929, %v1240
        %v1590 = vadd.f32 %v930, %v1464
        %v1591 = vadd.f32 %v931, %v1244
        %v1592 = vadd.f32 %v932, %v1246
        %v1593 = vadd.f32 %v933, %v1469
        %v1594 = vadd.f32 %v934, %v1250
        %v1595 = vadd.f32 %v935, %v1252
        %v1596 = vadd.f32 %v936, %v1474
        %v1597 = vadd.f32 %v937, %v1256
        %v1598 = vadd.f32 %v938, %v1258
        %v1599 = vadd.f32 %v939, %v1479
        %v1600 = vadd.f32 %v940, %v1262
        %v1601 = vadd.f32 %v941, %v1264
        %v1602 = vadd.f32 %v942, %v1484
        %v1603 = vadd.f32 %v943, %v1268
        %v1604 = vadd.f32 %v944, %v1270
        %v1605 = vadd.f32 %v945, %v1489
        %v1606 = vadd.f32 %v946, %v1274
        %v1607 = vadd.f32 %v947, %v1276
        %v1608 = vadd.f32 %v948, %v1494
        %v1609 = vadd.f32 %v949, %v1280
        %v1610 = vadd.f32 %v950, %v1282
        %v1611 = vadd.f32 %v951, %v1499
        %v1612 = vadd.f32 %v952, %v1286
        %v1613 = vadd.f32 %v953, %v1288
        %v1614 = vadd.f32 %v954, %v1504
        %v1615 = vadd.f32 %v955, %v1292
        %v1616 = vadd.f32 %v956, %v1294
        %v1617 = vadd.f32 %v957, %v1509
        %v1618 = vadd.f32 %v958, %v1298
        %v1619 = vadd.f32 %v959, %v1300
        %v1620 = vadd.f32 %v960, %v1514
        %v1621 = vadd.f32 %v961, %v1304
        %v1622 = vadd.f32 %v962, %v1306
        %v1623 = vadd.f32 %v963, %v1519
        %v1624 = vadd.f32 %v964, %v1310
        %v1625 = vadd.f32 %v965, %v1312
        %v1626 = vadd.f32 %v966, %v1524
        %v1627 = vadd.f32 %v967, %v1316
        %v1628 = vadd.f32 %v968, %v1318
        %v1629 = vadd.f32 %v969, %v1529
        %v1630 = vadd.f32 %v970, %v1322
        %v1631 = vadd.f32 %v971, %v1324
        %v1632 = vadd.f32 %v972, %v1534
        %v1633 = vadd.f32 %v973, %v1328
        %v1634 = vadd.f32 %v974, %v1330
        %v1635 = vadd.f32 %v975, %v1539
        %v1636 = vadd.f32 %v976, %v1334
        %v1637 = vadd.f32 %v977, %v1336
        %v1638 = vadd.f32 %v978, %v1544
        %v1639 = vadd.f32 %v979, %v1340
        %v1640 = vadd.f32 %v980, %v1342
        %v1641 = vadd.f32 %v981, %v1549
        %v1642 = vadd.f32 %v982, %v1346
        %v1643 = vadd.f32 %v983, %v1348
        %v1644 = vadd.f32 %v984, %v1554
        %v1645 = vadd.f32 %v985, %v1352
        %v1646 = vadd.f32 %v986, %v1354
        %v1647 = vadd.f32 %v987, %v1559
        %v1648 = vadd.f32 %v988, %v1358
        %v1649 = vadd.f32 %v989, %v1360
        %v1650 = vadd.f32 %v990, %v1564
        %vm1651 = vcmask 1045504
        %v1652 = vrot.slane %v317, 2
        %v1653 = vrot.slane %v318, 2
        %v1654 = vsel %vm1651, %v1652, %v1653
        %v1655 = vrot.slane %v319, 2
        %v1656 = vsel %vm1651, %v1653, %v1655
        %v1657 = vrot.slane %v320, 2
        %v1658 = vsel %vm1651, %v1655, %v1657
        %v1659 = vrot.slane %v321, 2
        %v1660 = vsel %vm1651, %v1657, %v1659
        %v1661 = vrot.slane %v322, 2
        %v1662 = vsel %vm1651, %v1659, %v1661
        %v1663 = vrot.slane %v323, 2
        %v1664 = vsel %vm1651, %v1661, %v1663
        %v1665 = vrot.slane %v324, 2
        %v1666 = vsel %vm1651, %v1663, %v1665
        %v1667 = vrot.slane %v325, 2
        %v1668 = vsel %vm1651, %v1665, %v1667
        %v1669 = vrot.slane %v326, 2
        %v1670 = vsel %vm1651, %v1667, %v1669
        %v1671 = vrot.slane %v327, 2
        %v1672 = vsel %vm1651, %v1669, %v1671
        %v1673 = vrot.slane %v328, 2
        %v1674 = vsel %vm1651, %v1671, %v1673
        %v1675 = vrot.slane %v329, 2
        %v1676 = vsel %vm1651, %v1673, %v1675
        %v1677 = vrot.slane %v330, 2
        %v1678 = vsel %vm1651, %v1675, %v1677
        %v1679 = vrot.slane %v331, 2
        %v1680 = vsel %vm1651, %v1677, %v1679
        %v1681 = vrot.slane %v332, 2
        %v1682 = vsel %vm1651, %v1679, %v1681
        %v1683 = vrot.slane %v333, 2
        %v1684 = vsel %vm1651, %v1681, %v1683
        %v1685 = vrot.slane %v334, 2
        %v1686 = vsel %vm1651, %v1683, %v1685
        %v1687 = vrot.slane %v335, 2
        %v1688 = vsel %vm1651, %v1685, %v1687
        %v1689 = vrot.slane %v336, 2
        %v1690 = vsel %vm1651, %v1687, %v1689
        %v1691 = vrot.slane %v337, 2
        %v1692 = vsel %vm1651, %v1689, %v1691
        %v1693 = vrot.slane %v338, 2
        %v1694 = vsel %vm1651, %v1691, %v1693
        %v1695 = vrot.slane %v339, 2
        %v1696 = vsel %vm1651, %v1693, %v1695
        %v1697 = vrot.slane %v340, 2
        %v1698 = vsel %vm1651, %v1695, %v1697
        %v1699 = vrot.slane %v341, 2
        %v1700 = vsel %vm1651, %v1697, %v1699
        %v1701 = vrot.slane %v342, 2
        %v1702 = vsel %vm1651, %v1699, %v1701
        %v1703 = vrot.slane %v343, 2
        %v1704 = vsel %vm1651, %v1701, %v1703
        %v1705 = vrot.slane %v344, 2
        %v1706 = vsel %vm1651, %v1703, %v1705
        %v1709 = vsel %vm1651, %v1705, %v1652
        %s1710 = scalar_lea.vmem %s1, 192
        %v1711 = vld [vmem:[%s1710] sm:$0xff]
        %v1712 = vld [vmem:[%s1710 + $0x8] sm:$0xff]
        %v1713 = vld [vmem:[%s1710 + $0x10] sm:$0xff]
        %v1714 = vld [vmem:[%s1710 + $0x18] sm:$0xff]
        %v1715 = vld [vmem:[%s1710 + $0x20] sm:$0xff]
        %v1716 = vld [vmem:[%s1710 + $0x28] sm:$0xff]
        %v1717 = vld [vmem:[%s1710 + $0x30] sm:$0xff]
        %v1718 = vld [vmem:[%s1710 + $0x38] sm:$0xff]
        %v1719 = vld [vmem:[%s1710 + $0x40] sm:$0xff]
        %v1720 = vld [vmem:[%s1710 + $0x48] sm:$0xf]
        %v1721 = vld [vmem:[%s1710 + $0x50] sm:$0xf]
        %v1722 = vld [vmem:[%s1710 + $0x58] sm:$0xf]
        %v1723 = vsel %vm358, %v1654, 0
        %v1725 = vsel %vm358, %v1656, 0
        %v1727 = vsel %vm358, %v1658, 0
        %v1729 = vsel %vm358, %v1660, 0
        %v1731 = vsel %vm358, %v1662, 0
        %v1733 = vsel %vm358, %v1664, 0
        %v1735 = vsel %vm358, %v1666, 0
        %v1737 = vsel %vm358, %v1668, 0
        %v1739 = vsel %vm358, %v1670, 0
        %v1741 = vsel %vm358, %v1672, 0
        %v1743 = vsel %vm358, %v1674, 0
        %v1745 = vsel %vm358, %v1676, 0
        %v1747 = vsel %vm358, %v1678, 0
        %v1749 = vsel %vm358, %v1680, 0
        %v1751 = vsel %vm358, %v1682, 0
        %v1753 = vsel %vm358, %v1684, 0
        %v1755 = vsel %vm358, %v1686, 0
        %v1757 = vsel %vm358, %v1688, 0
        %v1759 = vsel %vm358, %v1690, 0
        %v1761 = vsel %vm358, %v1692, 0
        %v1763 = vsel %vm358, %v1694, 0
        %v1765 = vsel %vm358, %v1696, 0
        %v1767 = vsel %vm358, %v1698, 0
        %v1769 = vsel %vm358, %v1700, 0
        %v1771 = vsel %vm358, %v1702, 0
        %v1773 = vsel %vm358, %v1704, 0
        %v1775 = vsel %vm358, %v1706, 0
        %v1778 = vsel %vm358, %v1709, 0
        %v1781 = vsel %vm443, %v1720, 0
        %v1784 = vsel %vm443, %v1721, 0
        %v1787 = vsel %vm443, %v1722, 0
        %1789 = vmatprep.subr.mxu0 0.0
        %1790 = vmatpush1.msra.mxu0 0.0
        %1791 = vmatprep.subr.mxu0 0.0
        %1792 = vmatpush1.msra.mxu0 0.0
        %1793 = vmatprep.subr.mxu0 0.0
        %1794 = vmatpush1.msra.mxu0 0.0
        %1795 = vmatprep.subr.mxu0 0.0
        %1796 = vmatpush1.msra.mxu0 0.0
        %1797 = vmatprep.subr.mxu0 0.0
        %1798 = vmatpush1.msra.mxu0 0.0
        %1799 = vmatprep.subr.mxu0 0.0
        %1800 = vmatpush1.msra.mxu0 0.0
        %1801 = vmatprep.subr.mxu0 0.0
        %1802 = vmatpush1.msra.mxu0 0.0
        %1803 = vmatprep.subr.mxu0 0.0
        %1804 = vmatpush1.msra.mxu0 0.0
        %1805 = vmatprep.subr.mxu0 0.0
        %1806 = vmatpush1.msra.mxu0 0.0
        %1807 = vmatprep.subr.mxu0 0.0
        %1808 = vmatpush1.msra.mxu0 0.0
        %1809 = vmatprep.subr.mxu0 0.0
        %1810 = vmatpush1.msra.mxu0 0.0
        %1811 = vmatprep.subr.mxu0 0.0
        %1812 = vmatpush1.msra.mxu0 0.0
        %1813 = vmatprep.subr.mxu0 %v1784
        %1814 = vmatpush1.msra.mxu0 %v1781
        %1815 = vmatprep.subr.mxu0 %v1718
        %1816 = vmatpush1.msra.mxu0 %v1717
        %1817 = vmatprep.subr.mxu0 %v1715
        %1818 = vmatpush1.msra.mxu0 %v1714
        %1819 = vmatprep.subr.mxu0 %v1712
        %1820 = vmatpush1.msra.mxu0 %v1711
        %1821 = vmatprep.subr.mxu0 0.0
        %1822 = vmatpush2.msra.mxu0 0.0
        %1823 = vmatprep.subr.mxu0 0.0
        %1824 = vmatpush2.msra.mxu0 0.0
        %1825 = vmatprep.subr.mxu0 0.0
        %1826 = vmatpush2.msra.mxu0 0.0
        %1827 = vmatprep.subr.mxu0 0.0
        %1828 = vmatpush2.msra.mxu0 0.0
        %1829 = vmatprep.subr.mxu0 0.0
        %1830 = vmatpush2.msra.mxu0 0.0
        %1831 = vmatprep.subr.mxu0 0.0
        %1832 = vmatpush2.msra.mxu0 0.0
        %1833 = vmatprep.subr.mxu0 0.0
        %1834 = vmatpush2.msra.mxu0 0.0
        %1835 = vmatprep.subr.mxu0 0.0
        %1836 = vmatpush2.msra.mxu0 0.0
        %1837 = vmatprep.subr.mxu0 0.0
        %1838 = vmatpush2.msra.mxu0 0.0
        %1839 = vmatprep.subr.mxu0 0.0
        %1840 = vmatpush2.msra.mxu0 0.0
        %1841 = vmatprep.subr.mxu0 0.0
        %1842 = vmatpush2.msra.mxu0 0.0
        %1843 = vmatprep.subr.mxu0 0.0
        %1844 = vmatpush2.msra.mxu0 0.0
        %1845 = vmatprep.subr.mxu0 0.0
        %1846 = vmatpush2.msra.mxu0 0.0
        %1847 = vmatprep.subr.mxu0 0.0
        %1848 = vmatpush2.msra.mxu0 0.0
        %1849 = vmatprep.subr.mxu0 0.0
        %1850 = vmatpush2.msra.mxu0 0.0
        %1851 = vmatprep.subr.mxu0 0.0
        %1852 = vmatpush2.msra.mxu0 0.0
        %1853 = vmatprep.mubr.f32.mxu0 0.0
        %1854 = vmatmul.mubr.f32.gmra.mxu0 %v1723
        %v1855 = vpop.f32.mrf.mxu0
        %v1856 = vadd.f32 0.0, %v1855
        %v1857 = vpop.f32.mrf.mxu0
        %v1858 = vadd.f32 0.0, %v1857
        %1859 = vmatprep.mubr.f32.mxu0 0.0
        %1860 = vmatmul.mubr.f32.gmra.mxu0 %v1725
        %v1861 = vpop.f32.mrf.mxu0
        %v1862 = vadd.f32 0.0, %v1861
        %v1863 = vpop.f32.mrf.mxu0
        %v1864 = vadd.f32 0.0, %v1863
        %1865 = vmatprep.mubr.f32.mxu0 0.0
        %1866 = vmatmul.mubr.f32.gmra.mxu0 %v1727
        %v1867 = vpop.f32.mrf.mxu0
        %v1868 = vadd.f32 0.0, %v1867
        %v1869 = vpop.f32.mrf.mxu0
        %v1870 = vadd.f32 0.0, %v1869
        %1871 = vmatprep.mubr.f32.mxu0 0.0
        %1872 = vmatmul.mubr.f32.gmra.mxu0 %v1729
        %v1873 = vpop.f32.mrf.mxu0
        %v1874 = vadd.f32 0.0, %v1873
        %v1875 = vpop.f32.mrf.mxu0
        %v1876 = vadd.f32 0.0, %v1875
        %1877 = vmatprep.mubr.f32.mxu0 0.0
        %1878 = vmatmul.mubr.f32.gmra.mxu0 %v1731
        %v1879 = vpop.f32.mrf.mxu0
        %v1880 = vadd.f32 0.0, %v1879
        %v1881 = vpop.f32.mrf.mxu0
        %v1882 = vadd.f32 0.0, %v1881
        %1883 = vmatprep.mubr.f32.mxu0 0.0
        %1884 = vmatmul.mubr.f32.gmra.mxu0 %v1733
        %v1885 = vpop.f32.mrf.mxu0
        %v1886 = vadd.f32 0.0, %v1885
        %v1887 = vpop.f32.mrf.mxu0
        %v1888 = vadd.f32 0.0, %v1887
        %1889 = vmatprep.mubr.f32.mxu0 0.0
        %1890 = vmatmul.mubr.f32.gmra.mxu0 %v1735
        %v1891 = vpop.f32.mrf.mxu0
        %v1892 = vadd.f32 0.0, %v1891
        %v1893 = vpop.f32.mrf.mxu0
        %v1894 = vadd.f32 0.0, %v1893
        %1895 = vmatprep.mubr.f32.mxu0 0.0
        %1896 = vmatmul.mubr.f32.gmra.mxu0 %v1737
        %v1897 = vpop.f32.mrf.mxu0
        %v1898 = vadd.f32 0.0, %v1897
        %v1899 = vpop.f32.mrf.mxu0
        %v1900 = vadd.f32 0.0, %v1899
        %1901 = vmatprep.mubr.f32.mxu0 0.0
        %1902 = vmatmul.mubr.f32.gmra.mxu0 %v1739
        %v1903 = vpop.f32.mrf.mxu0
        %v1904 = vadd.f32 0.0, %v1903
        %v1905 = vpop.f32.mrf.mxu0
        %v1906 = vadd.f32 0.0, %v1905
        %1907 = vmatprep.mubr.f32.mxu0 0.0
        %1908 = vmatmul.mubr.f32.gmra.mxu0 %v1741
        %v1909 = vpop.f32.mrf.mxu0
        %v1910 = vadd.f32 0.0, %v1909
        %v1911 = vpop.f32.mrf.mxu0
        %v1912 = vadd.f32 0.0, %v1911
        %1913 = vmatprep.mubr.f32.mxu0 0.0
        %1914 = vmatmul.mubr.f32.gmra.mxu0 %v1743
        %v1915 = vpop.f32.mrf.mxu0
        %v1916 = vadd.f32 0.0, %v1915
        %v1917 = vpop.f32.mrf.mxu0
        %v1918 = vadd.f32 0.0, %v1917
        %1919 = vmatprep.mubr.f32.mxu0 0.0
        %1920 = vmatmul.mubr.f32.gmra.mxu0 %v1745
        %v1921 = vpop.f32.mrf.mxu0
        %v1922 = vadd.f32 0.0, %v1921
        %v1923 = vpop.f32.mrf.mxu0
        %v1924 = vadd.f32 0.0, %v1923
        %1925 = vmatprep.mubr.f32.mxu0 0.0
        %1926 = vmatmul.mubr.f32.gmra.mxu0 %v1747
        %v1927 = vpop.f32.mrf.mxu0
        %v1928 = vadd.f32 0.0, %v1927
        %v1929 = vpop.f32.mrf.mxu0
        %v1930 = vadd.f32 0.0, %v1929
        %1931 = vmatprep.mubr.f32.mxu0 0.0
        %1932 = vmatmul.mubr.f32.gmra.mxu0 %v1749
        %v1933 = vpop.f32.mrf.mxu0
        %v1934 = vadd.f32 0.0, %v1933
        %v1935 = vpop.f32.mrf.mxu0
        %v1936 = vadd.f32 0.0, %v1935
        %1937 = vmatprep.mubr.f32.mxu0 0.0
        %1938 = vmatmul.mubr.f32.gmra.mxu0 %v1751
        %v1939 = vpop.f32.mrf.mxu0
        %v1940 = vadd.f32 0.0, %v1939
        %v1941 = vpop.f32.mrf.mxu0
        %v1942 = vadd.f32 0.0, %v1941
        %1943 = vmatprep.mubr.f32.mxu0 0.0
        %1944 = vmatmul.mubr.f32.gmra.mxu0 %v1753
        %v1945 = vpop.f32.mrf.mxu0
        %v1946 = vadd.f32 0.0, %v1945
        %v1947 = vpop.f32.mrf.mxu0
        %v1948 = vadd.f32 0.0, %v1947
        %1949 = vmatprep.mubr.f32.mxu0 0.0
        %1950 = vmatmul.mubr.f32.gmra.mxu0 %v1755
        %v1951 = vpop.f32.mrf.mxu0
        %v1952 = vadd.f32 0.0, %v1951
        %v1953 = vpop.f32.mrf.mxu0
        %v1954 = vadd.f32 0.0, %v1953
        %1955 = vmatprep.mubr.f32.mxu0 0.0
        %1956 = vmatmul.mubr.f32.gmra.mxu0 %v1757
        %v1957 = vpop.f32.mrf.mxu0
        %v1958 = vadd.f32 0.0, %v1957
        %v1959 = vpop.f32.mrf.mxu0
        %v1960 = vadd.f32 0.0, %v1959
        %1961 = vmatprep.mubr.f32.mxu0 0.0
        %1962 = vmatmul.mubr.f32.gmra.mxu0 %v1759
        %v1963 = vpop.f32.mrf.mxu0
        %v1964 = vadd.f32 0.0, %v1963
        %v1965 = vpop.f32.mrf.mxu0
        %v1966 = vadd.f32 0.0, %v1965
        %1967 = vmatprep.mubr.f32.mxu0 0.0
        %1968 = vmatmul.mubr.f32.gmra.mxu0 %v1761
        %v1969 = vpop.f32.mrf.mxu0
        %v1970 = vadd.f32 0.0, %v1969
        %v1971 = vpop.f32.mrf.mxu0
        %v1972 = vadd.f32 0.0, %v1971
        %1973 = vmatprep.mubr.f32.mxu0 0.0
        %1974 = vmatmul.mubr.f32.gmra.mxu0 %v1763
        %v1975 = vpop.f32.mrf.mxu0
        %v1976 = vadd.f32 0.0, %v1975
        %v1977 = vpop.f32.mrf.mxu0
        %v1978 = vadd.f32 0.0, %v1977
        %1979 = vmatprep.mubr.f32.mxu0 0.0
        %1980 = vmatmul.mubr.f32.gmra.mxu0 %v1765
        %v1981 = vpop.f32.mrf.mxu0
        %v1982 = vadd.f32 0.0, %v1981
        %v1983 = vpop.f32.mrf.mxu0
        %v1984 = vadd.f32 0.0, %v1983
        %1985 = vmatprep.mubr.f32.mxu0 0.0
        %1986 = vmatmul.mubr.f32.gmra.mxu0 %v1767
        %v1987 = vpop.f32.mrf.mxu0
        %v1988 = vadd.f32 0.0, %v1987
        %v1989 = vpop.f32.mrf.mxu0
        %v1990 = vadd.f32 0.0, %v1989
        %1991 = vmatprep.mubr.f32.mxu0 0.0
        %1992 = vmatmul.mubr.f32.gmra.mxu0 %v1769
        %v1993 = vpop.f32.mrf.mxu0
        %v1994 = vadd.f32 0.0, %v1993
        %v1995 = vpop.f32.mrf.mxu0
        %v1996 = vadd.f32 0.0, %v1995
        %1997 = vmatprep.mubr.f32.mxu0 0.0
        %1998 = vmatmul.mubr.f32.gmra.mxu0 %v1771
        %v1999 = vpop.f32.mrf.mxu0
        %v2000 = vadd.f32 0.0, %v1999
        %v2001 = vpop.f32.mrf.mxu0
        %v2002 = vadd.f32 0.0, %v2001
        %2003 = vmatprep.mubr.f32.mxu0 0.0
        %2004 = vmatmul.mubr.f32.gmra.mxu0 %v1773
        %v2005 = vpop.f32.mrf.mxu0
        %v2006 = vadd.f32 0.0, %v2005
        %v2007 = vpop.f32.mrf.mxu0
        %v2008 = vadd.f32 0.0, %v2007
        %2009 = vmatprep.mubr.f32.mxu0 0.0
        %2010 = vmatmul.mubr.f32.gmra.mxu0 %v1775
        %v2011 = vpop.f32.mrf.mxu0
        %v2012 = vadd.f32 0.0, %v2011
        %v2013 = vpop.f32.mrf.mxu0
        %v2014 = vadd.f32 0.0, %v2013
        %2015 = vmatprep.mubr.f32.mxu0 0.0
        %2016 = vmatmul.mubr.f32.gmra.mxu0 %v1778
        %v2017 = vpop.f32.mrf.mxu0
        %v2018 = vadd.f32 0.0, %v2017
        %v2019 = vpop.f32.mrf.mxu0
        %v2020 = vadd.f32 0.0, %v2019
        %2021 = vdwg.mxu0
        %2022 = vmatprep.subr.mxu0 0.0
        %2023 = vmatpush1.msra.mxu0 0.0
        %2024 = vmatprep.subr.mxu0 0.0
        %2025 = vmatpush1.msra.mxu0 0.0
        %2026 = vmatprep.subr.mxu0 0.0
        %2027 = vmatpush1.msra.mxu0 0.0
        %2028 = vmatprep.subr.mxu0 0.0
        %2029 = vmatpush1.msra.mxu0 0.0
        %2030 = vmatprep.subr.mxu0 0.0
        %2031 = vmatpush1.msra.mxu0 0.0
        %2032 = vmatprep.subr.mxu0 0.0
        %2033 = vmatpush1.msra.mxu0 0.0
        %2034 = vmatprep.subr.mxu0 0.0
        %2035 = vmatpush1.msra.mxu0 0.0
        %2036 = vmatprep.subr.mxu0 0.0
        %2037 = vmatpush1.msra.mxu0 0.0
        %2038 = vmatprep.subr.mxu0 0.0
        %2039 = vmatpush1.msra.mxu0 0.0
        %2040 = vmatprep.subr.mxu0 0.0
        %2041 = vmatpush1.msra.mxu0 0.0
        %2042 = vmatprep.subr.mxu0 0.0
        %2043 = vmatpush1.msra.mxu0 0.0
        %2044 = vmatprep.subr.mxu0 0.0
        %2045 = vmatpush1.msra.mxu0 0.0
        %2046 = vmatprep.subr.mxu0 0.0
        %2047 = vmatpush1.msra.mxu0 %v1787
        %2048 = vmatprep.subr.mxu0 0.0
        %2049 = vmatpush1.msra.mxu0 %v1719
        %2050 = vmatprep.subr.mxu0 0.0
        %2051 = vmatpush1.msra.mxu0 %v1716
        %2052 = vmatprep.subr.mxu0 0.0
        %2053 = vmatpush1.msra.mxu0 %v1713
        %2054 = vmatprep.subr.mxu0 0.0
        %2055 = vmatpush2.msra.mxu0 0.0
        %2056 = vmatprep.subr.mxu0 0.0
        %2057 = vmatpush2.msra.mxu0 0.0
        %2058 = vmatprep.subr.mxu0 0.0
        %2059 = vmatpush2.msra.mxu0 0.0
        %2060 = vmatprep.subr.mxu0 0.0
        %2061 = vmatpush2.msra.mxu0 0.0
        %2062 = vmatprep.subr.mxu0 0.0
        %2063 = vmatpush2.msra.mxu0 0.0
        %2064 = vmatprep.subr.mxu0 0.0
        %2065 = vmatpush2.msra.mxu0 0.0
        %2066 = vmatprep.subr.mxu0 0.0
        %2067 = vmatpush2.msra.mxu0 0.0
        %2068 = vmatprep.subr.mxu0 0.0
        %2069 = vmatpush2.msra.mxu0 0.0
        %2070 = vmatprep.subr.mxu0 0.0
        %2071 = vmatpush2.msra.mxu0 0.0
        %2072 = vmatprep.subr.mxu0 0.0
        %2073 = vmatpush2.msra.mxu0 0.0
        %2074 = vmatprep.subr.mxu0 0.0
        %2075 = vmatpush2.msra.mxu0 0.0
        %2076 = vmatprep.subr.mxu0 0.0
        %2077 = vmatpush2.msra.mxu0 0.0
        %2078 = vmatprep.subr.mxu0 0.0
        %2079 = vmatpush2.msra.mxu0 0.0
        %2080 = vmatprep.subr.mxu0 0.0
        %2081 = vmatpush2.msra.mxu0 0.0
        %2082 = vmatprep.subr.mxu0 0.0
        %2083 = vmatpush2.msra.mxu0 0.0
        %2084 = vmatprep.subr.mxu0 0.0
        %2085 = vmatpush2.msra.mxu0 0.0
        %2086 = vmatprep.mubr.f32.mxu0 0.0
        %2087 = vmatmul.mubr.f32.gmra.mxu0 %v1723
        %v2088 = vpop.f32.mrf.mxu0
        %v2089 = vadd.f32 0.0, %v2088
        %v2090 = vpop.f32.mrf.mxu0
        %2091 = vmatprep.mubr.f32.mxu0 0.0
        %2092 = vmatmul.mubr.f32.gmra.mxu0 %v1725
        %v2093 = vpop.f32.mrf.mxu0
        %v2094 = vadd.f32 0.0, %v2093
        %v2095 = vpop.f32.mrf.mxu0
        %2096 = vmatprep.mubr.f32.mxu0 0.0
        %2097 = vmatmul.mubr.f32.gmra.mxu0 %v1727
        %v2098 = vpop.f32.mrf.mxu0
        %v2099 = vadd.f32 0.0, %v2098
        %v2100 = vpop.f32.mrf.mxu0
        %2101 = vmatprep.mubr.f32.mxu0 0.0
        %2102 = vmatmul.mubr.f32.gmra.mxu0 %v1729
        %v2103 = vpop.f32.mrf.mxu0
        %v2104 = vadd.f32 0.0, %v2103
        %v2105 = vpop.f32.mrf.mxu0
        %2106 = vmatprep.mubr.f32.mxu0 0.0
        %2107 = vmatmul.mubr.f32.gmra.mxu0 %v1731
        %v2108 = vpop.f32.mrf.mxu0
        %v2109 = vadd.f32 0.0, %v2108
        %v2110 = vpop.f32.mrf.mxu0
        %2111 = vmatprep.mubr.f32.mxu0 0.0
        %2112 = vmatmul.mubr.f32.gmra.mxu0 %v1733
        %v2113 = vpop.f32.mrf.mxu0
        %v2114 = vadd.f32 0.0, %v2113
        %v2115 = vpop.f32.mrf.mxu0
        %2116 = vmatprep.mubr.f32.mxu0 0.0
        %2117 = vmatmul.mubr.f32.gmra.mxu0 %v1735
        %v2118 = vpop.f32.mrf.mxu0
        %v2119 = vadd.f32 0.0, %v2118
        %v2120 = vpop.f32.mrf.mxu0
        %2121 = vmatprep.mubr.f32.mxu0 0.0
        %2122 = vmatmul.mubr.f32.gmra.mxu0 %v1737
        %v2123 = vpop.f32.mrf.mxu0
        %v2124 = vadd.f32 0.0, %v2123
        %v2125 = vpop.f32.mrf.mxu0
        %2126 = vmatprep.mubr.f32.mxu0 0.0
        %2127 = vmatmul.mubr.f32.gmra.mxu0 %v1739
        %v2128 = vpop.f32.mrf.mxu0
        %v2129 = vadd.f32 0.0, %v2128
        %v2130 = vpop.f32.mrf.mxu0
        %2131 = vmatprep.mubr.f32.mxu0 0.0
        %2132 = vmatmul.mubr.f32.gmra.mxu0 %v1741
        %v2133 = vpop.f32.mrf.mxu0
        %v2134 = vadd.f32 0.0, %v2133
        %v2135 = vpop.f32.mrf.mxu0
        %2136 = vmatprep.mubr.f32.mxu0 0.0
        %2137 = vmatmul.mubr.f32.gmra.mxu0 %v1743
        %v2138 = vpop.f32.mrf.mxu0
        %v2139 = vadd.f32 0.0, %v2138
        %v2140 = vpop.f32.mrf.mxu0
        %2141 = vmatprep.mubr.f32.mxu0 0.0
        %2142 = vmatmul.mubr.f32.gmra.mxu0 %v1745
        %v2143 = vpop.f32.mrf.mxu0
        %v2144 = vadd.f32 0.0, %v2143
        %v2145 = vpop.f32.mrf.mxu0
        %2146 = vmatprep.mubr.f32.mxu0 0.0
        %2147 = vmatmul.mubr.f32.gmra.mxu0 %v1747
        %v2148 = vpop.f32.mrf.mxu0
        %v2149 = vadd.f32 0.0, %v2148
        %v2150 = vpop.f32.mrf.mxu0
        %2151 = vmatprep.mubr.f32.mxu0 0.0
        %2152 = vmatmul.mubr.f32.gmra.mxu0 %v1749
        %v2153 = vpop.f32.mrf.mxu0
        %v2154 = vadd.f32 0.0, %v2153
        %v2155 = vpop.f32.mrf.mxu0
        %2156 = vmatprep.mubr.f32.mxu0 0.0
        %2157 = vmatmul.mubr.f32.gmra.mxu0 %v1751
        %v2158 = vpop.f32.mrf.mxu0
        %v2159 = vadd.f32 0.0, %v2158
        %v2160 = vpop.f32.mrf.mxu0
        %2161 = vmatprep.mubr.f32.mxu0 0.0
        %2162 = vmatmul.mubr.f32.gmra.mxu0 %v1753
        %v2163 = vpop.f32.mrf.mxu0
        %v2164 = vadd.f32 0.0, %v2163
        %v2165 = vpop.f32.mrf.mxu0
        %2166 = vmatprep.mubr.f32.mxu0 0.0
        %2167 = vmatmul.mubr.f32.gmra.mxu0 %v1755
        %v2168 = vpop.f32.mrf.mxu0
        %v2169 = vadd.f32 0.0, %v2168
        %v2170 = vpop.f32.mrf.mxu0
        %2171 = vmatprep.mubr.f32.mxu0 0.0
        %2172 = vmatmul.mubr.f32.gmra.mxu0 %v1757
        %v2173 = vpop.f32.mrf.mxu0
        %v2174 = vadd.f32 0.0, %v2173
        %v2175 = vpop.f32.mrf.mxu0
        %2176 = vmatprep.mubr.f32.mxu0 0.0
        %2177 = vmatmul.mubr.f32.gmra.mxu0 %v1759
        %v2178 = vpop.f32.mrf.mxu0
        %v2179 = vadd.f32 0.0, %v2178
        %v2180 = vpop.f32.mrf.mxu0
        %2181 = vmatprep.mubr.f32.mxu0 0.0
        %2182 = vmatmul.mubr.f32.gmra.mxu0 %v1761
        %v2183 = vpop.f32.mrf.mxu0
        %v2184 = vadd.f32 0.0, %v2183
        %v2185 = vpop.f32.mrf.mxu0
        %2186 = vmatprep.mubr.f32.mxu0 0.0
        %2187 = vmatmul.mubr.f32.gmra.mxu0 %v1763
        %v2188 = vpop.f32.mrf.mxu0
        %v2189 = vadd.f32 0.0, %v2188
        %v2190 = vpop.f32.mrf.mxu0
        %2191 = vmatprep.mubr.f32.mxu0 0.0
        %2192 = vmatmul.mubr.f32.gmra.mxu0 %v1765
        %v2193 = vpop.f32.mrf.mxu0
        %v2194 = vadd.f32 0.0, %v2193
        %v2195 = vpop.f32.mrf.mxu0
        %2196 = vmatprep.mubr.f32.mxu0 0.0
        %2197 = vmatmul.mubr.f32.gmra.mxu0 %v1767
        %v2198 = vpop.f32.mrf.mxu0
        %v2199 = vadd.f32 0.0, %v2198
        %v2200 = vpop.f32.mrf.mxu0
        %2201 = vmatprep.mubr.f32.mxu0 0.0
        %2202 = vmatmul.mubr.f32.gmra.mxu0 %v1769
        %v2203 = vpop.f32.mrf.mxu0
        %v2204 = vadd.f32 0.0, %v2203
        %v2205 = vpop.f32.mrf.mxu0
        %2206 = vmatprep.mubr.f32.mxu0 0.0
        %2207 = vmatmul.mubr.f32.gmra.mxu0 %v1771
        %v2208 = vpop.f32.mrf.mxu0
        %v2209 = vadd.f32 0.0, %v2208
        %v2210 = vpop.f32.mrf.mxu0
        %2211 = vmatprep.mubr.f32.mxu0 0.0
        %2212 = vmatmul.mubr.f32.gmra.mxu0 %v1773
        %v2213 = vpop.f32.mrf.mxu0
        %v2214 = vadd.f32 0.0, %v2213
        %v2215 = vpop.f32.mrf.mxu0
        %2216 = vmatprep.mubr.f32.mxu0 0.0
        %2217 = vmatmul.mubr.f32.gmra.mxu0 %v1775
        %v2218 = vpop.f32.mrf.mxu0
        %v2219 = vadd.f32 0.0, %v2218
        %v2220 = vpop.f32.mrf.mxu0
        %2221 = vmatprep.mubr.f32.mxu0 0.0
        %2222 = vmatmul.mubr.f32.gmra.mxu0 %v1778
        %v2223 = vpop.f32.mrf.mxu0
        %v2224 = vadd.f32 0.0, %v2223
        %v2225 = vpop.f32.mrf.mxu0
        %2226 = vdwg.mxu0
        %v2227 = vadd.f32 %v1567, %v1856
        %v2228 = vadd.f32 %v1568, %v1858
        %v2229 = vadd.f32 %v1569, %v2089
        %v2230 = vadd.f32 %v1570, %v1862
        %v2231 = vadd.f32 %v1571, %v1864
        %v2232 = vadd.f32 %v1572, %v2094
        %v2233 = vadd.f32 %v1573, %v1868
        %v2234 = vadd.f32 %v1574, %v1870
        %v2235 = vadd.f32 %v1575, %v2099
        %v2236 = vadd.f32 %v1576, %v1874
        %v2237 = vadd.f32 %v1577, %v1876
        %v2238 = vadd.f32 %v1578, %v2104
        %v2239 = vadd.f32 %v1579, %v1880
        %v2240 = vadd.f32 %v1580, %v1882
        %v2241 = vadd.f32 %v1581, %v2109
        %v2242 = vadd.f32 %v1582, %v1886
        %v2243 = vadd.f32 %v1583, %v1888
        %v2244 = vadd.f32 %v1584, %v2114
        %v2245 = vadd.f32 %v1585, %v1892
        %v2246 = vadd.f32 %v1586, %v1894
        %v2247 = vadd.f32 %v1587, %v2119
        %v2248 = vadd.f32 %v1588, %v1898
        %v2249 = vadd.f32 %v1589, %v1900
        %v2250 = vadd.f32 %v1590, %v2124
        %v2251 = vadd.f32 %v1591, %v1904
        %v2252 = vadd.f32 %v1592, %v1906
        %v2253 = vadd.f32 %v1593, %v2129
        %v2254 = vadd.f32 %v1594, %v1910
        %v2255 = vadd.f32 %v1595, %v1912
        %v2256 = vadd.f32 %v1596, %v2134
        %v2257 = vadd.f32 %v1597, %v1916
        %v2258 = vadd.f32 %v1598, %v1918
        %v2259 = vadd.f32 %v1599, %v2139
        %v2260 = vadd.f32 %v1600, %v1922
        %v2261 = vadd.f32 %v1601, %v1924
        %v2262 = vadd.f32 %v1602, %v2144
        %v2263 = vadd.f32 %v1603, %v1928
        %v2264 = vadd.f32 %v1604, %v1930
        %v2265 = vadd.f32 %v1605, %v2149
        %v2266 = vadd.f32 %v1606, %v1934
        %v2267 = vadd.f32 %v1607, %v1936
        %v2268 = vadd.f32 %v1608, %v2154
        %v2269 = vadd.f32 %v1609, %v1940
        %v2270 = vadd.f32 %v1610, %v1942
        %v2271 = vadd.f32 %v1611, %v2159
        %v2272 = vadd.f32 %v1612, %v1946
        %v2273 = vadd.f32 %v1613, %v1948
        %v2274 = vadd.f32 %v1614, %v2164
        %v2275 = vadd.f32 %v1615, %v1952
        %v2276 = vadd.f32 %v1616, %v1954
        %v2277 = vadd.f32 %v1617, %v2169
        %v2278 = vadd.f32 %v1618, %v1958
        %v2279 = vadd.f32 %v1619, %v1960
        %v2280 = vadd.f32 %v1620, %v2174
        %v2281 = vadd.f32 %v1621, %v1964
        %v2282 = vadd.f32 %v1622, %v1966
        %v2283 = vadd.f32 %v1623, %v2179
        %v2284 = vadd.f32 %v1624, %v1970
        %v2285 = vadd.f32 %v1625, %v1972
        %v2286 = vadd.f32 %v1626, %v2184
        %v2287 = vadd.f32 %v1627, %v1976
        %v2288 = vadd.f32 %v1628, %v1978
        %v2289 = vadd.f32 %v1629, %v2189
        %v2290 = vadd.f32 %v1630, %v1982
        %v2291 = vadd.f32 %v1631, %v1984
        %v2292 = vadd.f32 %v1632, %v2194
        %v2293 = vadd.f32 %v1633, %v1988
        %v2294 = vadd.f32 %v1634, %v1990
        %v2295 = vadd.f32 %v1635, %v2199
        %v2296 = vadd.f32 %v1636, %v1994
        %v2297 = vadd.f32 %v1637, %v1996
        %v2298 = vadd.f32 %v1638, %v2204
        %v2299 = vadd.f32 %v1639, %v2000
        %v2300 = vadd.f32 %v1640, %v2002
        %v2301 = vadd.f32 %v1641, %v2209
        %v2302 = vadd.f32 %v1642, %v2006
        %v2303 = vadd.f32 %v1643, %v2008
        %v2304 = vadd.f32 %v1644, %v2214
        %v2305 = vadd.f32 %v1645, %v2012
        %v2306 = vadd.f32 %v1646, %v2014
        %v2307 = vadd.f32 %v1647, %v2219
        %v2308 = vadd.f32 %v1648, %v2018
        %v2309 = vadd.f32 %v1649, %v2020
        %v2310 = vadd.f32 %v1650, %v2224
        %vm2311 = vcmask 1044480
        %v2312 = vrot.slane %v317, 3
        %v2313 = vrot.slane %v318, 3
        %v2314 = vsel %vm2311, %v2312, %v2313
        %v2315 = vrot.slane %v319, 3
        %v2316 = vsel %vm2311, %v2313, %v2315
        %v2317 = vrot.slane %v320, 3
        %v2318 = vsel %vm2311, %v2315, %v2317
        %v2319 = vrot.slane %v321, 3
        %v2320 = vsel %vm2311, %v2317, %v2319
        %v2321 = vrot.slane %v322, 3
        %v2322 = vsel %vm2311, %v2319, %v2321
        %v2323 = vrot.slane %v323, 3
        %v2324 = vsel %vm2311, %v2321, %v2323
        %v2325 = vrot.slane %v324, 3
        %v2326 = vsel %vm2311, %v2323, %v2325
        %v2327 = vrot.slane %v325, 3
        %v2328 = vsel %vm2311, %v2325, %v2327
        %v2329 = vrot.slane %v326, 3
        %v2330 = vsel %vm2311, %v2327, %v2329
        %v2331 = vrot.slane %v327, 3
        %v2332 = vsel %vm2311, %v2329, %v2331
        %v2333 = vrot.slane %v328, 3
        %v2334 = vsel %vm2311, %v2331, %v2333
        %v2335 = vrot.slane %v329, 3
        %v2336 = vsel %vm2311, %v2333, %v2335
        %v2337 = vrot.slane %v330, 3
        %v2338 = vsel %vm2311, %v2335, %v2337
        %v2339 = vrot.slane %v331, 3
        %v2340 = vsel %vm2311, %v2337, %v2339
        %v2341 = vrot.slane %v332, 3
        %v2342 = vsel %vm2311, %v2339, %v2341
        %v2343 = vrot.slane %v333, 3
        %v2344 = vsel %vm2311, %v2341, %v2343
        %v2345 = vrot.slane %v334, 3
        %v2346 = vsel %vm2311, %v2343, %v2345
        %v2347 = vrot.slane %v335, 3
        %v2348 = vsel %vm2311, %v2345, %v2347
        %v2349 = vrot.slane %v336, 3
        %v2350 = vsel %vm2311, %v2347, %v2349
        %v2351 = vrot.slane %v337, 3
        %v2352 = vsel %vm2311, %v2349, %v2351
        %v2353 = vrot.slane %v338, 3
        %v2354 = vsel %vm2311, %v2351, %v2353
        %v2355 = vrot.slane %v339, 3
        %v2356 = vsel %vm2311, %v2353, %v2355
        %v2357 = vrot.slane %v340, 3
        %v2358 = vsel %vm2311, %v2355, %v2357
        %v2359 = vrot.slane %v341, 3
        %v2360 = vsel %vm2311, %v2357, %v2359
        %v2361 = vrot.slane %v342, 3
        %v2362 = vsel %vm2311, %v2359, %v2361
        %v2363 = vrot.slane %v343, 3
        %v2364 = vsel %vm2311, %v2361, %v2363
        %v2365 = vrot.slane %v344, 3
        %v2366 = vsel %vm2311, %v2363, %v2365
        %v2369 = vsel %vm2311, %v2365, %v2312
        %s2370 = scalar_lea.vmem %s1, 288
        %v2371 = vld [vmem:[%s2370] sm:$0xff]
        %v2372 = vld [vmem:[%s2370 + $0x8] sm:$0xff]
        %v2373 = vld [vmem:[%s2370 + $0x10] sm:$0xff]
        %v2374 = vld [vmem:[%s2370 + $0x18] sm:$0xff]
        %v2375 = vld [vmem:[%s2370 + $0x20] sm:$0xff]
        %v2376 = vld [vmem:[%s2370 + $0x28] sm:$0xff]
        %v2377 = vld [vmem:[%s2370 + $0x30] sm:$0xff]
        %v2378 = vld [vmem:[%s2370 + $0x38] sm:$0xff]
        %v2379 = vld [vmem:[%s2370 + $0x40] sm:$0xff]
        %v2380 = vld [vmem:[%s2370 + $0x48] sm:$0xf]
        %v2381 = vld [vmem:[%s2370 + $0x50] sm:$0xf]
        %v2382 = vld [vmem:[%s2370 + $0x58] sm:$0xf]
        %v2383 = vsel %vm358, %v2314, 0
        %v2385 = vsel %vm358, %v2316, 0
        %v2387 = vsel %vm358, %v2318, 0
        %v2389 = vsel %vm358, %v2320, 0
        %v2391 = vsel %vm358, %v2322, 0
        %v2393 = vsel %vm358, %v2324, 0
        %v2395 = vsel %vm358, %v2326, 0
        %v2397 = vsel %vm358, %v2328, 0
        %v2399 = vsel %vm358, %v2330, 0
        %v2401 = vsel %vm358, %v2332, 0
        %v2403 = vsel %vm358, %v2334, 0
        %v2405 = vsel %vm358, %v2336, 0
        %v2407 = vsel %vm358, %v2338, 0
        %v2409 = vsel %vm358, %v2340, 0
        %v2411 = vsel %vm358, %v2342, 0
        %v2413 = vsel %vm358, %v2344, 0
        %v2415 = vsel %vm358, %v2346, 0
        %v2417 = vsel %vm358, %v2348, 0
        %v2419 = vsel %vm358, %v2350, 0
        %v2421 = vsel %vm358, %v2352, 0
        %v2423 = vsel %vm358, %v2354, 0
        %v2425 = vsel %vm358, %v2356, 0
        %v2427 = vsel %vm358, %v2358, 0
        %v2429 = vsel %vm358, %v2360, 0
        %v2431 = vsel %vm358, %v2362, 0
        %v2433 = vsel %vm358, %v2364, 0
        %v2435 = vsel %vm358, %v2366, 0
        %v2438 = vsel %vm358, %v2369, 0
        %v2441 = vsel %vm443, %v2380, 0
        %v2444 = vsel %vm443, %v2381, 0
        %v2447 = vsel %vm443, %v2382, 0
        %2449 = vmatprep.subr.mxu0 0.0
        %2450 = vmatpush1.msra.mxu0 0.0
        %2451 = vmatprep.subr.mxu0 0.0
        %2452 = vmatpush1.msra.mxu0 0.0
        %2453 = vmatprep.subr.mxu0 0.0
        %2454 = vmatpush1.msra.mxu0 0.0
        %2455 = vmatprep.subr.mxu0 0.0
        %2456 = vmatpush1.msra.mxu0 0.0
        %2457 = vmatprep.subr.mxu0 0.0
        %2458 = vmatpush1.msra.mxu0 0.0
        %2459 = vmatprep.subr.mxu0 0.0
        %2460 = vmatpush1.msra.mxu0 0.0
        %2461 = vmatprep.subr.mxu0 0.0
        %2462 = vmatpush1.msra.mxu0 0.0
        %2463 = vmatprep.subr.mxu0 0.0
        %2464 = vmatpush1.msra.mxu0 0.0
        %2465 = vmatprep.subr.mxu0 0.0
        %2466 = vmatpush1.msra.mxu0 0.0
        %2467 = vmatprep.subr.mxu0 0.0
        %2468 = vmatpush1.msra.mxu0 0.0
        %2469 = vmatprep.subr.mxu0 0.0
        %2470 = vmatpush1.msra.mxu0 0.0
        %2471 = vmatprep.subr.mxu0 0.0
        %2472 = vmatpush1.msra.mxu0 0.0
        %2473 = vmatprep.subr.mxu0 %v2444
        %2474 = vmatpush1.msra.mxu0 %v2441
        %2475 = vmatprep.subr.mxu0 %v2378
        %2476 = vmatpush1.msra.mxu0 %v2377
        %2477 = vmatprep.subr.mxu0 %v2375
        %2478 = vmatpush1.msra.mxu0 %v2374
        %2479 = vmatprep.subr.mxu0 %v2372
        %2480 = vmatpush1.msra.mxu0 %v2371
        %2481 = vmatprep.subr.mxu0 0.0
        %2482 = vmatpush2.msra.mxu0 0.0
        %2483 = vmatprep.subr.mxu0 0.0
        %2484 = vmatpush2.msra.mxu0 0.0
        %2485 = vmatprep.subr.mxu0 0.0
        %2486 = vmatpush2.msra.mxu0 0.0
        %2487 = vmatprep.subr.mxu0 0.0
        %2488 = vmatpush2.msra.mxu0 0.0
        %2489 = vmatprep.subr.mxu0 0.0
        %2490 = vmatpush2.msra.mxu0 0.0
        %2491 = vmatprep.subr.mxu0 0.0
        %2492 = vmatpush2.msra.mxu0 0.0
        %2493 = vmatprep.subr.mxu0 0.0
        %2494 = vmatpush2.msra.mxu0 0.0
        %2495 = vmatprep.subr.mxu0 0.0
        %2496 = vmatpush2.msra.mxu0 0.0
        %2497 = vmatprep.subr.mxu0 0.0
        %2498 = vmatpush2.msra.mxu0 0.0
        %2499 = vmatprep.subr.mxu0 0.0
        %2500 = vmatpush2.msra.mxu0 0.0
        %2501 = vmatprep.subr.mxu0 0.0
        %2502 = vmatpush2.msra.mxu0 0.0
        %2503 = vmatprep.subr.mxu0 0.0
        %2504 = vmatpush2.msra.mxu0 0.0
        %2505 = vmatprep.subr.mxu0 0.0
        %2506 = vmatpush2.msra.mxu0 0.0
        %2507 = vmatprep.subr.mxu0 0.0
        %2508 = vmatpush2.msra.mxu0 0.0
        %2509 = vmatprep.subr.mxu0 0.0
        %2510 = vmatpush2.msra.mxu0 0.0
        %2511 = vmatprep.subr.mxu0 0.0
        %2512 = vmatpush2.msra.mxu0 0.0
        %2513 = vmatprep.mubr.f32.mxu0 0.0
        %2514 = vmatmul.mubr.f32.gmra.mxu0 %v2383
        %v2515 = vpop.f32.mrf.mxu0
        %v2516 = vadd.f32 0.0, %v2515
        %v2517 = vpop.f32.mrf.mxu0
        %v2518 = vadd.f32 0.0, %v2517
        %2519 = vmatprep.mubr.f32.mxu0 0.0
        %2520 = vmatmul.mubr.f32.gmra.mxu0 %v2385
        %v2521 = vpop.f32.mrf.mxu0
        %v2522 = vadd.f32 0.0, %v2521
        %v2523 = vpop.f32.mrf.mxu0
        %v2524 = vadd.f32 0.0, %v2523
        %2525 = vmatprep.mubr.f32.mxu0 0.0
        %2526 = vmatmul.mubr.f32.gmra.mxu0 %v2387
        %v2527 = vpop.f32.mrf.mxu0
        %v2528 = vadd.f32 0.0, %v2527
        %v2529 = vpop.f32.mrf.mxu0
        %v2530 = vadd.f32 0.0, %v2529
        %2531 = vmatprep.mubr.f32.mxu0 0.0
        %2532 = vmatmul.mubr.f32.gmra.mxu0 %v2389
        %v2533 = vpop.f32.mrf.mxu0
        %v2534 = vadd.f32 0.0, %v2533
        %v2535 = vpop.f32.mrf.mxu0
        %v2536 = vadd.f32 0.0, %v2535
        %2537 = vmatprep.mubr.f32.mxu0 0.0
        %2538 = vmatmul.mubr.f32.gmra.mxu0 %v2391
        %v2539 = vpop.f32.mrf.mxu0
        %v2540 = vadd.f32 0.0, %v2539
        %v2541 = vpop.f32.mrf.mxu0
        %v2542 = vadd.f32 0.0, %v2541
        %2543 = vmatprep.mubr.f32.mxu0 0.0
        %2544 = vmatmul.mubr.f32.gmra.mxu0 %v2393
        %v2545 = vpop.f32.mrf.mxu0
        %v2546 = vadd.f32 0.0, %v2545
        %v2547 = vpop.f32.mrf.mxu0
        %v2548 = vadd.f32 0.0, %v2547
        %2549 = vmatprep.mubr.f32.mxu0 0.0
        %2550 = vmatmul.mubr.f32.gmra.mxu0 %v2395
        %v2551 = vpop.f32.mrf.mxu0
        %v2552 = vadd.f32 0.0, %v2551
        %v2553 = vpop.f32.mrf.mxu0
        %v2554 = vadd.f32 0.0, %v2553
        %2555 = vmatprep.mubr.f32.mxu0 0.0
        %2556 = vmatmul.mubr.f32.gmra.mxu0 %v2397
        %v2557 = vpop.f32.mrf.mxu0
        %v2558 = vadd.f32 0.0, %v2557
        %v2559 = vpop.f32.mrf.mxu0
        %v2560 = vadd.f32 0.0, %v2559
        %2561 = vmatprep.mubr.f32.mxu0 0.0
        %2562 = vmatmul.mubr.f32.gmra.mxu0 %v2399
        %v2563 = vpop.f32.mrf.mxu0
        %v2564 = vadd.f32 0.0, %v2563
        %v2565 = vpop.f32.mrf.mxu0
        %v2566 = vadd.f32 0.0, %v2565
        %2567 = vmatprep.mubr.f32.mxu0 0.0
        %2568 = vmatmul.mubr.f32.gmra.mxu0 %v2401
        %v2569 = vpop.f32.mrf.mxu0
        %v2570 = vadd.f32 0.0, %v2569
        %v2571 = vpop.f32.mrf.mxu0
        %v2572 = vadd.f32 0.0, %v2571
        %2573 = vmatprep.mubr.f32.mxu0 0.0
        %2574 = vmatmul.mubr.f32.gmra.mxu0 %v2403
        %v2575 = vpop.f32.mrf.mxu0
        %v2576 = vadd.f32 0.0, %v2575
        %v2577 = vpop.f32.mrf.mxu0
        %v2578 = vadd.f32 0.0, %v2577
        %2579 = vmatprep.mubr.f32.mxu0 0.0
        %2580 = vmatmul.mubr.f32.gmra.mxu0 %v2405
        %v2581 = vpop.f32.mrf.mxu0
        %v2582 = vadd.f32 0.0, %v2581
        %v2583 = vpop.f32.mrf.mxu0
        %v2584 = vadd.f32 0.0, %v2583
        %2585 = vmatprep.mubr.f32.mxu0 0.0
        %2586 = vmatmul.mubr.f32.gmra.mxu0 %v2407
        %v2587 = vpop.f32.mrf.mxu0
        %v2588 = vadd.f32 0.0, %v2587
        %v2589 = vpop.f32.mrf.mxu0
        %v2590 = vadd.f32 0.0, %v2589
        %2591 = vmatprep.mubr.f32.mxu0 0.0
        %2592 = vmatmul.mubr.f32.gmra.mxu0 %v2409
        %v2593 = vpop.f32.mrf.mxu0
        %v2594 = vadd.f32 0.0, %v2593
        %v2595 = vpop.f32.mrf.mxu0
        %v2596 = vadd.f32 0.0, %v2595
        %2597 = vmatprep.mubr.f32.mxu0 0.0
        %2598 = vmatmul.mubr.f32.gmra.mxu0 %v2411
        %v2599 = vpop.f32.mrf.mxu0
        %v2600 = vadd.f32 0.0, %v2599
        %v2601 = vpop.f32.mrf.mxu0
        %v2602 = vadd.f32 0.0, %v2601
        %2603 = vmatprep.mubr.f32.mxu0 0.0
        %2604 = vmatmul.mubr.f32.gmra.mxu0 %v2413
        %v2605 = vpop.f32.mrf.mxu0
        %v2606 = vadd.f32 0.0, %v2605
        %v2607 = vpop.f32.mrf.mxu0
        %v2608 = vadd.f32 0.0, %v2607
        %2609 = vmatprep.mubr.f32.mxu0 0.0
        %2610 = vmatmul.mubr.f32.gmra.mxu0 %v2415
        %v2611 = vpop.f32.mrf.mxu0
        %v2612 = vadd.f32 0.0, %v2611
        %v2613 = vpop.f32.mrf.mxu0
        %v2614 = vadd.f32 0.0, %v2613
        %2615 = vmatprep.mubr.f32.mxu0 0.0
        %2616 = vmatmul.mubr.f32.gmra.mxu0 %v2417
        %v2617 = vpop.f32.mrf.mxu0
        %v2618 = vadd.f32 0.0, %v2617
        %v2619 = vpop.f32.mrf.mxu0
        %v2620 = vadd.f32 0.0, %v2619
        %2621 = vmatprep.mubr.f32.mxu0 0.0
        %2622 = vmatmul.mubr.f32.gmra.mxu0 %v2419
        %v2623 = vpop.f32.mrf.mxu0
        %v2624 = vadd.f32 0.0, %v2623
        %v2625 = vpop.f32.mrf.mxu0
        %v2626 = vadd.f32 0.0, %v2625
        %2627 = vmatprep.mubr.f32.mxu0 0.0
        %2628 = vmatmul.mubr.f32.gmra.mxu0 %v2421
        %v2629 = vpop.f32.mrf.mxu0
        %v2630 = vadd.f32 0.0, %v2629
        %v2631 = vpop.f32.mrf.mxu0
        %v2632 = vadd.f32 0.0, %v2631
        %2633 = vmatprep.mubr.f32.mxu0 0.0
        %2634 = vmatmul.mubr.f32.gmra.mxu0 %v2423
        %v2635 = vpop.f32.mrf.mxu0
        %v2636 = vadd.f32 0.0, %v2635
        %v2637 = vpop.f32.mrf.mxu0
        %v2638 = vadd.f32 0.0, %v2637
        %2639 = vmatprep.mubr.f32.mxu0 0.0
        %2640 = vmatmul.mubr.f32.gmra.mxu0 %v2425
        %v2641 = vpop.f32.mrf.mxu0
        %v2642 = vadd.f32 0.0, %v2641
        %v2643 = vpop.f32.mrf.mxu0
        %v2644 = vadd.f32 0.0, %v2643
        %2645 = vmatprep.mubr.f32.mxu0 0.0
        %2646 = vmatmul.mubr.f32.gmra.mxu0 %v2427
        %v2647 = vpop.f32.mrf.mxu0
        %v2648 = vadd.f32 0.0, %v2647
        %v2649 = vpop.f32.mrf.mxu0
        %v2650 = vadd.f32 0.0, %v2649
        %2651 = vmatprep.mubr.f32.mxu0 0.0
        %2652 = vmatmul.mubr.f32.gmra.mxu0 %v2429
        %v2653 = vpop.f32.mrf.mxu0
        %v2654 = vadd.f32 0.0, %v2653
        %v2655 = vpop.f32.mrf.mxu0
        %v2656 = vadd.f32 0.0, %v2655
        %2657 = vmatprep.mubr.f32.mxu0 0.0
        %2658 = vmatmul.mubr.f32.gmra.mxu0 %v2431
        %v2659 = vpop.f32.mrf.mxu0
        %v2660 = vadd.f32 0.0, %v2659
        %v2661 = vpop.f32.mrf.mxu0
        %v2662 = vadd.f32 0.0, %v2661
        %2663 = vmatprep.mubr.f32.mxu0 0.0
        %2664 = vmatmul.mubr.f32.gmra.mxu0 %v2433
        %v2665 = vpop.f32.mrf.mxu0
        %v2666 = vadd.f32 0.0, %v2665
        %v2667 = vpop.f32.mrf.mxu0
        %v2668 = vadd.f32 0.0, %v2667
        %2669 = vmatprep.mubr.f32.mxu0 0.0
        %2670 = vmatmul.mubr.f32.gmra.mxu0 %v2435
        %v2671 = vpop.f32.mrf.mxu0
        %v2672 = vadd.f32 0.0, %v2671
        %v2673 = vpop.f32.mrf.mxu0
        %v2674 = vadd.f32 0.0, %v2673
        %2675 = vmatprep.mubr.f32.mxu0 0.0
        %2676 = vmatmul.mubr.f32.gmra.mxu0 %v2438
        %v2677 = vpop.f32.mrf.mxu0
        %v2678 = vadd.f32 0.0, %v2677
        %v2679 = vpop.f32.mrf.mxu0
        %v2680 = vadd.f32 0.0, %v2679
        %2681 = vdwg.mxu0
        %2682 = vmatprep.subr.mxu0 0.0
        %2683 = vmatpush1.msra.mxu0 0.0
        %2684 = vmatprep.subr.mxu0 0.0
        %2685 = vmatpush1.msra.mxu0 0.0
        %2686 = vmatprep.subr.mxu0 0.0
        %2687 = vmatpush1.msra.mxu0 0.0
        %2688 = vmatprep.subr.mxu0 0.0
        %2689 = vmatpush1.msra.mxu0 0.0
        %2690 = vmatprep.subr.mxu0 0.0
        %2691 = vmatpush1.msra.mxu0 0.0
        %2692 = vmatprep.subr.mxu0 0.0
        %2693 = vmatpush1.msra.mxu0 0.0
        %2694 = vmatprep.subr.mxu0 0.0
        %2695 = vmatpush1.msra.mxu0 0.0
        %2696 = vmatprep.subr.mxu0 0.0
        %2697 = vmatpush1.msra.mxu0 0.0
        %2698 = vmatprep.subr.mxu0 0.0
        %2699 = vmatpush1.msra.mxu0 0.0
        %2700 = vmatprep.subr.mxu0 0.0
        %2701 = vmatpush1.msra.mxu0 0.0
        %2702 = vmatprep.subr.mxu0 0.0
        %2703 = vmatpush1.msra.mxu0 0.0
        %2704 = vmatprep.subr.mxu0 0.0
        %2705 = vmatpush1.msra.mxu0 0.0
        %2706 = vmatprep.subr.mxu0 0.0
        %2707 = vmatpush1.msra.mxu0 %v2447
        %2708 = vmatprep.subr.mxu0 0.0
        %2709 = vmatpush1.msra.mxu0 %v2379
        %2710 = vmatprep.subr.mxu0 0.0
        %2711 = vmatpush1.msra.mxu0 %v2376
        %2712 = vmatprep.subr.mxu0 0.0
        %2713 = vmatpush1.msra.mxu0 %v2373
        %2714 = vmatprep.subr.mxu0 0.0
        %2715 = vmatpush2.msra.mxu0 0.0
        %2716 = vmatprep.subr.mxu0 0.0
        %2717 = vmatpush2.msra.mxu0 0.0
        %2718 = vmatprep.subr.mxu0 0.0
        %2719 = vmatpush2.msra.mxu0 0.0
        %2720 = vmatprep.subr.mxu0 0.0
        %2721 = vmatpush2.msra.mxu0 0.0
        %2722 = vmatprep.subr.mxu0 0.0
        %2723 = vmatpush2.msra.mxu0 0.0
        %2724 = vmatprep.subr.mxu0 0.0
        %2725 = vmatpush2.msra.mxu0 0.0
        %2726 = vmatprep.subr.mxu0 0.0
        %2727 = vmatpush2.msra.mxu0 0.0
        %2728 = vmatprep.subr.mxu0 0.0
        %2729 = vmatpush2.msra.mxu0 0.0
        %2730 = vmatprep.subr.mxu0 0.0
        %2731 = vmatpush2.msra.mxu0 0.0
        %2732 = vmatprep.subr.mxu0 0.0
        %2733 = vmatpush2.msra.mxu0 0.0
        %2734 = vmatprep.subr.mxu0 0.0
        %2735 = vmatpush2.msra.mxu0 0.0
        %2736 = vmatprep.subr.mxu0 0.0
        %2737 = vmatpush2.msra.mxu0 0.0
        %2738 = vmatprep.subr.mxu0 0.0
        %2739 = vmatpush2.msra.mxu0 0.0
        %2740 = vmatprep.subr.mxu0 0.0
        %2741 = vmatpush2.msra.mxu0 0.0
        %2742 = vmatprep.subr.mxu0 0.0
        %2743 = vmatpush2.msra.mxu0 0.0
        %2744 = vmatprep.subr.mxu0 0.0
        %2745 = vmatpush2.msra.mxu0 0.0
        %2746 = vmatprep.mubr.f32.mxu0 0.0
        %2747 = vmatmul.mubr.f32.gmra.mxu0 %v2383
        %v2748 = vpop.f32.mrf.mxu0
        %v2749 = vadd.f32 0.0, %v2748
        %v2750 = vpop.f32.mrf.mxu0
        %2751 = vmatprep.mubr.f32.mxu0 0.0
        %2752 = vmatmul.mubr.f32.gmra.mxu0 %v2385
        %v2753 = vpop.f32.mrf.mxu0
        %v2754 = vadd.f32 0.0, %v2753
        %v2755 = vpop.f32.mrf.mxu0
        %2756 = vmatprep.mubr.f32.mxu0 0.0
        %2757 = vmatmul.mubr.f32.gmra.mxu0 %v2387
        %v2758 = vpop.f32.mrf.mxu0
        %v2759 = vadd.f32 0.0, %v2758
        %v2760 = vpop.f32.mrf.mxu0
        %2761 = vmatprep.mubr.f32.mxu0 0.0
        %2762 = vmatmul.mubr.f32.gmra.mxu0 %v2389
        %v2763 = vpop.f32.mrf.mxu0
        %v2764 = vadd.f32 0.0, %v2763
        %v2765 = vpop.f32.mrf.mxu0
        %2766 = vmatprep.mubr.f32.mxu0 0.0
        %2767 = vmatmul.mubr.f32.gmra.mxu0 %v2391
        %v2768 = vpop.f32.mrf.mxu0
        %v2769 = vadd.f32 0.0, %v2768
        %v2770 = vpop.f32.mrf.mxu0
        %2771 = vmatprep.mubr.f32.mxu0 0.0
        %2772 = vmatmul.mubr.f32.gmra.mxu0 %v2393
        %v2773 = vpop.f32.mrf.mxu0
        %v2774 = vadd.f32 0.0, %v2773
        %v2775 = vpop.f32.mrf.mxu0
        %2776 = vmatprep.mubr.f32.mxu0 0.0
        %2777 = vmatmul.mubr.f32.gmra.mxu0 %v2395
        %v2778 = vpop.f32.mrf.mxu0
        %v2779 = vadd.f32 0.0, %v2778
        %v2780 = vpop.f32.mrf.mxu0
        %2781 = vmatprep.mubr.f32.mxu0 0.0
        %2782 = vmatmul.mubr.f32.gmra.mxu0 %v2397
        %v2783 = vpop.f32.mrf.mxu0
        %v2784 = vadd.f32 0.0, %v2783
        %v2785 = vpop.f32.mrf.mxu0
        %2786 = vmatprep.mubr.f32.mxu0 0.0
        %2787 = vmatmul.mubr.f32.gmra.mxu0 %v2399
        %v2788 = vpop.f32.mrf.mxu0
        %v2789 = vadd.f32 0.0, %v2788
        %v2790 = vpop.f32.mrf.mxu0
        %2791 = vmatprep.mubr.f32.mxu0 0.0
        %2792 = vmatmul.mubr.f32.gmra.mxu0 %v2401
        %v2793 = vpop.f32.mrf.mxu0
        %v2794 = vadd.f32 0.0, %v2793
        %v2795 = vpop.f32.mrf.mxu0
        %2796 = vmatprep.mubr.f32.mxu0 0.0
        %2797 = vmatmul.mubr.f32.gmra.mxu0 %v2403
        %v2798 = vpop.f32.mrf.mxu0
        %v2799 = vadd.f32 0.0, %v2798
        %v2800 = vpop.f32.mrf.mxu0
        %2801 = vmatprep.mubr.f32.mxu0 0.0
        %2802 = vmatmul.mubr.f32.gmra.mxu0 %v2405
        %v2803 = vpop.f32.mrf.mxu0
        %v2804 = vadd.f32 0.0, %v2803
        %v2805 = vpop.f32.mrf.mxu0
        %2806 = vmatprep.mubr.f32.mxu0 0.0
        %2807 = vmatmul.mubr.f32.gmra.mxu0 %v2407
        %v2808 = vpop.f32.mrf.mxu0
        %v2809 = vadd.f32 0.0, %v2808
        %v2810 = vpop.f32.mrf.mxu0
        %2811 = vmatprep.mubr.f32.mxu0 0.0
        %2812 = vmatmul.mubr.f32.gmra.mxu0 %v2409
        %v2813 = vpop.f32.mrf.mxu0
        %v2814 = vadd.f32 0.0, %v2813
        %v2815 = vpop.f32.mrf.mxu0
        %2816 = vmatprep.mubr.f32.mxu0 0.0
        %2817 = vmatmul.mubr.f32.gmra.mxu0 %v2411
        %v2818 = vpop.f32.mrf.mxu0
        %v2819 = vadd.f32 0.0, %v2818
        %v2820 = vpop.f32.mrf.mxu0
        %2821 = vmatprep.mubr.f32.mxu0 0.0
        %2822 = vmatmul.mubr.f32.gmra.mxu0 %v2413
        %v2823 = vpop.f32.mrf.mxu0
        %v2824 = vadd.f32 0.0, %v2823
        %v2825 = vpop.f32.mrf.mxu0
        %2826 = vmatprep.mubr.f32.mxu0 0.0
        %2827 = vmatmul.mubr.f32.gmra.mxu0 %v2415
        %v2828 = vpop.f32.mrf.mxu0
        %v2829 = vadd.f32 0.0, %v2828
        %v2830 = vpop.f32.mrf.mxu0
        %2831 = vmatprep.mubr.f32.mxu0 0.0
        %2832 = vmatmul.mubr.f32.gmra.mxu0 %v2417
        %v2833 = vpop.f32.mrf.mxu0
        %v2834 = vadd.f32 0.0, %v2833
        %v2835 = vpop.f32.mrf.mxu0
        %2836 = vmatprep.mubr.f32.mxu0 0.0
        %2837 = vmatmul.mubr.f32.gmra.mxu0 %v2419
        %v2838 = vpop.f32.mrf.mxu0
        %v2839 = vadd.f32 0.0, %v2838
        %v2840 = vpop.f32.mrf.mxu0
        %2841 = vmatprep.mubr.f32.mxu0 0.0
        %2842 = vmatmul.mubr.f32.gmra.mxu0 %v2421
        %v2843 = vpop.f32.mrf.mxu0
        %v2844 = vadd.f32 0.0, %v2843
        %v2845 = vpop.f32.mrf.mxu0
        %2846 = vmatprep.mubr.f32.mxu0 0.0
        %2847 = vmatmul.mubr.f32.gmra.mxu0 %v2423
        %v2848 = vpop.f32.mrf.mxu0
        %v2849 = vadd.f32 0.0, %v2848
        %v2850 = vpop.f32.mrf.mxu0
        %2851 = vmatprep.mubr.f32.mxu0 0.0
        %2852 = vmatmul.mubr.f32.gmra.mxu0 %v2425
        %v2853 = vpop.f32.mrf.mxu0
        %v2854 = vadd.f32 0.0, %v2853
        %v2855 = vpop.f32.mrf.mxu0
        %2856 = vmatprep.mubr.f32.mxu0 0.0
        %2857 = vmatmul.mubr.f32.gmra.mxu0 %v2427
        %v2858 = vpop.f32.mrf.mxu0
        %v2859 = vadd.f32 0.0, %v2858
        %v2860 = vpop.f32.mrf.mxu0
        %2861 = vmatprep.mubr.f32.mxu0 0.0
        %2862 = vmatmul.mubr.f32.gmra.mxu0 %v2429
        %v2863 = vpop.f32.mrf.mxu0
        %v2864 = vadd.f32 0.0, %v2863
        %v2865 = vpop.f32.mrf.mxu0
        %2866 = vmatprep.mubr.f32.mxu0 0.0
        %2867 = vmatmul.mubr.f32.gmra.mxu0 %v2431
        %v2868 = vpop.f32.mrf.mxu0
        %v2869 = vadd.f32 0.0, %v2868
        %v2870 = vpop.f32.mrf.mxu0
        %2871 = vmatprep.mubr.f32.mxu0 0.0
        %2872 = vmatmul.mubr.f32.gmra.mxu0 %v2433
        %v2873 = vpop.f32.mrf.mxu0
        %v2874 = vadd.f32 0.0, %v2873
        %v2875 = vpop.f32.mrf.mxu0
        %2876 = vmatprep.mubr.f32.mxu0 0.0
        %2877 = vmatmul.mubr.f32.gmra.mxu0 %v2435
        %v2878 = vpop.f32.mrf.mxu0
        %v2879 = vadd.f32 0.0, %v2878
        %v2880 = vpop.f32.mrf.mxu0
        %2881 = vmatprep.mubr.f32.mxu0 0.0
        %2882 = vmatmul.mubr.f32.gmra.mxu0 %v2438
        %v2883 = vpop.f32.mrf.mxu0
        %v2884 = vadd.f32 0.0, %v2883
        %v2885 = vpop.f32.mrf.mxu0
        %2886 = vdwg.mxu0
        %v2887 = vadd.f32 %v2227, %v2516
        %v2888 = vadd.f32 %v2228, %v2518
        %v2889 = vadd.f32 %v2229, %v2749
        %v2890 = vadd.f32 %v2230, %v2522
        %v2891 = vadd.f32 %v2231, %v2524
        %v2892 = vadd.f32 %v2232, %v2754
        %v2893 = vadd.f32 %v2233, %v2528
        %v2894 = vadd.f32 %v2234, %v2530
        %v2895 = vadd.f32 %v2235, %v2759
        %v2896 = vadd.f32 %v2236, %v2534
        %v2897 = vadd.f32 %v2237, %v2536
        %v2898 = vadd.f32 %v2238, %v2764
        %v2899 = vadd.f32 %v2239, %v2540
        %v2900 = vadd.f32 %v2240, %v2542
        %v2901 = vadd.f32 %v2241, %v2769
        %v2902 = vadd.f32 %v2242, %v2546
        %v2903 = vadd.f32 %v2243, %v2548
        %v2904 = vadd.f32 %v2244, %v2774
        %v2905 = vadd.f32 %v2245, %v2552
        %v2906 = vadd.f32 %v2246, %v2554
        %v2907 = vadd.f32 %v2247, %v2779
        %v2908 = vadd.f32 %v2248, %v2558
        %v2909 = vadd.f32 %v2249, %v2560
        %v2910 = vadd.f32 %v2250, %v2784
        %v2911 = vadd.f32 %v2251, %v2564
        %v2912 = vadd.f32 %v2252, %v2566
        %v2913 = vadd.f32 %v2253, %v2789
        %v2914 = vadd.f32 %v2254, %v2570
        %v2915 = vadd.f32 %v2255, %v2572
        %v2916 = vadd.f32 %v2256, %v2794
        %v2917 = vadd.f32 %v2257, %v2576
        %v2918 = vadd.f32 %v2258, %v2578
        %v2919 = vadd.f32 %v2259, %v2799
        %v2920 = vadd.f32 %v2260, %v2582
        %v2921 = vadd.f32 %v2261, %v2584
        %v2922 = vadd.f32 %v2262, %v2804
        %v2923 = vadd.f32 %v2263, %v2588
        %v2924 = vadd.f32 %v2264, %v2590
        %v2925 = vadd.f32 %v2265, %v2809
        %v2926 = vadd.f32 %v2266, %v2594
        %v2927 = vadd.f32 %v2267, %v2596
        %v2928 = vadd.f32 %v2268, %v2814
        %v2929 = vadd.f32 %v2269, %v2600
        %v2930 = vadd.f32 %v2270, %v2602
        %v2931 = vadd.f32 %v2271, %v2819
        %v2932 = vadd.f32 %v2272, %v2606
        %v2933 = vadd.f32 %v2273, %v2608
        %v2934 = vadd.f32 %v2274, %v2824
        %v2935 = vadd.f32 %v2275, %v2612
        %v2936 = vadd.f32 %v2276, %v2614
        %v2937 = vadd.f32 %v2277, %v2829
        %v2938 = vadd.f32 %v2278, %v2618
        %v2939 = vadd.f32 %v2279, %v2620
        %v2940 = vadd.f32 %v2280, %v2834
        %v2941 = vadd.f32 %v2281, %v2624
        %v2942 = vadd.f32 %v2282, %v2626
        %v2943 = vadd.f32 %v2283, %v2839
        %v2944 = vadd.f32 %v2284, %v2630
        %v2945 = vadd.f32 %v2285, %v2632
        %v2946 = vadd.f32 %v2286, %v2844
        %v2947 = vadd.f32 %v2287, %v2636
        %v2948 = vadd.f32 %v2288, %v2638
        %v2949 = vadd.f32 %v2289, %v2849
        %v2950 = vadd.f32 %v2290, %v2642
        %v2951 = vadd.f32 %v2291, %v2644
        %v2952 = vadd.f32 %v2292, %v2854
        %v2953 = vadd.f32 %v2293, %v2648
        %v2954 = vadd.f32 %v2294, %v2650
        %v2955 = vadd.f32 %v2295, %v2859
        %v2956 = vadd.f32 %v2296, %v2654
        %v2957 = vadd.f32 %v2297, %v2656
        %v2958 = vadd.f32 %v2298, %v2864
        %v2959 = vadd.f32 %v2299, %v2660
        %v2960 = vadd.f32 %v2300, %v2662
        %v2961 = vadd.f32 %v2301, %v2869
        %v2962 = vadd.f32 %v2302, %v2666
        %v2963 = vadd.f32 %v2303, %v2668
        %v2964 = vadd.f32 %v2304, %v2874
        %v2965 = vadd.f32 %v2305, %v2672
        %v2966 = vadd.f32 %v2306, %v2674
        %v2967 = vadd.f32 %v2307, %v2879
        %v2968 = vadd.f32 %v2308, %v2678
        %v2969 = vadd.f32 %v2309, %v2680
        %v2970 = vadd.f32 %v2310, %v2884
        %v2971 = vrot.slane %v317, 4
        %v2972 = vrot.slane %v318, 4
        %v2973 = vsel %vm443, %v2971, %v2972
        %v2974 = vrot.slane %v319, 4
        %v2975 = vsel %vm443, %v2972, %v2974
        %v2976 = vrot.slane %v320, 4
        %v2977 = vsel %vm443, %v2974, %v2976
        %v2978 = vrot.slane %v321, 4
        %v2979 = vsel %vm443, %v2976, %v2978
        %v2980 = vrot.slane %v322, 4
        %v2981 = vsel %vm443, %v2978, %v2980
        %v2982 = vrot.slane %v323, 4
        %v2983 = vsel %vm443, %v2980, %v2982
        %v2984 = vrot.slane %v324, 4
        %v2985 = vsel %vm443, %v2982, %v2984
        %v2986 = vrot.slane %v325, 4
        %v2987 = vsel %vm443, %v2984, %v2986
        %v2988 = vrot.slane %v326, 4
        %v2989 = vsel %vm443, %v2986, %v2988
        %v2990 = vrot.slane %v327, 4
        %v2991 = vsel %vm443, %v2988, %v2990
        %v2992 = vrot.slane %v328, 4
        %v2993 = vsel %vm443, %v2990, %v2992
        %v2994 = vrot.slane %v329, 4
        %v2995 = vsel %vm443, %v2992, %v2994
        %v2996 = vrot.slane %v330, 4
        %v2997 = vsel %vm443, %v2994, %v2996
        %v2998 = vrot.slane %v331, 4
        %v2999 = vsel %vm443, %v2996, %v2998
        %v3000 = vrot.slane %v332, 4
        %v3001 = vsel %vm443, %v2998, %v3000
        %v3002 = vrot.slane %v333, 4
        %v3003 = vsel %vm443, %v3000, %v3002
        %v3004 = vrot.slane %v334, 4
        %v3005 = vsel %vm443, %v3002, %v3004
        %v3006 = vrot.slane %v335, 4
        %v3007 = vsel %vm443, %v3004, %v3006
        %v3008 = vrot.slane %v336, 4
        %v3009 = vsel %vm443, %v3006, %v3008
        %v3010 = vrot.slane %v337, 4
        %v3011 = vsel %vm443, %v3008, %v3010
        %v3012 = vrot.slane %v338, 4
        %v3013 = vsel %vm443, %v3010, %v3012
        %v3014 = vrot.slane %v339, 4
        %v3015 = vsel %vm443, %v3012, %v3014
        %v3016 = vrot.slane %v340, 4
        %v3017 = vsel %vm443, %v3014, %v3016
        %v3018 = vrot.slane %v341, 4
        %v3019 = vsel %vm443, %v3016, %v3018
        %v3020 = vrot.slane %v342, 4
        %v3021 = vsel %vm443, %v3018, %v3020
        %v3022 = vrot.slane %v343, 4
        %v3023 = vsel %vm443, %v3020, %v3022
        %v3024 = vrot.slane %v344, 4
        %v3025 = vsel %vm443, %v3022, %v3024
        %v3028 = vsel %vm443, %v3024, %v2971
        %s3029 = scalar_lea.vmem %s1, 384
        %v3030 = vld [vmem:[%s3029] sm:$0xff]
        %v3031 = vld [vmem:[%s3029 + $0x8] sm:$0xff]
        %v3032 = vld [vmem:[%s3029 + $0x10] sm:$0xff]
        %v3033 = vld [vmem:[%s3029 + $0x18] sm:$0xff]
        %v3034 = vld [vmem:[%s3029 + $0x20] sm:$0xff]
        %v3035 = vld [vmem:[%s3029 + $0x28] sm:$0xff]
        %v3036 = vld [vmem:[%s3029 + $0x30] sm:$0xff]
        %v3037 = vld [vmem:[%s3029 + $0x38] sm:$0xff]
        %v3038 = vld [vmem:[%s3029 + $0x40] sm:$0xff]
        %v3039 = vld [vmem:[%s3029 + $0x48] sm:$0xf]
        %v3040 = vld [vmem:[%s3029 + $0x50] sm:$0xf]
        %v3041 = vld [vmem:[%s3029 + $0x58] sm:$0xf]
        %v3042 = vsel %vm358, %v2973, 0
        %v3044 = vsel %vm358, %v2975, 0
        %v3046 = vsel %vm358, %v2977, 0
        %v3048 = vsel %vm358, %v2979, 0
        %v3050 = vsel %vm358, %v2981, 0
        %v3052 = vsel %vm358, %v2983, 0
        %v3054 = vsel %vm358, %v2985, 0
        %v3056 = vsel %vm358, %v2987, 0
        %v3058 = vsel %vm358, %v2989, 0
        %v3060 = vsel %vm358, %v2991, 0
        %v3062 = vsel %vm358, %v2993, 0
        %v3064 = vsel %vm358, %v2995, 0
        %v3066 = vsel %vm358, %v2997, 0
        %v3068 = vsel %vm358, %v2999, 0
        %v3070 = vsel %vm358, %v3001, 0
        %v3072 = vsel %vm358, %v3003, 0
        %v3074 = vsel %vm358, %v3005, 0
        %v3076 = vsel %vm358, %v3007, 0
        %v3078 = vsel %vm358, %v3009, 0
        %v3080 = vsel %vm358, %v3011, 0
        %v3082 = vsel %vm358, %v3013, 0
        %v3084 = vsel %vm358, %v3015, 0
        %v3086 = vsel %vm358, %v3017, 0
        %v3088 = vsel %vm358, %v3019, 0
        %v3090 = vsel %vm358, %v3021, 0
        %v3092 = vsel %vm358, %v3023, 0
        %v3094 = vsel %vm358, %v3025, 0
        %v3097 = vsel %vm358, %v3028, 0
        %v3100 = vsel %vm443, %v3039, 0
        %v3103 = vsel %vm443, %v3040, 0
        %v3106 = vsel %vm443, %v3041, 0
        %3108 = vmatprep.subr.mxu0 0.0
        %3109 = vmatpush1.msra.mxu0 0.0
        %3110 = vmatprep.subr.mxu0 0.0
        %3111 = vmatpush1.msra.mxu0 0.0
        %3112 = vmatprep.subr.mxu0 0.0
        %3113 = vmatpush1.msra.mxu0 0.0
        %3114 = vmatprep.subr.mxu0 0.0
        %3115 = vmatpush1.msra.mxu0 0.0
        %3116 = vmatprep.subr.mxu0 0.0
        %3117 = vmatpush1.msra.mxu0 0.0
        %3118 = vmatprep.subr.mxu0 0.0
        %3119 = vmatpush1.msra.mxu0 0.0
        %3120 = vmatprep.subr.mxu0 0.0
        %3121 = vmatpush1.msra.mxu0 0.0
        %3122 = vmatprep.subr.mxu0 0.0
        %3123 = vmatpush1.msra.mxu0 0.0
        %3124 = vmatprep.subr.mxu0 0.0
        %3125 = vmatpush1.msra.mxu0 0.0
        %3126 = vmatprep.subr.mxu0 0.0
        %3127 = vmatpush1.msra.mxu0 0.0
        %3128 = vmatprep.subr.mxu0 0.0
        %3129 = vmatpush1.msra.mxu0 0.0
        %3130 = vmatprep.subr.mxu0 0.0
        %3131 = vmatpush1.msra.mxu0 0.0
        %3132 = vmatprep.subr.mxu0 %v3103
        %3133 = vmatpush1.msra.mxu0 %v3100
        %3134 = vmatprep.subr.mxu0 %v3037
        %3135 = vmatpush1.msra.mxu0 %v3036
        %3136 = vmatprep.subr.mxu0 %v3034
        %3137 = vmatpush1.msra.mxu0 %v3033
        %3138 = vmatprep.subr.mxu0 %v3031
        %3139 = vmatpush1.msra.mxu0 %v3030
        %3140 = vmatprep.subr.mxu0 0.0
        %3141 = vmatpush2.msra.mxu0 0.0
        %3142 = vmatprep.subr.mxu0 0.0
        %3143 = vmatpush2.msra.mxu0 0.0
        %3144 = vmatprep.subr.mxu0 0.0
        %3145 = vmatpush2.msra.mxu0 0.0
        %3146 = vmatprep.subr.mxu0 0.0
        %3147 = vmatpush2.msra.mxu0 0.0
        %3148 = vmatprep.subr.mxu0 0.0
        %3149 = vmatpush2.msra.mxu0 0.0
        %3150 = vmatprep.subr.mxu0 0.0
        %3151 = vmatpush2.msra.mxu0 0.0
        %3152 = vmatprep.subr.mxu0 0.0
        %3153 = vmatpush2.msra.mxu0 0.0
        %3154 = vmatprep.subr.mxu0 0.0
        %3155 = vmatpush2.msra.mxu0 0.0
        %3156 = vmatprep.subr.mxu0 0.0
        %3157 = vmatpush2.msra.mxu0 0.0
        %3158 = vmatprep.subr.mxu0 0.0
        %3159 = vmatpush2.msra.mxu0 0.0
        %3160 = vmatprep.subr.mxu0 0.0
        %3161 = vmatpush2.msra.mxu0 0.0
        %3162 = vmatprep.subr.mxu0 0.0
        %3163 = vmatpush2.msra.mxu0 0.0
        %3164 = vmatprep.subr.mxu0 0.0
        %3165 = vmatpush2.msra.mxu0 0.0
        %3166 = vmatprep.subr.mxu0 0.0
        %3167 = vmatpush2.msra.mxu0 0.0
        %3168 = vmatprep.subr.mxu0 0.0
        %3169 = vmatpush2.msra.mxu0 0.0
        %3170 = vmatprep.subr.mxu0 0.0
        %3171 = vmatpush2.msra.mxu0 0.0
        %3172 = vmatprep.mubr.f32.mxu0 0.0
        %3173 = vmatmul.mubr.f32.gmra.mxu0 %v3042
        %v3174 = vpop.f32.mrf.mxu0
        %v3175 = vadd.f32 0.0, %v3174
        %v3176 = vpop.f32.mrf.mxu0
        %v3177 = vadd.f32 0.0, %v3176
        %3178 = vmatprep.mubr.f32.mxu0 0.0
        %3179 = vmatmul.mubr.f32.gmra.mxu0 %v3044
        %v3180 = vpop.f32.mrf.mxu0
        %v3181 = vadd.f32 0.0, %v3180
        %v3182 = vpop.f32.mrf.mxu0
        %v3183 = vadd.f32 0.0, %v3182
        %3184 = vmatprep.mubr.f32.mxu0 0.0
        %3185 = vmatmul.mubr.f32.gmra.mxu0 %v3046
        %v3186 = vpop.f32.mrf.mxu0
        %v3187 = vadd.f32 0.0, %v3186
        %v3188 = vpop.f32.mrf.mxu0
        %v3189 = vadd.f32 0.0, %v3188
        %3190 = vmatprep.mubr.f32.mxu0 0.0
        %3191 = vmatmul.mubr.f32.gmra.mxu0 %v3048
        %v3192 = vpop.f32.mrf.mxu0
        %v3193 = vadd.f32 0.0, %v3192
        %v3194 = vpop.f32.mrf.mxu0
        %v3195 = vadd.f32 0.0, %v3194
        %3196 = vmatprep.mubr.f32.mxu0 0.0
        %3197 = vmatmul.mubr.f32.gmra.mxu0 %v3050
        %v3198 = vpop.f32.mrf.mxu0
        %v3199 = vadd.f32 0.0, %v3198
        %v3200 = vpop.f32.mrf.mxu0
        %v3201 = vadd.f32 0.0, %v3200
        %3202 = vmatprep.mubr.f32.mxu0 0.0
        %3203 = vmatmul.mubr.f32.gmra.mxu0 %v3052
        %v3204 = vpop.f32.mrf.mxu0
        %v3205 = vadd.f32 0.0, %v3204
        %v3206 = vpop.f32.mrf.mxu0
        %v3207 = vadd.f32 0.0, %v3206
        %3208 = vmatprep.mubr.f32.mxu0 0.0
        %3209 = vmatmul.mubr.f32.gmra.mxu0 %v3054
        %v3210 = vpop.f32.mrf.mxu0
        %v3211 = vadd.f32 0.0, %v3210
        %v3212 = vpop.f32.mrf.mxu0
        %v3213 = vadd.f32 0.0, %v3212
        %3214 = vmatprep.mubr.f32.mxu0 0.0
        %3215 = vmatmul.mubr.f32.gmra.mxu0 %v3056
        %v3216 = vpop.f32.mrf.mxu0
        %v3217 = vadd.f32 0.0, %v3216
        %v3218 = vpop.f32.mrf.mxu0
        %v3219 = vadd.f32 0.0, %v3218
        %3220 = vmatprep.mubr.f32.mxu0 0.0
        %3221 = vmatmul.mubr.f32.gmra.mxu0 %v3058
        %v3222 = vpop.f32.mrf.mxu0
        %v3223 = vadd.f32 0.0, %v3222
        %v3224 = vpop.f32.mrf.mxu0
        %v3225 = vadd.f32 0.0, %v3224
        %3226 = vmatprep.mubr.f32.mxu0 0.0
        %3227 = vmatmul.mubr.f32.gmra.mxu0 %v3060
        %v3228 = vpop.f32.mrf.mxu0
        %v3229 = vadd.f32 0.0, %v3228
        %v3230 = vpop.f32.mrf.mxu0
        %v3231 = vadd.f32 0.0, %v3230
        %3232 = vmatprep.mubr.f32.mxu0 0.0
        %3233 = vmatmul.mubr.f32.gmra.mxu0 %v3062
        %v3234 = vpop.f32.mrf.mxu0
        %v3235 = vadd.f32 0.0, %v3234
        %v3236 = vpop.f32.mrf.mxu0
        %v3237 = vadd.f32 0.0, %v3236
        %3238 = vmatprep.mubr.f32.mxu0 0.0
        %3239 = vmatmul.mubr.f32.gmra.mxu0 %v3064
        %v3240 = vpop.f32.mrf.mxu0
        %v3241 = vadd.f32 0.0, %v3240
        %v3242 = vpop.f32.mrf.mxu0
        %v3243 = vadd.f32 0.0, %v3242
        %3244 = vmatprep.mubr.f32.mxu0 0.0
        %3245 = vmatmul.mubr.f32.gmra.mxu0 %v3066
        %v3246 = vpop.f32.mrf.mxu0
        %v3247 = vadd.f32 0.0, %v3246
        %v3248 = vpop.f32.mrf.mxu0
        %v3249 = vadd.f32 0.0, %v3248
        %3250 = vmatprep.mubr.f32.mxu0 0.0
        %3251 = vmatmul.mubr.f32.gmra.mxu0 %v3068
        %v3252 = vpop.f32.mrf.mxu0
        %v3253 = vadd.f32 0.0, %v3252
        %v3254 = vpop.f32.mrf.mxu0
        %v3255 = vadd.f32 0.0, %v3254
        %3256 = vmatprep.mubr.f32.mxu0 0.0
        %3257 = vmatmul.mubr.f32.gmra.mxu0 %v3070
        %v3258 = vpop.f32.mrf.mxu0
        %v3259 = vadd.f32 0.0, %v3258
        %v3260 = vpop.f32.mrf.mxu0
        %v3261 = vadd.f32 0.0, %v3260
        %3262 = vmatprep.mubr.f32.mxu0 0.0
        %3263 = vmatmul.mubr.f32.gmra.mxu0 %v3072
        %v3264 = vpop.f32.mrf.mxu0
        %v3265 = vadd.f32 0.0, %v3264
        %v3266 = vpop.f32.mrf.mxu0
        %v3267 = vadd.f32 0.0, %v3266
        %3268 = vmatprep.mubr.f32.mxu0 0.0
        %3269 = vmatmul.mubr.f32.gmra.mxu0 %v3074
        %v3270 = vpop.f32.mrf.mxu0
        %v3271 = vadd.f32 0.0, %v3270
        %v3272 = vpop.f32.mrf.mxu0
        %v3273 = vadd.f32 0.0, %v3272
        %3274 = vmatprep.mubr.f32.mxu0 0.0
        %3275 = vmatmul.mubr.f32.gmra.mxu0 %v3076
        %v3276 = vpop.f32.mrf.mxu0
        %v3277 = vadd.f32 0.0, %v3276
        %v3278 = vpop.f32.mrf.mxu0
        %v3279 = vadd.f32 0.0, %v3278
        %3280 = vmatprep.mubr.f32.mxu0 0.0
        %3281 = vmatmul.mubr.f32.gmra.mxu0 %v3078
        %v3282 = vpop.f32.mrf.mxu0
        %v3283 = vadd.f32 0.0, %v3282
        %v3284 = vpop.f32.mrf.mxu0
        %v3285 = vadd.f32 0.0, %v3284
        %3286 = vmatprep.mubr.f32.mxu0 0.0
        %3287 = vmatmul.mubr.f32.gmra.mxu0 %v3080
        %v3288 = vpop.f32.mrf.mxu0
        %v3289 = vadd.f32 0.0, %v3288
        %v3290 = vpop.f32.mrf.mxu0
        %v3291 = vadd.f32 0.0, %v3290
        %3292 = vmatprep.mubr.f32.mxu0 0.0
        %3293 = vmatmul.mubr.f32.gmra.mxu0 %v3082
        %v3294 = vpop.f32.mrf.mxu0
        %v3295 = vadd.f32 0.0, %v3294
        %v3296 = vpop.f32.mrf.mxu0
        %v3297 = vadd.f32 0.0, %v3296
        %3298 = vmatprep.mubr.f32.mxu0 0.0
        %3299 = vmatmul.mubr.f32.gmra.mxu0 %v3084
        %v3300 = vpop.f32.mrf.mxu0
        %v3301 = vadd.f32 0.0, %v3300
        %v3302 = vpop.f32.mrf.mxu0
        %v3303 = vadd.f32 0.0, %v3302
        %3304 = vmatprep.mubr.f32.mxu0 0.0
        %3305 = vmatmul.mubr.f32.gmra.mxu0 %v3086
        %v3306 = vpop.f32.mrf.mxu0
        %v3307 = vadd.f32 0.0, %v3306
        %v3308 = vpop.f32.mrf.mxu0
        %v3309 = vadd.f32 0.0, %v3308
        %3310 = vmatprep.mubr.f32.mxu0 0.0
        %3311 = vmatmul.mubr.f32.gmra.mxu0 %v3088
        %v3312 = vpop.f32.mrf.mxu0
        %v3313 = vadd.f32 0.0, %v3312
        %v3314 = vpop.f32.mrf.mxu0
        %v3315 = vadd.f32 0.0, %v3314
        %3316 = vmatprep.mubr.f32.mxu0 0.0
        %3317 = vmatmul.mubr.f32.gmra.mxu0 %v3090
        %v3318 = vpop.f32.mrf.mxu0
        %v3319 = vadd.f32 0.0, %v3318
        %v3320 = vpop.f32.mrf.mxu0
        %v3321 = vadd.f32 0.0, %v3320
        %3322 = vmatprep.mubr.f32.mxu0 0.0
        %3323 = vmatmul.mubr.f32.gmra.mxu0 %v3092
        %v3324 = vpop.f32.mrf.mxu0
        %v3325 = vadd.f32 0.0, %v3324
        %v3326 = vpop.f32.mrf.mxu0
        %v3327 = vadd.f32 0.0, %v3326
        %3328 = vmatprep.mubr.f32.mxu0 0.0
        %3329 = vmatmul.mubr.f32.gmra.mxu0 %v3094
        %v3330 = vpop.f32.mrf.mxu0
        %v3331 = vadd.f32 0.0, %v3330
        %v3332 = vpop.f32.mrf.mxu0
        %v3333 = vadd.f32 0.0, %v3332
        %3334 = vmatprep.mubr.f32.mxu0 0.0
        %3335 = vmatmul.mubr.f32.gmra.mxu0 %v3097
        %v3336 = vpop.f32.mrf.mxu0
        %v3337 = vadd.f32 0.0, %v3336
        %v3338 = vpop.f32.mrf.mxu0
        %v3339 = vadd.f32 0.0, %v3338
        %3340 = vdwg.mxu0
        %3341 = vmatprep.subr.mxu0 0.0
        %3342 = vmatpush1.msra.mxu0 0.0
        %3343 = vmatprep.subr.mxu0 0.0
        %3344 = vmatpush1.msra.mxu0 0.0
        %3345 = vmatprep.subr.mxu0 0.0
        %3346 = vmatpush1.msra.mxu0 0.0
        %3347 = vmatprep.subr.mxu0 0.0
        %3348 = vmatpush1.msra.mxu0 0.0
        %3349 = vmatprep.subr.mxu0 0.0
        %3350 = vmatpush1.msra.mxu0 0.0
        %3351 = vmatprep.subr.mxu0 0.0
        %3352 = vmatpush1.msra.mxu0 0.0
        %3353 = vmatprep.subr.mxu0 0.0
        %3354 = vmatpush1.msra.mxu0 0.0
        %3355 = vmatprep.subr.mxu0 0.0
        %3356 = vmatpush1.msra.mxu0 0.0
        %3357 = vmatprep.subr.mxu0 0.0
        %3358 = vmatpush1.msra.mxu0 0.0
        %3359 = vmatprep.subr.mxu0 0.0
        %3360 = vmatpush1.msra.mxu0 0.0
        %3361 = vmatprep.subr.mxu0 0.0
        %3362 = vmatpush1.msra.mxu0 0.0
        %3363 = vmatprep.subr.mxu0 0.0
        %3364 = vmatpush1.msra.mxu0 0.0
        %3365 = vmatprep.subr.mxu0 0.0
        %3366 = vmatpush1.msra.mxu0 %v3106
        %3367 = vmatprep.subr.mxu0 0.0
        %3368 = vmatpush1.msra.mxu0 %v3038
        %3369 = vmatprep.subr.mxu0 0.0
        %3370 = vmatpush1.msra.mxu0 %v3035
        %3371 = vmatprep.subr.mxu0 0.0
        %3372 = vmatpush1.msra.mxu0 %v3032
        %3373 = vmatprep.subr.mxu0 0.0
        %3374 = vmatpush2.msra.mxu0 0.0
        %3375 = vmatprep.subr.mxu0 0.0
        %3376 = vmatpush2.msra.mxu0 0.0
        %3377 = vmatprep.subr.mxu0 0.0
        %3378 = vmatpush2.msra.mxu0 0.0
        %3379 = vmatprep.subr.mxu0 0.0
        %3380 = vmatpush2.msra.mxu0 0.0
        %3381 = vmatprep.subr.mxu0 0.0
        %3382 = vmatpush2.msra.mxu0 0.0
        %3383 = vmatprep.subr.mxu0 0.0
        %3384 = vmatpush2.msra.mxu0 0.0
        %3385 = vmatprep.subr.mxu0 0.0
        %3386 = vmatpush2.msra.mxu0 0.0
        %3387 = vmatprep.subr.mxu0 0.0
        %3388 = vmatpush2.msra.mxu0 0.0
        %3389 = vmatprep.subr.mxu0 0.0
        %3390 = vmatpush2.msra.mxu0 0.0
        %3391 = vmatprep.subr.mxu0 0.0
        %3392 = vmatpush2.msra.mxu0 0.0
        %3393 = vmatprep.subr.mxu0 0.0
        %3394 = vmatpush2.msra.mxu0 0.0
        %3395 = vmatprep.subr.mxu0 0.0
        %3396 = vmatpush2.msra.mxu0 0.0
        %3397 = vmatprep.subr.mxu0 0.0
        %3398 = vmatpush2.msra.mxu0 0.0
        %3399 = vmatprep.subr.mxu0 0.0
        %3400 = vmatpush2.msra.mxu0 0.0
        %3401 = vmatprep.subr.mxu0 0.0
        %3402 = vmatpush2.msra.mxu0 0.0
        %3403 = vmatprep.subr.mxu0 0.0
        %3404 = vmatpush2.msra.mxu0 0.0
        %3405 = vmatprep.mubr.f32.mxu0 0.0
        %3406 = vmatmul.mubr.f32.gmra.mxu0 %v3042
        %v3407 = vpop.f32.mrf.mxu0
        %v3408 = vadd.f32 0.0, %v3407
        %v3409 = vpop.f32.mrf.mxu0
        %3410 = vmatprep.mubr.f32.mxu0 0.0
        %3411 = vmatmul.mubr.f32.gmra.mxu0 %v3044
        %v3412 = vpop.f32.mrf.mxu0
        %v3413 = vadd.f32 0.0, %v3412
        %v3414 = vpop.f32.mrf.mxu0
        %3415 = vmatprep.mubr.f32.mxu0 0.0
        %3416 = vmatmul.mubr.f32.gmra.mxu0 %v3046
        %v3417 = vpop.f32.mrf.mxu0
        %v3418 = vadd.f32 0.0, %v3417
        %v3419 = vpop.f32.mrf.mxu0
        %3420 = vmatprep.mubr.f32.mxu0 0.0
        %3421 = vmatmul.mubr.f32.gmra.mxu0 %v3048
        %v3422 = vpop.f32.mrf.mxu0
        %v3423 = vadd.f32 0.0, %v3422
        %v3424 = vpop.f32.mrf.mxu0
        %3425 = vmatprep.mubr.f32.mxu0 0.0
        %3426 = vmatmul.mubr.f32.gmra.mxu0 %v3050
        %v3427 = vpop.f32.mrf.mxu0
        %v3428 = vadd.f32 0.0, %v3427
        %v3429 = vpop.f32.mrf.mxu0
        %3430 = vmatprep.mubr.f32.mxu0 0.0
        %3431 = vmatmul.mubr.f32.gmra.mxu0 %v3052
        %v3432 = vpop.f32.mrf.mxu0
        %v3433 = vadd.f32 0.0, %v3432
        %v3434 = vpop.f32.mrf.mxu0
        %3435 = vmatprep.mubr.f32.mxu0 0.0
        %3436 = vmatmul.mubr.f32.gmra.mxu0 %v3054
        %v3437 = vpop.f32.mrf.mxu0
        %v3438 = vadd.f32 0.0, %v3437
        %v3439 = vpop.f32.mrf.mxu0
        %3440 = vmatprep.mubr.f32.mxu0 0.0
        %3441 = vmatmul.mubr.f32.gmra.mxu0 %v3056
        %v3442 = vpop.f32.mrf.mxu0
        %v3443 = vadd.f32 0.0, %v3442
        %v3444 = vpop.f32.mrf.mxu0
        %3445 = vmatprep.mubr.f32.mxu0 0.0
        %3446 = vmatmul.mubr.f32.gmra.mxu0 %v3058
        %v3447 = vpop.f32.mrf.mxu0
        %v3448 = vadd.f32 0.0, %v3447
        %v3449 = vpop.f32.mrf.mxu0
        %3450 = vmatprep.mubr.f32.mxu0 0.0
        %3451 = vmatmul.mubr.f32.gmra.mxu0 %v3060
        %v3452 = vpop.f32.mrf.mxu0
        %v3453 = vadd.f32 0.0, %v3452
        %v3454 = vpop.f32.mrf.mxu0
        %3455 = vmatprep.mubr.f32.mxu0 0.0
        %3456 = vmatmul.mubr.f32.gmra.mxu0 %v3062
        %v3457 = vpop.f32.mrf.mxu0
        %v3458 = vadd.f32 0.0, %v3457
        %v3459 = vpop.f32.mrf.mxu0
        %3460 = vmatprep.mubr.f32.mxu0 0.0
        %3461 = vmatmul.mubr.f32.gmra.mxu0 %v3064
        %v3462 = vpop.f32.mrf.mxu0
        %v3463 = vadd.f32 0.0, %v3462
        %v3464 = vpop.f32.mrf.mxu0
        %3465 = vmatprep.mubr.f32.mxu0 0.0
        %3466 = vmatmul.mubr.f32.gmra.mxu0 %v3066
        %v3467 = vpop.f32.mrf.mxu0
        %v3468 = vadd.f32 0.0, %v3467
        %v3469 = vpop.f32.mrf.mxu0
        %3470 = vmatprep.mubr.f32.mxu0 0.0
        %3471 = vmatmul.mubr.f32.gmra.mxu0 %v3068
        %v3472 = vpop.f32.mrf.mxu0
        %v3473 = vadd.f32 0.0, %v3472
        %v3474 = vpop.f32.mrf.mxu0
        %3475 = vmatprep.mubr.f32.mxu0 0.0
        %3476 = vmatmul.mubr.f32.gmra.mxu0 %v3070
        %v3477 = vpop.f32.mrf.mxu0
        %v3478 = vadd.f32 0.0, %v3477
        %v3479 = vpop.f32.mrf.mxu0
        %3480 = vmatprep.mubr.f32.mxu0 0.0
        %3481 = vmatmul.mubr.f32.gmra.mxu0 %v3072
        %v3482 = vpop.f32.mrf.mxu0
        %v3483 = vadd.f32 0.0, %v3482
        %v3484 = vpop.f32.mrf.mxu0
        %3485 = vmatprep.mubr.f32.mxu0 0.0
        %3486 = vmatmul.mubr.f32.gmra.mxu0 %v3074
        %v3487 = vpop.f32.mrf.mxu0
        %v3488 = vadd.f32 0.0, %v3487
        %v3489 = vpop.f32.mrf.mxu0
        %3490 = vmatprep.mubr.f32.mxu0 0.0
        %3491 = vmatmul.mubr.f32.gmra.mxu0 %v3076
        %v3492 = vpop.f32.mrf.mxu0
        %v3493 = vadd.f32 0.0, %v3492
        %v3494 = vpop.f32.mrf.mxu0
        %3495 = vmatprep.mubr.f32.mxu0 0.0
        %3496 = vmatmul.mubr.f32.gmra.mxu0 %v3078
        %v3497 = vpop.f32.mrf.mxu0
        %v3498 = vadd.f32 0.0, %v3497
        %v3499 = vpop.f32.mrf.mxu0
        %3500 = vmatprep.mubr.f32.mxu0 0.0
        %3501 = vmatmul.mubr.f32.gmra.mxu0 %v3080
        %v3502 = vpop.f32.mrf.mxu0
        %v3503 = vadd.f32 0.0, %v3502
        %v3504 = vpop.f32.mrf.mxu0
        %3505 = vmatprep.mubr.f32.mxu0 0.0
        %3506 = vmatmul.mubr.f32.gmra.mxu0 %v3082
        %v3507 = vpop.f32.mrf.mxu0
        %v3508 = vadd.f32 0.0, %v3507
        %v3509 = vpop.f32.mrf.mxu0
        %3510 = vmatprep.mubr.f32.mxu0 0.0
        %3511 = vmatmul.mubr.f32.gmra.mxu0 %v3084
        %v3512 = vpop.f32.mrf.mxu0
        %v3513 = vadd.f32 0.0, %v3512
        %v3514 = vpop.f32.mrf.mxu0
        %3515 = vmatprep.mubr.f32.mxu0 0.0
        %3516 = vmatmul.mubr.f32.gmra.mxu0 %v3086
        %v3517 = vpop.f32.mrf.mxu0
        %v3518 = vadd.f32 0.0, %v3517
        %v3519 = vpop.f32.mrf.mxu0
        %3520 = vmatprep.mubr.f32.mxu0 0.0
        %3521 = vmatmul.mubr.f32.gmra.mxu0 %v3088
        %v3522 = vpop.f32.mrf.mxu0
        %v3523 = vadd.f32 0.0, %v3522
        %v3524 = vpop.f32.mrf.mxu0
        %3525 = vmatprep.mubr.f32.mxu0 0.0
        %3526 = vmatmul.mubr.f32.gmra.mxu0 %v3090
        %v3527 = vpop.f32.mrf.mxu0
        %v3528 = vadd.f32 0.0, %v3527
        %v3529 = vpop.f32.mrf.mxu0
        %3530 = vmatprep.mubr.f32.mxu0 0.0
        %3531 = vmatmul.mubr.f32.gmra.mxu0 %v3092
        %v3532 = vpop.f32.mrf.mxu0
        %v3533 = vadd.f32 0.0, %v3532
        %v3534 = vpop.f32.mrf.mxu0
        %3535 = vmatprep.mubr.f32.mxu0 0.0
        %3536 = vmatmul.mubr.f32.gmra.mxu0 %v3094
        %v3537 = vpop.f32.mrf.mxu0
        %v3538 = vadd.f32 0.0, %v3537
        %v3539 = vpop.f32.mrf.mxu0
        %3540 = vmatprep.mubr.f32.mxu0 0.0
        %3541 = vmatmul.mubr.f32.gmra.mxu0 %v3097
        %v3542 = vpop.f32.mrf.mxu0
        %v3543 = vadd.f32 0.0, %v3542
        %v3544 = vpop.f32.mrf.mxu0
        %3545 = vdwg.mxu0
        %v3546 = vadd.f32 %v2887, %v3175
        %v3547 = vadd.f32 %v2888, %v3177
        %v3548 = vadd.f32 %v2889, %v3408
        %v3549 = vadd.f32 %v2890, %v3181
        %v3550 = vadd.f32 %v2891, %v3183
        %v3551 = vadd.f32 %v2892, %v3413
        %v3552 = vadd.f32 %v2893, %v3187
        %v3553 = vadd.f32 %v2894, %v3189
        %v3554 = vadd.f32 %v2895, %v3418
        %v3555 = vadd.f32 %v2896, %v3193
        %v3556 = vadd.f32 %v2897, %v3195
        %v3557 = vadd.f32 %v2898, %v3423
        %v3558 = vadd.f32 %v2899, %v3199
        %v3559 = vadd.f32 %v2900, %v3201
        %v3560 = vadd.f32 %v2901, %v3428
        %v3561 = vadd.f32 %v2902, %v3205
        %v3562 = vadd.f32 %v2903, %v3207
        %v3563 = vadd.f32 %v2904, %v3433
        %v3564 = vadd.f32 %v2905, %v3211
        %v3565 = vadd.f32 %v2906, %v3213
        %v3566 = vadd.f32 %v2907, %v3438
        %v3567 = vadd.f32 %v2908, %v3217
        %v3568 = vadd.f32 %v2909, %v3219
        %v3569 = vadd.f32 %v2910, %v3443
        %v3570 = vadd.f32 %v2911, %v3223
        %v3571 = vadd.f32 %v2912, %v3225
        %v3572 = vadd.f32 %v2913, %v3448
        %v3573 = vadd.f32 %v2914, %v3229
        %v3574 = vadd.f32 %v2915, %v3231
        %v3575 = vadd.f32 %v2916, %v3453
        %v3576 = vadd.f32 %v2917, %v3235
        %v3577 = vadd.f32 %v2918, %v3237
        %v3578 = vadd.f32 %v2919, %v3458
        %v3579 = vadd.f32 %v2920, %v3241
        %v3580 = vadd.f32 %v2921, %v3243
        %v3581 = vadd.f32 %v2922, %v3463
        %v3582 = vadd.f32 %v2923, %v3247
        %v3583 = vadd.f32 %v2924, %v3249
        %v3584 = vadd.f32 %v2925, %v3468
        %v3585 = vadd.f32 %v2926, %v3253
        %v3586 = vadd.f32 %v2927, %v3255
        %v3587 = vadd.f32 %v2928, %v3473
        %v3588 = vadd.f32 %v2929, %v3259
        %v3589 = vadd.f32 %v2930, %v3261
        %v3590 = vadd.f32 %v2931, %v3478
        %v3591 = vadd.f32 %v2932, %v3265
        %v3592 = vadd.f32 %v2933, %v3267
        %v3593 = vadd.f32 %v2934, %v3483
        %v3594 = vadd.f32 %v2935, %v3271
        %v3595 = vadd.f32 %v2936, %v3273
        %v3596 = vadd.f32 %v2937, %v3488
        %v3597 = vadd.f32 %v2938, %v3277
        %v3598 = vadd.f32 %v2939, %v3279
        %v3599 = vadd.f32 %v2940, %v3493
        %v3600 = vadd.f32 %v2941, %v3283
        %v3601 = vadd.f32 %v2942, %v3285
        %v3602 = vadd.f32 %v2943, %v3498
        %v3603 = vadd.f32 %v2944, %v3289
        %v3604 = vadd.f32 %v2945, %v3291
        %v3605 = vadd.f32 %v2946, %v3503
        %v3606 = vadd.f32 %v2947, %v3295
        %v3607 = vadd.f32 %v2948, %v3297
        %v3608 = vadd.f32 %v2949, %v3508
        %v3609 = vadd.f32 %v2950, %v3301
        %v3610 = vadd.f32 %v2951, %v3303
        %v3611 = vadd.f32 %v2952, %v3513
        %v3612 = vadd.f32 %v2953, %v3307
        %v3613 = vadd.f32 %v2954, %v3309
        %v3614 = vadd.f32 %v2955, %v3518
        %v3615 = vadd.f32 %v2956, %v3313
        %v3616 = vadd.f32 %v2957, %v3315
        %v3617 = vadd.f32 %v2958, %v3523
        %v3618 = vadd.f32 %v2959, %v3319
        %v3619 = vadd.f32 %v2960, %v3321
        %v3620 = vadd.f32 %v2961, %v3528
        %v3621 = vadd.f32 %v2962, %v3325
        %v3622 = vadd.f32 %v2963, %v3327
        %v3623 = vadd.f32 %v2964, %v3533
        %v3624 = vadd.f32 %v2965, %v3331
        %v3625 = vadd.f32 %v2966, %v3333
        %v3626 = vadd.f32 %v2967, %v3538
        %v3627 = vadd.f32 %v2968, %v3337
        %v3628 = vadd.f32 %v2969, %v3339
        %v3629 = vadd.f32 %v2970, %v3543
        %v3714 = vrot.slane %v3546, 1
        %v3715 = vrot.slane %v3549, 1
        %v3716 = vsel %vm991, %v3714, %v3715
        %v3717 = vrot.slane %v3547, 1
        %v3718 = vrot.slane %v3550, 1
        %v3719 = vsel %vm991, %v3717, %v3718
        %v3720 = vrot.slane %v3548, 1
        %v3721 = vrot.slane %v3551, 1
        %v3722 = vsel %vm991, %v3720, %v3721
        %v3723 = vrot.slane %v3552, 1
        %v3724 = vsel %vm991, %v3715, %v3723
        %v3725 = vrot.slane %v3553, 1
        %v3726 = vsel %vm991, %v3718, %v3725
        %v3727 = vrot.slane %v3554, 1
        %v3728 = vsel %vm991, %v3721, %v3727
        %v3729 = vrot.slane %v3555, 1
        %v3730 = vsel %vm991, %v3723, %v3729
        %v3731 = vrot.slane %v3556, 1
        %v3732 = vsel %vm991, %v3725, %v3731
        %v3733 = vrot.slane %v3557, 1
        %v3734 = vsel %vm991, %v3727, %v3733
        %v3735 = vrot.slane %v3558, 1
        %v3736 = vsel %vm991, %v3729, %v3735
        %v3737 = vrot.slane %v3559, 1
        %v3738 = vsel %vm991, %v3731, %v3737
        %v3739 = vrot.slane %v3560, 1
        %v3740 = vsel %vm991, %v3733, %v3739
        %v3741 = vrot.slane %v3561, 1
        %v3742 = vsel %vm991, %v3735, %v3741
        %v3743 = vrot.slane %v3562, 1
        %v3744 = vsel %vm991, %v3737, %v3743
        %v3745 = vrot.slane %v3563, 1
        %v3746 = vsel %vm991, %v3739, %v3745
        %v3747 = vrot.slane %v3564, 1
        %v3748 = vsel %vm991, %v3741, %v3747
        %v3749 = vrot.slane %v3565, 1
        %v3750 = vsel %vm991, %v3743, %v3749
        %v3751 = vrot.slane %v3566, 1
        %v3752 = vsel %vm991, %v3745, %v3751
        %v3753 = vrot.slane %v3567, 1
        %v3754 = vsel %vm991, %v3747, %v3753
        %v3755 = vrot.slane %v3568, 1
        %v3756 = vsel %vm991, %v3749, %v3755
        %v3757 = vrot.slane %v3569, 1
        %v3758 = vsel %vm991, %v3751, %v3757
        %v3759 = vrot.slane %v3570, 1
        %v3760 = vsel %vm991, %v3753, %v3759
        %v3761 = vrot.slane %v3571, 1
        %v3762 = vsel %vm991, %v3755, %v3761
        %v3763 = vrot.slane %v3572, 1
        %v3764 = vsel %vm991, %v3757, %v3763
        %v3765 = vrot.slane %v3573, 1
        %v3766 = vsel %vm991, %v3759, %v3765
        %v3767 = vrot.slane %v3574, 1
        %v3768 = vsel %vm991, %v3761, %v3767
        %v3769 = vrot.slane %v3575, 1
        %v3770 = vsel %vm991, %v3763, %v3769
        %v3771 = vrot.slane %v3576, 1
        %v3772 = vsel %vm991, %v3765, %v3771
        %v3773 = vrot.slane %v3577, 1
        %v3774 = vsel %vm991, %v3767, %v3773
        %v3775 = vrot.slane %v3578, 1
        %v3776 = vsel %vm991, %v3769, %v3775
        %v3777 = vrot.slane %v3579, 1
        %v3778 = vsel %vm991, %v3771, %v3777
        %v3779 = vrot.slane %v3580, 1
        %v3780 = vsel %vm991, %v3773, %v3779
        %v3781 = vrot.slane %v3581, 1
        %v3782 = vsel %vm991, %v3775, %v3781
        %v3783 = vrot.slane %v3582, 1
        %v3784 = vsel %vm991, %v3777, %v3783
        %v3785 = vrot.slane %v3583, 1
        %v3786 = vsel %vm991, %v3779, %v3785
        %v3787 = vrot.slane %v3584, 1
        %v3788 = vsel %vm991, %v3781, %v3787
        %v3789 = vrot.slane %v3585, 1
        %v3790 = vsel %vm991, %v3783, %v3789
        %v3791 = vrot.slane %v3586, 1
        %v3792 = vsel %vm991, %v3785, %v3791
        %v3793 = vrot.slane %v3587, 1
        %v3794 = vsel %vm991, %v3787, %v3793
        %v3795 = vrot.slane %v3588, 1
        %v3796 = vsel %vm991, %v3789, %v3795
        %v3797 = vrot.slane %v3589, 1
        %v3798 = vsel %vm991, %v3791, %v3797
        %v3799 = vrot.slane %v3590, 1
        %v3800 = vsel %vm991, %v3793, %v3799
        %v3801 = vrot.slane %v3591, 1
        %v3802 = vsel %vm991, %v3795, %v3801
        %v3803 = vrot.slane %v3592, 1
        %v3804 = vsel %vm991, %v3797, %v3803
        %v3805 = vrot.slane %v3593, 1
        %v3806 = vsel %vm991, %v3799, %v3805
        %v3807 = vrot.slane %v3594, 1
        %v3808 = vsel %vm991, %v3801, %v3807
        %v3809 = vrot.slane %v3595, 1
        %v3810 = vsel %vm991, %v3803, %v3809
        %v3811 = vrot.slane %v3596, 1
        %v3812 = vsel %vm991, %v3805, %v3811
        %v3813 = vrot.slane %v3597, 1
        %v3814 = vsel %vm991, %v3807, %v3813
        %v3815 = vrot.slane %v3598, 1
        %v3816 = vsel %vm991, %v3809, %v3815
        %v3817 = vrot.slane %v3599, 1
        %v3818 = vsel %vm991, %v3811, %v3817
        %v3819 = vrot.slane %v3600, 1
        %v3820 = vsel %vm991, %v3813, %v3819
        %v3821 = vrot.slane %v3601, 1
        %v3822 = vsel %vm991, %v3815, %v3821
        %v3823 = vrot.slane %v3602, 1
        %v3824 = vsel %vm991, %v3817, %v3823
        %v3825 = vrot.slane %v3603, 1
        %v3826 = vsel %vm991, %v3819, %v3825
        %v3827 = vrot.slane %v3604, 1
        %v3828 = vsel %vm991, %v3821, %v3827
        %v3829 = vrot.slane %v3605, 1
        %v3830 = vsel %vm991, %v3823, %v3829
        %v3831 = vrot.slane %v3606, 1
        %v3832 = vsel %vm991, %v3825, %v3831
        %v3833 = vrot.slane %v3607, 1
        %v3834 = vsel %vm991, %v3827, %v3833
        %v3835 = vrot.slane %v3608, 1
        %v3836 = vsel %vm991, %v3829, %v3835
        %v3837 = vrot.slane %v3609, 1
        %v3838 = vsel %vm991, %v3831, %v3837
        %v3839 = vrot.slane %v3610, 1
        %v3840 = vsel %vm991, %v3833, %v3839
        %v3841 = vrot.slane %v3611, 1
        %v3842 = vsel %vm991, %v3835, %v3841
        %v3843 = vrot.slane %v3612, 1
        %v3844 = vsel %vm991, %v3837, %v3843
        %v3845 = vrot.slane %v3613, 1
        %v3846 = vsel %vm991, %v3839, %v3845
        %v3847 = vrot.slane %v3614, 1
        %v3848 = vsel %vm991, %v3841, %v3847
        %v3849 = vrot.slane %v3615, 1
        %v3850 = vsel %vm991, %v3843, %v3849
        %v3851 = vrot.slane %v3616, 1
        %v3852 = vsel %vm991, %v3845, %v3851
        %v3853 = vrot.slane %v3617, 1
        %v3854 = vsel %vm991, %v3847, %v3853
        %v3855 = vrot.slane %v3618, 1
        %v3856 = vsel %vm991, %v3849, %v3855
        %v3857 = vrot.slane %v3619, 1
        %v3858 = vsel %vm991, %v3851, %v3857
        %v3859 = vrot.slane %v3620, 1
        %v3860 = vsel %vm991, %v3853, %v3859
        %v3861 = vrot.slane %v3621, 1
        %v3862 = vsel %vm991, %v3855, %v3861
        %v3863 = vrot.slane %v3622, 1
        %v3864 = vsel %vm991, %v3857, %v3863
        %v3865 = vrot.slane %v3623, 1
        %v3866 = vsel %vm991, %v3859, %v3865
        %v3867 = vrot.slane %v3624, 1
        %v3868 = vsel %vm991, %v3861, %v3867
        %v3869 = vrot.slane %v3625, 1
        %v3870 = vsel %vm991, %v3863, %v3869
        %v3871 = vrot.slane %v3626, 1
        %v3872 = vsel %vm991, %v3865, %v3871
        %v3873 = vrot.slane %v3627, 1
        %v3874 = vsel %vm991, %v3867, %v3873
        %v3875 = vrot.slane %v3628, 1
        %v3876 = vsel %vm991, %v3869, %v3875
        %v3877 = vrot.slane %v3629, 1
        %v3878 = vsel %vm991, %v3871, %v3877
        %v3966 = vsel %vm991, %v3873, %v3714
        %v3967 = vsel %vm991, %v3875, %v3717
        %v3968 = vsel %vm991, %v3877, %v3720
        %v3969 = vmax.f32 %v3546, %v3716
        %v3970 = vmax.f32 %v3547, %v3719
        %v3971 = vmax.f32 %v3548, %v3722
        %v3972 = vmax.f32 %v3549, %v3724
        %v3973 = vmax.f32 %v3550, %v3726
        %v3974 = vmax.f32 %v3551, %v3728
        %v3975 = vmax.f32 %v3552, %v3730
        %v3976 = vmax.f32 %v3553, %v3732
        %v3977 = vmax.f32 %v3554, %v3734
        %v3978 = vmax.f32 %v3555, %v3736
        %v3979 = vmax.f32 %v3556, %v3738
        %v3980 = vmax.f32 %v3557, %v3740
        %v3981 = vmax.f32 %v3558, %v3742
        %v3982 = vmax.f32 %v3559, %v3744
        %v3983 = vmax.f32 %v3560, %v3746
        %v3984 = vmax.f32 %v3561, %v3748
        %v3985 = vmax.f32 %v3562, %v3750
        %v3986 = vmax.f32 %v3563, %v3752
        %v3987 = vmax.f32 %v3564, %v3754
        %v3988 = vmax.f32 %v3565, %v3756
        %v3989 = vmax.f32 %v3566, %v3758
        %v3990 = vmax.f32 %v3567, %v3760
        %v3991 = vmax.f32 %v3568, %v3762
        %v3992 = vmax.f32 %v3569, %v3764
        %v3993 = vmax.f32 %v3570, %v3766
        %v3994 = vmax.f32 %v3571, %v3768
        %v3995 = vmax.f32 %v3572, %v3770
        %v3996 = vmax.f32 %v3573, %v3772
        %v3997 = vmax.f32 %v3574, %v3774
        %v3998 = vmax.f32 %v3575, %v3776
        %v3999 = vmax.f32 %v3576, %v3778
        %v4000 = vmax.f32 %v3577, %v3780
        %v4001 = vmax.f32 %v3578, %v3782
        %v4002 = vmax.f32 %v3579, %v3784
        %v4003 = vmax.f32 %v3580, %v3786
        %v4004 = vmax.f32 %v3581, %v3788
        %v4005 = vmax.f32 %v3582, %v3790
        %v4006 = vmax.f32 %v3583, %v3792
        %v4007 = vmax.f32 %v3584, %v3794
        %v4008 = vmax.f32 %v3585, %v3796
        %v4009 = vmax.f32 %v3586, %v3798
        %v4010 = vmax.f32 %v3587, %v3800
        %v4011 = vmax.f32 %v3588, %v3802
        %v4012 = vmax.f32 %v3589, %v3804
        %v4013 = vmax.f32 %v3590, %v3806
        %v4014 = vmax.f32 %v3591, %v3808
        %v4015 = vmax.f32 %v3592, %v3810
        %v4016 = vmax.f32 %v3593, %v3812
        %v4017 = vmax.f32 %v3594, %v3814
        %v4018 = vmax.f32 %v3595, %v3816
        %v4019 = vmax.f32 %v3596, %v3818
        %v4020 = vmax.f32 %v3597, %v3820
        %v4021 = vmax.f32 %v3598, %v3822
        %v4022 = vmax.f32 %v3599, %v3824
        %v4023 = vmax.f32 %v3600, %v3826
        %v4024 = vmax.f32 %v3601, %v3828
        %v4025 = vmax.f32 %v3602, %v3830
        %v4026 = vmax.f32 %v3603, %v3832
        %v4027 = vmax.f32 %v3604, %v3834
        %v4028 = vmax.f32 %v3605, %v3836
        %v4029 = vmax.f32 %v3606, %v3838
        %v4030 = vmax.f32 %v3607, %v3840
        %v4031 = vmax.f32 %v3608, %v3842
        %v4032 = vmax.f32 %v3609, %v3844
        %v4033 = vmax.f32 %v3610, %v3846
        %v4034 = vmax.f32 %v3611, %v3848
        %v4035 = vmax.f32 %v3612, %v3850
        %v4036 = vmax.f32 %v3613, %v3852
        %v4037 = vmax.f32 %v3614, %v3854
        %v4038 = vmax.f32 %v3615, %v3856
        %v4039 = vmax.f32 %v3616, %v3858
        %v4040 = vmax.f32 %v3617, %v3860
        %v4041 = vmax.f32 %v3618, %v3862
        %v4042 = vmax.f32 %v3619, %v3864
        %v4043 = vmax.f32 %v3620, %v3866
        %v4044 = vmax.f32 %v3621, %v3868
        %v4045 = vmax.f32 %v3622, %v3870
        %v4046 = vmax.f32 %v3623, %v3872
        %v4047 = vmax.f32 %v3624, %v3874
        %v4048 = vmax.f32 %v3625, %v3876
        %v4049 = vmax.f32 %v3626, %v3878
        %v4050 = vmax.f32 %v3627, %v3966
        %v4051 = vmax.f32 %v3628, %v3967
        %v4052 = vmax.f32 %v3629, %v3968
        %4137 = vrot.lane.b32.xlu0 %v3969, 127
        %v4138 = vpop.permute.xlu0 %4137
        %4139 = vrot.lane.b32.xlu0 %v3970, 127
        %v4140 = vpop.permute.xlu0 %4139
        %4141 = vrot.lane.b32.xlu0 %v3971, 127
        %v4142 = vpop.permute.xlu0 %4141
        %4143 = vrot.lane.b32.xlu0 %v3972, 127
        %v4144 = vpop.permute.xlu0 %4143
        %4145 = vrot.lane.b32.xlu0 %v3973, 127
        %v4146 = vpop.permute.xlu0 %4145
        %4147 = vrot.lane.b32.xlu0 %v3974, 127
        %v4148 = vpop.permute.xlu0 %4147
        %4149 = vrot.lane.b32.xlu0 %v3975, 127
        %v4150 = vpop.permute.xlu0 %4149
        %4151 = vrot.lane.b32.xlu0 %v3976, 127
        %v4152 = vpop.permute.xlu0 %4151
        %4153 = vrot.lane.b32.xlu0 %v3977, 127
        %v4154 = vpop.permute.xlu0 %4153
        %4155 = vrot.lane.b32.xlu0 %v3978, 127
        %v4156 = vpop.permute.xlu0 %4155
        %4157 = vrot.lane.b32.xlu0 %v3979, 127
        %v4158 = vpop.permute.xlu0 %4157
        %4159 = vrot.lane.b32.xlu0 %v3980, 127
        %v4160 = vpop.permute.xlu0 %4159
        %4161 = vrot.lane.b32.xlu0 %v3981, 127
        %v4162 = vpop.permute.xlu0 %4161
        %4163 = vrot.lane.b32.xlu0 %v3982, 127
        %v4164 = vpop.permute.xlu0 %4163
        %4165 = vrot.lane.b32.xlu0 %v3983, 127
        %v4166 = vpop.permute.xlu0 %4165
        %4167 = vrot.lane.b32.xlu0 %v3984, 127
        %v4168 = vpop.permute.xlu0 %4167
        %4169 = vrot.lane.b32.xlu0 %v3985, 127
        %v4170 = vpop.permute.xlu0 %4169
        %4171 = vrot.lane.b32.xlu0 %v3986, 127
        %v4172 = vpop.permute.xlu0 %4171
        %4173 = vrot.lane.b32.xlu0 %v3987, 127
        %v4174 = vpop.permute.xlu0 %4173
        %4175 = vrot.lane.b32.xlu0 %v3988, 127
        %v4176 = vpop.permute.xlu0 %4175
        %4177 = vrot.lane.b32.xlu0 %v3989, 127
        %v4178 = vpop.permute.xlu0 %4177
        %4179 = vrot.lane.b32.xlu0 %v3990, 127
        %v4180 = vpop.permute.xlu0 %4179
        %4181 = vrot.lane.b32.xlu0 %v3991, 127
        %v4182 = vpop.permute.xlu0 %4181
        %4183 = vrot.lane.b32.xlu0 %v3992, 127
        %v4184 = vpop.permute.xlu0 %4183
        %4185 = vrot.lane.b32.xlu0 %v3993, 127
        %v4186 = vpop.permute.xlu0 %4185
        %4187 = vrot.lane.b32.xlu0 %v3994, 127
        %v4188 = vpop.permute.xlu0 %4187
        %4189 = vrot.lane.b32.xlu0 %v3995, 127
        %v4190 = vpop.permute.xlu0 %4189
        %4191 = vrot.lane.b32.xlu0 %v3996, 127
        %v4192 = vpop.permute.xlu0 %4191
        %4193 = vrot.lane.b32.xlu0 %v3997, 127
        %v4194 = vpop.permute.xlu0 %4193
        %4195 = vrot.lane.b32.xlu0 %v3998, 127
        %v4196 = vpop.permute.xlu0 %4195
        %4197 = vrot.lane.b32.xlu0 %v3999, 127
        %v4198 = vpop.permute.xlu0 %4197
        %4199 = vrot.lane.b32.xlu0 %v4000, 127
        %v4200 = vpop.permute.xlu0 %4199
        %4201 = vrot.lane.b32.xlu0 %v4001, 127
        %v4202 = vpop.permute.xlu0 %4201
        %4203 = vrot.lane.b32.xlu0 %v4002, 127
        %v4204 = vpop.permute.xlu0 %4203
        %4205 = vrot.lane.b32.xlu0 %v4003, 127
        %v4206 = vpop.permute.xlu0 %4205
        %4207 = vrot.lane.b32.xlu0 %v4004, 127
        %v4208 = vpop.permute.xlu0 %4207
        %4209 = vrot.lane.b32.xlu0 %v4005, 127
        %v4210 = vpop.permute.xlu0 %4209
        %4211 = vrot.lane.b32.xlu0 %v4006, 127
        %v4212 = vpop.permute.xlu0 %4211
        %4213 = vrot.lane.b32.xlu0 %v4007, 127
        %v4214 = vpop.permute.xlu0 %4213
        %4215 = vrot.lane.b32.xlu0 %v4008, 127
        %v4216 = vpop.permute.xlu0 %4215
        %4217 = vrot.lane.b32.xlu0 %v4009, 127
        %v4218 = vpop.permute.xlu0 %4217
        %4219 = vrot.lane.b32.xlu0 %v4010, 127
        %v4220 = vpop.permute.xlu0 %4219
        %4221 = vrot.lane.b32.xlu0 %v4011, 127
        %v4222 = vpop.permute.xlu0 %4221
        %4223 = vrot.lane.b32.xlu0 %v4012, 127
        %v4224 = vpop.permute.xlu0 %4223
        %4225 = vrot.lane.b32.xlu0 %v4013, 127
        %v4226 = vpop.permute.xlu0 %4225
        %4227 = vrot.lane.b32.xlu0 %v4014, 127
        %v4228 = vpop.permute.xlu0 %4227
        %4229 = vrot.lane.b32.xlu0 %v4015, 127
        %v4230 = vpop.permute.xlu0 %4229
        %4231 = vrot.lane.b32.xlu0 %v4016, 127
        %v4232 = vpop.permute.xlu0 %4231
        %4233 = vrot.lane.b32.xlu0 %v4017, 127
        %v4234 = vpop.permute.xlu0 %4233
        %4235 = vrot.lane.b32.xlu0 %v4018, 127
        %v4236 = vpop.permute.xlu0 %4235
        %4237 = vrot.lane.b32.xlu0 %v4019, 127
        %v4238 = vpop.permute.xlu0 %4237
        %4239 = vrot.lane.b32.xlu0 %v4020, 127
        %v4240 = vpop.permute.xlu0 %4239
        %4241 = vrot.lane.b32.xlu0 %v4021, 127
        %v4242 = vpop.permute.xlu0 %4241
        %4243 = vrot.lane.b32.xlu0 %v4022, 127
        %v4244 = vpop.permute.xlu0 %4243
        %4245 = vrot.lane.b32.xlu0 %v4023, 127
        %v4246 = vpop.permute.xlu0 %4245
        %4247 = vrot.lane.b32.xlu0 %v4024, 127
        %v4248 = vpop.permute.xlu0 %4247
        %4249 = vrot.lane.b32.xlu0 %v4025, 127
        %v4250 = vpop.permute.xlu0 %4249
        %4251 = vrot.lane.b32.xlu0 %v4026, 127
        %v4252 = vpop.permute.xlu0 %4251
        %4253 = vrot.lane.b32.xlu0 %v4027, 127
        %v4254 = vpop.permute.xlu0 %4253
        %4255 = vrot.lane.b32.xlu0 %v4028, 127
        %v4256 = vpop.permute.xlu0 %4255
        %4257 = vrot.lane.b32.xlu0 %v4029, 127
        %v4258 = vpop.permute.xlu0 %4257
        %4259 = vrot.lane.b32.xlu0 %v4030, 127
        %v4260 = vpop.permute.xlu0 %4259
        %4261 = vrot.lane.b32.xlu0 %v4031, 127
        %v4262 = vpop.permute.xlu0 %4261
        %4263 = vrot.lane.b32.xlu0 %v4032, 127
        %v4264 = vpop.permute.xlu0 %4263
        %4265 = vrot.lane.b32.xlu0 %v4033, 127
        %v4266 = vpop.permute.xlu0 %4265
        %4267 = vrot.lane.b32.xlu0 %v4034, 127
        %v4268 = vpop.permute.xlu0 %4267
        %4269 = vrot.lane.b32.xlu0 %v4035, 127
        %v4270 = vpop.permute.xlu0 %4269
        %4271 = vrot.lane.b32.xlu0 %v4036, 127
        %v4272 = vpop.permute.xlu0 %4271
        %4273 = vrot.lane.b32.xlu0 %v4037, 127
        %v4274 = vpop.permute.xlu0 %4273
        %4275 = vrot.lane.b32.xlu0 %v4038, 127
        %v4276 = vpop.permute.xlu0 %4275
        %4277 = vrot.lane.b32.xlu0 %v4039, 127
        %v4278 = vpop.permute.xlu0 %4277
        %4279 = vrot.lane.b32.xlu0 %v4040, 127
        %v4280 = vpop.permute.xlu0 %4279
        %4281 = vrot.lane.b32.xlu0 %v4041, 127
        %v4282 = vpop.permute.xlu0 %4281
        %4283 = vrot.lane.b32.xlu0 %v4042, 127
        %v4284 = vpop.permute.xlu0 %4283
        %4285 = vrot.lane.b32.xlu0 %v4043, 127
        %v4286 = vpop.permute.xlu0 %4285
        %4287 = vrot.lane.b32.xlu0 %v4044, 127
        %v4288 = vpop.permute.xlu0 %4287
        %4289 = vrot.lane.b32.xlu0 %v4045, 127
        %v4290 = vpop.permute.xlu0 %4289
        %4291 = vrot.lane.b32.xlu0 %v4046, 127
        %v4292 = vpop.permute.xlu0 %4291
        %4293 = vrot.lane.b32.xlu0 %v4047, 127
        %v4294 = vpop.permute.xlu0 %4293
        %4295 = vrot.lane.b32.xlu0 %v4048, 127
        %v4296 = vpop.permute.xlu0 %4295
        %4297 = vrot.lane.b32.xlu0 %v4049, 127
        %v4298 = vpop.permute.xlu0 %4297
        %4299 = vrot.lane.b32.xlu0 %v4050, 127
        %v4300 = vpop.permute.xlu0 %4299
        %4301 = vrot.lane.b32.xlu0 %v4051, 127
        %v4302 = vpop.permute.xlu0 %4301
        %4303 = vrot.lane.b32.xlu0 %v4052, 127
        %v4304 = vpop.permute.xlu0 %4303
        %vm4305 = vcmask 1039360
        %v4306 = vsel %vm4305, %v4138, %v4140
        %v4307 = vsel %vm4305, %v4140, %v4142
        %v4308 = vsel %vm4305, %v4144, %v4146
        %v4309 = vsel %vm4305, %v4146, %v4148
        %v4310 = vsel %vm4305, %v4150, %v4152
        %v4311 = vsel %vm4305, %v4152, %v4154
        %v4312 = vsel %vm4305, %v4156, %v4158
        %v4313 = vsel %vm4305, %v4158, %v4160
        %v4314 = vsel %vm4305, %v4162, %v4164
        %v4315 = vsel %vm4305, %v4164, %v4166
        %v4316 = vsel %vm4305, %v4168, %v4170
        %v4317 = vsel %vm4305, %v4170, %v4172
        %v4318 = vsel %vm4305, %v4174, %v4176
        %v4319 = vsel %vm4305, %v4176, %v4178
        %v4320 = vsel %vm4305, %v4180, %v4182
        %v4321 = vsel %vm4305, %v4182, %v4184
        %v4322 = vsel %vm4305, %v4186, %v4188
        %v4323 = vsel %vm4305, %v4188, %v4190
        %v4324 = vsel %vm4305, %v4192, %v4194
        %v4325 = vsel %vm4305, %v4194, %v4196
        %v4326 = vsel %vm4305, %v4198, %v4200
        %v4327 = vsel %vm4305, %v4200, %v4202
        %v4328 = vsel %vm4305, %v4204, %v4206
        %v4329 = vsel %vm4305, %v4206, %v4208
        %v4330 = vsel %vm4305, %v4210, %v4212
        %v4331 = vsel %vm4305, %v4212, %v4214
        %v4332 = vsel %vm4305, %v4216, %v4218
        %v4333 = vsel %vm4305, %v4218, %v4220
        %v4334 = vsel %vm4305, %v4222, %v4224
        %v4335 = vsel %vm4305, %v4224, %v4226
        %v4336 = vsel %vm4305, %v4228, %v4230
        %v4337 = vsel %vm4305, %v4230, %v4232
        %v4338 = vsel %vm4305, %v4234, %v4236
        %v4339 = vsel %vm4305, %v4236, %v4238
        %v4340 = vsel %vm4305, %v4240, %v4242
        %v4341 = vsel %vm4305, %v4242, %v4244
        %v4342 = vsel %vm4305, %v4246, %v4248
        %v4343 = vsel %vm4305, %v4248, %v4250
        %v4344 = vsel %vm4305, %v4252, %v4254
        %v4345 = vsel %vm4305, %v4254, %v4256
        %v4346 = vsel %vm4305, %v4258, %v4260
        %v4347 = vsel %vm4305, %v4260, %v4262
        %v4348 = vsel %vm4305, %v4264, %v4266
        %v4349 = vsel %vm4305, %v4266, %v4268
        %v4350 = vsel %vm4305, %v4270, %v4272
        %v4351 = vsel %vm4305, %v4272, %v4274
        %v4352 = vsel %vm4305, %v4276, %v4278
        %v4353 = vsel %vm4305, %v4278, %v4280
        %v4354 = vsel %vm4305, %v4282, %v4284
        %v4355 = vsel %vm4305, %v4284, %v4286
        %v4356 = vsel %vm4305, %v4288, %v4290
        %v4357 = vsel %vm4305, %v4290, %v4292
        %v4358 = vsel %vm4305, %v4294, %v4296
        %v4359 = vsel %vm4305, %v4296, %v4298
        %v4360 = vsel %vm4305, %v4300, %v4302
        %v4361 = vsel %vm4305, %v4302, %v4304
        %v4474 = vsel %vm4305, %v4142, %v4138
        %v4475 = vsel %vm4305, %v4148, %v4144
        %v4476 = vsel %vm4305, %v4154, %v4150
        %v4477 = vsel %vm4305, %v4160, %v4156
        %v4478 = vsel %vm4305, %v4166, %v4162
        %v4479 = vsel %vm4305, %v4172, %v4168
        %v4480 = vsel %vm4305, %v4178, %v4174
        %v4481 = vsel %vm4305, %v4184, %v4180
        %v4482 = vsel %vm4305, %v4190, %v4186
        %v4483 = vsel %vm4305, %v4196, %v4192
        %v4484 = vsel %vm4305, %v4202, %v4198
        %v4485 = vsel %vm4305, %v4208, %v4204
        %v4486 = vsel %vm4305, %v4214, %v4210
        %v4487 = vsel %vm4305, %v4220, %v4216
        %v4488 = vsel %vm4305, %v4226, %v4222
        %v4489 = vsel %vm4305, %v4232, %v4228
        %v4490 = vsel %vm4305, %v4238, %v4234
        %v4491 = vsel %vm4305, %v4244, %v4240
        %v4492 = vsel %vm4305, %v4250, %v4246
        %v4493 = vsel %vm4305, %v4256, %v4252
        %v4494 = vsel %vm4305, %v4262, %v4258
        %v4495 = vsel %vm4305, %v4268, %v4264
        %v4496 = vsel %vm4305, %v4274, %v4270
        %v4497 = vsel %vm4305, %v4280, %v4276
        %v4498 = vsel %vm4305, %v4286, %v4282
        %v4499 = vsel %vm4305, %v4292, %v4288
        %v4500 = vsel %vm4305, %v4298, %v4294
        %v4501 = vsel %vm4305, %v4304, %v4300
        %v4502 = vmax.f32 %v3969, %v4306
        %v4503 = vmax.f32 %v3970, %v4307
        %v4504 = vmax.f32 %v3971, %v4474
        %v4505 = vmax.f32 %v3972, %v4308
        %v4506 = vmax.f32 %v3973, %v4309
        %v4507 = vmax.f32 %v3974, %v4475
        %v4508 = vmax.f32 %v3975, %v4310
        %v4509 = vmax.f32 %v3976, %v4311
        %v4510 = vmax.f32 %v3977, %v4476
        %v4511 = vmax.f32 %v3978, %v4312
        %v4512 = vmax.f32 %v3979, %v4313
        %v4513 = vmax.f32 %v3980, %v4477
        %v4514 = vmax.f32 %v3981, %v4314
        %v4515 = vmax.f32 %v3982, %v4315
        %v4516 = vmax.f32 %v3983, %v4478
        %v4517 = vmax.f32 %v3984, %v4316
        %v4518 = vmax.f32 %v3985, %v4317
        %v4519 = vmax.f32 %v3986, %v4479
        %v4520 = vmax.f32 %v3987, %v4318
        %v4521 = vmax.f32 %v3988, %v4319
        %v4522 = vmax.f32 %v3989, %v4480
        %v4523 = vmax.f32 %v3990, %v4320
        %v4524 = vmax.f32 %v3991, %v4321
        %v4525 = vmax.f32 %v3992, %v4481
        %v4526 = vmax.f32 %v3993, %v4322
        %v4527 = vmax.f32 %v3994, %v4323
        %v4528 = vmax.f32 %v3995, %v4482
        %v4529 = vmax.f32 %v3996, %v4324
        %v4530 = vmax.f32 %v3997, %v4325
        %v4531 = vmax.f32 %v3998, %v4483
        %v4532 = vmax.f32 %v3999, %v4326
        %v4533 = vmax.f32 %v4000, %v4327
        %v4534 = vmax.f32 %v4001, %v4484
        %v4535 = vmax.f32 %v4002, %v4328
        %v4536 = vmax.f32 %v4003, %v4329
        %v4537 = vmax.f32 %v4004, %v4485
        %v4538 = vmax.f32 %v4005, %v4330
        %v4539 = vmax.f32 %v4006, %v4331
        %v4540 = vmax.f32 %v4007, %v4486
        %v4541 = vmax.f32 %v4008, %v4332
        %v4542 = vmax.f32 %v4009, %v4333
        %v4543 = vmax.f32 %v4010, %v4487
        %v4544 = vmax.f32 %v4011, %v4334
        %v4545 = vmax.f32 %v4012, %v4335
        %v4546 = vmax.f32 %v4013, %v4488
        %v4547 = vmax.f32 %v4014, %v4336
        %v4548 = vmax.f32 %v4015, %v4337
        %v4549 = vmax.f32 %v4016, %v4489
        %v4550 = vmax.f32 %v4017, %v4338
        %v4551 = vmax.f32 %v4018, %v4339
        %v4552 = vmax.f32 %v4019, %v4490
        %v4553 = vmax.f32 %v4020, %v4340
        %v4554 = vmax.f32 %v4021, %v4341
        %v4555 = vmax.f32 %v4022, %v4491
        %v4556 = vmax.f32 %v4023, %v4342
        %v4557 = vmax.f32 %v4024, %v4343
        %v4558 = vmax.f32 %v4025, %v4492
        %v4559 = vmax.f32 %v4026, %v4344
        %v4560 = vmax.f32 %v4027, %v4345
        %v4561 = vmax.f32 %v4028, %v4493
        %v4562 = vmax.f32 %v4029, %v4346
        %v4563 = vmax.f32 %v4030, %v4347
        %v4564 = vmax.f32 %v4031, %v4494
        %v4565 = vmax.f32 %v4032, %v4348
        %v4566 = vmax.f32 %v4033, %v4349
        %v4567 = vmax.f32 %v4034, %v4495
        %v4568 = vmax.f32 %v4035, %v4350
        %v4569 = vmax.f32 %v4036, %v4351
        %v4570 = vmax.f32 %v4037, %v4496
        %v4571 = vmax.f32 %v4038, %v4352
        %v4572 = vmax.f32 %v4039, %v4353
        %v4573 = vmax.f32 %v4040, %v4497
        %v4574 = vmax.f32 %v4041, %v4354
        %v4575 = vmax.f32 %v4042, %v4355
        %v4576 = vmax.f32 %v4043, %v4498
        %v4577 = vmax.f32 %v4044, %v4356
        %v4578 = vmax.f32 %v4045, %v4357
        %v4579 = vmax.f32 %v4046, %v4499
        %v4580 = vmax.f32 %v4047, %v4358
        %v4581 = vmax.f32 %v4048, %v4359
        %v4582 = vmax.f32 %v4049, %v4500
        %v4583 = vmax.f32 %v4050, %v4360
        %v4584 = vmax.f32 %v4051, %v4361
        %v4585 = vmax.f32 %v4052, %v4501
        %v4586 = vtanh.pop %v4502
        %v4587 = vtanh.pop %v4503
        %v4588 = vtanh.pop %v4504
        %v4589 = vtanh.pop %v4505
        %v4590 = vtanh.pop %v4506
        %v4591 = vtanh.pop %v4507
        %v4592 = vtanh.pop %v4508
        %v4593 = vtanh.pop %v4509
        %v4594 = vtanh.pop %v4510
        %v4595 = vtanh.pop %v4511
        %v4596 = vtanh.pop %v4512
        %v4597 = vtanh.pop %v4513
        %v4598 = vtanh.pop %v4514
        %v4599 = vtanh.pop %v4515
        %v4600 = vtanh.pop %v4516
        %v4601 = vtanh.pop %v4517
        %v4602 = vtanh.pop %v4518
        %v4603 = vtanh.pop %v4519
        %v4604 = vtanh.pop %v4520
        %v4605 = vtanh.pop %v4521
        %v4606 = vtanh.pop %v4522
        %v4607 = vtanh.pop %v4523
        %v4608 = vtanh.pop %v4524
        %v4609 = vtanh.pop %v4525
        %v4610 = vtanh.pop %v4526
        %v4611 = vtanh.pop %v4527
        %v4612 = vtanh.pop %v4528
        %v4613 = vtanh.pop %v4529
        %v4614 = vtanh.pop %v4530
        %v4615 = vtanh.pop %v4531
        %v4616 = vtanh.pop %v4532
        %v4617 = vtanh.pop %v4533
        %v4618 = vtanh.pop %v4534
        %v4619 = vtanh.pop %v4535
        %v4620 = vtanh.pop %v4536
        %v4621 = vtanh.pop %v4537
        %v4622 = vtanh.pop %v4538
        %v4623 = vtanh.pop %v4539
        %v4624 = vtanh.pop %v4540
        %v4625 = vtanh.pop %v4541
        %v4626 = vtanh.pop %v4542
        %v4627 = vtanh.pop %v4543
        %v4628 = vtanh.pop %v4544
        %v4629 = vtanh.pop %v4545
        %v4630 = vtanh.pop %v4546
        %v4631 = vtanh.pop %v4547
        %v4632 = vtanh.pop %v4548
        %v4633 = vtanh.pop %v4549
        %v4634 = vtanh.pop %v4550
        %v4635 = vtanh.pop %v4551
        %v4636 = vtanh.pop %v4552
        %v4637 = vtanh.pop %v4553
        %v4638 = vtanh.pop %v4554
        %v4639 = vtanh.pop %v4555
        %v4640 = vtanh.pop %v4556
        %v4641 = vtanh.pop %v4557
        %v4642 = vtanh.pop %v4558
        %v4643 = vtanh.pop %v4559
        %v4644 = vtanh.pop %v4560
        %v4645 = vtanh.pop %v4561
        %v4646 = vtanh.pop %v4562
        %v4647 = vtanh.pop %v4563
        %v4648 = vtanh.pop %v4564
        %v4649 = vtanh.pop %v4565
        %v4650 = vtanh.pop %v4566
        %v4651 = vtanh.pop %v4567
        %v4652 = vtanh.pop %v4568
        %v4653 = vtanh.pop %v4569
        %v4654 = vtanh.pop %v4570
        %v4655 = vtanh.pop %v4571
        %v4656 = vtanh.pop %v4572
        %v4657 = vtanh.pop %v4573
        %v4658 = vtanh.pop %v4574
        %v4659 = vtanh.pop %v4575
        %v4660 = vtanh.pop %v4576
        %v4661 = vtanh.pop %v4577
        %v4662 = vtanh.pop %v4578
        %v4663 = vtanh.pop %v4579
        %v4664 = vtanh.pop %v4580
        %v4665 = vtanh.pop %v4581
        %v4666 = vtanh.pop %v4582
        %v4667 = vtanh.pop %v4583
        %v4668 = vtanh.pop %v4584
        %v4669 = vtanh.pop %v4585
        %v4670 = vpack.c.bf16 %v4589, %v4586
        %v4671 = vpack.c.bf16 %v4590, %v4587
        %v4672 = vpack.c.bf16 %v4591, %v4588
        %v4673 = vpack.c.bf16 %v4595, %v4592
        %v4674 = vpack.c.bf16 %v4596, %v4593
        %v4675 = vpack.c.bf16 %v4597, %v4594
        %v4676 = vpack.c.bf16 %v4601, %v4598
        %v4677 = vpack.c.bf16 %v4602, %v4599
        %v4678 = vpack.c.bf16 %v4603, %v4600
        %v4679 = vpack.c.bf16 %v4607, %v4604
        %v4680 = vpack.c.bf16 %v4608, %v4605
        %v4681 = vpack.c.bf16 %v4609, %v4606
        %v4682 = vpack.c.bf16 %v4613, %v4610
        %v4683 = vpack.c.bf16 %v4614, %v4611
        %v4684 = vpack.c.bf16 %v4615, %v4612
        %v4685 = vpack.c.bf16 %v4619, %v4616
        %v4686 = vpack.c.bf16 %v4620, %v4617
        %v4687 = vpack.c.bf16 %v4621, %v4618
        %v4688 = vpack.c.bf16 %v4625, %v4622
        %v4689 = vpack.c.bf16 %v4626, %v4623
        %v4690 = vpack.c.bf16 %v4627, %v4624
        %v4691 = vpack.c.bf16 %v4631, %v4628
        %v4692 = vpack.c.bf16 %v4632, %v4629
        %v4693 = vpack.c.bf16 %v4633, %v4630
        %v4694 = vpack.c.bf16 %v4637, %v4634
        %v4695 = vpack.c.bf16 %v4638, %v4635
        %v4696 = vpack.c.bf16 %v4639, %v4636
        %v4697 = vpack.c.bf16 %v4643, %v4640
        %v4698 = vpack.c.bf16 %v4644, %v4641
        %v4699 = vpack.c.bf16 %v4645, %v4642
        %v4700 = vpack.c.bf16 %v4649, %v4646
        %v4701 = vpack.c.bf16 %v4650, %v4647
        %v4702 = vpack.c.bf16 %v4651, %v4648
        %v4703 = vpack.c.bf16 %v4655, %v4652
        %v4704 = vpack.c.bf16 %v4656, %v4653
        %v4705 = vpack.c.bf16 %v4657, %v4654
        %v4706 = vpack.c.bf16 %v4661, %v4658
        %v4707 = vpack.c.bf16 %v4662, %v4659
        %v4708 = vpack.c.bf16 %v4663, %v4660
        %v4709 = vpack.c.bf16 %v4667, %v4664
        %v4710 = vpack.c.bf16 %v4668, %v4665
        %v4711 = vpack.c.bf16 %v4669, %v4666
        %v4712 = vld [vmem:[%s4] sm:$0x3]
        %v4713 = vld [vmem:[#allocation4] sm:$0xff]
        %v4714 = vld [vmem:[#allocation4 + $0x8] sm:$0xff]
        %v4715 = vld [vmem:[#allocation4 + $0x10] sm:$0xff]
        %v4716 = vld [vmem:[#allocation4 + $0x18] sm:$0xff]
        %v4717 = vld [vmem:[#allocation4 + $0x20] sm:$0xff]
        %v4718 = vld [vmem:[#allocation4 + $0x28] sm:$0xff]
        %v4719 = vld [vmem:[#allocation4 + $0x30] sm:$0xff]
        %v4720 = vld [vmem:[#allocation4 + $0x38] sm:$0xff]
        %v4721 = vld [vmem:[#allocation4 + $0x40] sm:$0xff]
        %v4722 = vld [vmem:[#allocation4 + $0x48] sm:$0xff]
        %v4723 = vld [vmem:[#allocation4 + $0x50] sm:$0xff]
        %v4724 = vld [vmem:[#allocation4 + $0x58] sm:$0xff]
        %v4725 = vld [vmem:[#allocation4 + $0x60] sm:$0xff]
        %v4726 = vld [vmem:[#allocation4 + $0x68] sm:$0xff]
        %v4727 = vld [vmem:[#allocation4 + $0x70] sm:$0xff]
        %v4728 = vld [vmem:[#allocation4 + $0x78] sm:$0xff]
        %v4729 = vld [vmem:[#allocation4 + $0x80] sm:$0xff]
        %v4730 = vld [vmem:[#allocation4 + $0x88] sm:$0xff]
        %v4731 = vld [vmem:[#allocation4 + $0x90] sm:$0xff]
        %v4732 = vld [vmem:[#allocation4 + $0x98] sm:$0xff]
        %v4733 = vld [vmem:[#allocation4 + $0xa0] sm:$0xff]
        %v4734 = vld [vmem:[#allocation4 + $0xa8] sm:$0xff]
        %v4735 = vld [vmem:[#allocation4 + $0xb0] sm:$0xff]
        %v4736 = vld [vmem:[#allocation4 + $0xb8] sm:$0xff]
        %v4737 = vld [vmem:[#allocation4 + $0xc0] sm:$0xff]
        %v4738 = vld [vmem:[#allocation4 + $0xc8] sm:$0xff]
        %v4739 = vld [vmem:[#allocation4 + $0xd0] sm:$0xff]
        %v4740 = vld [vmem:[#allocation4 + $0xd8] sm:$0xff]
        %v4741 = vld [vmem:[#allocation4 + $0xe0] sm:$0xff]
        %v4742 = vld [vmem:[#allocation4 + $0xe8] sm:$0xff]
        %v4743 = vld [vmem:[#allocation4 + $0xf0] sm:$0xff]
        %v4744 = vld [vmem:[#allocation4 + $0xf8] sm:$0xff]
        %v4745 = vld [vmem:[#allocation4 + $0x100] sm:$0xff]
        %v4746 = vld [vmem:[#allocation4 + $0x108] sm:$0xff]
        %v4747 = vld [vmem:[#allocation4 + $0x110] sm:$0xff]
        %v4748 = vld [vmem:[#allocation4 + $0x118] sm:$0xff]
        %v4749 = vld [vmem:[#allocation4 + $0x120] sm:$0xff]
        %v4750 = vld [vmem:[#allocation4 + $0x128] sm:$0xff]
        %v4751 = vld [vmem:[#allocation4 + $0x130] sm:$0xff]
        %v4752 = vld [vmem:[#allocation4 + $0x138] sm:$0xff]
        %v4753 = vld [vmem:[#allocation4 + $0x140] sm:$0xff]
        %v4754 = vld [vmem:[#allocation4 + $0x148] sm:$0xff]
        %v4755 = vld [vmem:[#allocation4 + $0x150] sm:$0xff]
        %v4756 = vld [vmem:[#allocation4 + $0x158] sm:$0xff]
        %v4757 = vld [vmem:[#allocation4 + $0x160] sm:$0xff]
        %v4758 = vld [vmem:[#allocation4 + $0x168] sm:$0xff]
        %v4759 = vld [vmem:[#allocation4 + $0x170] sm:$0xff]
        %v4760 = vld [vmem:[#allocation4 + $0x178] sm:$0xff]
        %v4809 = vunpack.c.l.b16 %v4713
        %v4810 = vunpack.c.h.b16 %v4713
        %v4811 = vunpack.c.l.b16 %v4714
        %v4812 = vunpack.c.h.b16 %v4714
        %v4813 = vunpack.c.l.b16 %v4715
        %v4814 = vunpack.c.h.b16 %v4715
        %v4815 = vunpack.c.l.b16 %v4716
        %v4816 = vunpack.c.h.b16 %v4716
        %v4817 = vunpack.c.l.b16 %v4717
        %v4818 = vunpack.c.h.b16 %v4717
        %v4819 = vunpack.c.l.b16 %v4718
        %v4820 = vunpack.c.h.b16 %v4718
        %v4821 = vunpack.c.l.b16 %v4719
        %v4822 = vunpack.c.h.b16 %v4719
        %v4823 = vunpack.c.l.b16 %v4720
        %v4824 = vunpack.c.h.b16 %v4720
        %v4825 = vunpack.c.l.b16 %v4721
        %v4826 = vunpack.c.h.b16 %v4721
        %v4827 = vunpack.c.l.b16 %v4722
        %v4828 = vunpack.c.h.b16 %v4722
        %v4829 = vunpack.c.l.b16 %v4723
        %v4830 = vunpack.c.h.b16 %v4723
        %v4831 = vunpack.c.l.b16 %v4724
        %v4832 = vunpack.c.h.b16 %v4724
        %v4833 = vunpack.c.l.b16 %v4725
        %v4834 = vunpack.c.h.b16 %v4725
        %v4835 = vunpack.c.l.b16 %v4726
        %v4836 = vunpack.c.h.b16 %v4726
        %v4837 = vunpack.c.l.b16 %v4727
        %v4838 = vunpack.c.h.b16 %v4727
        %v4839 = vunpack.c.l.b16 %v4728
        %v4840 = vunpack.c.h.b16 %v4728
        %v4841 = vunpack.c.l.b16 %v4729
        %v4842 = vunpack.c.h.b16 %v4729
        %v4843 = vunpack.c.l.b16 %v4730
        %v4844 = vunpack.c.h.b16 %v4730
        %v4845 = vunpack.c.l.b16 %v4731
        %v4846 = vunpack.c.h.b16 %v4731
        %v4847 = vunpack.c.l.b16 %v4732
        %v4848 = vunpack.c.h.b16 %v4732
        %v4849 = vunpack.c.l.b16 %v4733
        %v4850 = vunpack.c.h.b16 %v4733
        %v4851 = vunpack.c.l.b16 %v4734
        %v4852 = vunpack.c.h.b16 %v4734
        %v4853 = vunpack.c.l.b16 %v4735
        %v4854 = vunpack.c.h.b16 %v4735
        %v4855 = vunpack.c.l.b16 %v4736
        %v4856 = vunpack.c.h.b16 %v4736
        %v4857 = vunpack.c.l.b16 %v4737
        %v4858 = vunpack.c.h.b16 %v4737
        %v4859 = vunpack.c.l.b16 %v4738
        %v4860 = vunpack.c.h.b16 %v4738
        %v4861 = vunpack.c.l.b16 %v4739
        %v4862 = vunpack.c.h.b16 %v4739
        %v4863 = vunpack.c.l.b16 %v4740
        %v4864 = vunpack.c.h.b16 %v4740
        %v4865 = vunpack.c.l.b16 %v4741
        %v4866 = vunpack.c.h.b16 %v4741
        %v4867 = vunpack.c.l.b16 %v4742
        %v4868 = vunpack.c.h.b16 %v4742
        %v4869 = vunpack.c.l.b16 %v4743
        %v4870 = vunpack.c.h.b16 %v4743
        %v4871 = vunpack.c.l.b16 %v4744
        %v4872 = vunpack.c.h.b16 %v4744
        %v4873 = vunpack.c.l.b16 %v4745
        %v4874 = vunpack.c.h.b16 %v4745
        %v4875 = vunpack.c.l.b16 %v4746
        %v4876 = vunpack.c.h.b16 %v4746
        %v4877 = vunpack.c.l.b16 %v4747
        %v4878 = vunpack.c.h.b16 %v4747
        %v4879 = vunpack.c.l.b16 %v4748
        %v4880 = vunpack.c.h.b16 %v4748
        %v4881 = vunpack.c.l.b16 %v4749
        %v4882 = vunpack.c.h.b16 %v4749
        %v4883 = vunpack.c.l.b16 %v4750
        %v4884 = vunpack.c.h.b16 %v4750
        %v4885 = vunpack.c.l.b16 %v4751
        %v4886 = vunpack.c.h.b16 %v4751
        %v4887 = vunpack.c.l.b16 %v4752
        %v4888 = vunpack.c.h.b16 %v4752
        %v4889 = vunpack.c.l.b16 %v4753
        %v4890 = vunpack.c.h.b16 %v4753
        %v4891 = vunpack.c.l.b16 %v4754
        %v4892 = vunpack.c.h.b16 %v4754
        %v4893 = vunpack.c.l.b16 %v4755
        %v4894 = vunpack.c.h.b16 %v4755
        %v4895 = vunpack.c.l.b16 %v4756
        %v4896 = vunpack.c.h.b16 %v4756
        %v4897 = vunpack.c.l.b16 %v4757
        %v4898 = vunpack.c.h.b16 %v4757
        %v4899 = vunpack.c.l.b16 %v4758
        %v4900 = vunpack.c.h.b16 %v4758
        %v4901 = vunpack.c.l.b16 %v4759
        %v4902 = vunpack.c.h.b16 %v4759
        %v4903 = vunpack.c.l.b16 %v4760
        %v4904 = vunpack.c.h.b16 %v4760
        %v4905 = vpack.c.b16 %v4811, %v4809
        %v4906 = vpack.c.b16 %v4812, %v4810
        %v4907 = vpack.c.b16 %v4815, %v4813
        %v4908 = vpack.c.b16 %v4816, %v4814
        %v4909 = vpack.c.b16 %v4819, %v4817
        %v4910 = vpack.c.b16 %v4820, %v4818
        %v4911 = vpack.c.b16 %v4823, %v4821
        %v4912 = vpack.c.b16 %v4824, %v4822
        %v4913 = vpack.c.b16 %v4827, %v4825
        %v4914 = vpack.c.b16 %v4828, %v4826
        %v4915 = vpack.c.b16 %v4831, %v4829
        %v4916 = vpack.c.b16 %v4832, %v4830
        %v4917 = vpack.c.b16 %v4835, %v4833
        %v4918 = vpack.c.b16 %v4836, %v4834
        %v4919 = vpack.c.b16 %v4839, %v4837
        %v4920 = vpack.c.b16 %v4840, %v4838
        %v4921 = vpack.c.b16 %v4843, %v4841
        %v4922 = vpack.c.b16 %v4844, %v4842
        %v4923 = vpack.c.b16 %v4847, %v4845
        %v4924 = vpack.c.b16 %v4848, %v4846
        %v4925 = vpack.c.b16 %v4851, %v4849
        %v4926 = vpack.c.b16 %v4852, %v4850
        %v4927 = vpack.c.b16 %v4855, %v4853
        %v4928 = vpack.c.b16 %v4856, %v4854
        %v4929 = vpack.c.b16 %v4859, %v4857
        %v4930 = vpack.c.b16 %v4860, %v4858
        %v4931 = vpack.c.b16 %v4863, %v4861
        %v4932 = vpack.c.b16 %v4864, %v4862
        %v4933 = vpack.c.b16 %v4867, %v4865
        %v4934 = vpack.c.b16 %v4868, %v4866
        %v4935 = vpack.c.b16 %v4871, %v4869
        %v4936 = vpack.c.b16 %v4872, %v4870
        %v4937 = vpack.c.b16 %v4875, %v4873
        %v4938 = vpack.c.b16 %v4876, %v4874
        %v4939 = vpack.c.b16 %v4879, %v4877
        %v4940 = vpack.c.b16 %v4880, %v4878
        %v4941 = vpack.c.b16 %v4883, %v4881
        %v4942 = vpack.c.b16 %v4884, %v4882
        %v4943 = vpack.c.b16 %v4887, %v4885
        %v4944 = vpack.c.b16 %v4888, %v4886
        %v4945 = vpack.c.b16 %v4891, %v4889
        %v4946 = vpack.c.b16 %v4892, %v4890
        %v4947 = vpack.c.b16 %v4895, %v4893
        %v4948 = vpack.c.b16 %v4896, %v4894
        %v4949 = vpack.c.b16 %v4899, %v4897
        %v4950 = vpack.c.b16 %v4900, %v4898
        %v4951 = vpack.c.b16 %v4903, %v4901
        %v4952 = vpack.c.b16 %v4904, %v4902
        %5001 = vmatprep.subr.bf16.mxu0 %v4920
        %5002 = vmatpush1.bf16.msra.mxu0 %v4919
        %5003 = vmatprep.subr.bf16.mxu0 %v4918
        %5004 = vmatpush1.bf16.msra.mxu0 %v4917
        %5005 = vmatprep.subr.bf16.mxu0 %v4916
        %5006 = vmatpush1.bf16.msra.mxu0 %v4915
        %5007 = vmatprep.subr.bf16.mxu0 %v4914
        %5008 = vmatpush1.bf16.msra.mxu0 %v4913
        %5009 = vmatprep.subr.bf16.mxu0 %v4912
        %5010 = vmatpush1.bf16.msra.mxu0 %v4911
        %5011 = vmatprep.subr.bf16.mxu0 %v4910
        %5012 = vmatpush1.bf16.msra.mxu0 %v4909
        %5013 = vmatprep.subr.bf16.mxu0 %v4908
        %5014 = vmatpush1.bf16.msra.mxu0 %v4907
        %5015 = vmatprep.subr.bf16.mxu0 %v4906
        %5016 = vmatpush1.bf16.msra.mxu0 %v4905
        %5017 = vmatprep.subr.bf16.mxu0 %v4936
        %5018 = vmatpush2.bf16.msra.mxu0 %v4935
        %5019 = vmatprep.subr.bf16.mxu0 %v4934
        %5020 = vmatpush2.bf16.msra.mxu0 %v4933
        %5021 = vmatprep.subr.bf16.mxu0 %v4932
        %5022 = vmatpush2.bf16.msra.mxu0 %v4931
        %5023 = vmatprep.subr.bf16.mxu0 %v4930
        %5024 = vmatpush2.bf16.msra.mxu0 %v4929
        %5025 = vmatprep.subr.bf16.mxu0 %v4928
        %5026 = vmatpush2.bf16.msra.mxu0 %v4927
        %5027 = vmatprep.subr.bf16.mxu0 %v4926
        %5028 = vmatpush2.bf16.msra.mxu0 %v4925
        %5029 = vmatprep.subr.bf16.mxu0 %v4924
        %5030 = vmatpush2.bf16.msra.mxu0 %v4923
        %5031 = vmatprep.subr.bf16.mxu0 %v4922
        %5032 = vmatpush2.bf16.msra.mxu0 %v4921
        %5033 = vmatprep.mubr.bf16.mxu0 %v4671
        %5034 = vmatmul.mubr.bf16.gmra.mxu0 %v4670
        %v5035 = vpop.f32.mrf.mxu0
        %v5036 = vadd.f32 0.0, %v5035
        %v5037 = vpop.f32.mrf.mxu0
        %v5038 = vadd.f32 0.0, %v5037
        %v5039 = vpop.f32.mrf.mxu0
        %v5040 = vadd.f32 0.0, %v5039
        %v5041 = vpop.f32.mrf.mxu0
        %v5042 = vadd.f32 0.0, %v5041
        %5043 = vmatprep.mubr.bf16.mxu0 %v4674
        %5044 = vmatmul.mubr.bf16.gmra.mxu0 %v4673
        %v5045 = vpop.f32.mrf.mxu0
        %v5046 = vadd.f32 0.0, %v5045
        %v5047 = vpop.f32.mrf.mxu0
        %v5048 = vadd.f32 0.0, %v5047
        %v5049 = vpop.f32.mrf.mxu0
        %v5050 = vadd.f32 0.0, %v5049
        %v5051 = vpop.f32.mrf.mxu0
        %v5052 = vadd.f32 0.0, %v5051
        %5053 = vmatprep.mubr.bf16.mxu0 %v4677
        %5054 = vmatmul.mubr.bf16.gmra.mxu0 %v4676
        %v5055 = vpop.f32.mrf.mxu0
        %v5056 = vadd.f32 0.0, %v5055
        %v5057 = vpop.f32.mrf.mxu0
        %v5058 = vadd.f32 0.0, %v5057
        %v5059 = vpop.f32.mrf.mxu0
        %v5060 = vadd.f32 0.0, %v5059
        %v5061 = vpop.f32.mrf.mxu0
        %v5062 = vadd.f32 0.0, %v5061
        %5063 = vmatprep.mubr.bf16.mxu0 %v4680
        %5064 = vmatmul.mubr.bf16.gmra.mxu0 %v4679
        %v5065 = vpop.f32.mrf.mxu0
        %v5066 = vadd.f32 0.0, %v5065
        %v5067 = vpop.f32.mrf.mxu0
        %v5068 = vadd.f32 0.0, %v5067
        %v5069 = vpop.f32.mrf.mxu0
        %v5070 = vadd.f32 0.0, %v5069
        %v5071 = vpop.f32.mrf.mxu0
        %v5072 = vadd.f32 0.0, %v5071
        %5073 = vmatprep.mubr.bf16.mxu0 %v4683
        %5074 = vmatmul.mubr.bf16.gmra.mxu0 %v4682
        %v5075 = vpop.f32.mrf.mxu0
        %v5076 = vadd.f32 0.0, %v5075
        %v5077 = vpop.f32.mrf.mxu0
        %v5078 = vadd.f32 0.0, %v5077
        %v5079 = vpop.f32.mrf.mxu0
        %v5080 = vadd.f32 0.0, %v5079
        %v5081 = vpop.f32.mrf.mxu0
        %v5082 = vadd.f32 0.0, %v5081
        %5083 = vmatprep.mubr.bf16.mxu0 %v4686
        %5084 = vmatmul.mubr.bf16.gmra.mxu0 %v4685
        %v5085 = vpop.f32.mrf.mxu0
        %v5086 = vadd.f32 0.0, %v5085
        %v5087 = vpop.f32.mrf.mxu0
        %v5088 = vadd.f32 0.0, %v5087
        %v5089 = vpop.f32.mrf.mxu0
        %v5090 = vadd.f32 0.0, %v5089
        %v5091 = vpop.f32.mrf.mxu0
        %v5092 = vadd.f32 0.0, %v5091
        %5093 = vmatprep.mubr.bf16.mxu0 %v4689
        %5094 = vmatmul.mubr.bf16.gmra.mxu0 %v4688
        %v5095 = vpop.f32.mrf.mxu0
        %v5096 = vadd.f32 0.0, %v5095
        %v5097 = vpop.f32.mrf.mxu0
        %v5098 = vadd.f32 0.0, %v5097
        %v5099 = vpop.f32.mrf.mxu0
        %v5100 = vadd.f32 0.0, %v5099
        %v5101 = vpop.f32.mrf.mxu0
        %v5102 = vadd.f32 0.0, %v5101
        %5103 = vmatprep.mubr.bf16.mxu0 %v4692
        %5104 = vmatmul.mubr.bf16.gmra.mxu0 %v4691
        %v5105 = vpop.f32.mrf.mxu0
        %v5106 = vadd.f32 0.0, %v5105
        %v5107 = vpop.f32.mrf.mxu0
        %v5108 = vadd.f32 0.0, %v5107
        %v5109 = vpop.f32.mrf.mxu0
        %v5110 = vadd.f32 0.0, %v5109
        %v5111 = vpop.f32.mrf.mxu0
        %v5112 = vadd.f32 0.0, %v5111
        %5113 = vmatprep.mubr.bf16.mxu0 %v4695
        %5114 = vmatmul.mubr.bf16.gmra.mxu0 %v4694
        %v5115 = vpop.f32.mrf.mxu0
        %v5116 = vadd.f32 0.0, %v5115
        %v5117 = vpop.f32.mrf.mxu0
        %v5118 = vadd.f32 0.0, %v5117
        %v5119 = vpop.f32.mrf.mxu0
        %v5120 = vadd.f32 0.0, %v5119
        %v5121 = vpop.f32.mrf.mxu0
        %v5122 = vadd.f32 0.0, %v5121
        %5123 = vmatprep.mubr.bf16.mxu0 %v4698
        %5124 = vmatmul.mubr.bf16.gmra.mxu0 %v4697
        %v5125 = vpop.f32.mrf.mxu0
        %v5126 = vadd.f32 0.0, %v5125
        %v5127 = vpop.f32.mrf.mxu0
        %v5128 = vadd.f32 0.0, %v5127
        %v5129 = vpop.f32.mrf.mxu0
        %v5130 = vadd.f32 0.0, %v5129
        %v5131 = vpop.f32.mrf.mxu0
        %v5132 = vadd.f32 0.0, %v5131
        %5133 = vmatprep.mubr.bf16.mxu0 %v4701
        %5134 = vmatmul.mubr.bf16.gmra.mxu0 %v4700
        %v5135 = vpop.f32.mrf.mxu0
        %v5136 = vadd.f32 0.0, %v5135
        %v5137 = vpop.f32.mrf.mxu0
        %v5138 = vadd.f32 0.0, %v5137
        %v5139 = vpop.f32.mrf.mxu0
        %v5140 = vadd.f32 0.0, %v5139
        %v5141 = vpop.f32.mrf.mxu0
        %v5142 = vadd.f32 0.0, %v5141
        %5143 = vmatprep.mubr.bf16.mxu0 %v4704
        %5144 = vmatmul.mubr.bf16.gmra.mxu0 %v4703
        %v5145 = vpop.f32.mrf.mxu0
        %v5146 = vadd.f32 0.0, %v5145
        %v5147 = vpop.f32.mrf.mxu0
        %v5148 = vadd.f32 0.0, %v5147
        %v5149 = vpop.f32.mrf.mxu0
        %v5150 = vadd.f32 0.0, %v5149
        %v5151 = vpop.f32.mrf.mxu0
        %v5152 = vadd.f32 0.0, %v5151
        %5153 = vmatprep.mubr.bf16.mxu0 %v4707
        %5154 = vmatmul.mubr.bf16.gmra.mxu0 %v4706
        %v5155 = vpop.f32.mrf.mxu0
        %v5156 = vadd.f32 0.0, %v5155
        %v5157 = vpop.f32.mrf.mxu0
        %v5158 = vadd.f32 0.0, %v5157
        %v5159 = vpop.f32.mrf.mxu0
        %v5160 = vadd.f32 0.0, %v5159
        %v5161 = vpop.f32.mrf.mxu0
        %v5162 = vadd.f32 0.0, %v5161
        %5163 = vmatprep.mubr.bf16.mxu0 %v4710
        %5164 = vmatmul.mubr.bf16.gmra.mxu0 %v4709
        %v5165 = vpop.f32.mrf.mxu0
        %v5166 = vadd.f32 0.0, %v5165
        %v5167 = vpop.f32.mrf.mxu0
        %v5168 = vadd.f32 0.0, %v5167
        %v5169 = vpop.f32.mrf.mxu0
        %v5170 = vadd.f32 0.0, %v5169
        %v5171 = vpop.f32.mrf.mxu0
        %v5172 = vadd.f32 0.0, %v5171
        %5173 = vdwg.mxu0
        %5174 = vmatprep.subr.bf16.mxu0 %v4952
        %5175 = vmatpush1.bf16.msra.mxu0 %v4951
        %5176 = vmatprep.subr.bf16.mxu0 %v4950
        %5177 = vmatpush1.bf16.msra.mxu0 %v4949
        %5178 = vmatprep.subr.bf16.mxu0 %v4948
        %5179 = vmatpush1.bf16.msra.mxu0 %v4947
        %5180 = vmatprep.subr.bf16.mxu0 %v4946
        %5181 = vmatpush1.bf16.msra.mxu0 %v4945
        %5182 = vmatprep.subr.bf16.mxu0 %v4944
        %5183 = vmatpush1.bf16.msra.mxu0 %v4943
        %5184 = vmatprep.subr.bf16.mxu0 %v4942
        %5185 = vmatpush1.bf16.msra.mxu0 %v4941
        %5186 = vmatprep.subr.bf16.mxu0 %v4940
        %5187 = vmatpush1.bf16.msra.mxu0 %v4939
        %5188 = vmatprep.subr.bf16.mxu0 %v4938
        %5189 = vmatpush1.bf16.msra.mxu0 %v4937
        %5190 = vmatprep.subr.bf16.mxu0 0
        %5191 = vmatpush2.bf16.msra.mxu0 0
        %5192 = vmatprep.subr.bf16.mxu0 0
        %5193 = vmatpush2.bf16.msra.mxu0 0
        %5194 = vmatprep.subr.bf16.mxu0 0
        %5195 = vmatpush2.bf16.msra.mxu0 0
        %5196 = vmatprep.subr.bf16.mxu0 0
        %5197 = vmatpush2.bf16.msra.mxu0 0
        %5198 = vmatprep.subr.bf16.mxu0 0
        %5199 = vmatpush2.bf16.msra.mxu0 0
        %5200 = vmatprep.subr.bf16.mxu0 0
        %5201 = vmatpush2.bf16.msra.mxu0 0
        %5202 = vmatprep.subr.bf16.mxu0 0
        %5203 = vmatpush2.bf16.msra.mxu0 0
        %5204 = vmatprep.subr.bf16.mxu0 0
        %5205 = vmatpush2.bf16.msra.mxu0 0
        %5206 = vmatprep.mubr.bf16.mxu0 0
        %5207 = vmatmul.mubr.bf16.gmra.mxu0 %v4672
        %v5208 = vpop.f32.mrf.mxu0
        %v5209 = vadd.f32 %v5036, %v5208
        %v5210 = vpop.f32.mrf.mxu0
        %v5211 = vadd.f32 %v5038, %v5210
        %v5212 = vpop.f32.mrf.mxu0
        %v5213 = vadd.f32 %v5040, %v5212
        %v5214 = vpop.f32.mrf.mxu0
        %v5215 = vadd.f32 %v5042, %v5214
        %5216 = vmatprep.mubr.bf16.mxu0 0
        %5217 = vmatmul.mubr.bf16.gmra.mxu0 %v4675
        %v5218 = vpop.f32.mrf.mxu0
        %v5219 = vadd.f32 %v5046, %v5218
        %v5220 = vpop.f32.mrf.mxu0
        %v5221 = vadd.f32 %v5048, %v5220
        %v5222 = vpop.f32.mrf.mxu0
        %v5223 = vadd.f32 %v5050, %v5222
        %v5224 = vpop.f32.mrf.mxu0
        %v5225 = vadd.f32 %v5052, %v5224
        %5226 = vmatprep.mubr.bf16.mxu0 0
        %5227 = vmatmul.mubr.bf16.gmra.mxu0 %v4678
        %v5228 = vpop.f32.mrf.mxu0
        %v5229 = vadd.f32 %v5056, %v5228
        %v5230 = vpop.f32.mrf.mxu0
        %v5231 = vadd.f32 %v5058, %v5230
        %v5232 = vpop.f32.mrf.mxu0
        %v5233 = vadd.f32 %v5060, %v5232
        %v5234 = vpop.f32.mrf.mxu0
        %v5235 = vadd.f32 %v5062, %v5234
        %5236 = vmatprep.mubr.bf16.mxu0 0
        %5237 = vmatmul.mubr.bf16.gmra.mxu0 %v4681
        %v5238 = vpop.f32.mrf.mxu0
        %v5239 = vadd.f32 %v5066, %v5238
        %v5240 = vpop.f32.mrf.mxu0
        %v5241 = vadd.f32 %v5068, %v5240
        %v5242 = vpop.f32.mrf.mxu0
        %v5243 = vadd.f32 %v5070, %v5242
        %v5244 = vpop.f32.mrf.mxu0
        %v5245 = vadd.f32 %v5072, %v5244
        %5246 = vmatprep.mubr.bf16.mxu0 0
        %5247 = vmatmul.mubr.bf16.gmra.mxu0 %v4684
        %v5248 = vpop.f32.mrf.mxu0
        %v5249 = vadd.f32 %v5076, %v5248
        %v5250 = vpop.f32.mrf.mxu0
        %v5251 = vadd.f32 %v5078, %v5250
        %v5252 = vpop.f32.mrf.mxu0
        %v5253 = vadd.f32 %v5080, %v5252
        %v5254 = vpop.f32.mrf.mxu0
        %v5255 = vadd.f32 %v5082, %v5254
        %5256 = vmatprep.mubr.bf16.mxu0 0
        %5257 = vmatmul.mubr.bf16.gmra.mxu0 %v4687
        %v5258 = vpop.f32.mrf.mxu0
        %v5259 = vadd.f32 %v5086, %v5258
        %v5260 = vpop.f32.mrf.mxu0
        %v5261 = vadd.f32 %v5088, %v5260
        %v5262 = vpop.f32.mrf.mxu0
        %v5263 = vadd.f32 %v5090, %v5262
        %v5264 = vpop.f32.mrf.mxu0
        %v5265 = vadd.f32 %v5092, %v5264
        %5266 = vmatprep.mubr.bf16.mxu0 0
        %5267 = vmatmul.mubr.bf16.gmra.mxu0 %v4690
        %v5268 = vpop.f32.mrf.mxu0
        %v5269 = vadd.f32 %v5096, %v5268
        %v5270 = vpop.f32.mrf.mxu0
        %v5271 = vadd.f32 %v5098, %v5270
        %v5272 = vpop.f32.mrf.mxu0
        %v5273 = vadd.f32 %v5100, %v5272
        %v5274 = vpop.f32.mrf.mxu0
        %v5275 = vadd.f32 %v5102, %v5274
        %5276 = vmatprep.mubr.bf16.mxu0 0
        %5277 = vmatmul.mubr.bf16.gmra.mxu0 %v4693
        %v5278 = vpop.f32.mrf.mxu0
        %v5279 = vadd.f32 %v5106, %v5278
        %v5280 = vpop.f32.mrf.mxu0
        %v5281 = vadd.f32 %v5108, %v5280
        %v5282 = vpop.f32.mrf.mxu0
        %v5283 = vadd.f32 %v5110, %v5282
        %v5284 = vpop.f32.mrf.mxu0
        %v5285 = vadd.f32 %v5112, %v5284
        %5286 = vmatprep.mubr.bf16.mxu0 0
        %5287 = vmatmul.mubr.bf16.gmra.mxu0 %v4696
        %v5288 = vpop.f32.mrf.mxu0
        %v5289 = vadd.f32 %v5116, %v5288
        %v5290 = vpop.f32.mrf.mxu0
        %v5291 = vadd.f32 %v5118, %v5290
        %v5292 = vpop.f32.mrf.mxu0
        %v5293 = vadd.f32 %v5120, %v5292
        %v5294 = vpop.f32.mrf.mxu0
        %v5295 = vadd.f32 %v5122, %v5294
        %5296 = vmatprep.mubr.bf16.mxu0 0
        %5297 = vmatmul.mubr.bf16.gmra.mxu0 %v4699
        %v5298 = vpop.f32.mrf.mxu0
        %v5299 = vadd.f32 %v5126, %v5298
        %v5300 = vpop.f32.mrf.mxu0
        %v5301 = vadd.f32 %v5128, %v5300
        %v5302 = vpop.f32.mrf.mxu0
        %v5303 = vadd.f32 %v5130, %v5302
        %v5304 = vpop.f32.mrf.mxu0
        %v5305 = vadd.f32 %v5132, %v5304
        %5306 = vmatprep.mubr.bf16.mxu0 0
        %5307 = vmatmul.mubr.bf16.gmra.mxu0 %v4702
        %v5308 = vpop.f32.mrf.mxu0
        %v5309 = vadd.f32 %v5136, %v5308
        %v5310 = vpop.f32.mrf.mxu0
        %v5311 = vadd.f32 %v5138, %v5310
        %v5312 = vpop.f32.mrf.mxu0
        %v5313 = vadd.f32 %v5140, %v5312
        %v5314 = vpop.f32.mrf.mxu0
        %v5315 = vadd.f32 %v5142, %v5314
        %5316 = vmatprep.mubr.bf16.mxu0 0
        %5317 = vmatmul.mubr.bf16.gmra.mxu0 %v4705
        %v5318 = vpop.f32.mrf.mxu0
        %v5319 = vadd.f32 %v5146, %v5318
        %v5320 = vpop.f32.mrf.mxu0
        %v5321 = vadd.f32 %v5148, %v5320
        %v5322 = vpop.f32.mrf.mxu0
        %v5323 = vadd.f32 %v5150, %v5322
        %v5324 = vpop.f32.mrf.mxu0
        %v5325 = vadd.f32 %v5152, %v5324
        %5326 = vmatprep.mubr.bf16.mxu0 0
        %5327 = vmatmul.mubr.bf16.gmra.mxu0 %v4708
        %v5328 = vpop.f32.mrf.mxu0
        %v5329 = vadd.f32 %v5156, %v5328
        %v5330 = vpop.f32.mrf.mxu0
        %v5331 = vadd.f32 %v5158, %v5330
        %v5332 = vpop.f32.mrf.mxu0
        %v5333 = vadd.f32 %v5160, %v5332
        %v5334 = vpop.f32.mrf.mxu0
        %v5335 = vadd.f32 %v5162, %v5334
        %5336 = vmatprep.mubr.bf16.mxu0 0
        %5337 = vmatmul.mubr.bf16.gmra.mxu0 %v4711
        %v5338 = vpop.f32.mrf.mxu0
        %v5339 = vadd.f32 %v5166, %v5338
        %v5340 = vpop.f32.mrf.mxu0
        %v5341 = vadd.f32 %v5168, %v5340
        %v5342 = vpop.f32.mrf.mxu0
        %v5343 = vadd.f32 %v5170, %v5342
        %v5344 = vpop.f32.mrf.mxu0
        %v5345 = vadd.f32 %v5172, %v5344
        %5346 = vdwg.mxu0
        %v5348 = vlaneseq
        %v5349 = vshrl.u32 %v5348, 7
        %v5350 = vsub.s32 0, %v5349
        %v5351 = vrot.slane %v4712, %v5350
        %v5352 = vlaneseq
        %v5353 = vshrl.u32 %v5352, 7
        %v5354 = vsub.s32 1, %v5353
        %v5355 = vrot.slane %v4712, %v5354
        %v5358 = vadd.f32 %v5351, %v5209
        %v5359 = vadd.f32 %v5355, %v5211
        %v5360 = vadd.f32 %v5351, %v5213
        %v5361 = vadd.f32 %v5355, %v5215
        %v5362 = vadd.f32 %v5351, %v5219
        %v5363 = vadd.f32 %v5355, %v5221
        %v5364 = vadd.f32 %v5351, %v5223
        %v5365 = vadd.f32 %v5355, %v5225
        %v5366 = vadd.f32 %v5351, %v5229
        %v5367 = vadd.f32 %v5355, %v5231
        %v5368 = vadd.f32 %v5351, %v5233
        %v5369 = vadd.f32 %v5355, %v5235
        %v5370 = vadd.f32 %v5351, %v5239
        %v5371 = vadd.f32 %v5355, %v5241
        %v5372 = vadd.f32 %v5351, %v5243
        %v5373 = vadd.f32 %v5355, %v5245
        %v5374 = vadd.f32 %v5351, %v5249
        %v5375 = vadd.f32 %v5355, %v5251
        %v5376 = vadd.f32 %v5351, %v5253
        %v5377 = vadd.f32 %v5355, %v5255
        %v5378 = vadd.f32 %v5351, %v5259
        %v5379 = vadd.f32 %v5355, %v5261
        %v5380 = vadd.f32 %v5351, %v5263
        %v5381 = vadd.f32 %v5355, %v5265
        %v5382 = vadd.f32 %v5351, %v5269
        %v5383 = vadd.f32 %v5355, %v5271
        %v5384 = vadd.f32 %v5351, %v5273
        %v5385 = vadd.f32 %v5355, %v5275
        %v5386 = vadd.f32 %v5351, %v5279
        %v5387 = vadd.f32 %v5355, %v5281
        %v5388 = vadd.f32 %v5351, %v5283
        %v5389 = vadd.f32 %v5355, %v5285
        %v5390 = vadd.f32 %v5351, %v5289
        %v5391 = vadd.f32 %v5355, %v5291
        %v5392 = vadd.f32 %v5351, %v5293
        %v5393 = vadd.f32 %v5355, %v5295
        %v5394 = vadd.f32 %v5351, %v5299
        %v5395 = vadd.f32 %v5355, %v5301
        %v5396 = vadd.f32 %v5351, %v5303
        %v5397 = vadd.f32 %v5355, %v5305
        %v5398 = vadd.f32 %v5351, %v5309
        %v5399 = vadd.f32 %v5355, %v5311
        %v5400 = vadd.f32 %v5351, %v5313
        %v5401 = vadd.f32 %v5355, %v5315
        %v5402 = vadd.f32 %v5351, %v5319
        %v5403 = vadd.f32 %v5355, %v5321
        %v5404 = vadd.f32 %v5351, %v5323
        %v5405 = vadd.f32 %v5355, %v5325
        %v5406 = vadd.f32 %v5351, %v5329
        %v5407 = vadd.f32 %v5355, %v5331
        %v5408 = vadd.f32 %v5351, %v5333
        %v5409 = vadd.f32 %v5355, %v5335
        %v5410 = vadd.f32 %v5351, %v5339
        %v5411 = vadd.f32 %v5355, %v5341
        %v5412 = vadd.f32 %v5351, %v5343
        %v5413 = vadd.f32 %v5355, %v5345
        %vm5456 = vcmask 1046528
        %v5457 = vrot.slane %v4670, 1
        %v5458 = vrot.slane %v4673, 1
        %v5459 = vsel %vm5456, %v5457, %v5458
        %v5460 = vrot.slane %v4671, 1
        %v5461 = vrot.slane %v4674, 1
        %v5462 = vsel %vm5456, %v5460, %v5461
        %v5463 = vrot.slane %v4672, 1
        %v5464 = vrot.slane %v4675, 1
        %v5465 = vsel %vm5456, %v5463, %v5464
        %v5466 = vrot.slane %v4676, 1
        %v5467 = vsel %vm5456, %v5458, %v5466
        %v5468 = vrot.slane %v4677, 1
        %v5469 = vsel %vm5456, %v5461, %v5468
        %v5470 = vrot.slane %v4678, 1
        %v5471 = vsel %vm5456, %v5464, %v5470
        %v5472 = vrot.slane %v4679, 1
        %v5473 = vsel %vm5456, %v5466, %v5472
        %v5474 = vrot.slane %v4680, 1
        %v5475 = vsel %vm5456, %v5468, %v5474
        %v5476 = vrot.slane %v4681, 1
        %v5477 = vsel %vm5456, %v5470, %v5476
        %v5478 = vrot.slane %v4682, 1
        %v5479 = vsel %vm5456, %v5472, %v5478
        %v5480 = vrot.slane %v4683, 1
        %v5481 = vsel %vm5456, %v5474, %v5480
        %v5482 = vrot.slane %v4684, 1
        %v5483 = vsel %vm5456, %v5476, %v5482
        %v5484 = vrot.slane %v4685, 1
        %v5485 = vsel %vm5456, %v5478, %v5484
        %v5486 = vrot.slane %v4686, 1
        %v5487 = vsel %vm5456, %v5480, %v5486
        %v5488 = vrot.slane %v4687, 1
        %v5489 = vsel %vm5456, %v5482, %v5488
        %v5490 = vrot.slane %v4688, 1
        %v5491 = vsel %vm5456, %v5484, %v5490
        %v5492 = vrot.slane %v4689, 1
        %v5493 = vsel %vm5456, %v5486, %v5492
        %v5494 = vrot.slane %v4690, 1
        %v5495 = vsel %vm5456, %v5488, %v5494
        %v5496 = vrot.slane %v4691, 1
        %v5497 = vsel %vm5456, %v5490, %v5496
        %v5498 = vrot.slane %v4692, 1
        %v5499 = vsel %vm5456, %v5492, %v5498
        %v5500 = vrot.slane %v4693, 1
        %v5501 = vsel %vm5456, %v5494, %v5500
        %v5502 = vrot.slane %v4694, 1
        %v5503 = vsel %vm5456, %v5496, %v5502
        %v5504 = vrot.slane %v4695, 1
        %v5505 = vsel %vm5456, %v5498, %v5504
        %v5506 = vrot.slane %v4696, 1
        %v5507 = vsel %vm5456, %v5500, %v5506
        %v5508 = vrot.slane %v4697, 1
        %v5509 = vsel %vm5456, %v5502, %v5508
        %v5510 = vrot.slane %v4698, 1
        %v5511 = vsel %vm5456, %v5504, %v5510
        %v5512 = vrot.slane %v4699, 1
        %v5513 = vsel %vm5456, %v5506, %v5512
        %v5514 = vrot.slane %v4700, 1
        %v5515 = vsel %vm5456, %v5508, %v5514
        %v5516 = vrot.slane %v4701, 1
        %v5517 = vsel %vm5456, %v5510, %v5516
        %v5518 = vrot.slane %v4702, 1
        %v5519 = vsel %vm5456, %v5512, %v5518
        %v5520 = vrot.slane %v4703, 1
        %v5521 = vsel %vm5456, %v5514, %v5520
        %v5522 = vrot.slane %v4704, 1
        %v5523 = vsel %vm5456, %v5516, %v5522
        %v5524 = vrot.slane %v4705, 1
        %v5525 = vsel %vm5456, %v5518, %v5524
        %v5526 = vrot.slane %v4706, 1
        %v5527 = vsel %vm5456, %v5520, %v5526
        %v5528 = vrot.slane %v4707, 1
        %v5529 = vsel %vm5456, %v5522, %v5528
        %v5530 = vrot.slane %v4708, 1
        %v5531 = vsel %vm5456, %v5524, %v5530
        %v5532 = vrot.slane %v4709, 1
        %v5533 = vsel %vm5456, %v5526, %v5532
        %v5534 = vrot.slane %v4710, 1
        %v5535 = vsel %vm5456, %v5528, %v5534
        %v5536 = vrot.slane %v4711, 1
        %v5537 = vsel %vm5456, %v5530, %v5536
        %v5579 = vsel %vm991, %v5532, %v5457
        %v5583 = vsel %vm991, %v5534, %v5460
        %v5587 = vsel %vm991, %v5536, %v5463
        %s5589 = scalar_lea.vmem [#allocation4], 384
        %v5590 = vld [vmem:[%s5589] sm:$0xff]
        %v5591 = vld [vmem:[%s5589 + $0x8] sm:$0xff]
        %v5592 = vld [vmem:[%s5589 + $0x10] sm:$0xff]
        %v5593 = vld [vmem:[%s5589 + $0x18] sm:$0xff]
        %v5594 = vld [vmem:[%s5589 + $0x20] sm:$0xff]
        %v5595 = vld [vmem:[%s5589 + $0x28] sm:$0xff]
        %v5596 = vld [vmem:[%s5589 + $0x30] sm:$0xff]
        %v5597 = vld [vmem:[%s5589 + $0x38] sm:$0xff]
        %v5598 = vld [vmem:[%s5589 + $0x40] sm:$0xff]
        %v5599 = vld [vmem:[%s5589 + $0x48] sm:$0xff]
        %v5600 = vld [vmem:[%s5589 + $0x50] sm:$0xff]
        %v5601 = vld [vmem:[%s5589 + $0x58] sm:$0xff]
        %v5602 = vld [vmem:[%s5589 + $0x60] sm:$0xff]
        %v5603 = vld [vmem:[%s5589 + $0x68] sm:$0xff]
        %v5604 = vld [vmem:[%s5589 + $0x70] sm:$0xff]
        %v5605 = vld [vmem:[%s5589 + $0x78] sm:$0xff]
        %v5606 = vld [vmem:[%s5589 + $0x80] sm:$0xff]
        %v5607 = vld [vmem:[%s5589 + $0x88] sm:$0xff]
        %v5608 = vld [vmem:[%s5589 + $0x90] sm:$0xff]
        %v5609 = vld [vmem:[%s5589 + $0x98] sm:$0xff]
        %v5610 = vld [vmem:[%s5589 + $0xa0] sm:$0xff]
        %v5611 = vld [vmem:[%s5589 + $0xa8] sm:$0xff]
        %v5612 = vld [vmem:[%s5589 + $0xb0] sm:$0xff]
        %v5613 = vld [vmem:[%s5589 + $0xb8] sm:$0xff]
        %v5614 = vld [vmem:[%s5589 + $0xc0] sm:$0xff]
        %v5615 = vld [vmem:[%s5589 + $0xc8] sm:$0xff]
        %v5616 = vld [vmem:[%s5589 + $0xd0] sm:$0xff]
        %v5617 = vld [vmem:[%s5589 + $0xd8] sm:$0xff]
        %v5618 = vld [vmem:[%s5589 + $0xe0] sm:$0xff]
        %v5619 = vld [vmem:[%s5589 + $0xe8] sm:$0xff]
        %v5620 = vld [vmem:[%s5589 + $0xf0] sm:$0xff]
        %v5621 = vld [vmem:[%s5589 + $0xf8] sm:$0xff]
        %v5622 = vld [vmem:[%s5589 + $0x100] sm:$0xff]
        %v5623 = vld [vmem:[%s5589 + $0x108] sm:$0xff]
        %v5624 = vld [vmem:[%s5589 + $0x110] sm:$0xff]
        %v5625 = vld [vmem:[%s5589 + $0x118] sm:$0xff]
        %v5626 = vld [vmem:[%s5589 + $0x120] sm:$0xff]
        %v5627 = vld [vmem:[%s5589 + $0x128] sm:$0xff]
        %v5628 = vld [vmem:[%s5589 + $0x130] sm:$0xff]
        %v5629 = vld [vmem:[%s5589 + $0x138] sm:$0xff]
        %v5630 = vld [vmem:[%s5589 + $0x140] sm:$0xff]
        %v5631 = vld [vmem:[%s5589 + $0x148] sm:$0xff]
        %v5632 = vld [vmem:[%s5589 + $0x150] sm:$0xff]
        %v5633 = vld [vmem:[%s5589 + $0x158] sm:$0xff]
        %v5634 = vld [vmem:[%s5589 + $0x160] sm:$0xff]
        %v5635 = vld [vmem:[%s5589 + $0x168] sm:$0xff]
        %v5636 = vld [vmem:[%s5589 + $0x170] sm:$0xff]
        %v5637 = vld [vmem:[%s5589 + $0x178] sm:$0xff]
        %v5686 = vunpack.c.l.b16 %v5590
        %v5687 = vunpack.c.h.b16 %v5590
        %v5688 = vunpack.c.l.b16 %v5591
        %v5689 = vunpack.c.h.b16 %v5591
        %v5690 = vunpack.c.l.b16 %v5592
        %v5691 = vunpack.c.h.b16 %v5592
        %v5692 = vunpack.c.l.b16 %v5593
        %v5693 = vunpack.c.h.b16 %v5593
        %v5694 = vunpack.c.l.b16 %v5594
        %v5695 = vunpack.c.h.b16 %v5594
        %v5696 = vunpack.c.l.b16 %v5595
        %v5697 = vunpack.c.h.b16 %v5595
        %v5698 = vunpack.c.l.b16 %v5596
        %v5699 = vunpack.c.h.b16 %v5596
        %v5700 = vunpack.c.l.b16 %v5597
        %v5701 = vunpack.c.h.b16 %v5597
        %v5702 = vunpack.c.l.b16 %v5598
        %v5703 = vunpack.c.h.b16 %v5598
        %v5704 = vunpack.c.l.b16 %v5599
        %v5705 = vunpack.c.h.b16 %v5599
        %v5706 = vunpack.c.l.b16 %v5600
        %v5707 = vunpack.c.h.b16 %v5600
        %v5708 = vunpack.c.l.b16 %v5601
        %v5709 = vunpack.c.h.b16 %v5601
        %v5710 = vunpack.c.l.b16 %v5602
        %v5711 = vunpack.c.h.b16 %v5602
        %v5712 = vunpack.c.l.b16 %v5603
        %v5713 = vunpack.c.h.b16 %v5603
        %v5714 = vunpack.c.l.b16 %v5604
        %v5715 = vunpack.c.h.b16 %v5604
        %v5716 = vunpack.c.l.b16 %v5605
        %v5717 = vunpack.c.h.b16 %v5605
        %v5718 = vunpack.c.l.b16 %v5606
        %v5719 = vunpack.c.h.b16 %v5606
        %v5720 = vunpack.c.l.b16 %v5607
        %v5721 = vunpack.c.h.b16 %v5607
        %v5722 = vunpack.c.l.b16 %v5608
        %v5723 = vunpack.c.h.b16 %v5608
        %v5724 = vunpack.c.l.b16 %v5609
        %v5725 = vunpack.c.h.b16 %v5609
        %v5726 = vunpack.c.l.b16 %v5610
        %v5727 = vunpack.c.h.b16 %v5610
        %v5728 = vunpack.c.l.b16 %v5611
        %v5729 = vunpack.c.h.b16 %v5611
        %v5730 = vunpack.c.l.b16 %v5612
        %v5731 = vunpack.c.h.b16 %v5612
        %v5732 = vunpack.c.l.b16 %v5613
        %v5733 = vunpack.c.h.b16 %v5613
        %v5734 = vunpack.c.l.b16 %v5614
        %v5735 = vunpack.c.h.b16 %v5614
        %v5736 = vunpack.c.l.b16 %v5615
        %v5737 = vunpack.c.h.b16 %v5615
        %v5738 = vunpack.c.l.b16 %v5616
        %v5739 = vunpack.c.h.b16 %v5616
        %v5740 = vunpack.c.l.b16 %v5617
        %v5741 = vunpack.c.h.b16 %v5617
        %v5742 = vunpack.c.l.b16 %v5618
        %v5743 = vunpack.c.h.b16 %v5618
        %v5744 = vunpack.c.l.b16 %v5619
        %v5745 = vunpack.c.h.b16 %v5619
        %v5746 = vunpack.c.l.b16 %v5620
        %v5747 = vunpack.c.h.b16 %v5620
        %v5748 = vunpack.c.l.b16 %v5621
        %v5749 = vunpack.c.h.b16 %v5621
        %v5750 = vunpack.c.l.b16 %v5622
        %v5751 = vunpack.c.h.b16 %v5622
        %v5752 = vunpack.c.l.b16 %v5623
        %v5753 = vunpack.c.h.b16 %v5623
        %v5754 = vunpack.c.l.b16 %v5624
        %v5755 = vunpack.c.h.b16 %v5624
        %v5756 = vunpack.c.l.b16 %v5625
        %v5757 = vunpack.c.h.b16 %v5625
        %v5758 = vunpack.c.l.b16 %v5626
        %v5759 = vunpack.c.h.b16 %v5626
        %v5760 = vunpack.c.l.b16 %v5627
        %v5761 = vunpack.c.h.b16 %v5627
        %v5762 = vunpack.c.l.b16 %v5628
        %v5763 = vunpack.c.h.b16 %v5628
        %v5764 = vunpack.c.l.b16 %v5629
        %v5765 = vunpack.c.h.b16 %v5629
        %v5766 = vunpack.c.l.b16 %v5630
        %v5767 = vunpack.c.h.b16 %v5630
        %v5768 = vunpack.c.l.b16 %v5631
        %v5769 = vunpack.c.h.b16 %v5631
        %v5770 = vunpack.c.l.b16 %v5632
        %v5771 = vunpack.c.h.b16 %v5632
        %v5772 = vunpack.c.l.b16 %v5633
        %v5773 = vunpack.c.h.b16 %v5633
        %v5774 = vunpack.c.l.b16 %v5634
        %v5775 = vunpack.c.h.b16 %v5634
        %v5776 = vunpack.c.l.b16 %v5635
        %v5777 = vunpack.c.h.b16 %v5635
        %v5778 = vunpack.c.l.b16 %v5636
        %v5779 = vunpack.c.h.b16 %v5636
        %v5780 = vunpack.c.l.b16 %v5637
        %v5781 = vunpack.c.h.b16 %v5637
        %v5782 = vpack.c.b16 %v5688, %v5686
        %v5783 = vpack.c.b16 %v5689, %v5687
        %v5784 = vpack.c.b16 %v5692, %v5690
        %v5785 = vpack.c.b16 %v5693, %v5691
        %v5786 = vpack.c.b16 %v5696, %v5694
        %v5787 = vpack.c.b16 %v5697, %v5695
        %v5788 = vpack.c.b16 %v5700, %v5698
        %v5789 = vpack.c.b16 %v5701, %v5699
        %v5790 = vpack.c.b16 %v5704, %v5702
        %v5791 = vpack.c.b16 %v5705, %v5703
        %v5792 = vpack.c.b16 %v5708, %v5706
        %v5793 = vpack.c.b16 %v5709, %v5707
        %v5794 = vpack.c.b16 %v5712, %v5710
        %v5795 = vpack.c.b16 %v5713, %v5711
        %v5796 = vpack.c.b16 %v5716, %v5714
        %v5797 = vpack.c.b16 %v5717, %v5715
        %v5798 = vpack.c.b16 %v5720, %v5718
        %v5799 = vpack.c.b16 %v5721, %v5719
        %v5800 = vpack.c.b16 %v5724, %v5722
        %v5801 = vpack.c.b16 %v5725, %v5723
        %v5802 = vpack.c.b16 %v5728, %v5726
        %v5803 = vpack.c.b16 %v5729, %v5727
        %v5804 = vpack.c.b16 %v5732, %v5730
        %v5805 = vpack.c.b16 %v5733, %v5731
        %v5806 = vpack.c.b16 %v5736, %v5734
        %v5807 = vpack.c.b16 %v5737, %v5735
        %v5808 = vpack.c.b16 %v5740, %v5738
        %v5809 = vpack.c.b16 %v5741, %v5739
        %v5810 = vpack.c.b16 %v5744, %v5742
        %v5811 = vpack.c.b16 %v5745, %v5743
        %v5812 = vpack.c.b16 %v5748, %v5746
        %v5813 = vpack.c.b16 %v5749, %v5747
        %v5814 = vpack.c.b16 %v5752, %v5750
        %v5815 = vpack.c.b16 %v5753, %v5751
        %v5816 = vpack.c.b16 %v5756, %v5754
        %v5817 = vpack.c.b16 %v5757, %v5755
        %v5818 = vpack.c.b16 %v5760, %v5758
        %v5819 = vpack.c.b16 %v5761, %v5759
        %v5820 = vpack.c.b16 %v5764, %v5762
        %v5821 = vpack.c.b16 %v5765, %v5763
        %v5822 = vpack.c.b16 %v5768, %v5766
        %v5823 = vpack.c.b16 %v5769, %v5767
        %v5824 = vpack.c.b16 %v5772, %v5770
        %v5825 = vpack.c.b16 %v5773, %v5771
        %v5826 = vpack.c.b16 %v5776, %v5774
        %v5827 = vpack.c.b16 %v5777, %v5775
        %v5828 = vpack.c.b16 %v5780, %v5778
        %v5829 = vpack.c.b16 %v5781, %v5779
        %5878 = vmatprep.subr.bf16.mxu0 %v5797
        %5879 = vmatpush1.bf16.msra.mxu0 %v5796
        %5880 = vmatprep.subr.bf16.mxu0 %v5795
        %5881 = vmatpush1.bf16.msra.mxu0 %v5794
        %5882 = vmatprep.subr.bf16.mxu0 %v5793
        %5883 = vmatpush1.bf16.msra.mxu0 %v5792
        %5884 = vmatprep.subr.bf16.mxu0 %v5791
        %5885 = vmatpush1.bf16.msra.mxu0 %v5790
        %5886 = vmatprep.subr.bf16.mxu0 %v5789
        %5887 = vmatpush1.bf16.msra.mxu0 %v5788
        %5888 = vmatprep.subr.bf16.mxu0 %v5787
        %5889 = vmatpush1.bf16.msra.mxu0 %v5786
        %5890 = vmatprep.subr.bf16.mxu0 %v5785
        %5891 = vmatpush1.bf16.msra.mxu0 %v5784
        %5892 = vmatprep.subr.bf16.mxu0 %v5783
        %5893 = vmatpush1.bf16.msra.mxu0 %v5782
        %5894 = vmatprep.subr.bf16.mxu0 %v5813
        %5895 = vmatpush2.bf16.msra.mxu0 %v5812
        %5896 = vmatprep.subr.bf16.mxu0 %v5811
        %5897 = vmatpush2.bf16.msra.mxu0 %v5810
        %5898 = vmatprep.subr.bf16.mxu0 %v5809
        %5899 = vmatpush2.bf16.msra.mxu0 %v5808
        %5900 = vmatprep.subr.bf16.mxu0 %v5807
        %5901 = vmatpush2.bf16.msra.mxu0 %v5806
        %5902 = vmatprep.subr.bf16.mxu0 %v5805
        %5903 = vmatpush2.bf16.msra.mxu0 %v5804
        %5904 = vmatprep.subr.bf16.mxu0 %v5803
        %5905 = vmatpush2.bf16.msra.mxu0 %v5802
        %5906 = vmatprep.subr.bf16.mxu0 %v5801
        %5907 = vmatpush2.bf16.msra.mxu0 %v5800
        %5908 = vmatprep.subr.bf16.mxu0 %v5799
        %5909 = vmatpush2.bf16.msra.mxu0 %v5798
        %5910 = vmatprep.mubr.bf16.mxu0 %v5462
        %5911 = vmatmul.mubr.bf16.gmra.mxu0 %v5459
        %v5912 = vpop.f32.mrf.mxu0
        %v5913 = vadd.f32 0.0, %v5912
        %v5914 = vpop.f32.mrf.mxu0
        %v5915 = vadd.f32 0.0, %v5914
        %v5916 = vpop.f32.mrf.mxu0
        %v5917 = vadd.f32 0.0, %v5916
        %v5918 = vpop.f32.mrf.mxu0
        %v5919 = vadd.f32 0.0, %v5918
        %5920 = vmatprep.mubr.bf16.mxu0 %v5469
        %5921 = vmatmul.mubr.bf16.gmra.mxu0 %v5467
        %v5922 = vpop.f32.mrf.mxu0
        %v5923 = vadd.f32 0.0, %v5922
        %v5924 = vpop.f32.mrf.mxu0
        %v5925 = vadd.f32 0.0, %v5924
        %v5926 = vpop.f32.mrf.mxu0
        %v5927 = vadd.f32 0.0, %v5926
        %v5928 = vpop.f32.mrf.mxu0
        %v5929 = vadd.f32 0.0, %v5928
        %5930 = vmatprep.mubr.bf16.mxu0 %v5475
        %5931 = vmatmul.mubr.bf16.gmra.mxu0 %v5473
        %v5932 = vpop.f32.mrf.mxu0
        %v5933 = vadd.f32 0.0, %v5932
        %v5934 = vpop.f32.mrf.mxu0
        %v5935 = vadd.f32 0.0, %v5934
        %v5936 = vpop.f32.mrf.mxu0
        %v5937 = vadd.f32 0.0, %v5936
        %v5938 = vpop.f32.mrf.mxu0
        %v5939 = vadd.f32 0.0, %v5938
        %5940 = vmatprep.mubr.bf16.mxu0 %v5481
        %5941 = vmatmul.mubr.bf16.gmra.mxu0 %v5479
        %v5942 = vpop.f32.mrf.mxu0
        %v5943 = vadd.f32 0.0, %v5942
        %v5944 = vpop.f32.mrf.mxu0
        %v5945 = vadd.f32 0.0, %v5944
        %v5946 = vpop.f32.mrf.mxu0
        %v5947 = vadd.f32 0.0, %v5946
        %v5948 = vpop.f32.mrf.mxu0
        %v5949 = vadd.f32 0.0, %v5948
        %5950 = vmatprep.mubr.bf16.mxu0 %v5487
        %5951 = vmatmul.mubr.bf16.gmra.mxu0 %v5485
        %v5952 = vpop.f32.mrf.mxu0
        %v5953 = vadd.f32 0.0, %v5952
        %v5954 = vpop.f32.mrf.mxu0
        %v5955 = vadd.f32 0.0, %v5954
        %v5956 = vpop.f32.mrf.mxu0
        %v5957 = vadd.f32 0.0, %v5956
        %v5958 = vpop.f32.mrf.mxu0
        %v5959 = vadd.f32 0.0, %v5958
        %5960 = vmatprep.mubr.bf16.mxu0 %v5493
        %5961 = vmatmul.mubr.bf16.gmra.mxu0 %v5491
        %v5962 = vpop.f32.mrf.mxu0
        %v5963 = vadd.f32 0.0, %v5962
        %v5964 = vpop.f32.mrf.mxu0
        %v5965 = vadd.f32 0.0, %v5964
        %v5966 = vpop.f32.mrf.mxu0
        %v5967 = vadd.f32 0.0, %v5966
        %v5968 = vpop.f32.mrf.mxu0
        %v5969 = vadd.f32 0.0, %v5968
        %5970 = vmatprep.mubr.bf16.mxu0 %v5499
        %5971 = vmatmul.mubr.bf16.gmra.mxu0 %v5497
        %v5972 = vpop.f32.mrf.mxu0
        %v5973 = vadd.f32 0.0, %v5972
        %v5974 = vpop.f32.mrf.mxu0
        %v5975 = vadd.f32 0.0, %v5974
        %v5976 = vpop.f32.mrf.mxu0
        %v5977 = vadd.f32 0.0, %v5976
        %v5978 = vpop.f32.mrf.mxu0
        %v5979 = vadd.f32 0.0, %v5978
        %5980 = vmatprep.mubr.bf16.mxu0 %v5505
        %5981 = vmatmul.mubr.bf16.gmra.mxu0 %v5503
        %v5982 = vpop.f32.mrf.mxu0
        %v5983 = vadd.f32 0.0, %v5982
        %v5984 = vpop.f32.mrf.mxu0
        %v5985 = vadd.f32 0.0, %v5984
        %v5986 = vpop.f32.mrf.mxu0
        %v5987 = vadd.f32 0.0, %v5986
        %v5988 = vpop.f32.mrf.mxu0
        %v5989 = vadd.f32 0.0, %v5988
        %5990 = vmatprep.mubr.bf16.mxu0 %v5511
        %5991 = vmatmul.mubr.bf16.gmra.mxu0 %v5509
        %v5992 = vpop.f32.mrf.mxu0
        %v5993 = vadd.f32 0.0, %v5992
        %v5994 = vpop.f32.mrf.mxu0
        %v5995 = vadd.f32 0.0, %v5994
        %v5996 = vpop.f32.mrf.mxu0
        %v5997 = vadd.f32 0.0, %v5996
        %v5998 = vpop.f32.mrf.mxu0
        %v5999 = vadd.f32 0.0, %v5998
        %6000 = vmatprep.mubr.bf16.mxu0 %v5517
        %6001 = vmatmul.mubr.bf16.gmra.mxu0 %v5515
        %v6002 = vpop.f32.mrf.mxu0
        %v6003 = vadd.f32 0.0, %v6002
        %v6004 = vpop.f32.mrf.mxu0
        %v6005 = vadd.f32 0.0, %v6004
        %v6006 = vpop.f32.mrf.mxu0
        %v6007 = vadd.f32 0.0, %v6006
        %v6008 = vpop.f32.mrf.mxu0
        %v6009 = vadd.f32 0.0, %v6008
        %6010 = vmatprep.mubr.bf16.mxu0 %v5523
        %6011 = vmatmul.mubr.bf16.gmra.mxu0 %v5521
        %v6012 = vpop.f32.mrf.mxu0
        %v6013 = vadd.f32 0.0, %v6012
        %v6014 = vpop.f32.mrf.mxu0
        %v6015 = vadd.f32 0.0, %v6014
        %v6016 = vpop.f32.mrf.mxu0
        %v6017 = vadd.f32 0.0, %v6016
        %v6018 = vpop.f32.mrf.mxu0
        %v6019 = vadd.f32 0.0, %v6018
        %6020 = vmatprep.mubr.bf16.mxu0 %v5529
        %6021 = vmatmul.mubr.bf16.gmra.mxu0 %v5527
        %v6022 = vpop.f32.mrf.mxu0
        %v6023 = vadd.f32 0.0, %v6022
        %v6024 = vpop.f32.mrf.mxu0
        %v6025 = vadd.f32 0.0, %v6024
        %v6026 = vpop.f32.mrf.mxu0
        %v6027 = vadd.f32 0.0, %v6026
        %v6028 = vpop.f32.mrf.mxu0
        %v6029 = vadd.f32 0.0, %v6028
        %6030 = vmatprep.mubr.bf16.mxu0 %v5535
        %6031 = vmatmul.mubr.bf16.gmra.mxu0 %v5533
        %v6032 = vpop.f32.mrf.mxu0
        %v6033 = vadd.f32 0.0, %v6032
        %v6034 = vpop.f32.mrf.mxu0
        %v6035 = vadd.f32 0.0, %v6034
        %v6036 = vpop.f32.mrf.mxu0
        %v6037 = vadd.f32 0.0, %v6036
        %v6038 = vpop.f32.mrf.mxu0
        %v6039 = vadd.f32 0.0, %v6038
        %6040 = vmatprep.mubr.bf16.mxu0 %v5583
        %6041 = vmatmul.mubr.bf16.gmra.mxu0 %v5579
        %v6042 = vpop.f32.mrf.mxu0
        %v6043 = vadd.f32 0.0, %v6042
        %v6044 = vpop.f32.mrf.mxu0
        %v6045 = vadd.f32 0.0, %v6044
        %v6046 = vpop.f32.mrf.mxu0
        %v6047 = vadd.f32 0.0, %v6046
        %v6048 = vpop.f32.mrf.mxu0
        %v6049 = vadd.f32 0.0, %v6048
        %6050 = vdwg.mxu0
        %6051 = vmatprep.subr.bf16.mxu0 %v5829
        %6052 = vmatpush1.bf16.msra.mxu0 %v5828
        %6053 = vmatprep.subr.bf16.mxu0 %v5827
        %6054 = vmatpush1.bf16.msra.mxu0 %v5826
        %6055 = vmatprep.subr.bf16.mxu0 %v5825
        %6056 = vmatpush1.bf16.msra.mxu0 %v5824
        %6057 = vmatprep.subr.bf16.mxu0 %v5823
        %6058 = vmatpush1.bf16.msra.mxu0 %v5822
        %6059 = vmatprep.subr.bf16.mxu0 %v5821
        %6060 = vmatpush1.bf16.msra.mxu0 %v5820
        %6061 = vmatprep.subr.bf16.mxu0 %v5819
        %6062 = vmatpush1.bf16.msra.mxu0 %v5818
        %6063 = vmatprep.subr.bf16.mxu0 %v5817
        %6064 = vmatpush1.bf16.msra.mxu0 %v5816
        %6065 = vmatprep.subr.bf16.mxu0 %v5815
        %6066 = vmatpush1.bf16.msra.mxu0 %v5814
        %6067 = vmatprep.subr.bf16.mxu0 0
        %6068 = vmatpush2.bf16.msra.mxu0 0
        %6069 = vmatprep.subr.bf16.mxu0 0
        %6070 = vmatpush2.bf16.msra.mxu0 0
        %6071 = vmatprep.subr.bf16.mxu0 0
        %6072 = vmatpush2.bf16.msra.mxu0 0
        %6073 = vmatprep.subr.bf16.mxu0 0
        %6074 = vmatpush2.bf16.msra.mxu0 0
        %6075 = vmatprep.subr.bf16.mxu0 0
        %6076 = vmatpush2.bf16.msra.mxu0 0
        %6077 = vmatprep.subr.bf16.mxu0 0
        %6078 = vmatpush2.bf16.msra.mxu0 0
        %6079 = vmatprep.subr.bf16.mxu0 0
        %6080 = vmatpush2.bf16.msra.mxu0 0
        %6081 = vmatprep.subr.bf16.mxu0 0
        %6082 = vmatpush2.bf16.msra.mxu0 0
        %6083 = vmatprep.mubr.bf16.mxu0 0
        %6084 = vmatmul.mubr.bf16.gmra.mxu0 %v5465
        %v6085 = vpop.f32.mrf.mxu0
        %v6086 = vadd.f32 %v5913, %v6085
        %v6087 = vpop.f32.mrf.mxu0
        %v6088 = vadd.f32 %v5915, %v6087
        %v6089 = vpop.f32.mrf.mxu0
        %v6090 = vadd.f32 %v5917, %v6089
        %v6091 = vpop.f32.mrf.mxu0
        %v6092 = vadd.f32 %v5919, %v6091
        %6093 = vmatprep.mubr.bf16.mxu0 0
        %6094 = vmatmul.mubr.bf16.gmra.mxu0 %v5471
        %v6095 = vpop.f32.mrf.mxu0
        %v6096 = vadd.f32 %v5923, %v6095
        %v6097 = vpop.f32.mrf.mxu0
        %v6098 = vadd.f32 %v5925, %v6097
        %v6099 = vpop.f32.mrf.mxu0
        %v6100 = vadd.f32 %v5927, %v6099
        %v6101 = vpop.f32.mrf.mxu0
        %v6102 = vadd.f32 %v5929, %v6101
        %6103 = vmatprep.mubr.bf16.mxu0 0
        %6104 = vmatmul.mubr.bf16.gmra.mxu0 %v5477
        %v6105 = vpop.f32.mrf.mxu0
        %v6106 = vadd.f32 %v5933, %v6105
        %v6107 = vpop.f32.mrf.mxu0
        %v6108 = vadd.f32 %v5935, %v6107
        %v6109 = vpop.f32.mrf.mxu0
        %v6110 = vadd.f32 %v5937, %v6109
        %v6111 = vpop.f32.mrf.mxu0
        %v6112 = vadd.f32 %v5939, %v6111
        %6113 = vmatprep.mubr.bf16.mxu0 0
        %6114 = vmatmul.mubr.bf16.gmra.mxu0 %v5483
        %v6115 = vpop.f32.mrf.mxu0
        %v6116 = vadd.f32 %v5943, %v6115
        %v6117 = vpop.f32.mrf.mxu0
        %v6118 = vadd.f32 %v5945, %v6117
        %v6119 = vpop.f32.mrf.mxu0
        %v6120 = vadd.f32 %v5947, %v6119
        %v6121 = vpop.f32.mrf.mxu0
        %v6122 = vadd.f32 %v5949, %v6121
        %6123 = vmatprep.mubr.bf16.mxu0 0
        %6124 = vmatmul.mubr.bf16.gmra.mxu0 %v5489
        %v6125 = vpop.f32.mrf.mxu0
        %v6126 = vadd.f32 %v5953, %v6125
        %v6127 = vpop.f32.mrf.mxu0
        %v6128 = vadd.f32 %v5955, %v6127
        %v6129 = vpop.f32.mrf.mxu0
        %v6130 = vadd.f32 %v5957, %v6129
        %v6131 = vpop.f32.mrf.mxu0
        %v6132 = vadd.f32 %v5959, %v6131
        %6133 = vmatprep.mubr.bf16.mxu0 0
        %6134 = vmatmul.mubr.bf16.gmra.mxu0 %v5495
        %v6135 = vpop.f32.mrf.mxu0
        %v6136 = vadd.f32 %v5963, %v6135
        %v6137 = vpop.f32.mrf.mxu0
        %v6138 = vadd.f32 %v5965, %v6137
        %v6139 = vpop.f32.mrf.mxu0
        %v6140 = vadd.f32 %v5967, %v6139
        %v6141 = vpop.f32.mrf.mxu0
        %v6142 = vadd.f32 %v5969, %v6141
        %6143 = vmatprep.mubr.bf16.mxu0 0
        %6144 = vmatmul.mubr.bf16.gmra.mxu0 %v5501
        %v6145 = vpop.f32.mrf.mxu0
        %v6146 = vadd.f32 %v5973, %v6145
        %v6147 = vpop.f32.mrf.mxu0
        %v6148 = vadd.f32 %v5975, %v6147
        %v6149 = vpop.f32.mrf.mxu0
        %v6150 = vadd.f32 %v5977, %v6149
        %v6151 = vpop.f32.mrf.mxu0
        %v6152 = vadd.f32 %v5979, %v6151
        %6153 = vmatprep.mubr.bf16.mxu0 0
        %6154 = vmatmul.mubr.bf16.gmra.mxu0 %v5507
        %v6155 = vpop.f32.mrf.mxu0
        %v6156 = vadd.f32 %v5983, %v6155
        %v6157 = vpop.f32.mrf.mxu0
        %v6158 = vadd.f32 %v5985, %v6157
        %v6159 = vpop.f32.mrf.mxu0
        %v6160 = vadd.f32 %v5987, %v6159
        %v6161 = vpop.f32.mrf.mxu0
        %v6162 = vadd.f32 %v5989, %v6161
        %6163 = vmatprep.mubr.bf16.mxu0 0
        %6164 = vmatmul.mubr.bf16.gmra.mxu0 %v5513
        %v6165 = vpop.f32.mrf.mxu0
        %v6166 = vadd.f32 %v5993, %v6165
        %v6167 = vpop.f32.mrf.mxu0
        %v6168 = vadd.f32 %v5995, %v6167
        %v6169 = vpop.f32.mrf.mxu0
        %v6170 = vadd.f32 %v5997, %v6169
        %v6171 = vpop.f32.mrf.mxu0
        %v6172 = vadd.f32 %v5999, %v6171
        %6173 = vmatprep.mubr.bf16.mxu0 0
        %6174 = vmatmul.mubr.bf16.gmra.mxu0 %v5519
        %v6175 = vpop.f32.mrf.mxu0
        %v6176 = vadd.f32 %v6003, %v6175
        %v6177 = vpop.f32.mrf.mxu0
        %v6178 = vadd.f32 %v6005, %v6177
        %v6179 = vpop.f32.mrf.mxu0
        %v6180 = vadd.f32 %v6007, %v6179
        %v6181 = vpop.f32.mrf.mxu0
        %v6182 = vadd.f32 %v6009, %v6181
        %6183 = vmatprep.mubr.bf16.mxu0 0
        %6184 = vmatmul.mubr.bf16.gmra.mxu0 %v5525
        %v6185 = vpop.f32.mrf.mxu0
        %v6186 = vadd.f32 %v6013, %v6185
        %v6187 = vpop.f32.mrf.mxu0
        %v6188 = vadd.f32 %v6015, %v6187
        %v6189 = vpop.f32.mrf.mxu0
        %v6190 = vadd.f32 %v6017, %v6189
        %v6191 = vpop.f32.mrf.mxu0
        %v6192 = vadd.f32 %v6019, %v6191
        %6193 = vmatprep.mubr.bf16.mxu0 0
        %6194 = vmatmul.mubr.bf16.gmra.mxu0 %v5531
        %v6195 = vpop.f32.mrf.mxu0
        %v6196 = vadd.f32 %v6023, %v6195
        %v6197 = vpop.f32.mrf.mxu0
        %v6198 = vadd.f32 %v6025, %v6197
        %v6199 = vpop.f32.mrf.mxu0
        %v6200 = vadd.f32 %v6027, %v6199
        %v6201 = vpop.f32.mrf.mxu0
        %v6202 = vadd.f32 %v6029, %v6201
        %6203 = vmatprep.mubr.bf16.mxu0 0
        %6204 = vmatmul.mubr.bf16.gmra.mxu0 %v5537
        %v6205 = vpop.f32.mrf.mxu0
        %v6206 = vadd.f32 %v6033, %v6205
        %v6207 = vpop.f32.mrf.mxu0
        %v6208 = vadd.f32 %v6035, %v6207
        %v6209 = vpop.f32.mrf.mxu0
        %v6210 = vadd.f32 %v6037, %v6209
        %v6211 = vpop.f32.mrf.mxu0
        %v6212 = vadd.f32 %v6039, %v6211
        %6213 = vmatprep.mubr.bf16.mxu0 0
        %6214 = vmatmul.mubr.bf16.gmra.mxu0 %v5587
        %v6215 = vpop.f32.mrf.mxu0
        %v6216 = vadd.f32 %v6043, %v6215
        %v6217 = vpop.f32.mrf.mxu0
        %v6218 = vadd.f32 %v6045, %v6217
        %v6219 = vpop.f32.mrf.mxu0
        %v6220 = vadd.f32 %v6047, %v6219
        %v6221 = vpop.f32.mrf.mxu0
        %v6222 = vadd.f32 %v6049, %v6221
        %6223 = vdwg.mxu0
        %v6224 = vadd.f32 %v5358, %v6086
        %v6225 = vadd.f32 %v5359, %v6088
        %v6226 = vadd.f32 %v5360, %v6090
        %v6227 = vadd.f32 %v5361, %v6092
        %v6228 = vadd.f32 %v5362, %v6096
        %v6229 = vadd.f32 %v5363, %v6098
        %v6230 = vadd.f32 %v5364, %v6100
        %v6231 = vadd.f32 %v5365, %v6102
        %v6232 = vadd.f32 %v5366, %v6106
        %v6233 = vadd.f32 %v5367, %v6108
        %v6234 = vadd.f32 %v5368, %v6110
        %v6235 = vadd.f32 %v5369, %v6112
        %v6236 = vadd.f32 %v5370, %v6116
        %v6237 = vadd.f32 %v5371, %v6118
        %v6238 = vadd.f32 %v5372, %v6120
        %v6239 = vadd.f32 %v5373, %v6122
        %v6240 = vadd.f32 %v5374, %v6126
        %v6241 = vadd.f32 %v5375, %v6128
        %v6242 = vadd.f32 %v5376, %v6130
        %v6243 = vadd.f32 %v5377, %v6132
        %v6244 = vadd.f32 %v5378, %v6136
        %v6245 = vadd.f32 %v5379, %v6138
        %v6246 = vadd.f32 %v5380, %v6140
        %v6247 = vadd.f32 %v5381, %v6142
        %v6248 = vadd.f32 %v5382, %v6146
        %v6249 = vadd.f32 %v5383, %v6148
        %v6250 = vadd.f32 %v5384, %v6150
        %v6251 = vadd.f32 %v5385, %v6152
        %v6252 = vadd.f32 %v5386, %v6156
        %v6253 = vadd.f32 %v5387, %v6158
        %v6254 = vadd.f32 %v5388, %v6160
        %v6255 = vadd.f32 %v5389, %v6162
        %v6256 = vadd.f32 %v5390, %v6166
        %v6257 = vadd.f32 %v5391, %v6168
        %v6258 = vadd.f32 %v5392, %v6170
        %v6259 = vadd.f32 %v5393, %v6172
        %v6260 = vadd.f32 %v5394, %v6176
        %v6261 = vadd.f32 %v5395, %v6178
        %v6262 = vadd.f32 %v5396, %v6180
        %v6263 = vadd.f32 %v5397, %v6182
        %v6264 = vadd.f32 %v5398, %v6186
        %v6265 = vadd.f32 %v5399, %v6188
        %v6266 = vadd.f32 %v5400, %v6190
        %v6267 = vadd.f32 %v5401, %v6192
        %v6268 = vadd.f32 %v5402, %v6196
        %v6269 = vadd.f32 %v5403, %v6198
        %v6270 = vadd.f32 %v5404, %v6200
        %v6271 = vadd.f32 %v5405, %v6202
        %v6272 = vadd.f32 %v5406, %v6206
        %v6273 = vadd.f32 %v5407, %v6208
        %v6274 = vadd.f32 %v5408, %v6210
        %v6275 = vadd.f32 %v5409, %v6212
        %v6276 = vadd.f32 %v5410, %v6216
        %v6277 = vadd.f32 %v5411, %v6218
        %v6278 = vadd.f32 %v5412, %v6220
        %v6279 = vadd.f32 %v5413, %v6222
        %vm6280 = vcmask 1045504
        %v6281 = vrot.slane %v4670, 2
        %v6282 = vrot.slane %v4673, 2
        %v6283 = vsel %vm6280, %v6281, %v6282
        %v6284 = vrot.slane %v4671, 2
        %v6285 = vrot.slane %v4674, 2
        %v6286 = vsel %vm6280, %v6284, %v6285
        %v6287 = vrot.slane %v4672, 2
        %v6288 = vrot.slane %v4675, 2
        %v6289 = vsel %vm6280, %v6287, %v6288
        %v6290 = vrot.slane %v4676, 2
        %v6291 = vsel %vm6280, %v6282, %v6290
        %v6292 = vrot.slane %v4677, 2
        %v6293 = vsel %vm6280, %v6285, %v6292
        %v6294 = vrot.slane %v4678, 2
        %v6295 = vsel %vm6280, %v6288, %v6294
        %v6296 = vrot.slane %v4679, 2
        %v6297 = vsel %vm6280, %v6290, %v6296
        %v6298 = vrot.slane %v4680, 2
        %v6299 = vsel %vm6280, %v6292, %v6298
        %v6300 = vrot.slane %v4681, 2
        %v6301 = vsel %vm6280, %v6294, %v6300
        %v6302 = vrot.slane %v4682, 2
        %v6303 = vsel %vm6280, %v6296, %v6302
        %v6304 = vrot.slane %v4683, 2
        %v6305 = vsel %vm6280, %v6298, %v6304
        %v6306 = vrot.slane %v4684, 2
        %v6307 = vsel %vm6280, %v6300, %v6306
        %v6308 = vrot.slane %v4685, 2
        %v6309 = vsel %vm6280, %v6302, %v6308
        %v6310 = vrot.slane %v4686, 2
        %v6311 = vsel %vm6280, %v6304, %v6310
        %v6312 = vrot.slane %v4687, 2
        %v6313 = vsel %vm6280, %v6306, %v6312
        %v6314 = vrot.slane %v4688, 2
        %v6315 = vsel %vm6280, %v6308, %v6314
        %v6316 = vrot.slane %v4689, 2
        %v6317 = vsel %vm6280, %v6310, %v6316
        %v6318 = vrot.slane %v4690, 2
        %v6319 = vsel %vm6280, %v6312, %v6318
        %v6320 = vrot.slane %v4691, 2
        %v6321 = vsel %vm6280, %v6314, %v6320
        %v6322 = vrot.slane %v4692, 2
        %v6323 = vsel %vm6280, %v6316, %v6322
        %v6324 = vrot.slane %v4693, 2
        %v6325 = vsel %vm6280, %v6318, %v6324
        %v6326 = vrot.slane %v4694, 2
        %v6327 = vsel %vm6280, %v6320, %v6326
        %v6328 = vrot.slane %v4695, 2
        %v6329 = vsel %vm6280, %v6322, %v6328
        %v6330 = vrot.slane %v4696, 2
        %v6331 = vsel %vm6280, %v6324, %v6330
        %v6332 = vrot.slane %v4697, 2
        %v6333 = vsel %vm6280, %v6326, %v6332
        %v6334 = vrot.slane %v4698, 2
        %v6335 = vsel %vm6280, %v6328, %v6334
        %v6336 = vrot.slane %v4699, 2
        %v6337 = vsel %vm6280, %v6330, %v6336
        %v6338 = vrot.slane %v4700, 2
        %v6339 = vsel %vm6280, %v6332, %v6338
        %v6340 = vrot.slane %v4701, 2
        %v6341 = vsel %vm6280, %v6334, %v6340
        %v6342 = vrot.slane %v4702, 2
        %v6343 = vsel %vm6280, %v6336, %v6342
        %v6344 = vrot.slane %v4703, 2
        %v6345 = vsel %vm6280, %v6338, %v6344
        %v6346 = vrot.slane %v4704, 2
        %v6347 = vsel %vm6280, %v6340, %v6346
        %v6348 = vrot.slane %v4705, 2
        %v6349 = vsel %vm6280, %v6342, %v6348
        %v6350 = vrot.slane %v4706, 2
        %v6351 = vsel %vm6280, %v6344, %v6350
        %v6352 = vrot.slane %v4707, 2
        %v6353 = vsel %vm6280, %v6346, %v6352
        %v6354 = vrot.slane %v4708, 2
        %v6355 = vsel %vm6280, %v6348, %v6354
        %v6356 = vrot.slane %v4709, 2
        %v6357 = vsel %vm6280, %v6350, %v6356
        %v6358 = vrot.slane %v4710, 2
        %v6359 = vsel %vm6280, %v6352, %v6358
        %v6360 = vrot.slane %v4711, 2
        %v6361 = vsel %vm6280, %v6354, %v6360
        %v6403 = vsel %vm1651, %v6356, %v6281
        %v6407 = vsel %vm1651, %v6358, %v6284
        %v6411 = vsel %vm1651, %v6360, %v6287
        %s6413 = scalar_lea.vmem [#allocation4], 768
        %v6414 = vld [vmem:[%s6413] sm:$0xff]
        %v6415 = vld [vmem:[%s6413 + $0x8] sm:$0xff]
        %v6416 = vld [vmem:[%s6413 + $0x10] sm:$0xff]
        %v6417 = vld [vmem:[%s6413 + $0x18] sm:$0xff]
        %v6418 = vld [vmem:[%s6413 + $0x20] sm:$0xff]
        %v6419 = vld [vmem:[%s6413 + $0x28] sm:$0xff]
        %v6420 = vld [vmem:[%s6413 + $0x30] sm:$0xff]
        %v6421 = vld [vmem:[%s6413 + $0x38] sm:$0xff]
        %v6422 = vld [vmem:[%s6413 + $0x40] sm:$0xff]
        %v6423 = vld [vmem:[%s6413 + $0x48] sm:$0xff]
        %v6424 = vld [vmem:[%s6413 + $0x50] sm:$0xff]
        %v6425 = vld [vmem:[%s6413 + $0x58] sm:$0xff]
        %v6426 = vld [vmem:[%s6413 + $0x60] sm:$0xff]
        %v6427 = vld [vmem:[%s6413 + $0x68] sm:$0xff]
        %v6428 = vld [vmem:[%s6413 + $0x70] sm:$0xff]
        %v6429 = vld [vmem:[%s6413 + $0x78] sm:$0xff]
        %v6430 = vld [vmem:[%s6413 + $0x80] sm:$0xff]
        %v6431 = vld [vmem:[%s6413 + $0x88] sm:$0xff]
        %v6432 = vld [vmem:[%s6413 + $0x90] sm:$0xff]
        %v6433 = vld [vmem:[%s6413 + $0x98] sm:$0xff]
        %v6434 = vld [vmem:[%s6413 + $0xa0] sm:$0xff]
        %v6435 = vld [vmem:[%s6413 + $0xa8] sm:$0xff]
        %v6436 = vld [vmem:[%s6413 + $0xb0] sm:$0xff]
        %v6437 = vld [vmem:[%s6413 + $0xb8] sm:$0xff]
        %v6438 = vld [vmem:[%s6413 + $0xc0] sm:$0xff]
        %v6439 = vld [vmem:[%s6413 + $0xc8] sm:$0xff]
        %v6440 = vld [vmem:[%s6413 + $0xd0] sm:$0xff]
        %v6441 = vld [vmem:[%s6413 + $0xd8] sm:$0xff]
        %v6442 = vld [vmem:[%s6413 + $0xe0] sm:$0xff]
        %v6443 = vld [vmem:[%s6413 + $0xe8] sm:$0xff]
        %v6444 = vld [vmem:[%s6413 + $0xf0] sm:$0xff]
        %v6445 = vld [vmem:[%s6413 + $0xf8] sm:$0xff]
        %v6446 = vld [vmem:[%s6413 + $0x100] sm:$0xff]
        %v6447 = vld [vmem:[%s6413 + $0x108] sm:$0xff]
        %v6448 = vld [vmem:[%s6413 + $0x110] sm:$0xff]
        %v6449 = vld [vmem:[%s6413 + $0x118] sm:$0xff]
        %v6450 = vld [vmem:[%s6413 + $0x120] sm:$0xff]
        %v6451 = vld [vmem:[%s6413 + $0x128] sm:$0xff]
        %v6452 = vld [vmem:[%s6413 + $0x130] sm:$0xff]
        %v6453 = vld [vmem:[%s6413 + $0x138] sm:$0xff]
        %v6454 = vld [vmem:[%s6413 + $0x140] sm:$0xff]
        %v6455 = vld [vmem:[%s6413 + $0x148] sm:$0xff]
        %v6456 = vld [vmem:[%s6413 + $0x150] sm:$0xff]
        %v6457 = vld [vmem:[%s6413 + $0x158] sm:$0xff]
        %v6458 = vld [vmem:[%s6413 + $0x160] sm:$0xff]
        %v6459 = vld [vmem:[%s6413 + $0x168] sm:$0xff]
        %v6460 = vld [vmem:[%s6413 + $0x170] sm:$0xff]
        %v6461 = vld [vmem:[%s6413 + $0x178] sm:$0xff]
        %v6510 = vunpack.c.l.b16 %v6414
        %v6511 = vunpack.c.h.b16 %v6414
        %v6512 = vunpack.c.l.b16 %v6415
        %v6513 = vunpack.c.h.b16 %v6415
        %v6514 = vunpack.c.l.b16 %v6416
        %v6515 = vunpack.c.h.b16 %v6416
        %v6516 = vunpack.c.l.b16 %v6417
        %v6517 = vunpack.c.h.b16 %v6417
        %v6518 = vunpack.c.l.b16 %v6418
        %v6519 = vunpack.c.h.b16 %v6418
        %v6520 = vunpack.c.l.b16 %v6419
        %v6521 = vunpack.c.h.b16 %v6419
        %v6522 = vunpack.c.l.b16 %v6420
        %v6523 = vunpack.c.h.b16 %v6420
        %v6524 = vunpack.c.l.b16 %v6421
        %v6525 = vunpack.c.h.b16 %v6421
        %v6526 = vunpack.c.l.b16 %v6422
        %v6527 = vunpack.c.h.b16 %v6422
        %v6528 = vunpack.c.l.b16 %v6423
        %v6529 = vunpack.c.h.b16 %v6423
        %v6530 = vunpack.c.l.b16 %v6424
        %v6531 = vunpack.c.h.b16 %v6424
        %v6532 = vunpack.c.l.b16 %v6425
        %v6533 = vunpack.c.h.b16 %v6425
        %v6534 = vunpack.c.l.b16 %v6426
        %v6535 = vunpack.c.h.b16 %v6426
        %v6536 = vunpack.c.l.b16 %v6427
        %v6537 = vunpack.c.h.b16 %v6427
        %v6538 = vunpack.c.l.b16 %v6428
        %v6539 = vunpack.c.h.b16 %v6428
        %v6540 = vunpack.c.l.b16 %v6429
        %v6541 = vunpack.c.h.b16 %v6429
        %v6542 = vunpack.c.l.b16 %v6430
        %v6543 = vunpack.c.h.b16 %v6430
        %v6544 = vunpack.c.l.b16 %v6431
        %v6545 = vunpack.c.h.b16 %v6431
        %v6546 = vunpack.c.l.b16 %v6432
        %v6547 = vunpack.c.h.b16 %v6432
        %v6548 = vunpack.c.l.b16 %v6433
        %v6549 = vunpack.c.h.b16 %v6433
        %v6550 = vunpack.c.l.b16 %v6434
        %v6551 = vunpack.c.h.b16 %v6434
        %v6552 = vunpack.c.l.b16 %v6435
        %v6553 = vunpack.c.h.b16 %v6435
        %v6554 = vunpack.c.l.b16 %v6436
        %v6555 = vunpack.c.h.b16 %v6436
        %v6556 = vunpack.c.l.b16 %v6437
        %v6557 = vunpack.c.h.b16 %v6437
        %v6558 = vunpack.c.l.b16 %v6438
        %v6559 = vunpack.c.h.b16 %v6438
        %v6560 = vunpack.c.l.b16 %v6439
        %v6561 = vunpack.c.h.b16 %v6439
        %v6562 = vunpack.c.l.b16 %v6440
        %v6563 = vunpack.c.h.b16 %v6440
        %v6564 = vunpack.c.l.b16 %v6441
        %v6565 = vunpack.c.h.b16 %v6441
        %v6566 = vunpack.c.l.b16 %v6442
        %v6567 = vunpack.c.h.b16 %v6442
        %v6568 = vunpack.c.l.b16 %v6443
        %v6569 = vunpack.c.h.b16 %v6443
        %v6570 = vunpack.c.l.b16 %v6444
        %v6571 = vunpack.c.h.b16 %v6444
        %v6572 = vunpack.c.l.b16 %v6445
        %v6573 = vunpack.c.h.b16 %v6445
        %v6574 = vunpack.c.l.b16 %v6446
        %v6575 = vunpack.c.h.b16 %v6446
        %v6576 = vunpack.c.l.b16 %v6447
        %v6577 = vunpack.c.h.b16 %v6447
        %v6578 = vunpack.c.l.b16 %v6448
        %v6579 = vunpack.c.h.b16 %v6448
        %v6580 = vunpack.c.l.b16 %v6449
        %v6581 = vunpack.c.h.b16 %v6449
        %v6582 = vunpack.c.l.b16 %v6450
        %v6583 = vunpack.c.h.b16 %v6450
        %v6584 = vunpack.c.l.b16 %v6451
        %v6585 = vunpack.c.h.b16 %v6451
        %v6586 = vunpack.c.l.b16 %v6452
        %v6587 = vunpack.c.h.b16 %v6452
        %v6588 = vunpack.c.l.b16 %v6453
        %v6589 = vunpack.c.h.b16 %v6453
        %v6590 = vunpack.c.l.b16 %v6454
        %v6591 = vunpack.c.h.b16 %v6454
        %v6592 = vunpack.c.l.b16 %v6455
        %v6593 = vunpack.c.h.b16 %v6455
        %v6594 = vunpack.c.l.b16 %v6456
        %v6595 = vunpack.c.h.b16 %v6456
        %v6596 = vunpack.c.l.b16 %v6457
        %v6597 = vunpack.c.h.b16 %v6457
        %v6598 = vunpack.c.l.b16 %v6458
        %v6599 = vunpack.c.h.b16 %v6458
        %v6600 = vunpack.c.l.b16 %v6459
        %v6601 = vunpack.c.h.b16 %v6459
        %v6602 = vunpack.c.l.b16 %v6460
        %v6603 = vunpack.c.h.b16 %v6460
        %v6604 = vunpack.c.l.b16 %v6461
        %v6605 = vunpack.c.h.b16 %v6461
        %v6606 = vpack.c.b16 %v6512, %v6510
        %v6607 = vpack.c.b16 %v6513, %v6511
        %v6608 = vpack.c.b16 %v6516, %v6514
        %v6609 = vpack.c.b16 %v6517, %v6515
        %v6610 = vpack.c.b16 %v6520, %v6518
        %v6611 = vpack.c.b16 %v6521, %v6519
        %v6612 = vpack.c.b16 %v6524, %v6522
        %v6613 = vpack.c.b16 %v6525, %v6523
        %v6614 = vpack.c.b16 %v6528, %v6526
        %v6615 = vpack.c.b16 %v6529, %v6527
        %v6616 = vpack.c.b16 %v6532, %v6530
        %v6617 = vpack.c.b16 %v6533, %v6531
        %v6618 = vpack.c.b16 %v6536, %v6534
        %v6619 = vpack.c.b16 %v6537, %v6535
        %v6620 = vpack.c.b16 %v6540, %v6538
        %v6621 = vpack.c.b16 %v6541, %v6539
        %v6622 = vpack.c.b16 %v6544, %v6542
        %v6623 = vpack.c.b16 %v6545, %v6543
        %v6624 = vpack.c.b16 %v6548, %v6546
        %v6625 = vpack.c.b16 %v6549, %v6547
        %v6626 = vpack.c.b16 %v6552, %v6550
        %v6627 = vpack.c.b16 %v6553, %v6551
        %v6628 = vpack.c.b16 %v6556, %v6554
        %v6629 = vpack.c.b16 %v6557, %v6555
        %v6630 = vpack.c.b16 %v6560, %v6558
        %v6631 = vpack.c.b16 %v6561, %v6559
        %v6632 = vpack.c.b16 %v6564, %v6562
        %v6633 = vpack.c.b16 %v6565, %v6563
        %v6634 = vpack.c.b16 %v6568, %v6566
        %v6635 = vpack.c.b16 %v6569, %v6567
        %v6636 = vpack.c.b16 %v6572, %v6570
        %v6637 = vpack.c.b16 %v6573, %v6571
        %v6638 = vpack.c.b16 %v6576, %v6574
        %v6639 = vpack.c.b16 %v6577, %v6575
        %v6640 = vpack.c.b16 %v6580, %v6578
        %v6641 = vpack.c.b16 %v6581, %v6579
        %v6642 = vpack.c.b16 %v6584, %v6582
        %v6643 = vpack.c.b16 %v6585, %v6583
        %v6644 = vpack.c.b16 %v6588, %v6586
        %v6645 = vpack.c.b16 %v6589, %v6587
        %v6646 = vpack.c.b16 %v6592, %v6590
        %v6647 = vpack.c.b16 %v6593, %v6591
        %v6648 = vpack.c.b16 %v6596, %v6594
        %v6649 = vpack.c.b16 %v6597, %v6595
        %v6650 = vpack.c.b16 %v6600, %v6598
        %v6651 = vpack.c.b16 %v6601, %v6599
        %v6652 = vpack.c.b16 %v6604, %v6602
        %v6653 = vpack.c.b16 %v6605, %v6603
        %6702 = vmatprep.subr.bf16.mxu0 %v6621
        %6703 = vmatpush1.bf16.msra.mxu0 %v6620
        %6704 = vmatprep.subr.bf16.mxu0 %v6619
        %6705 = vmatpush1.bf16.msra.mxu0 %v6618
        %6706 = vmatprep.subr.bf16.mxu0 %v6617
        %6707 = vmatpush1.bf16.msra.mxu0 %v6616
        %6708 = vmatprep.subr.bf16.mxu0 %v6615
        %6709 = vmatpush1.bf16.msra.mxu0 %v6614
        %6710 = vmatprep.subr.bf16.mxu0 %v6613
        %6711 = vmatpush1.bf16.msra.mxu0 %v6612
        %6712 = vmatprep.subr.bf16.mxu0 %v6611
        %6713 = vmatpush1.bf16.msra.mxu0 %v6610
        %6714 = vmatprep.subr.bf16.mxu0 %v6609
        %6715 = vmatpush1.bf16.msra.mxu0 %v6608
        %6716 = vmatprep.subr.bf16.mxu0 %v6607
        %6717 = vmatpush1.bf16.msra.mxu0 %v6606
        %6718 = vmatprep.subr.bf16.mxu0 %v6637
        %6719 = vmatpush2.bf16.msra.mxu0 %v6636
        %6720 = vmatprep.subr.bf16.mxu0 %v6635
        %6721 = vmatpush2.bf16.msra.mxu0 %v6634
        %6722 = vmatprep.subr.bf16.mxu0 %v6633
        %6723 = vmatpush2.bf16.msra.mxu0 %v6632
        %6724 = vmatprep.subr.bf16.mxu0 %v6631
        %6725 = vmatpush2.bf16.msra.mxu0 %v6630
        %6726 = vmatprep.subr.bf16.mxu0 %v6629
        %6727 = vmatpush2.bf16.msra.mxu0 %v6628
        %6728 = vmatprep.subr.bf16.mxu0 %v6627
        %6729 = vmatpush2.bf16.msra.mxu0 %v6626
        %6730 = vmatprep.subr.bf16.mxu0 %v6625
        %6731 = vmatpush2.bf16.msra.mxu0 %v6624
        %6732 = vmatprep.subr.bf16.mxu0 %v6623
        %6733 = vmatpush2.bf16.msra.mxu0 %v6622
        %6734 = vmatprep.mubr.bf16.mxu0 %v6286
        %6735 = vmatmul.mubr.bf16.gmra.mxu0 %v6283
        %v6736 = vpop.f32.mrf.mxu0
        %v6737 = vadd.f32 0.0, %v6736
        %v6738 = vpop.f32.mrf.mxu0
        %v6739 = vadd.f32 0.0, %v6738
        %v6740 = vpop.f32.mrf.mxu0
        %v6741 = vadd.f32 0.0, %v6740
        %v6742 = vpop.f32.mrf.mxu0
        %v6743 = vadd.f32 0.0, %v6742
        %6744 = vmatprep.mubr.bf16.mxu0 %v6293
        %6745 = vmatmul.mubr.bf16.gmra.mxu0 %v6291
        %v6746 = vpop.f32.mrf.mxu0
        %v6747 = vadd.f32 0.0, %v6746
        %v6748 = vpop.f32.mrf.mxu0
        %v6749 = vadd.f32 0.0, %v6748
        %v6750 = vpop.f32.mrf.mxu0
        %v6751 = vadd.f32 0.0, %v6750
        %v6752 = vpop.f32.mrf.mxu0
        %v6753 = vadd.f32 0.0, %v6752
        %6754 = vmatprep.mubr.bf16.mxu0 %v6299
        %6755 = vmatmul.mubr.bf16.gmra.mxu0 %v6297
        %v6756 = vpop.f32.mrf.mxu0
        %v6757 = vadd.f32 0.0, %v6756
        %v6758 = vpop.f32.mrf.mxu0
        %v6759 = vadd.f32 0.0, %v6758
        %v6760 = vpop.f32.mrf.mxu0
        %v6761 = vadd.f32 0.0, %v6760
        %v6762 = vpop.f32.mrf.mxu0
        %v6763 = vadd.f32 0.0, %v6762
        %6764 = vmatprep.mubr.bf16.mxu0 %v6305
        %6765 = vmatmul.mubr.bf16.gmra.mxu0 %v6303
        %v6766 = vpop.f32.mrf.mxu0
        %v6767 = vadd.f32 0.0, %v6766
        %v6768 = vpop.f32.mrf.mxu0
        %v6769 = vadd.f32 0.0, %v6768
        %v6770 = vpop.f32.mrf.mxu0
        %v6771 = vadd.f32 0.0, %v6770
        %v6772 = vpop.f32.mrf.mxu0
        %v6773 = vadd.f32 0.0, %v6772
        %6774 = vmatprep.mubr.bf16.mxu0 %v6311
        %6775 = vmatmul.mubr.bf16.gmra.mxu0 %v6309
        %v6776 = vpop.f32.mrf.mxu0
        %v6777 = vadd.f32 0.0, %v6776
        %v6778 = vpop.f32.mrf.mxu0
        %v6779 = vadd.f32 0.0, %v6778
        %v6780 = vpop.f32.mrf.mxu0
        %v6781 = vadd.f32 0.0, %v6780
        %v6782 = vpop.f32.mrf.mxu0
        %v6783 = vadd.f32 0.0, %v6782
        %6784 = vmatprep.mubr.bf16.mxu0 %v6317
        %6785 = vmatmul.mubr.bf16.gmra.mxu0 %v6315
        %v6786 = vpop.f32.mrf.mxu0
        %v6787 = vadd.f32 0.0, %v6786
        %v6788 = vpop.f32.mrf.mxu0
        %v6789 = vadd.f32 0.0, %v6788
        %v6790 = vpop.f32.mrf.mxu0
        %v6791 = vadd.f32 0.0, %v6790
        %v6792 = vpop.f32.mrf.mxu0
        %v6793 = vadd.f32 0.0, %v6792
        %6794 = vmatprep.mubr.bf16.mxu0 %v6323
        %6795 = vmatmul.mubr.bf16.gmra.mxu0 %v6321
        %v6796 = vpop.f32.mrf.mxu0
        %v6797 = vadd.f32 0.0, %v6796
        %v6798 = vpop.f32.mrf.mxu0
        %v6799 = vadd.f32 0.0, %v6798
        %v6800 = vpop.f32.mrf.mxu0
        %v6801 = vadd.f32 0.0, %v6800
        %v6802 = vpop.f32.mrf.mxu0
        %v6803 = vadd.f32 0.0, %v6802
        %6804 = vmatprep.mubr.bf16.mxu0 %v6329
        %6805 = vmatmul.mubr.bf16.gmra.mxu0 %v6327
        %v6806 = vpop.f32.mrf.mxu0
        %v6807 = vadd.f32 0.0, %v6806
        %v6808 = vpop.f32.mrf.mxu0
        %v6809 = vadd.f32 0.0, %v6808
        %v6810 = vpop.f32.mrf.mxu0
        %v6811 = vadd.f32 0.0, %v6810
        %v6812 = vpop.f32.mrf.mxu0
        %v6813 = vadd.f32 0.0, %v6812
        %6814 = vmatprep.mubr.bf16.mxu0 %v6335
        %6815 = vmatmul.mubr.bf16.gmra.mxu0 %v6333
        %v6816 = vpop.f32.mrf.mxu0
        %v6817 = vadd.f32 0.0, %v6816
        %v6818 = vpop.f32.mrf.mxu0
        %v6819 = vadd.f32 0.0, %v6818
        %v6820 = vpop.f32.mrf.mxu0
        %v6821 = vadd.f32 0.0, %v6820
        %v6822 = vpop.f32.mrf.mxu0
        %v6823 = vadd.f32 0.0, %v6822
        %6824 = vmatprep.mubr.bf16.mxu0 %v6341
        %6825 = vmatmul.mubr.bf16.gmra.mxu0 %v6339
        %v6826 = vpop.f32.mrf.mxu0
        %v6827 = vadd.f32 0.0, %v6826
        %v6828 = vpop.f32.mrf.mxu0
        %v6829 = vadd.f32 0.0, %v6828
        %v6830 = vpop.f32.mrf.mxu0
        %v6831 = vadd.f32 0.0, %v6830
        %v6832 = vpop.f32.mrf.mxu0
        %v6833 = vadd.f32 0.0, %v6832
        %6834 = vmatprep.mubr.bf16.mxu0 %v6347
        %6835 = vmatmul.mubr.bf16.gmra.mxu0 %v6345
        %v6836 = vpop.f32.mrf.mxu0
        %v6837 = vadd.f32 0.0, %v6836
        %v6838 = vpop.f32.mrf.mxu0
        %v6839 = vadd.f32 0.0, %v6838
        %v6840 = vpop.f32.mrf.mxu0
        %v6841 = vadd.f32 0.0, %v6840
        %v6842 = vpop.f32.mrf.mxu0
        %v6843 = vadd.f32 0.0, %v6842
        %6844 = vmatprep.mubr.bf16.mxu0 %v6353
        %6845 = vmatmul.mubr.bf16.gmra.mxu0 %v6351
        %v6846 = vpop.f32.mrf.mxu0
        %v6847 = vadd.f32 0.0, %v6846
        %v6848 = vpop.f32.mrf.mxu0
        %v6849 = vadd.f32 0.0, %v6848
        %v6850 = vpop.f32.mrf.mxu0
        %v6851 = vadd.f32 0.0, %v6850
        %v6852 = vpop.f32.mrf.mxu0
        %v6853 = vadd.f32 0.0, %v6852
        %6854 = vmatprep.mubr.bf16.mxu0 %v6359
        %6855 = vmatmul.mubr.bf16.gmra.mxu0 %v6357
        %v6856 = vpop.f32.mrf.mxu0
        %v6857 = vadd.f32 0.0, %v6856
        %v6858 = vpop.f32.mrf.mxu0
        %v6859 = vadd.f32 0.0, %v6858
        %v6860 = vpop.f32.mrf.mxu0
        %v6861 = vadd.f32 0.0, %v6860
        %v6862 = vpop.f32.mrf.mxu0
        %v6863 = vadd.f32 0.0, %v6862
        %6864 = vmatprep.mubr.bf16.mxu0 %v6407
        %6865 = vmatmul.mubr.bf16.gmra.mxu0 %v6403
        %v6866 = vpop.f32.mrf.mxu0
        %v6867 = vadd.f32 0.0, %v6866
        %v6868 = vpop.f32.mrf.mxu0
        %v6869 = vadd.f32 0.0, %v6868
        %v6870 = vpop.f32.mrf.mxu0
        %v6871 = vadd.f32 0.0, %v6870
        %v6872 = vpop.f32.mrf.mxu0
        %v6873 = vadd.f32 0.0, %v6872
        %6874 = vdwg.mxu0
        %6875 = vmatprep.subr.bf16.mxu0 %v6653
        %6876 = vmatpush1.bf16.msra.mxu0 %v6652
        %6877 = vmatprep.subr.bf16.mxu0 %v6651
        %6878 = vmatpush1.bf16.msra.mxu0 %v6650
        %6879 = vmatprep.subr.bf16.mxu0 %v6649
        %6880 = vmatpush1.bf16.msra.mxu0 %v6648
        %6881 = vmatprep.subr.bf16.mxu0 %v6647
        %6882 = vmatpush1.bf16.msra.mxu0 %v6646
        %6883 = vmatprep.subr.bf16.mxu0 %v6645
        %6884 = vmatpush1.bf16.msra.mxu0 %v6644
        %6885 = vmatprep.subr.bf16.mxu0 %v6643
        %6886 = vmatpush1.bf16.msra.mxu0 %v6642
        %6887 = vmatprep.subr.bf16.mxu0 %v6641
        %6888 = vmatpush1.bf16.msra.mxu0 %v6640
        %6889 = vmatprep.subr.bf16.mxu0 %v6639
        %6890 = vmatpush1.bf16.msra.mxu0 %v6638
        %6891 = vmatprep.subr.bf16.mxu0 0
        %6892 = vmatpush2.bf16.msra.mxu0 0
        %6893 = vmatprep.subr.bf16.mxu0 0
        %6894 = vmatpush2.bf16.msra.mxu0 0
        %6895 = vmatprep.subr.bf16.mxu0 0
        %6896 = vmatpush2.bf16.msra.mxu0 0
        %6897 = vmatprep.subr.bf16.mxu0 0
        %6898 = vmatpush2.bf16.msra.mxu0 0
        %6899 = vmatprep.subr.bf16.mxu0 0
        %6900 = vmatpush2.bf16.msra.mxu0 0
        %6901 = vmatprep.subr.bf16.mxu0 0
        %6902 = vmatpush2.bf16.msra.mxu0 0
        %6903 = vmatprep.subr.bf16.mxu0 0
        %6904 = vmatpush2.bf16.msra.mxu0 0
        %6905 = vmatprep.subr.bf16.mxu0 0
        %6906 = vmatpush2.bf16.msra.mxu0 0
        %6907 = vmatprep.mubr.bf16.mxu0 0
        %6908 = vmatmul.mubr.bf16.gmra.mxu0 %v6289
        %v6909 = vpop.f32.mrf.mxu0
        %v6910 = vadd.f32 %v6737, %v6909
        %v6911 = vpop.f32.mrf.mxu0
        %v6912 = vadd.f32 %v6739, %v6911
        %v6913 = vpop.f32.mrf.mxu0
        %v6914 = vadd.f32 %v6741, %v6913
        %v6915 = vpop.f32.mrf.mxu0
        %v6916 = vadd.f32 %v6743, %v6915
        %6917 = vmatprep.mubr.bf16.mxu0 0
        %6918 = vmatmul.mubr.bf16.gmra.mxu0 %v6295
        %v6919 = vpop.f32.mrf.mxu0
        %v6920 = vadd.f32 %v6747, %v6919
        %v6921 = vpop.f32.mrf.mxu0
        %v6922 = vadd.f32 %v6749, %v6921
        %v6923 = vpop.f32.mrf.mxu0
        %v6924 = vadd.f32 %v6751, %v6923
        %v6925 = vpop.f32.mrf.mxu0
        %v6926 = vadd.f32 %v6753, %v6925
        %6927 = vmatprep.mubr.bf16.mxu0 0
        %6928 = vmatmul.mubr.bf16.gmra.mxu0 %v6301
        %v6929 = vpop.f32.mrf.mxu0
        %v6930 = vadd.f32 %v6757, %v6929
        %v6931 = vpop.f32.mrf.mxu0
        %v6932 = vadd.f32 %v6759, %v6931
        %v6933 = vpop.f32.mrf.mxu0
        %v6934 = vadd.f32 %v6761, %v6933
        %v6935 = vpop.f32.mrf.mxu0
        %v6936 = vadd.f32 %v6763, %v6935
        %6937 = vmatprep.mubr.bf16.mxu0 0
        %6938 = vmatmul.mubr.bf16.gmra.mxu0 %v6307
        %v6939 = vpop.f32.mrf.mxu0
        %v6940 = vadd.f32 %v6767, %v6939
        %v6941 = vpop.f32.mrf.mxu0
        %v6942 = vadd.f32 %v6769, %v6941
        %v6943 = vpop.f32.mrf.mxu0
        %v6944 = vadd.f32 %v6771, %v6943
        %v6945 = vpop.f32.mrf.mxu0
        %v6946 = vadd.f32 %v6773, %v6945
        %6947 = vmatprep.mubr.bf16.mxu0 0
        %6948 = vmatmul.mubr.bf16.gmra.mxu0 %v6313
        %v6949 = vpop.f32.mrf.mxu0
        %v6950 = vadd.f32 %v6777, %v6949
        %v6951 = vpop.f32.mrf.mxu0
        %v6952 = vadd.f32 %v6779, %v6951
        %v6953 = vpop.f32.mrf.mxu0
        %v6954 = vadd.f32 %v6781, %v6953
        %v6955 = vpop.f32.mrf.mxu0
        %v6956 = vadd.f32 %v6783, %v6955
        %6957 = vmatprep.mubr.bf16.mxu0 0
        %6958 = vmatmul.mubr.bf16.gmra.mxu0 %v6319
        %v6959 = vpop.f32.mrf.mxu0
        %v6960 = vadd.f32 %v6787, %v6959
        %v6961 = vpop.f32.mrf.mxu0
        %v6962 = vadd.f32 %v6789, %v6961
        %v6963 = vpop.f32.mrf.mxu0
        %v6964 = vadd.f32 %v6791, %v6963
        %v6965 = vpop.f32.mrf.mxu0
        %v6966 = vadd.f32 %v6793, %v6965
        %6967 = vmatprep.mubr.bf16.mxu0 0
        %6968 = vmatmul.mubr.bf16.gmra.mxu0 %v6325
        %v6969 = vpop.f32.mrf.mxu0
        %v6970 = vadd.f32 %v6797, %v6969
        %v6971 = vpop.f32.mrf.mxu0
        %v6972 = vadd.f32 %v6799, %v6971
        %v6973 = vpop.f32.mrf.mxu0
        %v6974 = vadd.f32 %v6801, %v6973
        %v6975 = vpop.f32.mrf.mxu0
        %v6976 = vadd.f32 %v6803, %v6975
        %6977 = vmatprep.mubr.bf16.mxu0 0
        %6978 = vmatmul.mubr.bf16.gmra.mxu0 %v6331
        %v6979 = vpop.f32.mrf.mxu0
        %v6980 = vadd.f32 %v6807, %v6979
        %v6981 = vpop.f32.mrf.mxu0
        %v6982 = vadd.f32 %v6809, %v6981
        %v6983 = vpop.f32.mrf.mxu0
        %v6984 = vadd.f32 %v6811, %v6983
        %v6985 = vpop.f32.mrf.mxu0
        %v6986 = vadd.f32 %v6813, %v6985
        %6987 = vmatprep.mubr.bf16.mxu0 0
        %6988 = vmatmul.mubr.bf16.gmra.mxu0 %v6337
        %v6989 = vpop.f32.mrf.mxu0
        %v6990 = vadd.f32 %v6817, %v6989
        %v6991 = vpop.f32.mrf.mxu0
        %v6992 = vadd.f32 %v6819, %v6991
        %v6993 = vpop.f32.mrf.mxu0
        %v6994 = vadd.f32 %v6821, %v6993
        %v6995 = vpop.f32.mrf.mxu0
        %v6996 = vadd.f32 %v6823, %v6995
        %6997 = vmatprep.mubr.bf16.mxu0 0
        %6998 = vmatmul.mubr.bf16.gmra.mxu0 %v6343
        %v6999 = vpop.f32.mrf.mxu0
        %v7000 = vadd.f32 %v6827, %v6999
        %v7001 = vpop.f32.mrf.mxu0
        %v7002 = vadd.f32 %v6829, %v7001
        %v7003 = vpop.f32.mrf.mxu0
        %v7004 = vadd.f32 %v6831, %v7003
        %v7005 = vpop.f32.mrf.mxu0
        %v7006 = vadd.f32 %v6833, %v7005
        %7007 = vmatprep.mubr.bf16.mxu0 0
        %7008 = vmatmul.mubr.bf16.gmra.mxu0 %v6349
        %v7009 = vpop.f32.mrf.mxu0
        %v7010 = vadd.f32 %v6837, %v7009
        %v7011 = vpop.f32.mrf.mxu0
        %v7012 = vadd.f32 %v6839, %v7011
        %v7013 = vpop.f32.mrf.mxu0
        %v7014 = vadd.f32 %v6841, %v7013
        %v7015 = vpop.f32.mrf.mxu0
        %v7016 = vadd.f32 %v6843, %v7015
        %7017 = vmatprep.mubr.bf16.mxu0 0
        %7018 = vmatmul.mubr.bf16.gmra.mxu0 %v6355
        %v7019 = vpop.f32.mrf.mxu0
        %v7020 = vadd.f32 %v6847, %v7019
        %v7021 = vpop.f32.mrf.mxu0
        %v7022 = vadd.f32 %v6849, %v7021
        %v7023 = vpop.f32.mrf.mxu0
        %v7024 = vadd.f32 %v6851, %v7023
        %v7025 = vpop.f32.mrf.mxu0
        %v7026 = vadd.f32 %v6853, %v7025
        %7027 = vmatprep.mubr.bf16.mxu0 0
        %7028 = vmatmul.mubr.bf16.gmra.mxu0 %v6361
        %v7029 = vpop.f32.mrf.mxu0
        %v7030 = vadd.f32 %v6857, %v7029
        %v7031 = vpop.f32.mrf.mxu0
        %v7032 = vadd.f32 %v6859, %v7031
        %v7033 = vpop.f32.mrf.mxu0
        %v7034 = vadd.f32 %v6861, %v7033
        %v7035 = vpop.f32.mrf.mxu0
        %v7036 = vadd.f32 %v6863, %v7035
        %7037 = vmatprep.mubr.bf16.mxu0 0
        %7038 = vmatmul.mubr.bf16.gmra.mxu0 %v6411
        %v7039 = vpop.f32.mrf.mxu0
        %v7040 = vadd.f32 %v6867, %v7039
        %v7041 = vpop.f32.mrf.mxu0
        %v7042 = vadd.f32 %v6869, %v7041
        %v7043 = vpop.f32.mrf.mxu0
        %v7044 = vadd.f32 %v6871, %v7043
        %v7045 = vpop.f32.mrf.mxu0
        %v7046 = vadd.f32 %v6873, %v7045
        %7047 = vdwg.mxu0
        %v7048 = vadd.f32 %v6224, %v6910
        %v7049 = vadd.f32 %v6225, %v6912
        %v7050 = vadd.f32 %v6226, %v6914
        %v7051 = vadd.f32 %v6227, %v6916
        %v7052 = vadd.f32 %v6228, %v6920
        %v7053 = vadd.f32 %v6229, %v6922
        %v7054 = vadd.f32 %v6230, %v6924
        %v7055 = vadd.f32 %v6231, %v6926
        %v7056 = vadd.f32 %v6232, %v6930
        %v7057 = vadd.f32 %v6233, %v6932
        %v7058 = vadd.f32 %v6234, %v6934
        %v7059 = vadd.f32 %v6235, %v6936
        %v7060 = vadd.f32 %v6236, %v6940
        %v7061 = vadd.f32 %v6237, %v6942
        %v7062 = vadd.f32 %v6238, %v6944
        %v7063 = vadd.f32 %v6239, %v6946
        %v7064 = vadd.f32 %v6240, %v6950
        %v7065 = vadd.f32 %v6241, %v6952
        %v7066 = vadd.f32 %v6242, %v6954
        %v7067 = vadd.f32 %v6243, %v6956
        %v7068 = vadd.f32 %v6244, %v6960
        %v7069 = vadd.f32 %v6245, %v6962
        %v7070 = vadd.f32 %v6246, %v6964
        %v7071 = vadd.f32 %v6247, %v6966
        %v7072 = vadd.f32 %v6248, %v6970
        %v7073 = vadd.f32 %v6249, %v6972
        %v7074 = vadd.f32 %v6250, %v6974
        %v7075 = vadd.f32 %v6251, %v6976
        %v7076 = vadd.f32 %v6252, %v6980
        %v7077 = vadd.f32 %v6253, %v6982
        %v7078 = vadd.f32 %v6254, %v6984
        %v7079 = vadd.f32 %v6255, %v6986
        %v7080 = vadd.f32 %v6256, %v6990
        %v7081 = vadd.f32 %v6257, %v6992
        %v7082 = vadd.f32 %v6258, %v6994
        %v7083 = vadd.f32 %v6259, %v6996
        %v7084 = vadd.f32 %v6260, %v7000
        %v7085 = vadd.f32 %v6261, %v7002
        %v7086 = vadd.f32 %v6262, %v7004
        %v7087 = vadd.f32 %v6263, %v7006
        %v7088 = vadd.f32 %v6264, %v7010
        %v7089 = vadd.f32 %v6265, %v7012
        %v7090 = vadd.f32 %v6266, %v7014
        %v7091 = vadd.f32 %v6267, %v7016
        %v7092 = vadd.f32 %v6268, %v7020
        %v7093 = vadd.f32 %v6269, %v7022
        %v7094 = vadd.f32 %v6270, %v7024
        %v7095 = vadd.f32 %v6271, %v7026
        %v7096 = vadd.f32 %v6272, %v7030
        %v7097 = vadd.f32 %v6273, %v7032
        %v7098 = vadd.f32 %v6274, %v7034
        %v7099 = vadd.f32 %v6275, %v7036
        %v7100 = vadd.f32 %v6276, %v7040
        %v7101 = vadd.f32 %v6277, %v7042
        %v7102 = vadd.f32 %v6278, %v7044
        %v7103 = vadd.f32 %v6279, %v7046
        %vm7104 = vcmask 1044480
        %v7105 = vrot.slane %v4670, 3
        %v7106 = vrot.slane %v4673, 3
        %v7107 = vsel %vm7104, %v7105, %v7106
        %v7108 = vrot.slane %v4671, 3
        %v7109 = vrot.slane %v4674, 3
        %v7110 = vsel %vm7104, %v7108, %v7109
        %v7111 = vrot.slane %v4672, 3
        %v7112 = vrot.slane %v4675, 3
        %v7113 = vsel %vm7104, %v7111, %v7112
        %v7114 = vrot.slane %v4676, 3
        %v7115 = vsel %vm7104, %v7106, %v7114
        %v7116 = vrot.slane %v4677, 3
        %v7117 = vsel %vm7104, %v7109, %v7116
        %v7118 = vrot.slane %v4678, 3
        %v7119 = vsel %vm7104, %v7112, %v7118
        %v7120 = vrot.slane %v4679, 3
        %v7121 = vsel %vm7104, %v7114, %v7120
        %v7122 = vrot.slane %v4680, 3
        %v7123 = vsel %vm7104, %v7116, %v7122
        %v7124 = vrot.slane %v4681, 3
        %v7125 = vsel %vm7104, %v7118, %v7124
        %v7126 = vrot.slane %v4682, 3
        %v7127 = vsel %vm7104, %v7120, %v7126
        %v7128 = vrot.slane %v4683, 3
        %v7129 = vsel %vm7104, %v7122, %v7128
        %v7130 = vrot.slane %v4684, 3
        %v7131 = vsel %vm7104, %v7124, %v7130
        %v7132 = vrot.slane %v4685, 3
        %v7133 = vsel %vm7104, %v7126, %v7132
        %v7134 = vrot.slane %v4686, 3
        %v7135 = vsel %vm7104, %v7128, %v7134
        %v7136 = vrot.slane %v4687, 3
        %v7137 = vsel %vm7104, %v7130, %v7136
        %v7138 = vrot.slane %v4688, 3
        %v7139 = vsel %vm7104, %v7132, %v7138
        %v7140 = vrot.slane %v4689, 3
        %v7141 = vsel %vm7104, %v7134, %v7140
        %v7142 = vrot.slane %v4690, 3
        %v7143 = vsel %vm7104, %v7136, %v7142
        %v7144 = vrot.slane %v4691, 3
        %v7145 = vsel %vm7104, %v7138, %v7144
        %v7146 = vrot.slane %v4692, 3
        %v7147 = vsel %vm7104, %v7140, %v7146
        %v7148 = vrot.slane %v4693, 3
        %v7149 = vsel %vm7104, %v7142, %v7148
        %v7150 = vrot.slane %v4694, 3
        %v7151 = vsel %vm7104, %v7144, %v7150
        %v7152 = vrot.slane %v4695, 3
        %v7153 = vsel %vm7104, %v7146, %v7152
        %v7154 = vrot.slane %v4696, 3
        %v7155 = vsel %vm7104, %v7148, %v7154
        %v7156 = vrot.slane %v4697, 3
        %v7157 = vsel %vm7104, %v7150, %v7156
        %v7158 = vrot.slane %v4698, 3
        %v7159 = vsel %vm7104, %v7152, %v7158
        %v7160 = vrot.slane %v4699, 3
        %v7161 = vsel %vm7104, %v7154, %v7160
        %v7162 = vrot.slane %v4700, 3
        %v7163 = vsel %vm7104, %v7156, %v7162
        %v7164 = vrot.slane %v4701, 3
        %v7165 = vsel %vm7104, %v7158, %v7164
        %v7166 = vrot.slane %v4702, 3
        %v7167 = vsel %vm7104, %v7160, %v7166
        %v7168 = vrot.slane %v4703, 3
        %v7169 = vsel %vm7104, %v7162, %v7168
        %v7170 = vrot.slane %v4704, 3
        %v7171 = vsel %vm7104, %v7164, %v7170
        %v7172 = vrot.slane %v4705, 3
        %v7173 = vsel %vm7104, %v7166, %v7172
        %v7174 = vrot.slane %v4706, 3
        %v7175 = vsel %vm7104, %v7168, %v7174
        %v7176 = vrot.slane %v4707, 3
        %v7177 = vsel %vm7104, %v7170, %v7176
        %v7178 = vrot.slane %v4708, 3
        %v7179 = vsel %vm7104, %v7172, %v7178
        %v7180 = vrot.slane %v4709, 3
        %v7181 = vsel %vm7104, %v7174, %v7180
        %v7182 = vrot.slane %v4710, 3
        %v7183 = vsel %vm7104, %v7176, %v7182
        %v7184 = vrot.slane %v4711, 3
        %v7185 = vsel %vm7104, %v7178, %v7184
        %v7227 = vsel %vm2311, %v7180, %v7105
        %v7231 = vsel %vm2311, %v7182, %v7108
        %v7235 = vsel %vm2311, %v7184, %v7111
        %s7237 = scalar_lea.vmem [#allocation4], 1152
        %v7238 = vld [vmem:[%s7237] sm:$0xff]
        %v7239 = vld [vmem:[%s7237 + $0x8] sm:$0xff]
        %v7240 = vld [vmem:[%s7237 + $0x10] sm:$0xff]
        %v7241 = vld [vmem:[%s7237 + $0x18] sm:$0xff]
        %v7242 = vld [vmem:[%s7237 + $0x20] sm:$0xff]
        %v7243 = vld [vmem:[%s7237 + $0x28] sm:$0xff]
        %v7244 = vld [vmem:[%s7237 + $0x30] sm:$0xff]
        %v7245 = vld [vmem:[%s7237 + $0x38] sm:$0xff]
        %v7246 = vld [vmem:[%s7237 + $0x40] sm:$0xff]
        %v7247 = vld [vmem:[%s7237 + $0x48] sm:$0xff]
        %v7248 = vld [vmem:[%s7237 + $0x50] sm:$0xff]
        %v7249 = vld [vmem:[%s7237 + $0x58] sm:$0xff]
        %v7250 = vld [vmem:[%s7237 + $0x60] sm:$0xff]
        %v7251 = vld [vmem:[%s7237 + $0x68] sm:$0xff]
        %v7252 = vld [vmem:[%s7237 + $0x70] sm:$0xff]
        %v7253 = vld [vmem:[%s7237 + $0x78] sm:$0xff]
        %v7254 = vld [vmem:[%s7237 + $0x80] sm:$0xff]
        %v7255 = vld [vmem:[%s7237 + $0x88] sm:$0xff]
        %v7256 = vld [vmem:[%s7237 + $0x90] sm:$0xff]
        %v7257 = vld [vmem:[%s7237 + $0x98] sm:$0xff]
        %v7258 = vld [vmem:[%s7237 + $0xa0] sm:$0xff]
        %v7259 = vld [vmem:[%s7237 + $0xa8] sm:$0xff]
        %v7260 = vld [vmem:[%s7237 + $0xb0] sm:$0xff]
        %v7261 = vld [vmem:[%s7237 + $0xb8] sm:$0xff]
        %v7262 = vld [vmem:[%s7237 + $0xc0] sm:$0xff]
        %v7263 = vld [vmem:[%s7237 + $0xc8] sm:$0xff]
        %v7264 = vld [vmem:[%s7237 + $0xd0] sm:$0xff]
        %v7265 = vld [vmem:[%s7237 + $0xd8] sm:$0xff]
        %v7266 = vld [vmem:[%s7237 + $0xe0] sm:$0xff]
        %v7267 = vld [vmem:[%s7237 + $0xe8] sm:$0xff]
        %v7268 = vld [vmem:[%s7237 + $0xf0] sm:$0xff]
        %v7269 = vld [vmem:[%s7237 + $0xf8] sm:$0xff]
        %v7270 = vld [vmem:[%s7237 + $0x100] sm:$0xff]
        %v7271 = vld [vmem:[%s7237 + $0x108] sm:$0xff]
        %v7272 = vld [vmem:[%s7237 + $0x110] sm:$0xff]
        %v7273 = vld [vmem:[%s7237 + $0x118] sm:$0xff]
        %v7274 = vld [vmem:[%s7237 + $0x120] sm:$0xff]
        %v7275 = vld [vmem:[%s7237 + $0x128] sm:$0xff]
        %v7276 = vld [vmem:[%s7237 + $0x130] sm:$0xff]
        %v7277 = vld [vmem:[%s7237 + $0x138] sm:$0xff]
        %v7278 = vld [vmem:[%s7237 + $0x140] sm:$0xff]
        %v7279 = vld [vmem:[%s7237 + $0x148] sm:$0xff]
        %v7280 = vld [vmem:[%s7237 + $0x150] sm:$0xff]
        %v7281 = vld [vmem:[%s7237 + $0x158] sm:$0xff]
        %v7282 = vld [vmem:[%s7237 + $0x160] sm:$0xff]
        %v7283 = vld [vmem:[%s7237 + $0x168] sm:$0xff]
        %v7284 = vld [vmem:[%s7237 + $0x170] sm:$0xff]
        %v7285 = vld [vmem:[%s7237 + $0x178] sm:$0xff]
        %v7334 = vunpack.c.l.b16 %v7238
        %v7335 = vunpack.c.h.b16 %v7238
        %v7336 = vunpack.c.l.b16 %v7239
        %v7337 = vunpack.c.h.b16 %v7239
        %v7338 = vunpack.c.l.b16 %v7240
        %v7339 = vunpack.c.h.b16 %v7240
        %v7340 = vunpack.c.l.b16 %v7241
        %v7341 = vunpack.c.h.b16 %v7241
        %v7342 = vunpack.c.l.b16 %v7242
        %v7343 = vunpack.c.h.b16 %v7242
        %v7344 = vunpack.c.l.b16 %v7243
        %v7345 = vunpack.c.h.b16 %v7243
        %v7346 = vunpack.c.l.b16 %v7244
        %v7347 = vunpack.c.h.b16 %v7244
        %v7348 = vunpack.c.l.b16 %v7245
        %v7349 = vunpack.c.h.b16 %v7245
        %v7350 = vunpack.c.l.b16 %v7246
        %v7351 = vunpack.c.h.b16 %v7246
        %v7352 = vunpack.c.l.b16 %v7247
        %v7353 = vunpack.c.h.b16 %v7247
        %v7354 = vunpack.c.l.b16 %v7248
        %v7355 = vunpack.c.h.b16 %v7248
        %v7356 = vunpack.c.l.b16 %v7249
        %v7357 = vunpack.c.h.b16 %v7249
        %v7358 = vunpack.c.l.b16 %v7250
        %v7359 = vunpack.c.h.b16 %v7250
        %v7360 = vunpack.c.l.b16 %v7251
        %v7361 = vunpack.c.h.b16 %v7251
        %v7362 = vunpack.c.l.b16 %v7252
        %v7363 = vunpack.c.h.b16 %v7252
        %v7364 = vunpack.c.l.b16 %v7253
        %v7365 = vunpack.c.h.b16 %v7253
        %v7366 = vunpack.c.l.b16 %v7254
        %v7367 = vunpack.c.h.b16 %v7254
        %v7368 = vunpack.c.l.b16 %v7255
        %v7369 = vunpack.c.h.b16 %v7255
        %v7370 = vunpack.c.l.b16 %v7256
        %v7371 = vunpack.c.h.b16 %v7256
        %v7372 = vunpack.c.l.b16 %v7257
        %v7373 = vunpack.c.h.b16 %v7257
        %v7374 = vunpack.c.l.b16 %v7258
        %v7375 = vunpack.c.h.b16 %v7258
        %v7376 = vunpack.c.l.b16 %v7259
        %v7377 = vunpack.c.h.b16 %v7259
        %v7378 = vunpack.c.l.b16 %v7260
        %v7379 = vunpack.c.h.b16 %v7260
        %v7380 = vunpack.c.l.b16 %v7261
        %v7381 = vunpack.c.h.b16 %v7261
        %v7382 = vunpack.c.l.b16 %v7262
        %v7383 = vunpack.c.h.b16 %v7262
        %v7384 = vunpack.c.l.b16 %v7263
        %v7385 = vunpack.c.h.b16 %v7263
        %v7386 = vunpack.c.l.b16 %v7264
        %v7387 = vunpack.c.h.b16 %v7264
        %v7388 = vunpack.c.l.b16 %v7265
        %v7389 = vunpack.c.h.b16 %v7265
        %v7390 = vunpack.c.l.b16 %v7266
        %v7391 = vunpack.c.h.b16 %v7266
        %v7392 = vunpack.c.l.b16 %v7267
        %v7393 = vunpack.c.h.b16 %v7267
        %v7394 = vunpack.c.l.b16 %v7268
        %v7395 = vunpack.c.h.b16 %v7268
        %v7396 = vunpack.c.l.b16 %v7269
        %v7397 = vunpack.c.h.b16 %v7269
        %v7398 = vunpack.c.l.b16 %v7270
        %v7399 = vunpack.c.h.b16 %v7270
        %v7400 = vunpack.c.l.b16 %v7271
        %v7401 = vunpack.c.h.b16 %v7271
        %v7402 = vunpack.c.l.b16 %v7272
        %v7403 = vunpack.c.h.b16 %v7272
        %v7404 = vunpack.c.l.b16 %v7273
        %v7405 = vunpack.c.h.b16 %v7273
        %v7406 = vunpack.c.l.b16 %v7274
        %v7407 = vunpack.c.h.b16 %v7274
        %v7408 = vunpack.c.l.b16 %v7275
        %v7409 = vunpack.c.h.b16 %v7275
        %v7410 = vunpack.c.l.b16 %v7276
        %v7411 = vunpack.c.h.b16 %v7276
        %v7412 = vunpack.c.l.b16 %v7277
        %v7413 = vunpack.c.h.b16 %v7277
        %v7414 = vunpack.c.l.b16 %v7278
        %v7415 = vunpack.c.h.b16 %v7278
        %v7416 = vunpack.c.l.b16 %v7279
        %v7417 = vunpack.c.h.b16 %v7279
        %v7418 = vunpack.c.l.b16 %v7280
        %v7419 = vunpack.c.h.b16 %v7280
        %v7420 = vunpack.c.l.b16 %v7281
        %v7421 = vunpack.c.h.b16 %v7281
        %v7422 = vunpack.c.l.b16 %v7282
        %v7423 = vunpack.c.h.b16 %v7282
        %v7424 = vunpack.c.l.b16 %v7283
        %v7425 = vunpack.c.h.b16 %v7283
        %v7426 = vunpack.c.l.b16 %v7284
        %v7427 = vunpack.c.h.b16 %v7284
        %v7428 = vunpack.c.l.b16 %v7285
        %v7429 = vunpack.c.h.b16 %v7285
        %v7430 = vpack.c.b16 %v7336, %v7334
        %v7431 = vpack.c.b16 %v7337, %v7335
        %v7432 = vpack.c.b16 %v7340, %v7338
        %v7433 = vpack.c.b16 %v7341, %v7339
        %v7434 = vpack.c.b16 %v7344, %v7342
        %v7435 = vpack.c.b16 %v7345, %v7343
        %v7436 = vpack.c.b16 %v7348, %v7346
        %v7437 = vpack.c.b16 %v7349, %v7347
        %v7438 = vpack.c.b16 %v7352, %v7350
        %v7439 = vpack.c.b16 %v7353, %v7351
        %v7440 = vpack.c.b16 %v7356, %v7354
        %v7441 = vpack.c.b16 %v7357, %v7355
        %v7442 = vpack.c.b16 %v7360, %v7358
        %v7443 = vpack.c.b16 %v7361, %v7359
        %v7444 = vpack.c.b16 %v7364, %v7362
        %v7445 = vpack.c.b16 %v7365, %v7363
        %v7446 = vpack.c.b16 %v7368, %v7366
        %v7447 = vpack.c.b16 %v7369, %v7367
        %v7448 = vpack.c.b16 %v7372, %v7370
        %v7449 = vpack.c.b16 %v7373, %v7371
        %v7450 = vpack.c.b16 %v7376, %v7374
        %v7451 = vpack.c.b16 %v7377, %v7375
        %v7452 = vpack.c.b16 %v7380, %v7378
        %v7453 = vpack.c.b16 %v7381, %v7379
        %v7454 = vpack.c.b16 %v7384, %v7382
        %v7455 = vpack.c.b16 %v7385, %v7383
        %v7456 = vpack.c.b16 %v7388, %v7386
        %v7457 = vpack.c.b16 %v7389, %v7387
        %v7458 = vpack.c.b16 %v7392, %v7390
        %v7459 = vpack.c.b16 %v7393, %v7391
        %v7460 = vpack.c.b16 %v7396, %v7394
        %v7461 = vpack.c.b16 %v7397, %v7395
        %v7462 = vpack.c.b16 %v7400, %v7398
        %v7463 = vpack.c.b16 %v7401, %v7399
        %v7464 = vpack.c.b16 %v7404, %v7402
        %v7465 = vpack.c.b16 %v7405, %v7403
        %v7466 = vpack.c.b16 %v7408, %v7406
        %v7467 = vpack.c.b16 %v7409, %v7407
        %v7468 = vpack.c.b16 %v7412, %v7410
        %v7469 = vpack.c.b16 %v7413, %v7411
        %v7470 = vpack.c.b16 %v7416, %v7414
        %v7471 = vpack.c.b16 %v7417, %v7415
        %v7472 = vpack.c.b16 %v7420, %v7418
        %v7473 = vpack.c.b16 %v7421, %v7419
        %v7474 = vpack.c.b16 %v7424, %v7422
        %v7475 = vpack.c.b16 %v7425, %v7423
        %v7476 = vpack.c.b16 %v7428, %v7426
        %v7477 = vpack.c.b16 %v7429, %v7427
        %7526 = vmatprep.subr.bf16.mxu0 %v7445
        %7527 = vmatpush1.bf16.msra.mxu0 %v7444
        %7528 = vmatprep.subr.bf16.mxu0 %v7443
        %7529 = vmatpush1.bf16.msra.mxu0 %v7442
        %7530 = vmatprep.subr.bf16.mxu0 %v7441
        %7531 = vmatpush1.bf16.msra.mxu0 %v7440
        %7532 = vmatprep.subr.bf16.mxu0 %v7439
        %7533 = vmatpush1.bf16.msra.mxu0 %v7438
        %7534 = vmatprep.subr.bf16.mxu0 %v7437
        %7535 = vmatpush1.bf16.msra.mxu0 %v7436
        %7536 = vmatprep.subr.bf16.mxu0 %v7435
        %7537 = vmatpush1.bf16.msra.mxu0 %v7434
        %7538 = vmatprep.subr.bf16.mxu0 %v7433
        %7539 = vmatpush1.bf16.msra.mxu0 %v7432
        %7540 = vmatprep.subr.bf16.mxu0 %v7431
        %7541 = vmatpush1.bf16.msra.mxu0 %v7430
        %7542 = vmatprep.subr.bf16.mxu0 %v7461
        %7543 = vmatpush2.bf16.msra.mxu0 %v7460
        %7544 = vmatprep.subr.bf16.mxu0 %v7459
        %7545 = vmatpush2.bf16.msra.mxu0 %v7458
        %7546 = vmatprep.subr.bf16.mxu0 %v7457
        %7547 = vmatpush2.bf16.msra.mxu0 %v7456
        %7548 = vmatprep.subr.bf16.mxu0 %v7455
        %7549 = vmatpush2.bf16.msra.mxu0 %v7454
        %7550 = vmatprep.subr.bf16.mxu0 %v7453
        %7551 = vmatpush2.bf16.msra.mxu0 %v7452
        %7552 = vmatprep.subr.bf16.mxu0 %v7451
        %7553 = vmatpush2.bf16.msra.mxu0 %v7450
        %7554 = vmatprep.subr.bf16.mxu0 %v7449
        %7555 = vmatpush2.bf16.msra.mxu0 %v7448
        %7556 = vmatprep.subr.bf16.mxu0 %v7447
        %7557 = vmatpush2.bf16.msra.mxu0 %v7446
        %7558 = vmatprep.mubr.bf16.mxu0 %v7110
        %7559 = vmatmul.mubr.bf16.gmra.mxu0 %v7107
        %v7560 = vpop.f32.mrf.mxu0
        %v7561 = vadd.f32 0.0, %v7560
        %v7562 = vpop.f32.mrf.mxu0
        %v7563 = vadd.f32 0.0, %v7562
        %v7564 = vpop.f32.mrf.mxu0
        %v7565 = vadd.f32 0.0, %v7564
        %v7566 = vpop.f32.mrf.mxu0
        %v7567 = vadd.f32 0.0, %v7566
        %7568 = vmatprep.mubr.bf16.mxu0 %v7117
        %7569 = vmatmul.mubr.bf16.gmra.mxu0 %v7115
        %v7570 = vpop.f32.mrf.mxu0
        %v7571 = vadd.f32 0.0, %v7570
        %v7572 = vpop.f32.mrf.mxu0
        %v7573 = vadd.f32 0.0, %v7572
        %v7574 = vpop.f32.mrf.mxu0
        %v7575 = vadd.f32 0.0, %v7574
        %v7576 = vpop.f32.mrf.mxu0
        %v7577 = vadd.f32 0.0, %v7576
        %7578 = vmatprep.mubr.bf16.mxu0 %v7123
        %7579 = vmatmul.mubr.bf16.gmra.mxu0 %v7121
        %v7580 = vpop.f32.mrf.mxu0
        %v7581 = vadd.f32 0.0, %v7580
        %v7582 = vpop.f32.mrf.mxu0
        %v7583 = vadd.f32 0.0, %v7582
        %v7584 = vpop.f32.mrf.mxu0
        %v7585 = vadd.f32 0.0, %v7584
        %v7586 = vpop.f32.mrf.mxu0
        %v7587 = vadd.f32 0.0, %v7586
        %7588 = vmatprep.mubr.bf16.mxu0 %v7129
        %7589 = vmatmul.mubr.bf16.gmra.mxu0 %v7127
        %v7590 = vpop.f32.mrf.mxu0
        %v7591 = vadd.f32 0.0, %v7590
        %v7592 = vpop.f32.mrf.mxu0
        %v7593 = vadd.f32 0.0, %v7592
        %v7594 = vpop.f32.mrf.mxu0
        %v7595 = vadd.f32 0.0, %v7594
        %v7596 = vpop.f32.mrf.mxu0
        %v7597 = vadd.f32 0.0, %v7596
        %7598 = vmatprep.mubr.bf16.mxu0 %v7135
        %7599 = vmatmul.mubr.bf16.gmra.mxu0 %v7133
        %v7600 = vpop.f32.mrf.mxu0
        %v7601 = vadd.f32 0.0, %v7600
        %v7602 = vpop.f32.mrf.mxu0
        %v7603 = vadd.f32 0.0, %v7602
        %v7604 = vpop.f32.mrf.mxu0
        %v7605 = vadd.f32 0.0, %v7604
        %v7606 = vpop.f32.mrf.mxu0
        %v7607 = vadd.f32 0.0, %v7606
        %7608 = vmatprep.mubr.bf16.mxu0 %v7141
        %7609 = vmatmul.mubr.bf16.gmra.mxu0 %v7139
        %v7610 = vpop.f32.mrf.mxu0
        %v7611 = vadd.f32 0.0, %v7610
        %v7612 = vpop.f32.mrf.mxu0
        %v7613 = vadd.f32 0.0, %v7612
        %v7614 = vpop.f32.mrf.mxu0
        %v7615 = vadd.f32 0.0, %v7614
        %v7616 = vpop.f32.mrf.mxu0
        %v7617 = vadd.f32 0.0, %v7616
        %7618 = vmatprep.mubr.bf16.mxu0 %v7147
        %7619 = vmatmul.mubr.bf16.gmra.mxu0 %v7145
        %v7620 = vpop.f32.mrf.mxu0
        %v7621 = vadd.f32 0.0, %v7620
        %v7622 = vpop.f32.mrf.mxu0
        %v7623 = vadd.f32 0.0, %v7622
        %v7624 = vpop.f32.mrf.mxu0
        %v7625 = vadd.f32 0.0, %v7624
        %v7626 = vpop.f32.mrf.mxu0
        %v7627 = vadd.f32 0.0, %v7626
        %7628 = vmatprep.mubr.bf16.mxu0 %v7153
        %7629 = vmatmul.mubr.bf16.gmra.mxu0 %v7151
        %v7630 = vpop.f32.mrf.mxu0
        %v7631 = vadd.f32 0.0, %v7630
        %v7632 = vpop.f32.mrf.mxu0
        %v7633 = vadd.f32 0.0, %v7632
        %v7634 = vpop.f32.mrf.mxu0
        %v7635 = vadd.f32 0.0, %v7634
        %v7636 = vpop.f32.mrf.mxu0
        %v7637 = vadd.f32 0.0, %v7636
        %7638 = vmatprep.mubr.bf16.mxu0 %v7159
        %7639 = vmatmul.mubr.bf16.gmra.mxu0 %v7157
        %v7640 = vpop.f32.mrf.mxu0
        %v7641 = vadd.f32 0.0, %v7640
        %v7642 = vpop.f32.mrf.mxu0
        %v7643 = vadd.f32 0.0, %v7642
        %v7644 = vpop.f32.mrf.mxu0
        %v7645 = vadd.f32 0.0, %v7644
        %v7646 = vpop.f32.mrf.mxu0
        %v7647 = vadd.f32 0.0, %v7646
        %7648 = vmatprep.mubr.bf16.mxu0 %v7165
        %7649 = vmatmul.mubr.bf16.gmra.mxu0 %v7163
        %v7650 = vpop.f32.mrf.mxu0
        %v7651 = vadd.f32 0.0, %v7650
        %v7652 = vpop.f32.mrf.mxu0
        %v7653 = vadd.f32 0.0, %v7652
        %v7654 = vpop.f32.mrf.mxu0
        %v7655 = vadd.f32 0.0, %v7654
        %v7656 = vpop.f32.mrf.mxu0
        %v7657 = vadd.f32 0.0, %v7656
        %7658 = vmatprep.mubr.bf16.mxu0 %v7171
        %7659 = vmatmul.mubr.bf16.gmra.mxu0 %v7169
        %v7660 = vpop.f32.mrf.mxu0
        %v7661 = vadd.f32 0.0, %v7660
        %v7662 = vpop.f32.mrf.mxu0
        %v7663 = vadd.f32 0.0, %v7662
        %v7664 = vpop.f32.mrf.mxu0
        %v7665 = vadd.f32 0.0, %v7664
        %v7666 = vpop.f32.mrf.mxu0
        %v7667 = vadd.f32 0.0, %v7666
        %7668 = vmatprep.mubr.bf16.mxu0 %v7177
        %7669 = vmatmul.mubr.bf16.gmra.mxu0 %v7175
        %v7670 = vpop.f32.mrf.mxu0
        %v7671 = vadd.f32 0.0, %v7670
        %v7672 = vpop.f32.mrf.mxu0
        %v7673 = vadd.f32 0.0, %v7672
        %v7674 = vpop.f32.mrf.mxu0
        %v7675 = vadd.f32 0.0, %v7674
        %v7676 = vpop.f32.mrf.mxu0
        %v7677 = vadd.f32 0.0, %v7676
        %7678 = vmatprep.mubr.bf16.mxu0 %v7183
        %7679 = vmatmul.mubr.bf16.gmra.mxu0 %v7181
        %v7680 = vpop.f32.mrf.mxu0
        %v7681 = vadd.f32 0.0, %v7680
        %v7682 = vpop.f32.mrf.mxu0
        %v7683 = vadd.f32 0.0, %v7682
        %v7684 = vpop.f32.mrf.mxu0
        %v7685 = vadd.f32 0.0, %v7684
        %v7686 = vpop.f32.mrf.mxu0
        %v7687 = vadd.f32 0.0, %v7686
        %7688 = vmatprep.mubr.bf16.mxu0 %v7231
        %7689 = vmatmul.mubr.bf16.gmra.mxu0 %v7227
        %v7690 = vpop.f32.mrf.mxu0
        %v7691 = vadd.f32 0.0, %v7690
        %v7692 = vpop.f32.mrf.mxu0
        %v7693 = vadd.f32 0.0, %v7692
        %v7694 = vpop.f32.mrf.mxu0
        %v7695 = vadd.f32 0.0, %v7694
        %v7696 = vpop.f32.mrf.mxu0
        %v7697 = vadd.f32 0.0, %v7696
        %7698 = vdwg.mxu0
        %7699 = vmatprep.subr.bf16.mxu0 %v7477
        %7700 = vmatpush1.bf16.msra.mxu0 %v7476
        %7701 = vmatprep.subr.bf16.mxu0 %v7475
        %7702 = vmatpush1.bf16.msra.mxu0 %v7474
        %7703 = vmatprep.subr.bf16.mxu0 %v7473
        %7704 = vmatpush1.bf16.msra.mxu0 %v7472
        %7705 = vmatprep.subr.bf16.mxu0 %v7471
        %7706 = vmatpush1.bf16.msra.mxu0 %v7470
        %7707 = vmatprep.subr.bf16.mxu0 %v7469
        %7708 = vmatpush1.bf16.msra.mxu0 %v7468
        %7709 = vmatprep.subr.bf16.mxu0 %v7467
        %7710 = vmatpush1.bf16.msra.mxu0 %v7466
        %7711 = vmatprep.subr.bf16.mxu0 %v7465
        %7712 = vmatpush1.bf16.msra.mxu0 %v7464
        %7713 = vmatprep.subr.bf16.mxu0 %v7463
        %7714 = vmatpush1.bf16.msra.mxu0 %v7462
        %7715 = vmatprep.subr.bf16.mxu0 0
        %7716 = vmatpush2.bf16.msra.mxu0 0
        %7717 = vmatprep.subr.bf16.mxu0 0
        %7718 = vmatpush2.bf16.msra.mxu0 0
        %7719 = vmatprep.subr.bf16.mxu0 0
        %7720 = vmatpush2.bf16.msra.mxu0 0
        %7721 = vmatprep.subr.bf16.mxu0 0
        %7722 = vmatpush2.bf16.msra.mxu0 0
        %7723 = vmatprep.subr.bf16.mxu0 0
        %7724 = vmatpush2.bf16.msra.mxu0 0
        %7725 = vmatprep.subr.bf16.mxu0 0
        %7726 = vmatpush2.bf16.msra.mxu0 0
        %7727 = vmatprep.subr.bf16.mxu0 0
        %7728 = vmatpush2.bf16.msra.mxu0 0
        %7729 = vmatprep.subr.bf16.mxu0 0
        %7730 = vmatpush2.bf16.msra.mxu0 0
        %7731 = vmatprep.mubr.bf16.mxu0 0
        %7732 = vmatmul.mubr.bf16.gmra.mxu0 %v7113
        %v7733 = vpop.f32.mrf.mxu0
        %v7734 = vadd.f32 %v7561, %v7733
        %v7735 = vpop.f32.mrf.mxu0
        %v7736 = vadd.f32 %v7563, %v7735
        %v7737 = vpop.f32.mrf.mxu0
        %v7738 = vadd.f32 %v7565, %v7737
        %v7739 = vpop.f32.mrf.mxu0
        %v7740 = vadd.f32 %v7567, %v7739
        %7741 = vmatprep.mubr.bf16.mxu0 0
        %7742 = vmatmul.mubr.bf16.gmra.mxu0 %v7119
        %v7743 = vpop.f32.mrf.mxu0
        %v7744 = vadd.f32 %v7571, %v7743
        %v7745 = vpop.f32.mrf.mxu0
        %v7746 = vadd.f32 %v7573, %v7745
        %v7747 = vpop.f32.mrf.mxu0
        %v7748 = vadd.f32 %v7575, %v7747
        %v7749 = vpop.f32.mrf.mxu0
        %v7750 = vadd.f32 %v7577, %v7749
        %7751 = vmatprep.mubr.bf16.mxu0 0
        %7752 = vmatmul.mubr.bf16.gmra.mxu0 %v7125
        %v7753 = vpop.f32.mrf.mxu0
        %v7754 = vadd.f32 %v7581, %v7753
        %v7755 = vpop.f32.mrf.mxu0
        %v7756 = vadd.f32 %v7583, %v7755
        %v7757 = vpop.f32.mrf.mxu0
        %v7758 = vadd.f32 %v7585, %v7757
        %v7759 = vpop.f32.mrf.mxu0
        %v7760 = vadd.f32 %v7587, %v7759
        %7761 = vmatprep.mubr.bf16.mxu0 0
        %7762 = vmatmul.mubr.bf16.gmra.mxu0 %v7131
        %v7763 = vpop.f32.mrf.mxu0
        %v7764 = vadd.f32 %v7591, %v7763
        %v7765 = vpop.f32.mrf.mxu0
        %v7766 = vadd.f32 %v7593, %v7765
        %v7767 = vpop.f32.mrf.mxu0
        %v7768 = vadd.f32 %v7595, %v7767
        %v7769 = vpop.f32.mrf.mxu0
        %v7770 = vadd.f32 %v7597, %v7769
        %7771 = vmatprep.mubr.bf16.mxu0 0
        %7772 = vmatmul.mubr.bf16.gmra.mxu0 %v7137
        %v7773 = vpop.f32.mrf.mxu0
        %v7774 = vadd.f32 %v7601, %v7773
        %v7775 = vpop.f32.mrf.mxu0
        %v7776 = vadd.f32 %v7603, %v7775
        %v7777 = vpop.f32.mrf.mxu0
        %v7778 = vadd.f32 %v7605, %v7777
        %v7779 = vpop.f32.mrf.mxu0
        %v7780 = vadd.f32 %v7607, %v7779
        %7781 = vmatprep.mubr.bf16.mxu0 0
        %7782 = vmatmul.mubr.bf16.gmra.mxu0 %v7143
        %v7783 = vpop.f32.mrf.mxu0
        %v7784 = vadd.f32 %v7611, %v7783
        %v7785 = vpop.f32.mrf.mxu0
        %v7786 = vadd.f32 %v7613, %v7785
        %v7787 = vpop.f32.mrf.mxu0
        %v7788 = vadd.f32 %v7615, %v7787
        %v7789 = vpop.f32.mrf.mxu0
        %v7790 = vadd.f32 %v7617, %v7789
        %7791 = vmatprep.mubr.bf16.mxu0 0
        %7792 = vmatmul.mubr.bf16.gmra.mxu0 %v7149
        %v7793 = vpop.f32.mrf.mxu0
        %v7794 = vadd.f32 %v7621, %v7793
        %v7795 = vpop.f32.mrf.mxu0
        %v7796 = vadd.f32 %v7623, %v7795
        %v7797 = vpop.f32.mrf.mxu0
        %v7798 = vadd.f32 %v7625, %v7797
        %v7799 = vpop.f32.mrf.mxu0
        %v7800 = vadd.f32 %v7627, %v7799
        %7801 = vmatprep.mubr.bf16.mxu0 0
        %7802 = vmatmul.mubr.bf16.gmra.mxu0 %v7155
        %v7803 = vpop.f32.mrf.mxu0
        %v7804 = vadd.f32 %v7631, %v7803
        %v7805 = vpop.f32.mrf.mxu0
        %v7806 = vadd.f32 %v7633, %v7805
        %v7807 = vpop.f32.mrf.mxu0
        %v7808 = vadd.f32 %v7635, %v7807
        %v7809 = vpop.f32.mrf.mxu0
        %v7810 = vadd.f32 %v7637, %v7809
        %7811 = vmatprep.mubr.bf16.mxu0 0
        %7812 = vmatmul.mubr.bf16.gmra.mxu0 %v7161
        %v7813 = vpop.f32.mrf.mxu0
        %v7814 = vadd.f32 %v7641, %v7813
        %v7815 = vpop.f32.mrf.mxu0
        %v7816 = vadd.f32 %v7643, %v7815
        %v7817 = vpop.f32.mrf.mxu0
        %v7818 = vadd.f32 %v7645, %v7817
        %v7819 = vpop.f32.mrf.mxu0
        %v7820 = vadd.f32 %v7647, %v7819
        %7821 = vmatprep.mubr.bf16.mxu0 0
        %7822 = vmatmul.mubr.bf16.gmra.mxu0 %v7167
        %v7823 = vpop.f32.mrf.mxu0
        %v7824 = vadd.f32 %v7651, %v7823
        %v7825 = vpop.f32.mrf.mxu0
        %v7826 = vadd.f32 %v7653, %v7825
        %v7827 = vpop.f32.mrf.mxu0
        %v7828 = vadd.f32 %v7655, %v7827
        %v7829 = vpop.f32.mrf.mxu0
        %v7830 = vadd.f32 %v7657, %v7829
        %7831 = vmatprep.mubr.bf16.mxu0 0
        %7832 = vmatmul.mubr.bf16.gmra.mxu0 %v7173
        %v7833 = vpop.f32.mrf.mxu0
        %v7834 = vadd.f32 %v7661, %v7833
        %v7835 = vpop.f32.mrf.mxu0
        %v7836 = vadd.f32 %v7663, %v7835
        %v7837 = vpop.f32.mrf.mxu0
        %v7838 = vadd.f32 %v7665, %v7837
        %v7839 = vpop.f32.mrf.mxu0
        %v7840 = vadd.f32 %v7667, %v7839
        %7841 = vmatprep.mubr.bf16.mxu0 0
        %7842 = vmatmul.mubr.bf16.gmra.mxu0 %v7179
        %v7843 = vpop.f32.mrf.mxu0
        %v7844 = vadd.f32 %v7671, %v7843
        %v7845 = vpop.f32.mrf.mxu0
        %v7846 = vadd.f32 %v7673, %v7845
        %v7847 = vpop.f32.mrf.mxu0
        %v7848 = vadd.f32 %v7675, %v7847
        %v7849 = vpop.f32.mrf.mxu0
        %v7850 = vadd.f32 %v7677, %v7849
        %7851 = vmatprep.mubr.bf16.mxu0 0
        %7852 = vmatmul.mubr.bf16.gmra.mxu0 %v7185
        %v7853 = vpop.f32.mrf.mxu0
        %v7854 = vadd.f32 %v7681, %v7853
        %v7855 = vpop.f32.mrf.mxu0
        %v7856 = vadd.f32 %v7683, %v7855
        %v7857 = vpop.f32.mrf.mxu0
        %v7858 = vadd.f32 %v7685, %v7857
        %v7859 = vpop.f32.mrf.mxu0
        %v7860 = vadd.f32 %v7687, %v7859
        %7861 = vmatprep.mubr.bf16.mxu0 0
        %7862 = vmatmul.mubr.bf16.gmra.mxu0 %v7235
        %v7863 = vpop.f32.mrf.mxu0
        %v7864 = vadd.f32 %v7691, %v7863
        %v7865 = vpop.f32.mrf.mxu0
        %v7866 = vadd.f32 %v7693, %v7865
        %v7867 = vpop.f32.mrf.mxu0
        %v7868 = vadd.f32 %v7695, %v7867
        %v7869 = vpop.f32.mrf.mxu0
        %v7870 = vadd.f32 %v7697, %v7869
        %7871 = vdwg.mxu0
        %v7872 = vadd.f32 %v7048, %v7734
        %v7873 = vadd.f32 %v7049, %v7736
        %v7874 = vadd.f32 %v7050, %v7738
        %v7875 = vadd.f32 %v7051, %v7740
        %v7876 = vadd.f32 %v7052, %v7744
        %v7877 = vadd.f32 %v7053, %v7746
        %v7878 = vadd.f32 %v7054, %v7748
        %v7879 = vadd.f32 %v7055, %v7750
        %v7880 = vadd.f32 %v7056, %v7754
        %v7881 = vadd.f32 %v7057, %v7756
        %v7882 = vadd.f32 %v7058, %v7758
        %v7883 = vadd.f32 %v7059, %v7760
        %v7884 = vadd.f32 %v7060, %v7764
        %v7885 = vadd.f32 %v7061, %v7766
        %v7886 = vadd.f32 %v7062, %v7768
        %v7887 = vadd.f32 %v7063, %v7770
        %v7888 = vadd.f32 %v7064, %v7774
        %v7889 = vadd.f32 %v7065, %v7776
        %v7890 = vadd.f32 %v7066, %v7778
        %v7891 = vadd.f32 %v7067, %v7780
        %v7892 = vadd.f32 %v7068, %v7784
        %v7893 = vadd.f32 %v7069, %v7786
        %v7894 = vadd.f32 %v7070, %v7788
        %v7895 = vadd.f32 %v7071, %v7790
        %v7896 = vadd.f32 %v7072, %v7794
        %v7897 = vadd.f32 %v7073, %v7796
        %v7898 = vadd.f32 %v7074, %v7798
        %v7899 = vadd.f32 %v7075, %v7800
        %v7900 = vadd.f32 %v7076, %v7804
        %v7901 = vadd.f32 %v7077, %v7806
        %v7902 = vadd.f32 %v7078, %v7808
        %v7903 = vadd.f32 %v7079, %v7810
        %v7904 = vadd.f32 %v7080, %v7814
        %v7905 = vadd.f32 %v7081, %v7816
        %v7906 = vadd.f32 %v7082, %v7818
        %v7907 = vadd.f32 %v7083, %v7820
        %v7908 = vadd.f32 %v7084, %v7824
        %v7909 = vadd.f32 %v7085, %v7826
        %v7910 = vadd.f32 %v7086, %v7828
        %v7911 = vadd.f32 %v7087, %v7830
        %v7912 = vadd.f32 %v7088, %v7834
        %v7913 = vadd.f32 %v7089, %v7836
        %v7914 = vadd.f32 %v7090, %v7838
        %v7915 = vadd.f32 %v7091, %v7840
        %v7916 = vadd.f32 %v7092, %v7844
        %v7917 = vadd.f32 %v7093, %v7846
        %v7918 = vadd.f32 %v7094, %v7848
        %v7919 = vadd.f32 %v7095, %v7850
        %v7920 = vadd.f32 %v7096, %v7854
        %v7921 = vadd.f32 %v7097, %v7856
        %v7922 = vadd.f32 %v7098, %v7858
        %v7923 = vadd.f32 %v7099, %v7860
        %v7924 = vadd.f32 %v7100, %v7864
        %v7925 = vadd.f32 %v7101, %v7866
        %v7926 = vadd.f32 %v7102, %v7868
        %v7927 = vadd.f32 %v7103, %v7870
        %vm7928 = vcmask 1043456
        %v7929 = vrot.slane %v4670, 4
        %v7930 = vrot.slane %v4673, 4
        %v7931 = vsel %vm7928, %v7929, %v7930
        %v7932 = vrot.slane %v4671, 4
        %v7933 = vrot.slane %v4674, 4
        %v7934 = vsel %vm7928, %v7932, %v7933
        %v7935 = vrot.slane %v4672, 4
        %v7936 = vrot.slane %v4675, 4
        %v7937 = vsel %vm7928, %v7935, %v7936
        %v7938 = vrot.slane %v4676, 4
        %v7939 = vsel %vm7928, %v7930, %v7938
        %v7940 = vrot.slane %v4677, 4
        %v7941 = vsel %vm7928, %v7933, %v7940
        %v7942 = vrot.slane %v4678, 4
        %v7943 = vsel %vm7928, %v7936, %v7942
        %v7944 = vrot.slane %v4679, 4
        %v7945 = vsel %vm7928, %v7938, %v7944
        %v7946 = vrot.slane %v4680, 4
        %v7947 = vsel %vm7928, %v7940, %v7946
        %v7948 = vrot.slane %v4681, 4
        %v7949 = vsel %vm7928, %v7942, %v7948
        %v7950 = vrot.slane %v4682, 4
        %v7951 = vsel %vm7928, %v7944, %v7950
        %v7952 = vrot.slane %v4683, 4
        %v7953 = vsel %vm7928, %v7946, %v7952
        %v7954 = vrot.slane %v4684, 4
        %v7955 = vsel %vm7928, %v7948, %v7954
        %v7956 = vrot.slane %v4685, 4
        %v7957 = vsel %vm7928, %v7950, %v7956
        %v7958 = vrot.slane %v4686, 4
        %v7959 = vsel %vm7928, %v7952, %v7958
        %v7960 = vrot.slane %v4687, 4
        %v7961 = vsel %vm7928, %v7954, %v7960
        %v7962 = vrot.slane %v4688, 4
        %v7963 = vsel %vm7928, %v7956, %v7962
        %v7964 = vrot.slane %v4689, 4
        %v7965 = vsel %vm7928, %v7958, %v7964
        %v7966 = vrot.slane %v4690, 4
        %v7967 = vsel %vm7928, %v7960, %v7966
        %v7968 = vrot.slane %v4691, 4
        %v7969 = vsel %vm7928, %v7962, %v7968
        %v7970 = vrot.slane %v4692, 4
        %v7971 = vsel %vm7928, %v7964, %v7970
        %v7972 = vrot.slane %v4693, 4
        %v7973 = vsel %vm7928, %v7966, %v7972
        %v7974 = vrot.slane %v4694, 4
        %v7975 = vsel %vm7928, %v7968, %v7974
        %v7976 = vrot.slane %v4695, 4
        %v7977 = vsel %vm7928, %v7970, %v7976
        %v7978 = vrot.slane %v4696, 4
        %v7979 = vsel %vm7928, %v7972, %v7978
        %v7980 = vrot.slane %v4697, 4
        %v7981 = vsel %vm7928, %v7974, %v7980
        %v7982 = vrot.slane %v4698, 4
        %v7983 = vsel %vm7928, %v7976, %v7982
        %v7984 = vrot.slane %v4699, 4
        %v7985 = vsel %vm7928, %v7978, %v7984
        %v7986 = vrot.slane %v4700, 4
        %v7987 = vsel %vm7928, %v7980, %v7986
        %v7988 = vrot.slane %v4701, 4
        %v7989 = vsel %vm7928, %v7982, %v7988
        %v7990 = vrot.slane %v4702, 4
        %v7991 = vsel %vm7928, %v7984, %v7990
        %v7992 = vrot.slane %v4703, 4
        %v7993 = vsel %vm7928, %v7986, %v7992
        %v7994 = vrot.slane %v4704, 4
        %v7995 = vsel %vm7928, %v7988, %v7994
        %v7996 = vrot.slane %v4705, 4
        %v7997 = vsel %vm7928, %v7990, %v7996
        %v7998 = vrot.slane %v4706, 4
        %v7999 = vsel %vm7928, %v7992, %v7998
        %v8000 = vrot.slane %v4707, 4
        %v8001 = vsel %vm7928, %v7994, %v8000
        %v8002 = vrot.slane %v4708, 4
        %v8003 = vsel %vm7928, %v7996, %v8002
        %v8004 = vrot.slane %v4709, 4
        %v8005 = vsel %vm7928, %v7998, %v8004
        %v8006 = vrot.slane %v4710, 4
        %v8007 = vsel %vm7928, %v8000, %v8006
        %v8008 = vrot.slane %v4711, 4
        %v8009 = vsel %vm7928, %v8002, %v8008
        %v8051 = vsel %vm443, %v8004, %v7929
        %v8055 = vsel %vm443, %v8006, %v7932
        %v8059 = vsel %vm443, %v8008, %v7935
        %s8061 = scalar_lea.vmem [#allocation4], 1536
        %v8062 = vld [vmem:[%s8061] sm:$0xff]
        %v8063 = vld [vmem:[%s8061 + $0x8] sm:$0xff]
        %v8064 = vld [vmem:[%s8061 + $0x10] sm:$0xff]
        %v8065 = vld [vmem:[%s8061 + $0x18] sm:$0xff]
        %v8066 = vld [vmem:[%s8061 + $0x20] sm:$0xff]
        %v8067 = vld [vmem:[%s8061 + $0x28] sm:$0xff]
        %v8068 = vld [vmem:[%s8061 + $0x30] sm:$0xff]
        %v8069 = vld [vmem:[%s8061 + $0x38] sm:$0xff]
        %v8070 = vld [vmem:[%s8061 + $0x40] sm:$0xff]
        %v8071 = vld [vmem:[%s8061 + $0x48] sm:$0xff]
        %v8072 = vld [vmem:[%s8061 + $0x50] sm:$0xff]
        %v8073 = vld [vmem:[%s8061 + $0x58] sm:$0xff]
        %v8074 = vld [vmem:[%s8061 + $0x60] sm:$0xff]
        %v8075 = vld [vmem:[%s8061 + $0x68] sm:$0xff]
        %v8076 = vld [vmem:[%s8061 + $0x70] sm:$0xff]
        %v8077 = vld [vmem:[%s8061 + $0x78] sm:$0xff]
        %v8078 = vld [vmem:[%s8061 + $0x80] sm:$0xff]
        %v8079 = vld [vmem:[%s8061 + $0x88] sm:$0xff]
        %v8080 = vld [vmem:[%s8061 + $0x90] sm:$0xff]
        %v8081 = vld [vmem:[%s8061 + $0x98] sm:$0xff]
        %v8082 = vld [vmem:[%s8061 + $0xa0] sm:$0xff]
        %v8083 = vld [vmem:[%s8061 + $0xa8] sm:$0xff]
        %v8084 = vld [vmem:[%s8061 + $0xb0] sm:$0xff]
        %v8085 = vld [vmem:[%s8061 + $0xb8] sm:$0xff]
        %v8086 = vld [vmem:[%s8061 + $0xc0] sm:$0xff]
        %v8087 = vld [vmem:[%s8061 + $0xc8] sm:$0xff]
        %v8088 = vld [vmem:[%s8061 + $0xd0] sm:$0xff]
        %v8089 = vld [vmem:[%s8061 + $0xd8] sm:$0xff]
        %v8090 = vld [vmem:[%s8061 + $0xe0] sm:$0xff]
        %v8091 = vld [vmem:[%s8061 + $0xe8] sm:$0xff]
        %v8092 = vld [vmem:[%s8061 + $0xf0] sm:$0xff]
        %v8093 = vld [vmem:[%s8061 + $0xf8] sm:$0xff]
        %v8094 = vld [vmem:[%s8061 + $0x100] sm:$0xff]
        %v8095 = vld [vmem:[%s8061 + $0x108] sm:$0xff]
        %v8096 = vld [vmem:[%s8061 + $0x110] sm:$0xff]
        %v8097 = vld [vmem:[%s8061 + $0x118] sm:$0xff]
        %v8098 = vld [vmem:[%s8061 + $0x120] sm:$0xff]
        %v8099 = vld [vmem:[%s8061 + $0x128] sm:$0xff]
        %v8100 = vld [vmem:[%s8061 + $0x130] sm:$0xff]
        %v8101 = vld [vmem:[%s8061 + $0x138] sm:$0xff]
        %v8102 = vld [vmem:[%s8061 + $0x140] sm:$0xff]
        %v8103 = vld [vmem:[%s8061 + $0x148] sm:$0xff]
        %v8104 = vld [vmem:[%s8061 + $0x150] sm:$0xff]
        %v8105 = vld [vmem:[%s8061 + $0x158] sm:$0xff]
        %v8106 = vld [vmem:[%s8061 + $0x160] sm:$0xff]
        %v8107 = vld [vmem:[%s8061 + $0x168] sm:$0xff]
        %v8108 = vld [vmem:[%s8061 + $0x170] sm:$0xff]
        %v8109 = vld [vmem:[%s8061 + $0x178] sm:$0xff]
        %v8158 = vunpack.c.l.b16 %v8062
        %v8159 = vunpack.c.h.b16 %v8062
        %v8160 = vunpack.c.l.b16 %v8063
        %v8161 = vunpack.c.h.b16 %v8063
        %v8162 = vunpack.c.l.b16 %v8064
        %v8163 = vunpack.c.h.b16 %v8064
        %v8164 = vunpack.c.l.b16 %v8065
        %v8165 = vunpack.c.h.b16 %v8065
        %v8166 = vunpack.c.l.b16 %v8066
        %v8167 = vunpack.c.h.b16 %v8066
        %v8168 = vunpack.c.l.b16 %v8067
        %v8169 = vunpack.c.h.b16 %v8067
        %v8170 = vunpack.c.l.b16 %v8068
        %v8171 = vunpack.c.h.b16 %v8068
        %v8172 = vunpack.c.l.b16 %v8069
        %v8173 = vunpack.c.h.b16 %v8069
        %v8174 = vunpack.c.l.b16 %v8070
        %v8175 = vunpack.c.h.b16 %v8070
        %v8176 = vunpack.c.l.b16 %v8071
        %v8177 = vunpack.c.h.b16 %v8071
        %v8178 = vunpack.c.l.b16 %v8072
        %v8179 = vunpack.c.h.b16 %v8072
        %v8180 = vunpack.c.l.b16 %v8073
        %v8181 = vunpack.c.h.b16 %v8073
        %v8182 = vunpack.c.l.b16 %v8074
        %v8183 = vunpack.c.h.b16 %v8074
        %v8184 = vunpack.c.l.b16 %v8075
        %v8185 = vunpack.c.h.b16 %v8075
        %v8186 = vunpack.c.l.b16 %v8076
        %v8187 = vunpack.c.h.b16 %v8076
        %v8188 = vunpack.c.l.b16 %v8077
        %v8189 = vunpack.c.h.b16 %v8077
        %v8190 = vunpack.c.l.b16 %v8078
        %v8191 = vunpack.c.h.b16 %v8078
        %v8192 = vunpack.c.l.b16 %v8079
        %v8193 = vunpack.c.h.b16 %v8079
        %v8194 = vunpack.c.l.b16 %v8080
        %v8195 = vunpack.c.h.b16 %v8080
        %v8196 = vunpack.c.l.b16 %v8081
        %v8197 = vunpack.c.h.b16 %v8081
        %v8198 = vunpack.c.l.b16 %v8082
        %v8199 = vunpack.c.h.b16 %v8082
        %v8200 = vunpack.c.l.b16 %v8083
        %v8201 = vunpack.c.h.b16 %v8083
        %v8202 = vunpack.c.l.b16 %v8084
        %v8203 = vunpack.c.h.b16 %v8084
        %v8204 = vunpack.c.l.b16 %v8085
        %v8205 = vunpack.c.h.b16 %v8085
        %v8206 = vunpack.c.l.b16 %v8086
        %v8207 = vunpack.c.h.b16 %v8086
        %v8208 = vunpack.c.l.b16 %v8087
        %v8209 = vunpack.c.h.b16 %v8087
        %v8210 = vunpack.c.l.b16 %v8088
        %v8211 = vunpack.c.h.b16 %v8088
        %v8212 = vunpack.c.l.b16 %v8089
        %v8213 = vunpack.c.h.b16 %v8089
        %v8214 = vunpack.c.l.b16 %v8090
        %v8215 = vunpack.c.h.b16 %v8090
        %v8216 = vunpack.c.l.b16 %v8091
        %v8217 = vunpack.c.h.b16 %v8091
        %v8218 = vunpack.c.l.b16 %v8092
        %v8219 = vunpack.c.h.b16 %v8092
        %v8220 = vunpack.c.l.b16 %v8093
        %v8221 = vunpack.c.h.b16 %v8093
        %v8222 = vunpack.c.l.b16 %v8094
        %v8223 = vunpack.c.h.b16 %v8094
        %v8224 = vunpack.c.l.b16 %v8095
        %v8225 = vunpack.c.h.b16 %v8095
        %v8226 = vunpack.c.l.b16 %v8096
        %v8227 = vunpack.c.h.b16 %v8096
        %v8228 = vunpack.c.l.b16 %v8097
        %v8229 = vunpack.c.h.b16 %v8097
        %v8230 = vunpack.c.l.b16 %v8098
        %v8231 = vunpack.c.h.b16 %v8098
        %v8232 = vunpack.c.l.b16 %v8099
        %v8233 = vunpack.c.h.b16 %v8099
        %v8234 = vunpack.c.l.b16 %v8100
        %v8235 = vunpack.c.h.b16 %v8100
        %v8236 = vunpack.c.l.b16 %v8101
        %v8237 = vunpack.c.h.b16 %v8101
        %v8238 = vunpack.c.l.b16 %v8102
        %v8239 = vunpack.c.h.b16 %v8102
        %v8240 = vunpack.c.l.b16 %v8103
        %v8241 = vunpack.c.h.b16 %v8103
        %v8242 = vunpack.c.l.b16 %v8104
        %v8243 = vunpack.c.h.b16 %v8104
        %v8244 = vunpack.c.l.b16 %v8105
        %v8245 = vunpack.c.h.b16 %v8105
        %v8246 = vunpack.c.l.b16 %v8106
        %v8247 = vunpack.c.h.b16 %v8106
        %v8248 = vunpack.c.l.b16 %v8107
        %v8249 = vunpack.c.h.b16 %v8107
        %v8250 = vunpack.c.l.b16 %v8108
        %v8251 = vunpack.c.h.b16 %v8108
        %v8252 = vunpack.c.l.b16 %v8109
        %v8253 = vunpack.c.h.b16 %v8109
        %v8254 = vpack.c.b16 %v8160, %v8158
        %v8255 = vpack.c.b16 %v8161, %v8159
        %v8256 = vpack.c.b16 %v8164, %v8162
        %v8257 = vpack.c.b16 %v8165, %v8163
        %v8258 = vpack.c.b16 %v8168, %v8166
        %v8259 = vpack.c.b16 %v8169, %v8167
        %v8260 = vpack.c.b16 %v8172, %v8170
        %v8261 = vpack.c.b16 %v8173, %v8171
        %v8262 = vpack.c.b16 %v8176, %v8174
        %v8263 = vpack.c.b16 %v8177, %v8175
        %v8264 = vpack.c.b16 %v8180, %v8178
        %v8265 = vpack.c.b16 %v8181, %v8179
        %v8266 = vpack.c.b16 %v8184, %v8182
        %v8267 = vpack.c.b16 %v8185, %v8183
        %v8268 = vpack.c.b16 %v8188, %v8186
        %v8269 = vpack.c.b16 %v8189, %v8187
        %v8270 = vpack.c.b16 %v8192, %v8190
        %v8271 = vpack.c.b16 %v8193, %v8191
        %v8272 = vpack.c.b16 %v8196, %v8194
        %v8273 = vpack.c.b16 %v8197, %v8195
        %v8274 = vpack.c.b16 %v8200, %v8198
        %v8275 = vpack.c.b16 %v8201, %v8199
        %v8276 = vpack.c.b16 %v8204, %v8202
        %v8277 = vpack.c.b16 %v8205, %v8203
        %v8278 = vpack.c.b16 %v8208, %v8206
        %v8279 = vpack.c.b16 %v8209, %v8207
        %v8280 = vpack.c.b16 %v8212, %v8210
        %v8281 = vpack.c.b16 %v8213, %v8211
        %v8282 = vpack.c.b16 %v8216, %v8214
        %v8283 = vpack.c.b16 %v8217, %v8215
        %v8284 = vpack.c.b16 %v8220, %v8218
        %v8285 = vpack.c.b16 %v8221, %v8219
        %v8286 = vpack.c.b16 %v8224, %v8222
        %v8287 = vpack.c.b16 %v8225, %v8223
        %v8288 = vpack.c.b16 %v8228, %v8226
        %v8289 = vpack.c.b16 %v8229, %v8227
        %v8290 = vpack.c.b16 %v8232, %v8230
        %v8291 = vpack.c.b16 %v8233, %v8231
        %v8292 = vpack.c.b16 %v8236, %v8234
        %v8293 = vpack.c.b16 %v8237, %v8235
        %v8294 = vpack.c.b16 %v8240, %v8238
        %v8295 = vpack.c.b16 %v8241, %v8239
        %v8296 = vpack.c.b16 %v8244, %v8242
        %v8297 = vpack.c.b16 %v8245, %v8243
        %v8298 = vpack.c.b16 %v8248, %v8246
        %v8299 = vpack.c.b16 %v8249, %v8247
        %v8300 = vpack.c.b16 %v8252, %v8250
        %v8301 = vpack.c.b16 %v8253, %v8251
        %8350 = vmatprep.subr.bf16.mxu0 %v8269
        %8351 = vmatpush1.bf16.msra.mxu0 %v8268
        %8352 = vmatprep.subr.bf16.mxu0 %v8267
        %8353 = vmatpush1.bf16.msra.mxu0 %v8266
        %8354 = vmatprep.subr.bf16.mxu0 %v8265
        %8355 = vmatpush1.bf16.msra.mxu0 %v8264
        %8356 = vmatprep.subr.bf16.mxu0 %v8263
        %8357 = vmatpush1.bf16.msra.mxu0 %v8262
        %8358 = vmatprep.subr.bf16.mxu0 %v8261
        %8359 = vmatpush1.bf16.msra.mxu0 %v8260
        %8360 = vmatprep.subr.bf16.mxu0 %v8259
        %8361 = vmatpush1.bf16.msra.mxu0 %v8258
        %8362 = vmatprep.subr.bf16.mxu0 %v8257
        %8363 = vmatpush1.bf16.msra.mxu0 %v8256
        %8364 = vmatprep.subr.bf16.mxu0 %v8255
        %8365 = vmatpush1.bf16.msra.mxu0 %v8254
        %8366 = vmatprep.subr.bf16.mxu0 %v8285
        %8367 = vmatpush2.bf16.msra.mxu0 %v8284
        %8368 = vmatprep.subr.bf16.mxu0 %v8283
        %8369 = vmatpush2.bf16.msra.mxu0 %v8282
        %8370 = vmatprep.subr.bf16.mxu0 %v8281
        %8371 = vmatpush2.bf16.msra.mxu0 %v8280
        %8372 = vmatprep.subr.bf16.mxu0 %v8279
        %8373 = vmatpush2.bf16.msra.mxu0 %v8278
        %8374 = vmatprep.subr.bf16.mxu0 %v8277
        %8375 = vmatpush2.bf16.msra.mxu0 %v8276
        %8376 = vmatprep.subr.bf16.mxu0 %v8275
        %8377 = vmatpush2.bf16.msra.mxu0 %v8274
        %8378 = vmatprep.subr.bf16.mxu0 %v8273
        %8379 = vmatpush2.bf16.msra.mxu0 %v8272
        %8380 = vmatprep.subr.bf16.mxu0 %v8271
        %8381 = vmatpush2.bf16.msra.mxu0 %v8270
        %8382 = vmatprep.mubr.bf16.mxu0 %v7934
        %8383 = vmatmul.mubr.bf16.gmra.mxu0 %v7931
        %v8384 = vpop.f32.mrf.mxu0
        %v8385 = vadd.f32 0.0, %v8384
        %v8386 = vpop.f32.mrf.mxu0
        %v8387 = vadd.f32 0.0, %v8386
        %v8388 = vpop.f32.mrf.mxu0
        %v8389 = vadd.f32 0.0, %v8388
        %v8390 = vpop.f32.mrf.mxu0
        %v8391 = vadd.f32 0.0, %v8390
        %8392 = vmatprep.mubr.bf16.mxu0 %v7941
        %8393 = vmatmul.mubr.bf16.gmra.mxu0 %v7939
        %v8394 = vpop.f32.mrf.mxu0
        %v8395 = vadd.f32 0.0, %v8394
        %v8396 = vpop.f32.mrf.mxu0
        %v8397 = vadd.f32 0.0, %v8396
        %v8398 = vpop.f32.mrf.mxu0
        %v8399 = vadd.f32 0.0, %v8398
        %v8400 = vpop.f32.mrf.mxu0
        %v8401 = vadd.f32 0.0, %v8400
        %8402 = vmatprep.mubr.bf16.mxu0 %v7947
        %8403 = vmatmul.mubr.bf16.gmra.mxu0 %v7945
        %v8404 = vpop.f32.mrf.mxu0
        %v8405 = vadd.f32 0.0, %v8404
        %v8406 = vpop.f32.mrf.mxu0
        %v8407 = vadd.f32 0.0, %v8406
        %v8408 = vpop.f32.mrf.mxu0
        %v8409 = vadd.f32 0.0, %v8408
        %v8410 = vpop.f32.mrf.mxu0
        %v8411 = vadd.f32 0.0, %v8410
        %8412 = vmatprep.mubr.bf16.mxu0 %v7953
        %8413 = vmatmul.mubr.bf16.gmra.mxu0 %v7951
        %v8414 = vpop.f32.mrf.mxu0
        %v8415 = vadd.f32 0.0, %v8414
        %v8416 = vpop.f32.mrf.mxu0
        %v8417 = vadd.f32 0.0, %v8416
        %v8418 = vpop.f32.mrf.mxu0
        %v8419 = vadd.f32 0.0, %v8418
        %v8420 = vpop.f32.mrf.mxu0
        %v8421 = vadd.f32 0.0, %v8420
        %8422 = vmatprep.mubr.bf16.mxu0 %v7959
        %8423 = vmatmul.mubr.bf16.gmra.mxu0 %v7957
        %v8424 = vpop.f32.mrf.mxu0
        %v8425 = vadd.f32 0.0, %v8424
        %v8426 = vpop.f32.mrf.mxu0
        %v8427 = vadd.f32 0.0, %v8426
        %v8428 = vpop.f32.mrf.mxu0
        %v8429 = vadd.f32 0.0, %v8428
        %v8430 = vpop.f32.mrf.mxu0
        %v8431 = vadd.f32 0.0, %v8430
        %8432 = vmatprep.mubr.bf16.mxu0 %v7965
        %8433 = vmatmul.mubr.bf16.gmra.mxu0 %v7963
        %v8434 = vpop.f32.mrf.mxu0
        %v8435 = vadd.f32 0.0, %v8434
        %v8436 = vpop.f32.mrf.mxu0
        %v8437 = vadd.f32 0.0, %v8436
        %v8438 = vpop.f32.mrf.mxu0
        %v8439 = vadd.f32 0.0, %v8438
        %v8440 = vpop.f32.mrf.mxu0
        %v8441 = vadd.f32 0.0, %v8440
        %8442 = vmatprep.mubr.bf16.mxu0 %v7971
        %8443 = vmatmul.mubr.bf16.gmra.mxu0 %v7969
        %v8444 = vpop.f32.mrf.mxu0
        %v8445 = vadd.f32 0.0, %v8444
        %v8446 = vpop.f32.mrf.mxu0
        %v8447 = vadd.f32 0.0, %v8446
        %v8448 = vpop.f32.mrf.mxu0
        %v8449 = vadd.f32 0.0, %v8448
        %v8450 = vpop.f32.mrf.mxu0
        %v8451 = vadd.f32 0.0, %v8450
        %8452 = vmatprep.mubr.bf16.mxu0 %v7977
        %8453 = vmatmul.mubr.bf16.gmra.mxu0 %v7975
        %v8454 = vpop.f32.mrf.mxu0
        %v8455 = vadd.f32 0.0, %v8454
        %v8456 = vpop.f32.mrf.mxu0
        %v8457 = vadd.f32 0.0, %v8456
        %v8458 = vpop.f32.mrf.mxu0
        %v8459 = vadd.f32 0.0, %v8458
        %v8460 = vpop.f32.mrf.mxu0
        %v8461 = vadd.f32 0.0, %v8460
        %8462 = vmatprep.mubr.bf16.mxu0 %v7983
        %8463 = vmatmul.mubr.bf16.gmra.mxu0 %v7981
        %v8464 = vpop.f32.mrf.mxu0
        %v8465 = vadd.f32 0.0, %v8464
        %v8466 = vpop.f32.mrf.mxu0
        %v8467 = vadd.f32 0.0, %v8466
        %v8468 = vpop.f32.mrf.mxu0
        %v8469 = vadd.f32 0.0, %v8468
        %v8470 = vpop.f32.mrf.mxu0
        %v8471 = vadd.f32 0.0, %v8470
        %8472 = vmatprep.mubr.bf16.mxu0 %v7989
        %8473 = vmatmul.mubr.bf16.gmra.mxu0 %v7987
        %v8474 = vpop.f32.mrf.mxu0
        %v8475 = vadd.f32 0.0, %v8474
        %v8476 = vpop.f32.mrf.mxu0
        %v8477 = vadd.f32 0.0, %v8476
        %v8478 = vpop.f32.mrf.mxu0
        %v8479 = vadd.f32 0.0, %v8478
        %v8480 = vpop.f32.mrf.mxu0
        %v8481 = vadd.f32 0.0, %v8480
        %8482 = vmatprep.mubr.bf16.mxu0 %v7995
        %8483 = vmatmul.mubr.bf16.gmra.mxu0 %v7993
        %v8484 = vpop.f32.mrf.mxu0
        %v8485 = vadd.f32 0.0, %v8484
        %v8486 = vpop.f32.mrf.mxu0
        %v8487 = vadd.f32 0.0, %v8486
        %v8488 = vpop.f32.mrf.mxu0
        %v8489 = vadd.f32 0.0, %v8488
        %v8490 = vpop.f32.mrf.mxu0
        %v8491 = vadd.f32 0.0, %v8490
        %8492 = vmatprep.mubr.bf16.mxu0 %v8001
        %8493 = vmatmul.mubr.bf16.gmra.mxu0 %v7999
        %v8494 = vpop.f32.mrf.mxu0
        %v8495 = vadd.f32 0.0, %v8494
        %v8496 = vpop.f32.mrf.mxu0
        %v8497 = vadd.f32 0.0, %v8496
        %v8498 = vpop.f32.mrf.mxu0
        %v8499 = vadd.f32 0.0, %v8498
        %v8500 = vpop.f32.mrf.mxu0
        %v8501 = vadd.f32 0.0, %v8500
        %8502 = vmatprep.mubr.bf16.mxu0 %v8007
        %8503 = vmatmul.mubr.bf16.gmra.mxu0 %v8005
        %v8504 = vpop.f32.mrf.mxu0
        %v8505 = vadd.f32 0.0, %v8504
        %v8506 = vpop.f32.mrf.mxu0
        %v8507 = vadd.f32 0.0, %v8506
        %v8508 = vpop.f32.mrf.mxu0
        %v8509 = vadd.f32 0.0, %v8508
        %v8510 = vpop.f32.mrf.mxu0
        %v8511 = vadd.f32 0.0, %v8510
        %8512 = vmatprep.mubr.bf16.mxu0 %v8055
        %8513 = vmatmul.mubr.bf16.gmra.mxu0 %v8051
        %v8514 = vpop.f32.mrf.mxu0
        %v8515 = vadd.f32 0.0, %v8514
        %v8516 = vpop.f32.mrf.mxu0
        %v8517 = vadd.f32 0.0, %v8516
        %v8518 = vpop.f32.mrf.mxu0
        %v8519 = vadd.f32 0.0, %v8518
        %v8520 = vpop.f32.mrf.mxu0
        %v8521 = vadd.f32 0.0, %v8520
        %8522 = vdwg.mxu0
        %8523 = vmatprep.subr.bf16.mxu0 %v8301
        %8524 = vmatpush1.bf16.msra.mxu0 %v8300
        %8525 = vmatprep.subr.bf16.mxu0 %v8299
        %8526 = vmatpush1.bf16.msra.mxu0 %v8298
        %8527 = vmatprep.subr.bf16.mxu0 %v8297
        %8528 = vmatpush1.bf16.msra.mxu0 %v8296
        %8529 = vmatprep.subr.bf16.mxu0 %v8295
        %8530 = vmatpush1.bf16.msra.mxu0 %v8294
        %8531 = vmatprep.subr.bf16.mxu0 %v8293
        %8532 = vmatpush1.bf16.msra.mxu0 %v8292
        %8533 = vmatprep.subr.bf16.mxu0 %v8291
        %8534 = vmatpush1.bf16.msra.mxu0 %v8290
        %8535 = vmatprep.subr.bf16.mxu0 %v8289
        %8536 = vmatpush1.bf16.msra.mxu0 %v8288
        %8537 = vmatprep.subr.bf16.mxu0 %v8287
        %8538 = vmatpush1.bf16.msra.mxu0 %v8286
        %8539 = vmatprep.subr.bf16.mxu0 0
        %8540 = vmatpush2.bf16.msra.mxu0 0
        %8541 = vmatprep.subr.bf16.mxu0 0
        %8542 = vmatpush2.bf16.msra.mxu0 0
        %8543 = vmatprep.subr.bf16.mxu0 0
        %8544 = vmatpush2.bf16.msra.mxu0 0
        %8545 = vmatprep.subr.bf16.mxu0 0
        %8546 = vmatpush2.bf16.msra.mxu0 0
        %8547 = vmatprep.subr.bf16.mxu0 0
        %8548 = vmatpush2.bf16.msra.mxu0 0
        %8549 = vmatprep.subr.bf16.mxu0 0
        %8550 = vmatpush2.bf16.msra.mxu0 0
        %8551 = vmatprep.subr.bf16.mxu0 0
        %8552 = vmatpush2.bf16.msra.mxu0 0
        %8553 = vmatprep.subr.bf16.mxu0 0
        %8554 = vmatpush2.bf16.msra.mxu0 0
        %8555 = vmatprep.mubr.bf16.mxu0 0
        %8556 = vmatmul.mubr.bf16.gmra.mxu0 %v7937
        %v8557 = vpop.f32.mrf.mxu0
        %v8558 = vadd.f32 %v8385, %v8557
        %v8559 = vpop.f32.mrf.mxu0
        %v8560 = vadd.f32 %v8387, %v8559
        %v8561 = vpop.f32.mrf.mxu0
        %v8562 = vadd.f32 %v8389, %v8561
        %v8563 = vpop.f32.mrf.mxu0
        %v8564 = vadd.f32 %v8391, %v8563
        %8565 = vmatprep.mubr.bf16.mxu0 0
        %8566 = vmatmul.mubr.bf16.gmra.mxu0 %v7943
        %v8567 = vpop.f32.mrf.mxu0
        %v8568 = vadd.f32 %v8395, %v8567
        %v8569 = vpop.f32.mrf.mxu0
        %v8570 = vadd.f32 %v8397, %v8569
        %v8571 = vpop.f32.mrf.mxu0
        %v8572 = vadd.f32 %v8399, %v8571
        %v8573 = vpop.f32.mrf.mxu0
        %v8574 = vadd.f32 %v8401, %v8573
        %8575 = vmatprep.mubr.bf16.mxu0 0
        %8576 = vmatmul.mubr.bf16.gmra.mxu0 %v7949
        %v8577 = vpop.f32.mrf.mxu0
        %v8578 = vadd.f32 %v8405, %v8577
        %v8579 = vpop.f32.mrf.mxu0
        %v8580 = vadd.f32 %v8407, %v8579
        %v8581 = vpop.f32.mrf.mxu0
        %v8582 = vadd.f32 %v8409, %v8581
        %v8583 = vpop.f32.mrf.mxu0
        %v8584 = vadd.f32 %v8411, %v8583
        %8585 = vmatprep.mubr.bf16.mxu0 0
        %8586 = vmatmul.mubr.bf16.gmra.mxu0 %v7955
        %v8587 = vpop.f32.mrf.mxu0
        %v8588 = vadd.f32 %v8415, %v8587
        %v8589 = vpop.f32.mrf.mxu0
        %v8590 = vadd.f32 %v8417, %v8589
        %v8591 = vpop.f32.mrf.mxu0
        %v8592 = vadd.f32 %v8419, %v8591
        %v8593 = vpop.f32.mrf.mxu0
        %v8594 = vadd.f32 %v8421, %v8593
        %8595 = vmatprep.mubr.bf16.mxu0 0
        %8596 = vmatmul.mubr.bf16.gmra.mxu0 %v7961
        %v8597 = vpop.f32.mrf.mxu0
        %v8598 = vadd.f32 %v8425, %v8597
        %v8599 = vpop.f32.mrf.mxu0
        %v8600 = vadd.f32 %v8427, %v8599
        %v8601 = vpop.f32.mrf.mxu0
        %v8602 = vadd.f32 %v8429, %v8601
        %v8603 = vpop.f32.mrf.mxu0
        %v8604 = vadd.f32 %v8431, %v8603
        %8605 = vmatprep.mubr.bf16.mxu0 0
        %8606 = vmatmul.mubr.bf16.gmra.mxu0 %v7967
        %v8607 = vpop.f32.mrf.mxu0
        %v8608 = vadd.f32 %v8435, %v8607
        %v8609 = vpop.f32.mrf.mxu0
        %v8610 = vadd.f32 %v8437, %v8609
        %v8611 = vpop.f32.mrf.mxu0
        %v8612 = vadd.f32 %v8439, %v8611
        %v8613 = vpop.f32.mrf.mxu0
        %v8614 = vadd.f32 %v8441, %v8613
        %8615 = vmatprep.mubr.bf16.mxu0 0
        %8616 = vmatmul.mubr.bf16.gmra.mxu0 %v7973
        %v8617 = vpop.f32.mrf.mxu0
        %v8618 = vadd.f32 %v8445, %v8617
        %v8619 = vpop.f32.mrf.mxu0
        %v8620 = vadd.f32 %v8447, %v8619
        %v8621 = vpop.f32.mrf.mxu0
        %v8622 = vadd.f32 %v8449, %v8621
        %v8623 = vpop.f32.mrf.mxu0
        %v8624 = vadd.f32 %v8451, %v8623
        %8625 = vmatprep.mubr.bf16.mxu0 0
        %8626 = vmatmul.mubr.bf16.gmra.mxu0 %v7979
        %v8627 = vpop.f32.mrf.mxu0
        %v8628 = vadd.f32 %v8455, %v8627
        %v8629 = vpop.f32.mrf.mxu0
        %v8630 = vadd.f32 %v8457, %v8629
        %v8631 = vpop.f32.mrf.mxu0
        %v8632 = vadd.f32 %v8459, %v8631
        %v8633 = vpop.f32.mrf.mxu0
        %v8634 = vadd.f32 %v8461, %v8633
        %8635 = vmatprep.mubr.bf16.mxu0 0
        %8636 = vmatmul.mubr.bf16.gmra.mxu0 %v7985
        %v8637 = vpop.f32.mrf.mxu0
        %v8638 = vadd.f32 %v8465, %v8637
        %v8639 = vpop.f32.mrf.mxu0
        %v8640 = vadd.f32 %v8467, %v8639
        %v8641 = vpop.f32.mrf.mxu0
        %v8642 = vadd.f32 %v8469, %v8641
        %v8643 = vpop.f32.mrf.mxu0
        %v8644 = vadd.f32 %v8471, %v8643
        %8645 = vmatprep.mubr.bf16.mxu0 0
        %8646 = vmatmul.mubr.bf16.gmra.mxu0 %v7991
        %v8647 = vpop.f32.mrf.mxu0
        %v8648 = vadd.f32 %v8475, %v8647
        %v8649 = vpop.f32.mrf.mxu0
        %v8650 = vadd.f32 %v8477, %v8649
        %v8651 = vpop.f32.mrf.mxu0
        %v8652 = vadd.f32 %v8479, %v8651
        %v8653 = vpop.f32.mrf.mxu0
        %v8654 = vadd.f32 %v8481, %v8653
        %8655 = vmatprep.mubr.bf16.mxu0 0
        %8656 = vmatmul.mubr.bf16.gmra.mxu0 %v7997
        %v8657 = vpop.f32.mrf.mxu0
        %v8658 = vadd.f32 %v8485, %v8657
        %v8659 = vpop.f32.mrf.mxu0
        %v8660 = vadd.f32 %v8487, %v8659
        %v8661 = vpop.f32.mrf.mxu0
        %v8662 = vadd.f32 %v8489, %v8661
        %v8663 = vpop.f32.mrf.mxu0
        %v8664 = vadd.f32 %v8491, %v8663
        %8665 = vmatprep.mubr.bf16.mxu0 0
        %8666 = vmatmul.mubr.bf16.gmra.mxu0 %v8003
        %v8667 = vpop.f32.mrf.mxu0
        %v8668 = vadd.f32 %v8495, %v8667
        %v8669 = vpop.f32.mrf.mxu0
        %v8670 = vadd.f32 %v8497, %v8669
        %v8671 = vpop.f32.mrf.mxu0
        %v8672 = vadd.f32 %v8499, %v8671
        %v8673 = vpop.f32.mrf.mxu0
        %v8674 = vadd.f32 %v8501, %v8673
        %8675 = vmatprep.mubr.bf16.mxu0 0
        %8676 = vmatmul.mubr.bf16.gmra.mxu0 %v8009
        %v8677 = vpop.f32.mrf.mxu0
        %v8678 = vadd.f32 %v8505, %v8677
        %v8679 = vpop.f32.mrf.mxu0
        %v8680 = vadd.f32 %v8507, %v8679
        %v8681 = vpop.f32.mrf.mxu0
        %v8682 = vadd.f32 %v8509, %v8681
        %v8683 = vpop.f32.mrf.mxu0
        %v8684 = vadd.f32 %v8511, %v8683
        %8685 = vmatprep.mubr.bf16.mxu0 0
        %8686 = vmatmul.mubr.bf16.gmra.mxu0 %v8059
        %v8687 = vpop.f32.mrf.mxu0
        %v8688 = vadd.f32 %v8515, %v8687
        %v8689 = vpop.f32.mrf.mxu0
        %v8690 = vadd.f32 %v8517, %v8689
        %v8691 = vpop.f32.mrf.mxu0
        %v8692 = vadd.f32 %v8519, %v8691
        %v8693 = vpop.f32.mrf.mxu0
        %v8694 = vadd.f32 %v8521, %v8693
        %8695 = vdwg.mxu0
        %v8696 = vadd.f32 %v7872, %v8558
        %v8697 = vadd.f32 %v7873, %v8560
        %v8698 = vadd.f32 %v7874, %v8562
        %v8699 = vadd.f32 %v7875, %v8564
        %v8700 = vadd.f32 %v7876, %v8568
        %v8701 = vadd.f32 %v7877, %v8570
        %v8702 = vadd.f32 %v7878, %v8572
        %v8703 = vadd.f32 %v7879, %v8574
        %v8704 = vadd.f32 %v7880, %v8578
        %v8705 = vadd.f32 %v7881, %v8580
        %v8706 = vadd.f32 %v7882, %v8582
        %v8707 = vadd.f32 %v7883, %v8584
        %v8708 = vadd.f32 %v7884, %v8588
        %v8709 = vadd.f32 %v7885, %v8590
        %v8710 = vadd.f32 %v7886, %v8592
        %v8711 = vadd.f32 %v7887, %v8594
        %v8712 = vadd.f32 %v7888, %v8598
        %v8713 = vadd.f32 %v7889, %v8600
        %v8714 = vadd.f32 %v7890, %v8602
        %v8715 = vadd.f32 %v7891, %v8604
        %v8716 = vadd.f32 %v7892, %v8608
        %v8717 = vadd.f32 %v7893, %v8610
        %v8718 = vadd.f32 %v7894, %v8612
        %v8719 = vadd.f32 %v7895, %v8614
        %v8720 = vadd.f32 %v7896, %v8618
        %v8721 = vadd.f32 %v7897, %v8620
        %v8722 = vadd.f32 %v7898, %v8622
        %v8723 = vadd.f32 %v7899, %v8624
        %v8724 = vadd.f32 %v7900, %v8628
        %v8725 = vadd.f32 %v7901, %v8630
        %v8726 = vadd.f32 %v7902, %v8632
        %v8727 = vadd.f32 %v7903, %v8634
        %v8728 = vadd.f32 %v7904, %v8638
        %v8729 = vadd.f32 %v7905, %v8640
        %v8730 = vadd.f32 %v7906, %v8642
        %v8731 = vadd.f32 %v7907, %v8644
        %v8732 = vadd.f32 %v7908, %v8648
        %v8733 = vadd.f32 %v7909, %v8650
        %v8734 = vadd.f32 %v7910, %v8652
        %v8735 = vadd.f32 %v7911, %v8654
        %v8736 = vadd.f32 %v7912, %v8658
        %v8737 = vadd.f32 %v7913, %v8660
        %v8738 = vadd.f32 %v7914, %v8662
        %v8739 = vadd.f32 %v7915, %v8664
        %v8740 = vadd.f32 %v7916, %v8668
        %v8741 = vadd.f32 %v7917, %v8670
        %v8742 = vadd.f32 %v7918, %v8672
        %v8743 = vadd.f32 %v7919, %v8674
        %v8744 = vadd.f32 %v7920, %v8678
        %v8745 = vadd.f32 %v7921, %v8680
        %v8746 = vadd.f32 %v7922, %v8682
        %v8747 = vadd.f32 %v7923, %v8684
        %v8748 = vadd.f32 %v7924, %v8688
        %v8749 = vadd.f32 %v7925, %v8690
        %v8750 = vadd.f32 %v7926, %v8692
        %v8751 = vadd.f32 %v7927, %v8694
        %v8808 = vrot.slane %v8696, 2
        %v8809 = vrot.slane %v8698, 2
        %v8810 = vsel %vm1651, %v8808, %v8809
        %v8811 = vrot.slane %v8697, 2
        %v8812 = vrot.slane %v8699, 2
        %v8813 = vsel %vm1651, %v8811, %v8812
        %v8814 = vrot.slane %v8700, 2
        %v8815 = vsel %vm1651, %v8809, %v8814
        %v8816 = vrot.slane %v8701, 2
        %v8817 = vsel %vm1651, %v8812, %v8816
        %v8818 = vrot.slane %v8702, 2
        %v8819 = vsel %vm1651, %v8814, %v8818
        %v8820 = vrot.slane %v8703, 2
        %v8821 = vsel %vm1651, %v8816, %v8820
        %v8822 = vrot.slane %v8704, 2
        %v8823 = vsel %vm1651, %v8818, %v8822
        %v8824 = vrot.slane %v8705, 2
        %v8825 = vsel %vm1651, %v8820, %v8824
        %v8826 = vrot.slane %v8706, 2
        %v8827 = vsel %vm1651, %v8822, %v8826
        %v8828 = vrot.slane %v8707, 2
        %v8829 = vsel %vm1651, %v8824, %v8828
        %v8830 = vrot.slane %v8708, 2
        %v8831 = vsel %vm1651, %v8826, %v8830
        %v8832 = vrot.slane %v8709, 2
        %v8833 = vsel %vm1651, %v8828, %v8832
        %v8834 = vrot.slane %v8710, 2
        %v8835 = vsel %vm1651, %v8830, %v8834
        %v8836 = vrot.slane %v8711, 2
        %v8837 = vsel %vm1651, %v8832, %v8836
        %v8838 = vrot.slane %v8712, 2
        %v8839 = vsel %vm1651, %v8834, %v8838
        %v8840 = vrot.slane %v8713, 2
        %v8841 = vsel %vm1651, %v8836, %v8840
        %v8842 = vrot.slane %v8714, 2
        %v8843 = vsel %vm1651, %v8838, %v8842
        %v8844 = vrot.slane %v8715, 2
        %v8845 = vsel %vm1651, %v8840, %v8844
        %v8846 = vrot.slane %v8716, 2
        %v8847 = vsel %vm1651, %v8842, %v8846
        %v8848 = vrot.slane %v8717, 2
        %v8849 = vsel %vm1651, %v8844, %v8848
        %v8850 = vrot.slane %v8718, 2
        %v8851 = vsel %vm1651, %v8846, %v8850
        %v8852 = vrot.slane %v8719, 2
        %v8853 = vsel %vm1651, %v8848, %v8852
        %v8854 = vrot.slane %v8720, 2
        %v8855 = vsel %vm1651, %v8850, %v8854
        %v8856 = vrot.slane %v8721, 2
        %v8857 = vsel %vm1651, %v8852, %v8856
        %v8858 = vrot.slane %v8722, 2
        %v8859 = vsel %vm1651, %v8854, %v8858
        %v8860 = vrot.slane %v8723, 2
        %v8861 = vsel %vm1651, %v8856, %v8860
        %v8862 = vrot.slane %v8724, 2
        %v8863 = vsel %vm1651, %v8858, %v8862
        %v8864 = vrot.slane %v8725, 2
        %v8865 = vsel %vm1651, %v8860, %v8864
        %v8866 = vrot.slane %v8726, 2
        %v8867 = vsel %vm1651, %v8862, %v8866
        %v8868 = vrot.slane %v8727, 2
        %v8869 = vsel %vm1651, %v8864, %v8868
        %v8870 = vrot.slane %v8728, 2
        %v8871 = vsel %vm1651, %v8866, %v8870
        %v8872 = vrot.slane %v8729, 2
        %v8873 = vsel %vm1651, %v8868, %v8872
        %v8874 = vrot.slane %v8730, 2
        %v8875 = vsel %vm1651, %v8870, %v8874
        %v8876 = vrot.slane %v8731, 2
        %v8877 = vsel %vm1651, %v8872, %v8876
        %v8878 = vrot.slane %v8732, 2
        %v8879 = vsel %vm1651, %v8874, %v8878
        %v8880 = vrot.slane %v8733, 2
        %v8881 = vsel %vm1651, %v8876, %v8880
        %v8882 = vrot.slane %v8734, 2
        %v8883 = vsel %vm1651, %v8878, %v8882
        %v8884 = vrot.slane %v8735, 2
        %v8885 = vsel %vm1651, %v8880, %v8884
        %v8886 = vrot.slane %v8736, 2
        %v8887 = vsel %vm1651, %v8882, %v8886
        %v8888 = vrot.slane %v8737, 2
        %v8889 = vsel %vm1651, %v8884, %v8888
        %v8890 = vrot.slane %v8738, 2
        %v8891 = vsel %vm1651, %v8886, %v8890
        %v8892 = vrot.slane %v8739, 2
        %v8893 = vsel %vm1651, %v8888, %v8892
        %v8894 = vrot.slane %v8740, 2
        %v8895 = vsel %vm1651, %v8890, %v8894
        %v8896 = vrot.slane %v8741, 2
        %v8897 = vsel %vm1651, %v8892, %v8896
        %v8898 = vrot.slane %v8742, 2
        %v8899 = vsel %vm1651, %v8894, %v8898
        %v8900 = vrot.slane %v8743, 2
        %v8901 = vsel %vm1651, %v8896, %v8900
        %v8902 = vrot.slane %v8744, 2
        %v8903 = vsel %vm1651, %v8898, %v8902
        %v8904 = vrot.slane %v8745, 2
        %v8905 = vsel %vm1651, %v8900, %v8904
        %v8906 = vrot.slane %v8746, 2
        %v8907 = vsel %vm1651, %v8902, %v8906
        %v8908 = vrot.slane %v8747, 2
        %v8909 = vsel %vm1651, %v8904, %v8908
        %v8910 = vrot.slane %v8748, 2
        %v8911 = vsel %vm1651, %v8906, %v8910
        %v8912 = vrot.slane %v8749, 2
        %v8913 = vsel %vm1651, %v8908, %v8912
        %v8914 = vrot.slane %v8750, 2
        %v8915 = vsel %vm1651, %v8910, %v8914
        %v8916 = vrot.slane %v8751, 2
        %v8917 = vsel %vm1651, %v8912, %v8916
        %v8976 = vsel %vm1651, %v8914, %v8808
        %v8977 = vsel %vm1651, %v8916, %v8811
        %v8978 = vmax.f32 %v8696, %v8810
        %v8979 = vmax.f32 %v8697, %v8813
        %v8980 = vmax.f32 %v8698, %v8815
        %v8981 = vmax.f32 %v8699, %v8817
        %v8982 = vmax.f32 %v8700, %v8819
        %v8983 = vmax.f32 %v8701, %v8821
        %v8984 = vmax.f32 %v8702, %v8823
        %v8985 = vmax.f32 %v8703, %v8825
        %v8986 = vmax.f32 %v8704, %v8827
        %v8987 = vmax.f32 %v8705, %v8829
        %v8988 = vmax.f32 %v8706, %v8831
        %v8989 = vmax.f32 %v8707, %v8833
        %v8990 = vmax.f32 %v8708, %v8835
        %v8991 = vmax.f32 %v8709, %v8837
        %v8992 = vmax.f32 %v8710, %v8839
        %v8993 = vmax.f32 %v8711, %v8841
        %v8994 = vmax.f32 %v8712, %v8843
        %v8995 = vmax.f32 %v8713, %v8845
        %v8996 = vmax.f32 %v8714, %v8847
        %v8997 = vmax.f32 %v8715, %v8849
        %v8998 = vmax.f32 %v8716, %v8851
        %v8999 = vmax.f32 %v8717, %v8853
        %v9000 = vmax.f32 %v8718, %v8855
        %v9001 = vmax.f32 %v8719, %v8857
        %v9002 = vmax.f32 %v8720, %v8859
        %v9003 = vmax.f32 %v8721, %v8861
        %v9004 = vmax.f32 %v8722, %v8863
        %v9005 = vmax.f32 %v8723, %v8865
        %v9006 = vmax.f32 %v8724, %v8867
        %v9007 = vmax.f32 %v8725, %v8869
        %v9008 = vmax.f32 %v8726, %v8871
        %v9009 = vmax.f32 %v8727, %v8873
        %v9010 = vmax.f32 %v8728, %v8875
        %v9011 = vmax.f32 %v8729, %v8877
        %v9012 = vmax.f32 %v8730, %v8879
        %v9013 = vmax.f32 %v8731, %v8881
        %v9014 = vmax.f32 %v8732, %v8883
        %v9015 = vmax.f32 %v8733, %v8885
        %v9016 = vmax.f32 %v8734, %v8887
        %v9017 = vmax.f32 %v8735, %v8889
        %v9018 = vmax.f32 %v8736, %v8891
        %v9019 = vmax.f32 %v8737, %v8893
        %v9020 = vmax.f32 %v8738, %v8895
        %v9021 = vmax.f32 %v8739, %v8897
        %v9022 = vmax.f32 %v8740, %v8899
        %v9023 = vmax.f32 %v8741, %v8901
        %v9024 = vmax.f32 %v8742, %v8903
        %v9025 = vmax.f32 %v8743, %v8905
        %v9026 = vmax.f32 %v8744, %v8907
        %v9027 = vmax.f32 %v8745, %v8909
        %v9028 = vmax.f32 %v8746, %v8911
        %v9029 = vmax.f32 %v8747, %v8913
        %v9030 = vmax.f32 %v8748, %v8915
        %v9031 = vmax.f32 %v8749, %v8917
        %v9032 = vmax.f32 %v8750, %v8976
        %v9033 = vmax.f32 %v8751, %v8977
        %9090 = vrot.lane.b32.xlu0 %v8978, 127
        %v9091 = vpop.permute.xlu0 %9090
        %9092 = vrot.lane.b32.xlu0 %v8979, 127
        %v9093 = vpop.permute.xlu0 %9092
        %9094 = vrot.lane.b32.xlu0 %v8980, 127
        %v9095 = vpop.permute.xlu0 %9094
        %9096 = vrot.lane.b32.xlu0 %v8981, 127
        %v9097 = vpop.permute.xlu0 %9096
        %9098 = vrot.lane.b32.xlu0 %v8982, 127
        %v9099 = vpop.permute.xlu0 %9098
        %9100 = vrot.lane.b32.xlu0 %v8983, 127
        %v9101 = vpop.permute.xlu0 %9100
        %9102 = vrot.lane.b32.xlu0 %v8984, 127
        %v9103 = vpop.permute.xlu0 %9102
        %9104 = vrot.lane.b32.xlu0 %v8985, 127
        %v9105 = vpop.permute.xlu0 %9104
        %9106 = vrot.lane.b32.xlu0 %v8986, 127
        %v9107 = vpop.permute.xlu0 %9106
        %9108 = vrot.lane.b32.xlu0 %v8987, 127
        %v9109 = vpop.permute.xlu0 %9108
        %9110 = vrot.lane.b32.xlu0 %v8988, 127
        %v9111 = vpop.permute.xlu0 %9110
        %9112 = vrot.lane.b32.xlu0 %v8989, 127
        %v9113 = vpop.permute.xlu0 %9112
        %9114 = vrot.lane.b32.xlu0 %v8990, 127
        %v9115 = vpop.permute.xlu0 %9114
        %9116 = vrot.lane.b32.xlu0 %v8991, 127
        %v9117 = vpop.permute.xlu0 %9116
        %9118 = vrot.lane.b32.xlu0 %v8992, 127
        %v9119 = vpop.permute.xlu0 %9118
        %9120 = vrot.lane.b32.xlu0 %v8993, 127
        %v9121 = vpop.permute.xlu0 %9120
        %9122 = vrot.lane.b32.xlu0 %v8994, 127
        %v9123 = vpop.permute.xlu0 %9122
        %9124 = vrot.lane.b32.xlu0 %v8995, 127
        %v9125 = vpop.permute.xlu0 %9124
        %9126 = vrot.lane.b32.xlu0 %v8996, 127
        %v9127 = vpop.permute.xlu0 %9126
        %9128 = vrot.lane.b32.xlu0 %v8997, 127
        %v9129 = vpop.permute.xlu0 %9128
        %9130 = vrot.lane.b32.xlu0 %v8998, 127
        %v9131 = vpop.permute.xlu0 %9130
        %9132 = vrot.lane.b32.xlu0 %v8999, 127
        %v9133 = vpop.permute.xlu0 %9132
        %9134 = vrot.lane.b32.xlu0 %v9000, 127
        %v9135 = vpop.permute.xlu0 %9134
        %9136 = vrot.lane.b32.xlu0 %v9001, 127
        %v9137 = vpop.permute.xlu0 %9136
        %9138 = vrot.lane.b32.xlu0 %v9002, 127
        %v9139 = vpop.permute.xlu0 %9138
        %9140 = vrot.lane.b32.xlu0 %v9003, 127
        %v9141 = vpop.permute.xlu0 %9140
        %9142 = vrot.lane.b32.xlu0 %v9004, 127
        %v9143 = vpop.permute.xlu0 %9142
        %9144 = vrot.lane.b32.xlu0 %v9005, 127
        %v9145 = vpop.permute.xlu0 %9144
        %9146 = vrot.lane.b32.xlu0 %v9006, 127
        %v9147 = vpop.permute.xlu0 %9146
        %9148 = vrot.lane.b32.xlu0 %v9007, 127
        %v9149 = vpop.permute.xlu0 %9148
        %9150 = vrot.lane.b32.xlu0 %v9008, 127
        %v9151 = vpop.permute.xlu0 %9150
        %9152 = vrot.lane.b32.xlu0 %v9009, 127
        %v9153 = vpop.permute.xlu0 %9152
        %9154 = vrot.lane.b32.xlu0 %v9010, 127
        %v9155 = vpop.permute.xlu0 %9154
        %9156 = vrot.lane.b32.xlu0 %v9011, 127
        %v9157 = vpop.permute.xlu0 %9156
        %9158 = vrot.lane.b32.xlu0 %v9012, 127
        %v9159 = vpop.permute.xlu0 %9158
        %9160 = vrot.lane.b32.xlu0 %v9013, 127
        %v9161 = vpop.permute.xlu0 %9160
        %9162 = vrot.lane.b32.xlu0 %v9014, 127
        %v9163 = vpop.permute.xlu0 %9162
        %9164 = vrot.lane.b32.xlu0 %v9015, 127
        %v9165 = vpop.permute.xlu0 %9164
        %9166 = vrot.lane.b32.xlu0 %v9016, 127
        %v9167 = vpop.permute.xlu0 %9166
        %9168 = vrot.lane.b32.xlu0 %v9017, 127
        %v9169 = vpop.permute.xlu0 %9168
        %9170 = vrot.lane.b32.xlu0 %v9018, 127
        %v9171 = vpop.permute.xlu0 %9170
        %9172 = vrot.lane.b32.xlu0 %v9019, 127
        %v9173 = vpop.permute.xlu0 %9172
        %9174 = vrot.lane.b32.xlu0 %v9020, 127
        %v9175 = vpop.permute.xlu0 %9174
        %9176 = vrot.lane.b32.xlu0 %v9021, 127
        %v9177 = vpop.permute.xlu0 %9176
        %9178 = vrot.lane.b32.xlu0 %v9022, 127
        %v9179 = vpop.permute.xlu0 %9178
        %9180 = vrot.lane.b32.xlu0 %v9023, 127
        %v9181 = vpop.permute.xlu0 %9180
        %9182 = vrot.lane.b32.xlu0 %v9024, 127
        %v9183 = vpop.permute.xlu0 %9182
        %9184 = vrot.lane.b32.xlu0 %v9025, 127
        %v9185 = vpop.permute.xlu0 %9184
        %9186 = vrot.lane.b32.xlu0 %v9026, 127
        %v9187 = vpop.permute.xlu0 %9186
        %9188 = vrot.lane.b32.xlu0 %v9027, 127
        %v9189 = vpop.permute.xlu0 %9188
        %9190 = vrot.lane.b32.xlu0 %v9028, 127
        %v9191 = vpop.permute.xlu0 %9190
        %9192 = vrot.lane.b32.xlu0 %v9029, 127
        %v9193 = vpop.permute.xlu0 %9192
        %9194 = vrot.lane.b32.xlu0 %v9030, 127
        %v9195 = vpop.permute.xlu0 %9194
        %9196 = vrot.lane.b32.xlu0 %v9031, 127
        %v9197 = vpop.permute.xlu0 %9196
        %9198 = vrot.lane.b32.xlu0 %v9032, 127
        %v9199 = vpop.permute.xlu0 %9198
        %9200 = vrot.lane.b32.xlu0 %v9033, 127
        %v9201 = vpop.permute.xlu0 %9200
        %v9202 = vsel %vm4305, %v9091, %v9093
        %v9203 = vsel %vm4305, %v9095, %v9097
        %v9204 = vsel %vm4305, %v9099, %v9101
        %v9205 = vsel %vm4305, %v9103, %v9105
        %v9206 = vsel %vm4305, %v9107, %v9109
        %v9207 = vsel %vm4305, %v9111, %v9113
        %v9208 = vsel %vm4305, %v9115, %v9117
        %v9209 = vsel %vm4305, %v9119, %v9121
        %v9210 = vsel %vm4305, %v9123, %v9125
        %v9211 = vsel %vm4305, %v9127, %v9129
        %v9212 = vsel %vm4305, %v9131, %v9133
        %v9213 = vsel %vm4305, %v9135, %v9137
        %v9214 = vsel %vm4305, %v9139, %v9141
        %v9215 = vsel %vm4305, %v9143, %v9145
        %v9216 = vsel %vm4305, %v9147, %v9149
        %v9217 = vsel %vm4305, %v9151, %v9153
        %v9218 = vsel %vm4305, %v9155, %v9157
        %v9219 = vsel %vm4305, %v9159, %v9161
        %v9220 = vsel %vm4305, %v9163, %v9165
        %v9221 = vsel %vm4305, %v9167, %v9169
        %v9222 = vsel %vm4305, %v9171, %v9173
        %v9223 = vsel %vm4305, %v9175, %v9177
        %v9224 = vsel %vm4305, %v9179, %v9181
        %v9225 = vsel %vm4305, %v9183, %v9185
        %v9226 = vsel %vm4305, %v9187, %v9189
        %v9227 = vsel %vm4305, %v9191, %v9193
        %v9228 = vsel %vm4305, %v9195, %v9197
        %v9229 = vsel %vm4305, %v9199, %v9201
        %v9314 = vsel %vm4305, %v9093, %v9091
        %v9315 = vsel %vm4305, %v9097, %v9095
        %v9316 = vsel %vm4305, %v9101, %v9099
        %v9317 = vsel %vm4305, %v9105, %v9103
        %v9318 = vsel %vm4305, %v9109, %v9107
        %v9319 = vsel %vm4305, %v9113, %v9111
        %v9320 = vsel %vm4305, %v9117, %v9115
        %v9321 = vsel %vm4305, %v9121, %v9119
        %v9322 = vsel %vm4305, %v9125, %v9123
        %v9323 = vsel %vm4305, %v9129, %v9127
        %v9324 = vsel %vm4305, %v9133, %v9131
        %v9325 = vsel %vm4305, %v9137, %v9135
        %v9326 = vsel %vm4305, %v9141, %v9139
        %v9327 = vsel %vm4305, %v9145, %v9143
        %v9328 = vsel %vm4305, %v9149, %v9147
        %v9329 = vsel %vm4305, %v9153, %v9151
        %v9330 = vsel %vm4305, %v9157, %v9155
        %v9331 = vsel %vm4305, %v9161, %v9159
        %v9332 = vsel %vm4305, %v9165, %v9163
        %v9333 = vsel %vm4305, %v9169, %v9167
        %v9334 = vsel %vm4305, %v9173, %v9171
        %v9335 = vsel %vm4305, %v9177, %v9175
        %v9336 = vsel %vm4305, %v9181, %v9179
        %v9337 = vsel %vm4305, %v9185, %v9183
        %v9338 = vsel %vm4305, %v9189, %v9187
        %v9339 = vsel %vm4305, %v9193, %v9191
        %v9340 = vsel %vm4305, %v9197, %v9195
        %v9341 = vsel %vm4305, %v9201, %v9199
        %v9342 = vmax.f32 %v8978, %v9202
        %v9343 = vmax.f32 %v8979, %v9314
        %v9344 = vmax.f32 %v8980, %v9203
        %v9345 = vmax.f32 %v8981, %v9315
        %v9346 = vmax.f32 %v8982, %v9204
        %v9347 = vmax.f32 %v8983, %v9316
        %v9348 = vmax.f32 %v8984, %v9205
        %v9349 = vmax.f32 %v8985, %v9317
        %v9350 = vmax.f32 %v8986, %v9206
        %v9351 = vmax.f32 %v8987, %v9318
        %v9352 = vmax.f32 %v8988, %v9207
        %v9353 = vmax.f32 %v8989, %v9319
        %v9354 = vmax.f32 %v8990, %v9208
        %v9355 = vmax.f32 %v8991, %v9320
        %v9356 = vmax.f32 %v8992, %v9209
        %v9357 = vmax.f32 %v8993, %v9321
        %v9358 = vmax.f32 %v8994, %v9210
        %v9359 = vmax.f32 %v8995, %v9322
        %v9360 = vmax.f32 %v8996, %v9211
        %v9361 = vmax.f32 %v8997, %v9323
        %v9362 = vmax.f32 %v8998, %v9212
        %v9363 = vmax.f32 %v8999, %v9324
        %v9364 = vmax.f32 %v9000, %v9213
        %v9365 = vmax.f32 %v9001, %v9325
        %v9366 = vmax.f32 %v9002, %v9214
        %v9367 = vmax.f32 %v9003, %v9326
        %v9368 = vmax.f32 %v9004, %v9215
        %v9369 = vmax.f32 %v9005, %v9327
        %v9370 = vmax.f32 %v9006, %v9216
        %v9371 = vmax.f32 %v9007, %v9328
        %v9372 = vmax.f32 %v9008, %v9217
        %v9373 = vmax.f32 %v9009, %v9329
        %v9374 = vmax.f32 %v9010, %v9218
        %v9375 = vmax.f32 %v9011, %v9330
        %v9376 = vmax.f32 %v9012, %v9219
        %v9377 = vmax.f32 %v9013, %v9331
        %v9378 = vmax.f32 %v9014, %v9220
        %v9379 = vmax.f32 %v9015, %v9332
        %v9380 = vmax.f32 %v9016, %v9221
        %v9381 = vmax.f32 %v9017, %v9333
        %v9382 = vmax.f32 %v9018, %v9222
        %v9383 = vmax.f32 %v9019, %v9334
        %v9384 = vmax.f32 %v9020, %v9223
        %v9385 = vmax.f32 %v9021, %v9335
        %v9386 = vmax.f32 %v9022, %v9224
        %v9387 = vmax.f32 %v9023, %v9336
        %v9388 = vmax.f32 %v9024, %v9225
        %v9389 = vmax.f32 %v9025, %v9337
        %v9390 = vmax.f32 %v9026, %v9226
        %v9391 = vmax.f32 %v9027, %v9338
        %v9392 = vmax.f32 %v9028, %v9227
        %v9393 = vmax.f32 %v9029, %v9339
        %v9394 = vmax.f32 %v9030, %v9228
        %v9395 = vmax.f32 %v9031, %v9340
        %v9396 = vmax.f32 %v9032, %v9229
        %v9397 = vmax.f32 %v9033, %v9341
        %v9398 = vtanh.pop %v9342
        %v9399 = vtanh.pop %v9343
        %v9400 = vtanh.pop %v9344
        %v9401 = vtanh.pop %v9345
        %v9402 = vtanh.pop %v9346
        %v9403 = vtanh.pop %v9347
        %v9404 = vtanh.pop %v9348
        %v9405 = vtanh.pop %v9349
        %v9406 = vtanh.pop %v9350
        %v9407 = vtanh.pop %v9351
        %v9408 = vtanh.pop %v9352
        %v9409 = vtanh.pop %v9353
        %v9410 = vtanh.pop %v9354
        %v9411 = vtanh.pop %v9355
        %v9412 = vtanh.pop %v9356
        %v9413 = vtanh.pop %v9357
        %v9414 = vtanh.pop %v9358
        %v9415 = vtanh.pop %v9359
        %v9416 = vtanh.pop %v9360
        %v9417 = vtanh.pop %v9361
        %v9418 = vtanh.pop %v9362
        %v9419 = vtanh.pop %v9363
        %v9420 = vtanh.pop %v9364
        %v9421 = vtanh.pop %v9365
        %v9422 = vtanh.pop %v9366
        %v9423 = vtanh.pop %v9367
        %v9424 = vtanh.pop %v9368
        %v9425 = vtanh.pop %v9369
        %v9426 = vtanh.pop %v9370
        %v9427 = vtanh.pop %v9371
        %v9428 = vtanh.pop %v9372
        %v9429 = vtanh.pop %v9373
        %v9430 = vtanh.pop %v9374
        %v9431 = vtanh.pop %v9375
        %v9432 = vtanh.pop %v9376
        %v9433 = vtanh.pop %v9377
        %v9434 = vtanh.pop %v9378
        %v9435 = vtanh.pop %v9379
        %v9436 = vtanh.pop %v9380
        %v9437 = vtanh.pop %v9381
        %v9438 = vtanh.pop %v9382
        %v9439 = vtanh.pop %v9383
        %v9440 = vtanh.pop %v9384
        %v9441 = vtanh.pop %v9385
        %v9442 = vtanh.pop %v9386
        %v9443 = vtanh.pop %v9387
        %v9444 = vtanh.pop %v9388
        %v9445 = vtanh.pop %v9389
        %v9446 = vtanh.pop %v9390
        %v9447 = vtanh.pop %v9391
        %v9448 = vtanh.pop %v9392
        %v9449 = vtanh.pop %v9393
        %v9450 = vtanh.pop %v9394
        %v9451 = vtanh.pop %v9395
        %v9452 = vtanh.pop %v9396
        %v9453 = vtanh.pop %v9397
        %v9454 = vpack.c.bf16 %v9400, %v9398
        %v9455 = vpack.c.bf16 %v9401, %v9399
        %v9456 = vpack.c.bf16 %v9404, %v9402
        %v9457 = vpack.c.bf16 %v9405, %v9403
        %v9458 = vpack.c.bf16 %v9408, %v9406
        %v9459 = vpack.c.bf16 %v9409, %v9407
        %v9460 = vpack.c.bf16 %v9412, %v9410
        %v9461 = vpack.c.bf16 %v9413, %v9411
        %v9462 = vpack.c.bf16 %v9416, %v9414
        %v9463 = vpack.c.bf16 %v9417, %v9415
        %v9464 = vpack.c.bf16 %v9420, %v9418
        %v9465 = vpack.c.bf16 %v9421, %v9419
        %v9466 = vpack.c.bf16 %v9424, %v9422
        %v9467 = vpack.c.bf16 %v9425, %v9423
        %v9468 = vpack.c.bf16 %v9428, %v9426
        %v9469 = vpack.c.bf16 %v9429, %v9427
        %v9470 = vpack.c.bf16 %v9432, %v9430
        %v9471 = vpack.c.bf16 %v9433, %v9431
        %v9472 = vpack.c.bf16 %v9436, %v9434
        %v9473 = vpack.c.bf16 %v9437, %v9435
        %v9474 = vpack.c.bf16 %v9440, %v9438
        %v9475 = vpack.c.bf16 %v9441, %v9439
        %v9476 = vpack.c.bf16 %v9444, %v9442
        %v9477 = vpack.c.bf16 %v9445, %v9443
        %v9478 = vpack.c.bf16 %v9448, %v9446
        %v9479 = vpack.c.bf16 %v9449, %v9447
        %v9480 = vpack.c.bf16 %v9452, %v9450
        %v9481 = vpack.c.bf16 %v9453, %v9451
        %v9482 = vld [vmem:[%s6] sm:$0x1]
        %v9483 = vld [vmem:[%s5] sm:$0xf]
        %v9484 = vld [vmem:[%s5 + $0x4] sm:$0xf]
        %v9485 = vld [vmem:[%s5 + $0x8] sm:$0xf]
        %v9486 = vld [vmem:[%s5 + $0xc] sm:$0xf]
        %v9487 = vld [vmem:[%s5 + $0x10] sm:$0xf]
        %v9488 = vld [vmem:[%s5 + $0x14] sm:$0xf]
        %v9489 = vld [vmem:[%s5 + $0x18] sm:$0xf]
        %v9490 = vld [vmem:[%s5 + $0x1c] sm:$0xf]
        %v9491 = vld [vmem:[%s5 + $0x20] sm:$0xf]
        %v9492 = vld [vmem:[%s5 + $0x24] sm:$0xf]
        %v9493 = vld [vmem:[%s5 + $0x28] sm:$0xf]
        %v9494 = vld [vmem:[%s5 + $0x2c] sm:$0xf]
        %v9495 = vld [vmem:[%s5 + $0x30] sm:$0xf]
        %v9496 = vld [vmem:[%s5 + $0x34] sm:$0xf]
        %v9497 = vld [vmem:[%s5 + $0x38] sm:$0xf]
        %v9498 = vld [vmem:[%s5 + $0x3c] sm:$0xf]
        %v9499 = vld [vmem:[%s5 + $0x40] sm:$0xf]
        %v9500 = vld [vmem:[%s5 + $0x44] sm:$0xf]
        %v9501 = vld [vmem:[%s5 + $0x48] sm:$0xf]
        %v9502 = vld [vmem:[%s5 + $0x4c] sm:$0xf]
        %v9503 = vld [vmem:[%s5 + $0x50] sm:$0xf]
        %v9504 = vld [vmem:[%s5 + $0x54] sm:$0xf]
        %v9505 = vld [vmem:[%s5 + $0x58] sm:$0xf]
        %v9506 = vld [vmem:[%s5 + $0x5c] sm:$0xf]
        %v9507 = vld [vmem:[%s5 + $0x60] sm:$0xf]
        %v9508 = vld [vmem:[%s5 + $0x64] sm:$0xf]
        %v9509 = vld [vmem:[%s5 + $0x68] sm:$0xf]
        %v9510 = vld [vmem:[%s5 + $0x6c] sm:$0xf]
        %v9511 = vld [vmem:[%s5 + $0x70] sm:$0xf]
        %v9512 = vld [vmem:[%s5 + $0x74] sm:$0xf]
        %v9513 = vld [vmem:[%s5 + $0x78] sm:$0xf]
        %v9514 = vld [vmem:[%s5 + $0x7c] sm:$0xf]
        %v9547 = vunpack.c.l.b16 %v9483
        %v9548 = vunpack.c.l.b16 %v9484
        %v9549 = vunpack.c.l.b16 %v9485
        %v9550 = vunpack.c.l.b16 %v9486
        %v9551 = vunpack.c.l.b16 %v9487
        %v9552 = vunpack.c.l.b16 %v9488
        %v9553 = vunpack.c.l.b16 %v9489
        %v9554 = vunpack.c.l.b16 %v9490
        %v9555 = vunpack.c.l.b16 %v9491
        %v9556 = vunpack.c.l.b16 %v9492
        %v9557 = vunpack.c.l.b16 %v9493
        %v9558 = vunpack.c.l.b16 %v9494
        %v9559 = vunpack.c.l.b16 %v9495
        %v9560 = vunpack.c.l.b16 %v9496
        %v9561 = vunpack.c.l.b16 %v9497
        %v9562 = vunpack.c.l.b16 %v9498
        %v9563 = vunpack.c.l.b16 %v9499
        %v9564 = vunpack.c.l.b16 %v9500
        %v9565 = vunpack.c.l.b16 %v9501
        %v9566 = vunpack.c.l.b16 %v9502
        %v9567 = vunpack.c.l.b16 %v9503
        %v9568 = vunpack.c.l.b16 %v9504
        %v9569 = vunpack.c.l.b16 %v9505
        %v9570 = vunpack.c.l.b16 %v9506
        %v9571 = vunpack.c.l.b16 %v9507
        %v9572 = vunpack.c.l.b16 %v9508
        %v9573 = vunpack.c.l.b16 %v9509
        %v9574 = vunpack.c.l.b16 %v9510
        %v9575 = vunpack.c.l.b16 %v9511
        %v9576 = vunpack.c.l.b16 %v9512
        %v9577 = vunpack.c.l.b16 %v9513
        %v9578 = vunpack.c.l.b16 %v9514
        %v9579 = vpack.c.b16 %v9548, %v9547
        %v9580 = vpack.c.b16 %v9550, %v9549
        %v9581 = vpack.c.b16 %v9552, %v9551
        %v9582 = vpack.c.b16 %v9554, %v9553
        %v9583 = vpack.c.b16 %v9556, %v9555
        %v9584 = vpack.c.b16 %v9558, %v9557
        %v9585 = vpack.c.b16 %v9560, %v9559
        %v9586 = vpack.c.b16 %v9562, %v9561
        %v9587 = vpack.c.b16 %v9564, %v9563
        %v9588 = vpack.c.b16 %v9566, %v9565
        %v9589 = vpack.c.b16 %v9568, %v9567
        %v9590 = vpack.c.b16 %v9570, %v9569
        %v9591 = vpack.c.b16 %v9572, %v9571
        %v9592 = vpack.c.b16 %v9574, %v9573
        %v9593 = vpack.c.b16 %v9576, %v9575
        %v9594 = vpack.c.b16 %v9578, %v9577
        %9611 = vmatprep.subr.bf16.mxu0 0
        %9612 = vmatpush1.bf16.msra.mxu0 %v9586
        %9613 = vmatprep.subr.bf16.mxu0 0
        %9614 = vmatpush1.bf16.msra.mxu0 %v9585
        %9615 = vmatprep.subr.bf16.mxu0 0
        %9616 = vmatpush1.bf16.msra.mxu0 %v9584
        %9617 = vmatprep.subr.bf16.mxu0 0
        %9618 = vmatpush1.bf16.msra.mxu0 %v9583
        %9619 = vmatprep.subr.bf16.mxu0 0
        %9620 = vmatpush1.bf16.msra.mxu0 %v9582
        %9621 = vmatprep.subr.bf16.mxu0 0
        %9622 = vmatpush1.bf16.msra.mxu0 %v9581
        %9623 = vmatprep.subr.bf16.mxu0 0
        %9624 = vmatpush1.bf16.msra.mxu0 %v9580
        %9625 = vmatprep.subr.bf16.mxu0 0
        %9626 = vmatpush1.bf16.msra.mxu0 %v9579
        %9627 = vmatprep.subr.bf16.mxu0 0
        %9628 = vmatpush2.bf16.msra.mxu0 %v9594
        %9629 = vmatprep.subr.bf16.mxu0 0
        %9630 = vmatpush2.bf16.msra.mxu0 %v9593
        %9631 = vmatprep.subr.bf16.mxu0 0
        %9632 = vmatpush2.bf16.msra.mxu0 %v9592
        %9633 = vmatprep.subr.bf16.mxu0 0
        %9634 = vmatpush2.bf16.msra.mxu0 %v9591
        %9635 = vmatprep.subr.bf16.mxu0 0
        %9636 = vmatpush2.bf16.msra.mxu0 %v9590
        %9637 = vmatprep.subr.bf16.mxu0 0
        %9638 = vmatpush2.bf16.msra.mxu0 %v9589
        %9639 = vmatprep.subr.bf16.mxu0 0
        %9640 = vmatpush2.bf16.msra.mxu0 %v9588
        %9641 = vmatprep.subr.bf16.mxu0 0
        %9642 = vmatpush2.bf16.msra.mxu0 %v9587
        %9643 = vmatprep.mubr.bf16.mxu0 %v9455
        %9644 = vmatmul.mubr.bf16.gmra.mxu0 %v9454
        %v9645 = vpop.f32.mrf.mxu0
        %v9646 = vadd.f32 0.0, %v9645
        %v9647 = vpop.f32.mrf.mxu0
        %v9648 = vpop.f32.mrf.mxu0
        %v9649 = vadd.f32 0.0, %v9648
        %v9650 = vpop.f32.mrf.mxu0
        %9651 = vmatprep.mubr.bf16.mxu0 %v9457
        %9652 = vmatmul.mubr.bf16.gmra.mxu0 %v9456
        %v9653 = vpop.f32.mrf.mxu0
        %v9654 = vadd.f32 0.0, %v9653
        %v9655 = vpop.f32.mrf.mxu0
        %v9656 = vpop.f32.mrf.mxu0
        %v9657 = vadd.f32 0.0, %v9656
        %v9658 = vpop.f32.mrf.mxu0
        %9659 = vmatprep.mubr.bf16.mxu0 %v9459
        %9660 = vmatmul.mubr.bf16.gmra.mxu0 %v9458
        %v9661 = vpop.f32.mrf.mxu0
        %v9662 = vadd.f32 0.0, %v9661
        %v9663 = vpop.f32.mrf.mxu0
        %v9664 = vpop.f32.mrf.mxu0
        %v9665 = vadd.f32 0.0, %v9664
        %v9666 = vpop.f32.mrf.mxu0
        %9667 = vmatprep.mubr.bf16.mxu0 %v9461
        %9668 = vmatmul.mubr.bf16.gmra.mxu0 %v9460
        %v9669 = vpop.f32.mrf.mxu0
        %v9670 = vadd.f32 0.0, %v9669
        %v9671 = vpop.f32.mrf.mxu0
        %v9672 = vpop.f32.mrf.mxu0
        %v9673 = vadd.f32 0.0, %v9672
        %v9674 = vpop.f32.mrf.mxu0
        %9675 = vmatprep.mubr.bf16.mxu0 %v9463
        %9676 = vmatmul.mubr.bf16.gmra.mxu0 %v9462
        %v9677 = vpop.f32.mrf.mxu0
        %v9678 = vadd.f32 0.0, %v9677
        %v9679 = vpop.f32.mrf.mxu0
        %v9680 = vpop.f32.mrf.mxu0
        %v9681 = vadd.f32 0.0, %v9680
        %v9682 = vpop.f32.mrf.mxu0
        %9683 = vmatprep.mubr.bf16.mxu0 %v9465
        %9684 = vmatmul.mubr.bf16.gmra.mxu0 %v9464
        %v9685 = vpop.f32.mrf.mxu0
        %v9686 = vadd.f32 0.0, %v9685
        %v9687 = vpop.f32.mrf.mxu0
        %v9688 = vpop.f32.mrf.mxu0
        %v9689 = vadd.f32 0.0, %v9688
        %v9690 = vpop.f32.mrf.mxu0
        %9691 = vmatprep.mubr.bf16.mxu0 %v9467
        %9692 = vmatmul.mubr.bf16.gmra.mxu0 %v9466
        %v9693 = vpop.f32.mrf.mxu0
        %v9694 = vadd.f32 0.0, %v9693
        %v9695 = vpop.f32.mrf.mxu0
        %v9696 = vpop.f32.mrf.mxu0
        %v9697 = vadd.f32 0.0, %v9696
        %v9698 = vpop.f32.mrf.mxu0
        %9699 = vmatprep.mubr.bf16.mxu0 %v9469
        %9700 = vmatmul.mubr.bf16.gmra.mxu0 %v9468
        %v9701 = vpop.f32.mrf.mxu0
        %v9702 = vadd.f32 0.0, %v9701
        %v9703 = vpop.f32.mrf.mxu0
        %v9704 = vpop.f32.mrf.mxu0
        %v9705 = vadd.f32 0.0, %v9704
        %v9706 = vpop.f32.mrf.mxu0
        %9707 = vmatprep.mubr.bf16.mxu0 %v9471
        %9708 = vmatmul.mubr.bf16.gmra.mxu0 %v9470
        %v9709 = vpop.f32.mrf.mxu0
        %v9710 = vadd.f32 0.0, %v9709
        %v9711 = vpop.f32.mrf.mxu0
        %v9712 = vpop.f32.mrf.mxu0
        %v9713 = vadd.f32 0.0, %v9712
        %v9714 = vpop.f32.mrf.mxu0
        %9715 = vmatprep.mubr.bf16.mxu0 %v9473
        %9716 = vmatmul.mubr.bf16.gmra.mxu0 %v9472
        %v9717 = vpop.f32.mrf.mxu0
        %v9718 = vadd.f32 0.0, %v9717
        %v9719 = vpop.f32.mrf.mxu0
        %v9720 = vpop.f32.mrf.mxu0
        %v9721 = vadd.f32 0.0, %v9720
        %v9722 = vpop.f32.mrf.mxu0
        %9723 = vmatprep.mubr.bf16.mxu0 %v9475
        %9724 = vmatmul.mubr.bf16.gmra.mxu0 %v9474
        %v9725 = vpop.f32.mrf.mxu0
        %v9726 = vadd.f32 0.0, %v9725
        %v9727 = vpop.f32.mrf.mxu0
        %v9728 = vpop.f32.mrf.mxu0
        %v9729 = vadd.f32 0.0, %v9728
        %v9730 = vpop.f32.mrf.mxu0
        %9731 = vmatprep.mubr.bf16.mxu0 %v9477
        %9732 = vmatmul.mubr.bf16.gmra.mxu0 %v9476
        %v9733 = vpop.f32.mrf.mxu0
        %v9734 = vadd.f32 0.0, %v9733
        %v9735 = vpop.f32.mrf.mxu0
        %v9736 = vpop.f32.mrf.mxu0
        %v9737 = vadd.f32 0.0, %v9736
        %v9738 = vpop.f32.mrf.mxu0
        %9739 = vmatprep.mubr.bf16.mxu0 %v9479
        %9740 = vmatmul.mubr.bf16.gmra.mxu0 %v9478
        %v9741 = vpop.f32.mrf.mxu0
        %v9742 = vadd.f32 0.0, %v9741
        %v9743 = vpop.f32.mrf.mxu0
        %v9744 = vpop.f32.mrf.mxu0
        %v9745 = vadd.f32 0.0, %v9744
        %v9746 = vpop.f32.mrf.mxu0
        %9747 = vmatprep.mubr.bf16.mxu0 %v9481
        %9748 = vmatmul.mubr.bf16.gmra.mxu0 %v9480
        %v9749 = vpop.f32.mrf.mxu0
        %v9750 = vadd.f32 0.0, %v9749
        %v9751 = vpop.f32.mrf.mxu0
        %v9752 = vpop.f32.mrf.mxu0
        %v9753 = vadd.f32 0.0, %v9752
        %v9754 = vpop.f32.mrf.mxu0
        %9755 = vdwg.mxu0
        %v9757 = vlaneseq
        %v9758 = vshrl.u32 %v9757, 7
        %v9759 = vsub.s32 0, %v9758
        %v9760 = vrot.slane %v9482, %v9759
        %v9762 = vadd.f32 %v9760, %v9646
        %v9763 = vadd.f32 %v9760, %v9649
        %v9764 = vadd.f32 %v9760, %v9654
        %v9765 = vadd.f32 %v9760, %v9657
        %v9766 = vadd.f32 %v9760, %v9662
        %v9767 = vadd.f32 %v9760, %v9665
        %v9768 = vadd.f32 %v9760, %v9670
        %v9769 = vadd.f32 %v9760, %v9673
        %v9770 = vadd.f32 %v9760, %v9678
        %v9771 = vadd.f32 %v9760, %v9681
        %v9772 = vadd.f32 %v9760, %v9686
        %v9773 = vadd.f32 %v9760, %v9689
        %v9774 = vadd.f32 %v9760, %v9694
        %v9775 = vadd.f32 %v9760, %v9697
        %v9776 = vadd.f32 %v9760, %v9702
        %v9777 = vadd.f32 %v9760, %v9705
        %v9778 = vadd.f32 %v9760, %v9710
        %v9779 = vadd.f32 %v9760, %v9713
        %v9780 = vadd.f32 %v9760, %v9718
        %v9781 = vadd.f32 %v9760, %v9721
        %v9782 = vadd.f32 %v9760, %v9726
        %v9783 = vadd.f32 %v9760, %v9729
        %v9784 = vadd.f32 %v9760, %v9734
        %v9785 = vadd.f32 %v9760, %v9737
        %v9786 = vadd.f32 %v9760, %v9742
        %v9787 = vadd.f32 %v9760, %v9745
        %v9788 = vadd.f32 %v9760, %v9750
        %v9789 = vadd.f32 %v9760, %v9753
        %v9818 = vrot.slane %v9454, 2
        %v9819 = vrot.slane %v9456, 2
        %v9820 = vsel %vm6280, %v9818, %v9819
        %v9821 = vrot.slane %v9455, 2
        %v9822 = vrot.slane %v9457, 2
        %v9823 = vsel %vm6280, %v9821, %v9822
        %v9824 = vrot.slane %v9458, 2
        %v9825 = vsel %vm6280, %v9819, %v9824
        %v9826 = vrot.slane %v9459, 2
        %v9827 = vsel %vm6280, %v9822, %v9826
        %v9828 = vrot.slane %v9460, 2
        %v9829 = vsel %vm6280, %v9824, %v9828
        %v9830 = vrot.slane %v9461, 2
        %v9831 = vsel %vm6280, %v9826, %v9830
        %v9832 = vrot.slane %v9462, 2
        %v9833 = vsel %vm6280, %v9828, %v9832
        %v9834 = vrot.slane %v9463, 2
        %v9835 = vsel %vm6280, %v9830, %v9834
        %v9836 = vrot.slane %v9464, 2
        %v9837 = vsel %vm6280, %v9832, %v9836
        %v9838 = vrot.slane %v9465, 2
        %v9839 = vsel %vm6280, %v9834, %v9838
        %v9840 = vrot.slane %v9466, 2
        %v9841 = vsel %vm6280, %v9836, %v9840
        %v9842 = vrot.slane %v9467, 2
        %v9843 = vsel %vm6280, %v9838, %v9842
        %v9844 = vrot.slane %v9468, 2
        %v9845 = vsel %vm6280, %v9840, %v9844
        %v9846 = vrot.slane %v9469, 2
        %v9847 = vsel %vm6280, %v9842, %v9846
        %v9848 = vrot.slane %v9470, 2
        %v9849 = vsel %vm6280, %v9844, %v9848
        %v9850 = vrot.slane %v9471, 2
        %v9851 = vsel %vm6280, %v9846, %v9850
        %v9852 = vrot.slane %v9472, 2
        %v9853 = vsel %vm6280, %v9848, %v9852
        %v9854 = vrot.slane %v9473, 2
        %v9855 = vsel %vm6280, %v9850, %v9854
        %v9856 = vrot.slane %v9474, 2
        %v9857 = vsel %vm6280, %v9852, %v9856
        %v9858 = vrot.slane %v9475, 2
        %v9859 = vsel %vm6280, %v9854, %v9858
        %v9860 = vrot.slane %v9476, 2
        %v9861 = vsel %vm6280, %v9856, %v9860
        %v9862 = vrot.slane %v9477, 2
        %v9863 = vsel %vm6280, %v9858, %v9862
        %v9864 = vrot.slane %v9478, 2
        %v9865 = vsel %vm6280, %v9860, %v9864
        %v9866 = vrot.slane %v9479, 2
        %v9867 = vsel %vm6280, %v9862, %v9866
        %v9868 = vrot.slane %v9480, 2
        %v9869 = vsel %vm6280, %v9864, %v9868
        %v9870 = vrot.slane %v9481, 2
        %v9871 = vsel %vm6280, %v9866, %v9870
        %v9900 = vsel %vm1651, %v9868, %v9818
        %v9904 = vsel %vm1651, %v9870, %v9821
        %s9906 = scalar_lea.vmem %s5, 128
        %v9907 = vld [vmem:[%s9906] sm:$0xf]
        %v9908 = vld [vmem:[%s9906 + $0x4] sm:$0xf]
        %v9909 = vld [vmem:[%s9906 + $0x8] sm:$0xf]
        %v9910 = vld [vmem:[%s9906 + $0xc] sm:$0xf]
        %v9911 = vld [vmem:[%s9906 + $0x10] sm:$0xf]
        %v9912 = vld [vmem:[%s9906 + $0x14] sm:$0xf]
        %v9913 = vld [vmem:[%s9906 + $0x18] sm:$0xf]
        %v9914 = vld [vmem:[%s9906 + $0x1c] sm:$0xf]
        %v9915 = vld [vmem:[%s9906 + $0x20] sm:$0xf]
        %v9916 = vld [vmem:[%s9906 + $0x24] sm:$0xf]
        %v9917 = vld [vmem:[%s9906 + $0x28] sm:$0xf]
        %v9918 = vld [vmem:[%s9906 + $0x2c] sm:$0xf]
        %v9919 = vld [vmem:[%s9906 + $0x30] sm:$0xf]
        %v9920 = vld [vmem:[%s9906 + $0x34] sm:$0xf]
        %v9921 = vld [vmem:[%s9906 + $0x38] sm:$0xf]
        %v9922 = vld [vmem:[%s9906 + $0x3c] sm:$0xf]
        %v9923 = vld [vmem:[%s9906 + $0x40] sm:$0xf]
        %v9924 = vld [vmem:[%s9906 + $0x44] sm:$0xf]
        %v9925 = vld [vmem:[%s9906 + $0x48] sm:$0xf]
        %v9926 = vld [vmem:[%s9906 + $0x4c] sm:$0xf]
        %v9927 = vld [vmem:[%s9906 + $0x50] sm:$0xf]
        %v9928 = vld [vmem:[%s9906 + $0x54] sm:$0xf]
        %v9929 = vld [vmem:[%s9906 + $0x58] sm:$0xf]
        %v9930 = vld [vmem:[%s9906 + $0x5c] sm:$0xf]
        %v9931 = vld [vmem:[%s9906 + $0x60] sm:$0xf]
        %v9932 = vld [vmem:[%s9906 + $0x64] sm:$0xf]
        %v9933 = vld [vmem:[%s9906 + $0x68] sm:$0xf]
        %v9934 = vld [vmem:[%s9906 + $0x6c] sm:$0xf]
        %v9935 = vld [vmem:[%s9906 + $0x70] sm:$0xf]
        %v9936 = vld [vmem:[%s9906 + $0x74] sm:$0xf]
        %v9937 = vld [vmem:[%s9906 + $0x78] sm:$0xf]
        %v9938 = vld [vmem:[%s9906 + $0x7c] sm:$0xf]
        %v9971 = vunpack.c.l.b16 %v9907
        %v9972 = vunpack.c.l.b16 %v9908
        %v9973 = vunpack.c.l.b16 %v9909
        %v9974 = vunpack.c.l.b16 %v9910
        %v9975 = vunpack.c.l.b16 %v9911
        %v9976 = vunpack.c.l.b16 %v9912
        %v9977 = vunpack.c.l.b16 %v9913
        %v9978 = vunpack.c.l.b16 %v9914
        %v9979 = vunpack.c.l.b16 %v9915
        %v9980 = vunpack.c.l.b16 %v9916
        %v9981 = vunpack.c.l.b16 %v9917
        %v9982 = vunpack.c.l.b16 %v9918
        %v9983 = vunpack.c.l.b16 %v9919
        %v9984 = vunpack.c.l.b16 %v9920
        %v9985 = vunpack.c.l.b16 %v9921
        %v9986 = vunpack.c.l.b16 %v9922
        %v9987 = vunpack.c.l.b16 %v9923
        %v9988 = vunpack.c.l.b16 %v9924
        %v9989 = vunpack.c.l.b16 %v9925
        %v9990 = vunpack.c.l.b16 %v9926
        %v9991 = vunpack.c.l.b16 %v9927
        %v9992 = vunpack.c.l.b16 %v9928
        %v9993 = vunpack.c.l.b16 %v9929
        %v9994 = vunpack.c.l.b16 %v9930
        %v9995 = vunpack.c.l.b16 %v9931
        %v9996 = vunpack.c.l.b16 %v9932
        %v9997 = vunpack.c.l.b16 %v9933
        %v9998 = vunpack.c.l.b16 %v9934
        %v9999 = vunpack.c.l.b16 %v9935
        %v10000 = vunpack.c.l.b16 %v9936
        %v10001 = vunpack.c.l.b16 %v9937
        %v10002 = vunpack.c.l.b16 %v9938
        %v10003 = vpack.c.b16 %v9972, %v9971
        %v10004 = vpack.c.b16 %v9974, %v9973
        %v10005 = vpack.c.b16 %v9976, %v9975
        %v10006 = vpack.c.b16 %v9978, %v9977
        %v10007 = vpack.c.b16 %v9980, %v9979
        %v10008 = vpack.c.b16 %v9982, %v9981
        %v10009 = vpack.c.b16 %v9984, %v9983
        %v10010 = vpack.c.b16 %v9986, %v9985
        %v10011 = vpack.c.b16 %v9988, %v9987
        %v10012 = vpack.c.b16 %v9990, %v9989
        %v10013 = vpack.c.b16 %v9992, %v9991
        %v10014 = vpack.c.b16 %v9994, %v9993
        %v10015 = vpack.c.b16 %v9996, %v9995
        %v10016 = vpack.c.b16 %v9998, %v9997
        %v10017 = vpack.c.b16 %v10000, %v9999
        %v10018 = vpack.c.b16 %v10002, %v10001
        %10035 = vmatprep.subr.bf16.mxu0 0
        %10036 = vmatpush1.bf16.msra.mxu0 %v10010
        %10037 = vmatprep.subr.bf16.mxu0 0
        %10038 = vmatpush1.bf16.msra.mxu0 %v10009
        %10039 = vmatprep.subr.bf16.mxu0 0
        %10040 = vmatpush1.bf16.msra.mxu0 %v10008
        %10041 = vmatprep.subr.bf16.mxu0 0
        %10042 = vmatpush1.bf16.msra.mxu0 %v10007
        %10043 = vmatprep.subr.bf16.mxu0 0
        %10044 = vmatpush1.bf16.msra.mxu0 %v10006
        %10045 = vmatprep.subr.bf16.mxu0 0
        %10046 = vmatpush1.bf16.msra.mxu0 %v10005
        %10047 = vmatprep.subr.bf16.mxu0 0
        %10048 = vmatpush1.bf16.msra.mxu0 %v10004
        %10049 = vmatprep.subr.bf16.mxu0 0
        %10050 = vmatpush1.bf16.msra.mxu0 %v10003
        %10051 = vmatprep.subr.bf16.mxu0 0
        %10052 = vmatpush2.bf16.msra.mxu0 %v10018
        %10053 = vmatprep.subr.bf16.mxu0 0
        %10054 = vmatpush2.bf16.msra.mxu0 %v10017
        %10055 = vmatprep.subr.bf16.mxu0 0
        %10056 = vmatpush2.bf16.msra.mxu0 %v10016
        %10057 = vmatprep.subr.bf16.mxu0 0
        %10058 = vmatpush2.bf16.msra.mxu0 %v10015
        %10059 = vmatprep.subr.bf16.mxu0 0
        %10060 = vmatpush2.bf16.msra.mxu0 %v10014
        %10061 = vmatprep.subr.bf16.mxu0 0
        %10062 = vmatpush2.bf16.msra.mxu0 %v10013
        %10063 = vmatprep.subr.bf16.mxu0 0
        %10064 = vmatpush2.bf16.msra.mxu0 %v10012
        %10065 = vmatprep.subr.bf16.mxu0 0
        %10066 = vmatpush2.bf16.msra.mxu0 %v10011
        %10067 = vmatprep.mubr.bf16.mxu0 %v9823
        %10068 = vmatmul.mubr.bf16.gmra.mxu0 %v9820
        %v10069 = vpop.f32.mrf.mxu0
        %v10070 = vadd.f32 0.0, %v10069
        %v10071 = vpop.f32.mrf.mxu0
        %v10072 = vpop.f32.mrf.mxu0
        %v10073 = vadd.f32 0.0, %v10072
        %v10074 = vpop.f32.mrf.mxu0
        %10075 = vmatprep.mubr.bf16.mxu0 %v9827
        %10076 = vmatmul.mubr.bf16.gmra.mxu0 %v9825
        %v10077 = vpop.f32.mrf.mxu0
        %v10078 = vadd.f32 0.0, %v10077
        %v10079 = vpop.f32.mrf.mxu0
        %v10080 = vpop.f32.mrf.mxu0
        %v10081 = vadd.f32 0.0, %v10080
        %v10082 = vpop.f32.mrf.mxu0
        %10083 = vmatprep.mubr.bf16.mxu0 %v9831
        %10084 = vmatmul.mubr.bf16.gmra.mxu0 %v9829
        %v10085 = vpop.f32.mrf.mxu0
        %v10086 = vadd.f32 0.0, %v10085
        %v10087 = vpop.f32.mrf.mxu0
        %v10088 = vpop.f32.mrf.mxu0
        %v10089 = vadd.f32 0.0, %v10088
        %v10090 = vpop.f32.mrf.mxu0
        %10091 = vmatprep.mubr.bf16.mxu0 %v9835
        %10092 = vmatmul.mubr.bf16.gmra.mxu0 %v9833
        %v10093 = vpop.f32.mrf.mxu0
        %v10094 = vadd.f32 0.0, %v10093
        %v10095 = vpop.f32.mrf.mxu0
        %v10096 = vpop.f32.mrf.mxu0
        %v10097 = vadd.f32 0.0, %v10096
        %v10098 = vpop.f32.mrf.mxu0
        %10099 = vmatprep.mubr.bf16.mxu0 %v9839
        %10100 = vmatmul.mubr.bf16.gmra.mxu0 %v9837
        %v10101 = vpop.f32.mrf.mxu0
        %v10102 = vadd.f32 0.0, %v10101
        %v10103 = vpop.f32.mrf.mxu0
        %v10104 = vpop.f32.mrf.mxu0
        %v10105 = vadd.f32 0.0, %v10104
        %v10106 = vpop.f32.mrf.mxu0
        %10107 = vmatprep.mubr.bf16.mxu0 %v9843
        %10108 = vmatmul.mubr.bf16.gmra.mxu0 %v9841
        %v10109 = vpop.f32.mrf.mxu0
        %v10110 = vadd.f32 0.0, %v10109
        %v10111 = vpop.f32.mrf.mxu0
        %v10112 = vpop.f32.mrf.mxu0
        %v10113 = vadd.f32 0.0, %v10112
        %v10114 = vpop.f32.mrf.mxu0
        %10115 = vmatprep.mubr.bf16.mxu0 %v9847
        %10116 = vmatmul.mubr.bf16.gmra.mxu0 %v9845
        %v10117 = vpop.f32.mrf.mxu0
        %v10118 = vadd.f32 0.0, %v10117
        %v10119 = vpop.f32.mrf.mxu0
        %v10120 = vpop.f32.mrf.mxu0
        %v10121 = vadd.f32 0.0, %v10120
        %v10122 = vpop.f32.mrf.mxu0
        %10123 = vmatprep.mubr.bf16.mxu0 %v9851
        %10124 = vmatmul.mubr.bf16.gmra.mxu0 %v9849
        %v10125 = vpop.f32.mrf.mxu0
        %v10126 = vadd.f32 0.0, %v10125
        %v10127 = vpop.f32.mrf.mxu0
        %v10128 = vpop.f32.mrf.mxu0
        %v10129 = vadd.f32 0.0, %v10128
        %v10130 = vpop.f32.mrf.mxu0
        %10131 = vmatprep.mubr.bf16.mxu0 %v9855
        %10132 = vmatmul.mubr.bf16.gmra.mxu0 %v9853
        %v10133 = vpop.f32.mrf.mxu0
        %v10134 = vadd.f32 0.0, %v10133
        %v10135 = vpop.f32.mrf.mxu0
        %v10136 = vpop.f32.mrf.mxu0
        %v10137 = vadd.f32 0.0, %v10136
        %v10138 = vpop.f32.mrf.mxu0
        %10139 = vmatprep.mubr.bf16.mxu0 %v9859
        %10140 = vmatmul.mubr.bf16.gmra.mxu0 %v9857
        %v10141 = vpop.f32.mrf.mxu0
        %v10142 = vadd.f32 0.0, %v10141
        %v10143 = vpop.f32.mrf.mxu0
        %v10144 = vpop.f32.mrf.mxu0
        %v10145 = vadd.f32 0.0, %v10144
        %v10146 = vpop.f32.mrf.mxu0
        %10147 = vmatprep.mubr.bf16.mxu0 %v9863
        %10148 = vmatmul.mubr.bf16.gmra.mxu0 %v9861
        %v10149 = vpop.f32.mrf.mxu0
        %v10150 = vadd.f32 0.0, %v10149
        %v10151 = vpop.f32.mrf.mxu0
        %v10152 = vpop.f32.mrf.mxu0
        %v10153 = vadd.f32 0.0, %v10152
        %v10154 = vpop.f32.mrf.mxu0
        %10155 = vmatprep.mubr.bf16.mxu0 %v9867
        %10156 = vmatmul.mubr.bf16.gmra.mxu0 %v9865
        %v10157 = vpop.f32.mrf.mxu0
        %v10158 = vadd.f32 0.0, %v10157
        %v10159 = vpop.f32.mrf.mxu0
        %v10160 = vpop.f32.mrf.mxu0
        %v10161 = vadd.f32 0.0, %v10160
        %v10162 = vpop.f32.mrf.mxu0
        %10163 = vmatprep.mubr.bf16.mxu0 %v9871
        %10164 = vmatmul.mubr.bf16.gmra.mxu0 %v9869
        %v10165 = vpop.f32.mrf.mxu0
        %v10166 = vadd.f32 0.0, %v10165
        %v10167 = vpop.f32.mrf.mxu0
        %v10168 = vpop.f32.mrf.mxu0
        %v10169 = vadd.f32 0.0, %v10168
        %v10170 = vpop.f32.mrf.mxu0
        %10171 = vmatprep.mubr.bf16.mxu0 %v9904
        %10172 = vmatmul.mubr.bf16.gmra.mxu0 %v9900
        %v10173 = vpop.f32.mrf.mxu0
        %v10174 = vadd.f32 0.0, %v10173
        %v10175 = vpop.f32.mrf.mxu0
        %v10176 = vpop.f32.mrf.mxu0
        %v10177 = vadd.f32 0.0, %v10176
        %v10178 = vpop.f32.mrf.mxu0
        %10179 = vdwg.mxu0
        %v10180 = vadd.f32 %v9762, %v10070
        %v10181 = vadd.f32 %v9763, %v10073
        %v10182 = vadd.f32 %v9764, %v10078
        %v10183 = vadd.f32 %v9765, %v10081
        %v10184 = vadd.f32 %v9766, %v10086
        %v10185 = vadd.f32 %v9767, %v10089
        %v10186 = vadd.f32 %v9768, %v10094
        %v10187 = vadd.f32 %v9769, %v10097
        %v10188 = vadd.f32 %v9770, %v10102
        %v10189 = vadd.f32 %v9771, %v10105
        %v10190 = vadd.f32 %v9772, %v10110
        %v10191 = vadd.f32 %v9773, %v10113
        %v10192 = vadd.f32 %v9774, %v10118
        %v10193 = vadd.f32 %v9775, %v10121
        %v10194 = vadd.f32 %v9776, %v10126
        %v10195 = vadd.f32 %v9777, %v10129
        %v10196 = vadd.f32 %v9778, %v10134
        %v10197 = vadd.f32 %v9779, %v10137
        %v10198 = vadd.f32 %v9780, %v10142
        %v10199 = vadd.f32 %v9781, %v10145
        %v10200 = vadd.f32 %v9782, %v10150
        %v10201 = vadd.f32 %v9783, %v10153
        %v10202 = vadd.f32 %v9784, %v10158
        %v10203 = vadd.f32 %v9785, %v10161
        %v10204 = vadd.f32 %v9786, %v10166
        %v10205 = vadd.f32 %v9787, %v10169
        %v10206 = vadd.f32 %v9788, %v10174
        %v10207 = vadd.f32 %v9789, %v10177
        %v10208 = vrot.slane %v9454, 4
        %v10209 = vrot.slane %v9456, 4
        %v10210 = vsel %vm7928, %v10208, %v10209
        %v10211 = vrot.slane %v9455, 4
        %v10212 = vrot.slane %v9457, 4
        %v10213 = vsel %vm7928, %v10211, %v10212
        %v10214 = vrot.slane %v9458, 4
        %v10215 = vsel %vm7928, %v10209, %v10214
        %v10216 = vrot.slane %v9459, 4
        %v10217 = vsel %vm7928, %v10212, %v10216
        %v10218 = vrot.slane %v9460, 4
        %v10219 = vsel %vm7928, %v10214, %v10218
        %v10220 = vrot.slane %v9461, 4
        %v10221 = vsel %vm7928, %v10216, %v10220
        %v10222 = vrot.slane %v9462, 4
        %v10223 = vsel %vm7928, %v10218, %v10222
        %v10224 = vrot.slane %v9463, 4
        %v10225 = vsel %vm7928, %v10220, %v10224
        %v10226 = vrot.slane %v9464, 4
        %v10227 = vsel %vm7928, %v10222, %v10226
        %v10228 = vrot.slane %v9465, 4
        %v10229 = vsel %vm7928, %v10224, %v10228
        %v10230 = vrot.slane %v9466, 4
        %v10231 = vsel %vm7928, %v10226, %v10230
        %v10232 = vrot.slane %v9467, 4
        %v10233 = vsel %vm7928, %v10228, %v10232
        %v10234 = vrot.slane %v9468, 4
        %v10235 = vsel %vm7928, %v10230, %v10234
        %v10236 = vrot.slane %v9469, 4
        %v10237 = vsel %vm7928, %v10232, %v10236
        %v10238 = vrot.slane %v9470, 4
        %v10239 = vsel %vm7928, %v10234, %v10238
        %v10240 = vrot.slane %v9471, 4
        %v10241 = vsel %vm7928, %v10236, %v10240
        %v10242 = vrot.slane %v9472, 4
        %v10243 = vsel %vm7928, %v10238, %v10242
        %v10244 = vrot.slane %v9473, 4
        %v10245 = vsel %vm7928, %v10240, %v10244
        %v10246 = vrot.slane %v9474, 4
        %v10247 = vsel %vm7928, %v10242, %v10246
        %v10248 = vrot.slane %v9475, 4
        %v10249 = vsel %vm7928, %v10244, %v10248
        %v10250 = vrot.slane %v9476, 4
        %v10251 = vsel %vm7928, %v10246, %v10250
        %v10252 = vrot.slane %v9477, 4
        %v10253 = vsel %vm7928, %v10248, %v10252
        %v10254 = vrot.slane %v9478, 4
        %v10255 = vsel %vm7928, %v10250, %v10254
        %v10256 = vrot.slane %v9479, 4
        %v10257 = vsel %vm7928, %v10252, %v10256
        %v10258 = vrot.slane %v9480, 4
        %v10259 = vsel %vm7928, %v10254, %v10258
        %v10260 = vrot.slane %v9481, 4
        %v10261 = vsel %vm7928, %v10256, %v10260
        %v10290 = vsel %vm443, %v10258, %v10208
        %v10294 = vsel %vm443, %v10260, %v10211
        %s10296 = scalar_lea.vmem %s5, 256
        %v10297 = vld [vmem:[%s10296] sm:$0xf]
        %v10298 = vld [vmem:[%s10296 + $0x4] sm:$0xf]
        %v10299 = vld [vmem:[%s10296 + $0x8] sm:$0xf]
        %v10300 = vld [vmem:[%s10296 + $0xc] sm:$0xf]
        %v10301 = vld [vmem:[%s10296 + $0x10] sm:$0xf]
        %v10302 = vld [vmem:[%s10296 + $0x14] sm:$0xf]
        %v10303 = vld [vmem:[%s10296 + $0x18] sm:$0xf]
        %v10304 = vld [vmem:[%s10296 + $0x1c] sm:$0xf]
        %v10305 = vld [vmem:[%s10296 + $0x20] sm:$0xf]
        %v10306 = vld [vmem:[%s10296 + $0x24] sm:$0xf]
        %v10307 = vld [vmem:[%s10296 + $0x28] sm:$0xf]
        %v10308 = vld [vmem:[%s10296 + $0x2c] sm:$0xf]
        %v10309 = vld [vmem:[%s10296 + $0x30] sm:$0xf]
        %v10310 = vld [vmem:[%s10296 + $0x34] sm:$0xf]
        %v10311 = vld [vmem:[%s10296 + $0x38] sm:$0xf]
        %v10312 = vld [vmem:[%s10296 + $0x3c] sm:$0xf]
        %v10313 = vld [vmem:[%s10296 + $0x40] sm:$0xf]
        %v10314 = vld [vmem:[%s10296 + $0x44] sm:$0xf]
        %v10315 = vld [vmem:[%s10296 + $0x48] sm:$0xf]
        %v10316 = vld [vmem:[%s10296 + $0x4c] sm:$0xf]
        %v10317 = vld [vmem:[%s10296 + $0x50] sm:$0xf]
        %v10318 = vld [vmem:[%s10296 + $0x54] sm:$0xf]
        %v10319 = vld [vmem:[%s10296 + $0x58] sm:$0xf]
        %v10320 = vld [vmem:[%s10296 + $0x5c] sm:$0xf]
        %v10321 = vld [vmem:[%s10296 + $0x60] sm:$0xf]
        %v10322 = vld [vmem:[%s10296 + $0x64] sm:$0xf]
        %v10323 = vld [vmem:[%s10296 + $0x68] sm:$0xf]
        %v10324 = vld [vmem:[%s10296 + $0x6c] sm:$0xf]
        %v10325 = vld [vmem:[%s10296 + $0x70] sm:$0xf]
        %v10326 = vld [vmem:[%s10296 + $0x74] sm:$0xf]
        %v10327 = vld [vmem:[%s10296 + $0x78] sm:$0xf]
        %v10328 = vld [vmem:[%s10296 + $0x7c] sm:$0xf]
        %v10361 = vunpack.c.l.b16 %v10297
        %v10362 = vunpack.c.l.b16 %v10298
        %v10363 = vunpack.c.l.b16 %v10299
        %v10364 = vunpack.c.l.b16 %v10300
        %v10365 = vunpack.c.l.b16 %v10301
        %v10366 = vunpack.c.l.b16 %v10302
        %v10367 = vunpack.c.l.b16 %v10303
        %v10368 = vunpack.c.l.b16 %v10304
        %v10369 = vunpack.c.l.b16 %v10305
        %v10370 = vunpack.c.l.b16 %v10306
        %v10371 = vunpack.c.l.b16 %v10307
        %v10372 = vunpack.c.l.b16 %v10308
        %v10373 = vunpack.c.l.b16 %v10309
        %v10374 = vunpack.c.l.b16 %v10310
        %v10375 = vunpack.c.l.b16 %v10311
        %v10376 = vunpack.c.l.b16 %v10312
        %v10377 = vunpack.c.l.b16 %v10313
        %v10378 = vunpack.c.l.b16 %v10314
        %v10379 = vunpack.c.l.b16 %v10315
        %v10380 = vunpack.c.l.b16 %v10316
        %v10381 = vunpack.c.l.b16 %v10317
        %v10382 = vunpack.c.l.b16 %v10318
        %v10383 = vunpack.c.l.b16 %v10319
        %v10384 = vunpack.c.l.b16 %v10320
        %v10385 = vunpack.c.l.b16 %v10321
        %v10386 = vunpack.c.l.b16 %v10322
        %v10387 = vunpack.c.l.b16 %v10323
        %v10388 = vunpack.c.l.b16 %v10324
        %v10389 = vunpack.c.l.b16 %v10325
        %v10390 = vunpack.c.l.b16 %v10326
        %v10391 = vunpack.c.l.b16 %v10327
        %v10392 = vunpack.c.l.b16 %v10328
        %v10393 = vpack.c.b16 %v10362, %v10361
        %v10394 = vpack.c.b16 %v10364, %v10363
        %v10395 = vpack.c.b16 %v10366, %v10365
        %v10396 = vpack.c.b16 %v10368, %v10367
        %v10397 = vpack.c.b16 %v10370, %v10369
        %v10398 = vpack.c.b16 %v10372, %v10371
        %v10399 = vpack.c.b16 %v10374, %v10373
        %v10400 = vpack.c.b16 %v10376, %v10375
        %v10401 = vpack.c.b16 %v10378, %v10377
        %v10402 = vpack.c.b16 %v10380, %v10379
        %v10403 = vpack.c.b16 %v10382, %v10381
        %v10404 = vpack.c.b16 %v10384, %v10383
        %v10405 = vpack.c.b16 %v10386, %v10385
        %v10406 = vpack.c.b16 %v10388, %v10387
        %v10407 = vpack.c.b16 %v10390, %v10389
        %v10408 = vpack.c.b16 %v10392, %v10391
        %10425 = vmatprep.subr.bf16.mxu0 0
        %10426 = vmatpush1.bf16.msra.mxu0 %v10400
        %10427 = vmatprep.subr.bf16.mxu0 0
        %10428 = vmatpush1.bf16.msra.mxu0 %v10399
        %10429 = vmatprep.subr.bf16.mxu0 0
        %10430 = vmatpush1.bf16.msra.mxu0 %v10398
        %10431 = vmatprep.subr.bf16.mxu0 0
        %10432 = vmatpush1.bf16.msra.mxu0 %v10397
        %10433 = vmatprep.subr.bf16.mxu0 0
        %10434 = vmatpush1.bf16.msra.mxu0 %v10396
        %10435 = vmatprep.subr.bf16.mxu0 0
        %10436 = vmatpush1.bf16.msra.mxu0 %v10395
        %10437 = vmatprep.subr.bf16.mxu0 0
        %10438 = vmatpush1.bf16.msra.mxu0 %v10394
        %10439 = vmatprep.subr.bf16.mxu0 0
        %10440 = vmatpush1.bf16.msra.mxu0 %v10393
        %10441 = vmatprep.subr.bf16.mxu0 0
        %10442 = vmatpush2.bf16.msra.mxu0 %v10408
        %10443 = vmatprep.subr.bf16.mxu0 0
        %10444 = vmatpush2.bf16.msra.mxu0 %v10407
        %10445 = vmatprep.subr.bf16.mxu0 0
        %10446 = vmatpush2.bf16.msra.mxu0 %v10406
        %10447 = vmatprep.subr.bf16.mxu0 0
        %10448 = vmatpush2.bf16.msra.mxu0 %v10405
        %10449 = vmatprep.subr.bf16.mxu0 0
        %10450 = vmatpush2.bf16.msra.mxu0 %v10404
        %10451 = vmatprep.subr.bf16.mxu0 0
        %10452 = vmatpush2.bf16.msra.mxu0 %v10403
        %10453 = vmatprep.subr.bf16.mxu0 0
        %10454 = vmatpush2.bf16.msra.mxu0 %v10402
        %10455 = vmatprep.subr.bf16.mxu0 0
        %10456 = vmatpush2.bf16.msra.mxu0 %v10401
        %10457 = vmatprep.mubr.bf16.mxu0 %v10213
        %10458 = vmatmul.mubr.bf16.gmra.mxu0 %v10210
        %v10459 = vpop.f32.mrf.mxu0
        %v10460 = vadd.f32 0.0, %v10459
        %v10461 = vpop.f32.mrf.mxu0
        %v10462 = vpop.f32.mrf.mxu0
        %v10463 = vadd.f32 0.0, %v10462
        %v10464 = vpop.f32.mrf.mxu0
        %10465 = vmatprep.mubr.bf16.mxu0 %v10217
        %10466 = vmatmul.mubr.bf16.gmra.mxu0 %v10215
        %v10467 = vpop.f32.mrf.mxu0
        %v10468 = vadd.f32 0.0, %v10467
        %v10469 = vpop.f32.mrf.mxu0
        %v10470 = vpop.f32.mrf.mxu0
        %v10471 = vadd.f32 0.0, %v10470
        %v10472 = vpop.f32.mrf.mxu0
        %10473 = vmatprep.mubr.bf16.mxu0 %v10221
        %10474 = vmatmul.mubr.bf16.gmra.mxu0 %v10219
        %v10475 = vpop.f32.mrf.mxu0
        %v10476 = vadd.f32 0.0, %v10475
        %v10477 = vpop.f32.mrf.mxu0
        %v10478 = vpop.f32.mrf.mxu0
        %v10479 = vadd.f32 0.0, %v10478
        %v10480 = vpop.f32.mrf.mxu0
        %10481 = vmatprep.mubr.bf16.mxu0 %v10225
        %10482 = vmatmul.mubr.bf16.gmra.mxu0 %v10223
        %v10483 = vpop.f32.mrf.mxu0
        %v10484 = vadd.f32 0.0, %v10483
        %v10485 = vpop.f32.mrf.mxu0
        %v10486 = vpop.f32.mrf.mxu0
        %v10487 = vadd.f32 0.0, %v10486
        %v10488 = vpop.f32.mrf.mxu0
        %10489 = vmatprep.mubr.bf16.mxu0 %v10229
        %10490 = vmatmul.mubr.bf16.gmra.mxu0 %v10227
        %v10491 = vpop.f32.mrf.mxu0
        %v10492 = vadd.f32 0.0, %v10491
        %v10493 = vpop.f32.mrf.mxu0
        %v10494 = vpop.f32.mrf.mxu0
        %v10495 = vadd.f32 0.0, %v10494
        %v10496 = vpop.f32.mrf.mxu0
        %10497 = vmatprep.mubr.bf16.mxu0 %v10233
        %10498 = vmatmul.mubr.bf16.gmra.mxu0 %v10231
        %v10499 = vpop.f32.mrf.mxu0
        %v10500 = vadd.f32 0.0, %v10499
        %v10501 = vpop.f32.mrf.mxu0
        %v10502 = vpop.f32.mrf.mxu0
        %v10503 = vadd.f32 0.0, %v10502
        %v10504 = vpop.f32.mrf.mxu0
        %10505 = vmatprep.mubr.bf16.mxu0 %v10237
        %10506 = vmatmul.mubr.bf16.gmra.mxu0 %v10235
        %v10507 = vpop.f32.mrf.mxu0
        %v10508 = vadd.f32 0.0, %v10507
        %v10509 = vpop.f32.mrf.mxu0
        %v10510 = vpop.f32.mrf.mxu0
        %v10511 = vadd.f32 0.0, %v10510
        %v10512 = vpop.f32.mrf.mxu0
        %10513 = vmatprep.mubr.bf16.mxu0 %v10241
        %10514 = vmatmul.mubr.bf16.gmra.mxu0 %v10239
        %v10515 = vpop.f32.mrf.mxu0
        %v10516 = vadd.f32 0.0, %v10515
        %v10517 = vpop.f32.mrf.mxu0
        %v10518 = vpop.f32.mrf.mxu0
        %v10519 = vadd.f32 0.0, %v10518
        %v10520 = vpop.f32.mrf.mxu0
        %10521 = vmatprep.mubr.bf16.mxu0 %v10245
        %10522 = vmatmul.mubr.bf16.gmra.mxu0 %v10243
        %v10523 = vpop.f32.mrf.mxu0
        %v10524 = vadd.f32 0.0, %v10523
        %v10525 = vpop.f32.mrf.mxu0
        %v10526 = vpop.f32.mrf.mxu0
        %v10527 = vadd.f32 0.0, %v10526
        %v10528 = vpop.f32.mrf.mxu0
        %10529 = vmatprep.mubr.bf16.mxu0 %v10249
        %10530 = vmatmul.mubr.bf16.gmra.mxu0 %v10247
        %v10531 = vpop.f32.mrf.mxu0
        %v10532 = vadd.f32 0.0, %v10531
        %v10533 = vpop.f32.mrf.mxu0
        %v10534 = vpop.f32.mrf.mxu0
        %v10535 = vadd.f32 0.0, %v10534
        %v10536 = vpop.f32.mrf.mxu0
        %10537 = vmatprep.mubr.bf16.mxu0 %v10253
        %10538 = vmatmul.mubr.bf16.gmra.mxu0 %v10251
        %v10539 = vpop.f32.mrf.mxu0
        %v10540 = vadd.f32 0.0, %v10539
        %v10541 = vpop.f32.mrf.mxu0
        %v10542 = vpop.f32.mrf.mxu0
        %v10543 = vadd.f32 0.0, %v10542
        %v10544 = vpop.f32.mrf.mxu0
        %10545 = vmatprep.mubr.bf16.mxu0 %v10257
        %10546 = vmatmul.mubr.bf16.gmra.mxu0 %v10255
        %v10547 = vpop.f32.mrf.mxu0
        %v10548 = vadd.f32 0.0, %v10547
        %v10549 = vpop.f32.mrf.mxu0
        %v10550 = vpop.f32.mrf.mxu0
        %v10551 = vadd.f32 0.0, %v10550
        %v10552 = vpop.f32.mrf.mxu0
        %10553 = vmatprep.mubr.bf16.mxu0 %v10261
        %10554 = vmatmul.mubr.bf16.gmra.mxu0 %v10259
        %v10555 = vpop.f32.mrf.mxu0
        %v10556 = vadd.f32 0.0, %v10555
        %v10557 = vpop.f32.mrf.mxu0
        %v10558 = vpop.f32.mrf.mxu0
        %v10559 = vadd.f32 0.0, %v10558
        %v10560 = vpop.f32.mrf.mxu0
        %10561 = vmatprep.mubr.bf16.mxu0 %v10294
        %10562 = vmatmul.mubr.bf16.gmra.mxu0 %v10290
        %v10563 = vpop.f32.mrf.mxu0
        %v10564 = vadd.f32 0.0, %v10563
        %v10565 = vpop.f32.mrf.mxu0
        %v10566 = vpop.f32.mrf.mxu0
        %v10567 = vadd.f32 0.0, %v10566
        %v10568 = vpop.f32.mrf.mxu0
        %10569 = vdwg.mxu0
        %v10570 = vadd.f32 %v10180, %v10460
        %v10571 = vadd.f32 %v10181, %v10463
        %v10572 = vadd.f32 %v10182, %v10468
        %v10573 = vadd.f32 %v10183, %v10471
        %v10574 = vadd.f32 %v10184, %v10476
        %v10575 = vadd.f32 %v10185, %v10479
        %v10576 = vadd.f32 %v10186, %v10484
        %v10577 = vadd.f32 %v10187, %v10487
        %v10578 = vadd.f32 %v10188, %v10492
        %v10579 = vadd.f32 %v10189, %v10495
        %v10580 = vadd.f32 %v10190, %v10500
        %v10581 = vadd.f32 %v10191, %v10503
        %v10582 = vadd.f32 %v10192, %v10508
        %v10583 = vadd.f32 %v10193, %v10511
        %v10584 = vadd.f32 %v10194, %v10516
        %v10585 = vadd.f32 %v10195, %v10519
        %v10586 = vadd.f32 %v10196, %v10524
        %v10587 = vadd.f32 %v10197, %v10527
        %v10588 = vadd.f32 %v10198, %v10532
        %v10589 = vadd.f32 %v10199, %v10535
        %v10590 = vadd.f32 %v10200, %v10540
        %v10591 = vadd.f32 %v10201, %v10543
        %v10592 = vadd.f32 %v10202, %v10548
        %v10593 = vadd.f32 %v10203, %v10551
        %v10594 = vadd.f32 %v10204, %v10556
        %v10595 = vadd.f32 %v10205, %v10559
        %v10596 = vadd.f32 %v10206, %v10564
        %v10597 = vadd.f32 %v10207, %v10567
        %vm10598 = vcmask 1041408
        %v10599 = vrot.slane %v9454, 6
        %v10600 = vrot.slane %v9456, 6
        %v10601 = vsel %vm10598, %v10599, %v10600
        %v10602 = vrot.slane %v9455, 6
        %v10603 = vrot.slane %v9457, 6
        %v10604 = vsel %vm10598, %v10602, %v10603
        %v10605 = vrot.slane %v9458, 6
        %v10606 = vsel %vm10598, %v10600, %v10605
        %v10607 = vrot.slane %v9459, 6
        %v10608 = vsel %vm10598, %v10603, %v10607
        %v10609 = vrot.slane %v9460, 6
        %v10610 = vsel %vm10598, %v10605, %v10609
        %v10611 = vrot.slane %v9461, 6
        %v10612 = vsel %vm10598, %v10607, %v10611
        %v10613 = vrot.slane %v9462, 6
        %v10614 = vsel %vm10598, %v10609, %v10613
        %v10615 = vrot.slane %v9463, 6
        %v10616 = vsel %vm10598, %v10611, %v10615
        %v10617 = vrot.slane %v9464, 6
        %v10618 = vsel %vm10598, %v10613, %v10617
        %v10619 = vrot.slane %v9465, 6
        %v10620 = vsel %vm10598, %v10615, %v10619
        %v10621 = vrot.slane %v9466, 6
        %v10622 = vsel %vm10598, %v10617, %v10621
        %v10623 = vrot.slane %v9467, 6
        %v10624 = vsel %vm10598, %v10619, %v10623
        %v10625 = vrot.slane %v9468, 6
        %v10626 = vsel %vm10598, %v10621, %v10625
        %v10627 = vrot.slane %v9469, 6
        %v10628 = vsel %vm10598, %v10623, %v10627
        %v10629 = vrot.slane %v9470, 6
        %v10630 = vsel %vm10598, %v10625, %v10629
        %v10631 = vrot.slane %v9471, 6
        %v10632 = vsel %vm10598, %v10627, %v10631
        %v10633 = vrot.slane %v9472, 6
        %v10634 = vsel %vm10598, %v10629, %v10633
        %v10635 = vrot.slane %v9473, 6
        %v10636 = vsel %vm10598, %v10631, %v10635
        %v10637 = vrot.slane %v9474, 6
        %v10638 = vsel %vm10598, %v10633, %v10637
        %v10639 = vrot.slane %v9475, 6
        %v10640 = vsel %vm10598, %v10635, %v10639
        %v10641 = vrot.slane %v9476, 6
        %v10642 = vsel %vm10598, %v10637, %v10641
        %v10643 = vrot.slane %v9477, 6
        %v10644 = vsel %vm10598, %v10639, %v10643
        %v10645 = vrot.slane %v9478, 6
        %v10646 = vsel %vm10598, %v10641, %v10645
        %v10647 = vrot.slane %v9479, 6
        %v10648 = vsel %vm10598, %v10643, %v10647
        %v10649 = vrot.slane %v9480, 6
        %v10650 = vsel %vm10598, %v10645, %v10649
        %v10651 = vrot.slane %v9481, 6
        %v10652 = vsel %vm10598, %v10647, %v10651
        %vm10679 = vcmask 1041408
        %v10682 = vsel %vm10679, %v10649, %v10599
        %v10686 = vsel %vm10679, %v10651, %v10602
        %s10688 = scalar_lea.vmem %s5, 384
        %v10689 = vld [vmem:[%s10688] sm:$0xf]
        %v10690 = vld [vmem:[%s10688 + $0x4] sm:$0xf]
        %v10691 = vld [vmem:[%s10688 + $0x8] sm:$0xf]
        %v10692 = vld [vmem:[%s10688 + $0xc] sm:$0xf]
        %v10693 = vld [vmem:[%s10688 + $0x10] sm:$0xf]
        %v10694 = vld [vmem:[%s10688 + $0x14] sm:$0xf]
        %v10695 = vld [vmem:[%s10688 + $0x18] sm:$0xf]
        %v10696 = vld [vmem:[%s10688 + $0x1c] sm:$0xf]
        %v10697 = vld [vmem:[%s10688 + $0x20] sm:$0xf]
        %v10698 = vld [vmem:[%s10688 + $0x24] sm:$0xf]
        %v10699 = vld [vmem:[%s10688 + $0x28] sm:$0xf]
        %v10700 = vld [vmem:[%s10688 + $0x2c] sm:$0xf]
        %v10701 = vld [vmem:[%s10688 + $0x30] sm:$0xf]
        %v10702 = vld [vmem:[%s10688 + $0x34] sm:$0xf]
        %v10703 = vld [vmem:[%s10688 + $0x38] sm:$0xf]
        %v10704 = vld [vmem:[%s10688 + $0x3c] sm:$0xf]
        %v10705 = vld [vmem:[%s10688 + $0x40] sm:$0xf]
        %v10706 = vld [vmem:[%s10688 + $0x44] sm:$0xf]
        %v10707 = vld [vmem:[%s10688 + $0x48] sm:$0xf]
        %v10708 = vld [vmem:[%s10688 + $0x4c] sm:$0xf]
        %v10709 = vld [vmem:[%s10688 + $0x50] sm:$0xf]
        %v10710 = vld [vmem:[%s10688 + $0x54] sm:$0xf]
        %v10711 = vld [vmem:[%s10688 + $0x58] sm:$0xf]
        %v10712 = vld [vmem:[%s10688 + $0x5c] sm:$0xf]
        %v10713 = vld [vmem:[%s10688 + $0x60] sm:$0xf]
        %v10714 = vld [vmem:[%s10688 + $0x64] sm:$0xf]
        %v10715 = vld [vmem:[%s10688 + $0x68] sm:$0xf]
        %v10716 = vld [vmem:[%s10688 + $0x6c] sm:$0xf]
        %v10717 = vld [vmem:[%s10688 + $0x70] sm:$0xf]
        %v10718 = vld [vmem:[%s10688 + $0x74] sm:$0xf]
        %v10719 = vld [vmem:[%s10688 + $0x78] sm:$0xf]
        %v10720 = vld [vmem:[%s10688 + $0x7c] sm:$0xf]
        %v10753 = vunpack.c.l.b16 %v10689
        %v10754 = vunpack.c.l.b16 %v10690
        %v10755 = vunpack.c.l.b16 %v10691
        %v10756 = vunpack.c.l.b16 %v10692
        %v10757 = vunpack.c.l.b16 %v10693
        %v10758 = vunpack.c.l.b16 %v10694
        %v10759 = vunpack.c.l.b16 %v10695
        %v10760 = vunpack.c.l.b16 %v10696
        %v10761 = vunpack.c.l.b16 %v10697
        %v10762 = vunpack.c.l.b16 %v10698
        %v10763 = vunpack.c.l.b16 %v10699
        %v10764 = vunpack.c.l.b16 %v10700
        %v10765 = vunpack.c.l.b16 %v10701
        %v10766 = vunpack.c.l.b16 %v10702
        %v10767 = vunpack.c.l.b16 %v10703
        %v10768 = vunpack.c.l.b16 %v10704
        %v10769 = vunpack.c.l.b16 %v10705
        %v10770 = vunpack.c.l.b16 %v10706
        %v10771 = vunpack.c.l.b16 %v10707
        %v10772 = vunpack.c.l.b16 %v10708
        %v10773 = vunpack.c.l.b16 %v10709
        %v10774 = vunpack.c.l.b16 %v10710
        %v10775 = vunpack.c.l.b16 %v10711
        %v10776 = vunpack.c.l.b16 %v10712
        %v10777 = vunpack.c.l.b16 %v10713
        %v10778 = vunpack.c.l.b16 %v10714
        %v10779 = vunpack.c.l.b16 %v10715
        %v10780 = vunpack.c.l.b16 %v10716
        %v10781 = vunpack.c.l.b16 %v10717
        %v10782 = vunpack.c.l.b16 %v10718
        %v10783 = vunpack.c.l.b16 %v10719
        %v10784 = vunpack.c.l.b16 %v10720
        %v10785 = vpack.c.b16 %v10754, %v10753
        %v10786 = vpack.c.b16 %v10756, %v10755
        %v10787 = vpack.c.b16 %v10758, %v10757
        %v10788 = vpack.c.b16 %v10760, %v10759
        %v10789 = vpack.c.b16 %v10762, %v10761
        %v10790 = vpack.c.b16 %v10764, %v10763
        %v10791 = vpack.c.b16 %v10766, %v10765
        %v10792 = vpack.c.b16 %v10768, %v10767
        %v10793 = vpack.c.b16 %v10770, %v10769
        %v10794 = vpack.c.b16 %v10772, %v10771
        %v10795 = vpack.c.b16 %v10774, %v10773
        %v10796 = vpack.c.b16 %v10776, %v10775
        %v10797 = vpack.c.b16 %v10778, %v10777
        %v10798 = vpack.c.b16 %v10780, %v10779
        %v10799 = vpack.c.b16 %v10782, %v10781
        %v10800 = vpack.c.b16 %v10784, %v10783
        %10817 = vmatprep.subr.bf16.mxu0 0
        %10818 = vmatpush1.bf16.msra.mxu0 %v10792
        %10819 = vmatprep.subr.bf16.mxu0 0
        %10820 = vmatpush1.bf16.msra.mxu0 %v10791
        %10821 = vmatprep.subr.bf16.mxu0 0
        %10822 = vmatpush1.bf16.msra.mxu0 %v10790
        %10823 = vmatprep.subr.bf16.mxu0 0
        %10824 = vmatpush1.bf16.msra.mxu0 %v10789
        %10825 = vmatprep.subr.bf16.mxu0 0
        %10826 = vmatpush1.bf16.msra.mxu0 %v10788
        %10827 = vmatprep.subr.bf16.mxu0 0
        %10828 = vmatpush1.bf16.msra.mxu0 %v10787
        %10829 = vmatprep.subr.bf16.mxu0 0
        %10830 = vmatpush1.bf16.msra.mxu0 %v10786
        %10831 = vmatprep.subr.bf16.mxu0 0
        %10832 = vmatpush1.bf16.msra.mxu0 %v10785
        %10833 = vmatprep.subr.bf16.mxu0 0
        %10834 = vmatpush2.bf16.msra.mxu0 %v10800
        %10835 = vmatprep.subr.bf16.mxu0 0
        %10836 = vmatpush2.bf16.msra.mxu0 %v10799
        %10837 = vmatprep.subr.bf16.mxu0 0
        %10838 = vmatpush2.bf16.msra.mxu0 %v10798
        %10839 = vmatprep.subr.bf16.mxu0 0
        %10840 = vmatpush2.bf16.msra.mxu0 %v10797
        %10841 = vmatprep.subr.bf16.mxu0 0
        %10842 = vmatpush2.bf16.msra.mxu0 %v10796
        %10843 = vmatprep.subr.bf16.mxu0 0
        %10844 = vmatpush2.bf16.msra.mxu0 %v10795
        %10845 = vmatprep.subr.bf16.mxu0 0
        %10846 = vmatpush2.bf16.msra.mxu0 %v10794
        %10847 = vmatprep.subr.bf16.mxu0 0
        %10848 = vmatpush2.bf16.msra.mxu0 %v10793
        %10849 = vmatprep.mubr.bf16.mxu0 %v10604
        %10850 = vmatmul.mubr.bf16.gmra.mxu0 %v10601
        %v10851 = vpop.f32.mrf.mxu0
        %v10852 = vadd.f32 0.0, %v10851
        %v10853 = vpop.f32.mrf.mxu0
        %v10854 = vpop.f32.mrf.mxu0
        %v10855 = vadd.f32 0.0, %v10854
        %v10856 = vpop.f32.mrf.mxu0
        %10857 = vmatprep.mubr.bf16.mxu0 %v10608
        %10858 = vmatmul.mubr.bf16.gmra.mxu0 %v10606
        %v10859 = vpop.f32.mrf.mxu0
        %v10860 = vadd.f32 0.0, %v10859
        %v10861 = vpop.f32.mrf.mxu0
        %v10862 = vpop.f32.mrf.mxu0
        %v10863 = vadd.f32 0.0, %v10862
        %v10864 = vpop.f32.mrf.mxu0
        %10865 = vmatprep.mubr.bf16.mxu0 %v10612
        %10866 = vmatmul.mubr.bf16.gmra.mxu0 %v10610
        %v10867 = vpop.f32.mrf.mxu0
        %v10868 = vadd.f32 0.0, %v10867
        %v10869 = vpop.f32.mrf.mxu0
        %v10870 = vpop.f32.mrf.mxu0
        %v10871 = vadd.f32 0.0, %v10870
        %v10872 = vpop.f32.mrf.mxu0
        %10873 = vmatprep.mubr.bf16.mxu0 %v10616
        %10874 = vmatmul.mubr.bf16.gmra.mxu0 %v10614
        %v10875 = vpop.f32.mrf.mxu0
        %v10876 = vadd.f32 0.0, %v10875
        %v10877 = vpop.f32.mrf.mxu0
        %v10878 = vpop.f32.mrf.mxu0
        %v10879 = vadd.f32 0.0, %v10878
        %v10880 = vpop.f32.mrf.mxu0
        %10881 = vmatprep.mubr.bf16.mxu0 %v10620
        %10882 = vmatmul.mubr.bf16.gmra.mxu0 %v10618
        %v10883 = vpop.f32.mrf.mxu0
        %v10884 = vadd.f32 0.0, %v10883
        %v10885 = vpop.f32.mrf.mxu0
        %v10886 = vpop.f32.mrf.mxu0
        %v10887 = vadd.f32 0.0, %v10886
        %v10888 = vpop.f32.mrf.mxu0
        %10889 = vmatprep.mubr.bf16.mxu0 %v10624
        %10890 = vmatmul.mubr.bf16.gmra.mxu0 %v10622
        %v10891 = vpop.f32.mrf.mxu0
        %v10892 = vadd.f32 0.0, %v10891
        %v10893 = vpop.f32.mrf.mxu0
        %v10894 = vpop.f32.mrf.mxu0
        %v10895 = vadd.f32 0.0, %v10894
        %v10896 = vpop.f32.mrf.mxu0
        %10897 = vmatprep.mubr.bf16.mxu0 %v10628
        %10898 = vmatmul.mubr.bf16.gmra.mxu0 %v10626
        %v10899 = vpop.f32.mrf.mxu0
        %v10900 = vadd.f32 0.0, %v10899
        %v10901 = vpop.f32.mrf.mxu0
        %v10902 = vpop.f32.mrf.mxu0
        %v10903 = vadd.f32 0.0, %v10902
        %v10904 = vpop.f32.mrf.mxu0
        %10905 = vmatprep.mubr.bf16.mxu0 %v10632
        %10906 = vmatmul.mubr.bf16.gmra.mxu0 %v10630
        %v10907 = vpop.f32.mrf.mxu0
        %v10908 = vadd.f32 0.0, %v10907
        %v10909 = vpop.f32.mrf.mxu0
        %v10910 = vpop.f32.mrf.mxu0
        %v10911 = vadd.f32 0.0, %v10910
        %v10912 = vpop.f32.mrf.mxu0
        %10913 = vmatprep.mubr.bf16.mxu0 %v10636
        %10914 = vmatmul.mubr.bf16.gmra.mxu0 %v10634
        %v10915 = vpop.f32.mrf.mxu0
        %v10916 = vadd.f32 0.0, %v10915
        %v10917 = vpop.f32.mrf.mxu0
        %v10918 = vpop.f32.mrf.mxu0
        %v10919 = vadd.f32 0.0, %v10918
        %v10920 = vpop.f32.mrf.mxu0
        %10921 = vmatprep.mubr.bf16.mxu0 %v10640
        %10922 = vmatmul.mubr.bf16.gmra.mxu0 %v10638
        %v10923 = vpop.f32.mrf.mxu0
        %v10924 = vadd.f32 0.0, %v10923
        %v10925 = vpop.f32.mrf.mxu0
        %v10926 = vpop.f32.mrf.mxu0
        %v10927 = vadd.f32 0.0, %v10926
        %v10928 = vpop.f32.mrf.mxu0
        %10929 = vmatprep.mubr.bf16.mxu0 %v10644
        %10930 = vmatmul.mubr.bf16.gmra.mxu0 %v10642
        %v10931 = vpop.f32.mrf.mxu0
        %v10932 = vadd.f32 0.0, %v10931
        %v10933 = vpop.f32.mrf.mxu0
        %v10934 = vpop.f32.mrf.mxu0
        %v10935 = vadd.f32 0.0, %v10934
        %v10936 = vpop.f32.mrf.mxu0
        %10937 = vmatprep.mubr.bf16.mxu0 %v10648
        %10938 = vmatmul.mubr.bf16.gmra.mxu0 %v10646
        %v10939 = vpop.f32.mrf.mxu0
        %v10940 = vadd.f32 0.0, %v10939
        %v10941 = vpop.f32.mrf.mxu0
        %v10942 = vpop.f32.mrf.mxu0
        %v10943 = vadd.f32 0.0, %v10942
        %v10944 = vpop.f32.mrf.mxu0
        %10945 = vmatprep.mubr.bf16.mxu0 %v10652
        %10946 = vmatmul.mubr.bf16.gmra.mxu0 %v10650
        %v10947 = vpop.f32.mrf.mxu0
        %v10948 = vadd.f32 0.0, %v10947
        %v10949 = vpop.f32.mrf.mxu0
        %v10950 = vpop.f32.mrf.mxu0
        %v10951 = vadd.f32 0.0, %v10950
        %v10952 = vpop.f32.mrf.mxu0
        %10953 = vmatprep.mubr.bf16.mxu0 %v10686
        %10954 = vmatmul.mubr.bf16.gmra.mxu0 %v10682
        %v10955 = vpop.f32.mrf.mxu0
        %v10956 = vadd.f32 0.0, %v10955
        %v10957 = vpop.f32.mrf.mxu0
        %v10958 = vpop.f32.mrf.mxu0
        %v10959 = vadd.f32 0.0, %v10958
        %v10960 = vpop.f32.mrf.mxu0
        %10961 = vdwg.mxu0
        %v10962 = vadd.f32 %v10570, %v10852
        %v10963 = vadd.f32 %v10571, %v10855
        %v10964 = vadd.f32 %v10572, %v10860
        %v10965 = vadd.f32 %v10573, %v10863
        %v10966 = vadd.f32 %v10574, %v10868
        %v10967 = vadd.f32 %v10575, %v10871
        %v10968 = vadd.f32 %v10576, %v10876
        %v10969 = vadd.f32 %v10577, %v10879
        %v10970 = vadd.f32 %v10578, %v10884
        %v10971 = vadd.f32 %v10579, %v10887
        %v10972 = vadd.f32 %v10580, %v10892
        %v10973 = vadd.f32 %v10581, %v10895
        %v10974 = vadd.f32 %v10582, %v10900
        %v10975 = vadd.f32 %v10583, %v10903
        %v10976 = vadd.f32 %v10584, %v10908
        %v10977 = vadd.f32 %v10585, %v10911
        %v10978 = vadd.f32 %v10586, %v10916
        %v10979 = vadd.f32 %v10587, %v10919
        %v10980 = vadd.f32 %v10588, %v10924
        %v10981 = vadd.f32 %v10589, %v10927
        %v10982 = vadd.f32 %v10590, %v10932
        %v10983 = vadd.f32 %v10591, %v10935
        %v10984 = vadd.f32 %v10592, %v10940
        %v10985 = vadd.f32 %v10593, %v10943
        %v10986 = vadd.f32 %v10594, %v10948
        %v10987 = vadd.f32 %v10595, %v10951
        %v10988 = vadd.f32 %v10596, %v10956
        %v10989 = vadd.f32 %v10597, %v10959
        %vm10990 = vcmask 80896
        %v10991 = vsel %vm10990, %v10962, -inf
        %10992 = vmax.xlane.f32.xlu0 %v10991
        %v10993 = vpop.xlane.xlu0 %10992
        %v10994 = vsel %vm10990, %v10963, -inf
        %10995 = vmax.xlane.f32.xlu0 %v10994
        %v10996 = vpop.xlane.xlu0 %10995
        %v10997 = vsel %vm10990, %v10964, -inf
        %10998 = vmax.xlane.f32.xlu0 %v10997
        %v10999 = vpop.xlane.xlu0 %10998
        %v11000 = vsel %vm10990, %v10965, -inf
        %11001 = vmax.xlane.f32.xlu0 %v11000
        %v11002 = vpop.xlane.xlu0 %11001
        %v11003 = vsel %vm10990, %v10966, -inf
        %11004 = vmax.xlane.f32.xlu0 %v11003
        %v11005 = vpop.xlane.xlu0 %11004
        %v11006 = vsel %vm10990, %v10967, -inf
        %11007 = vmax.xlane.f32.xlu0 %v11006
        %v11008 = vpop.xlane.xlu0 %11007
        %v11009 = vsel %vm10990, %v10968, -inf
        %11010 = vmax.xlane.f32.xlu0 %v11009
        %v11011 = vpop.xlane.xlu0 %11010
        %v11012 = vsel %vm10990, %v10969, -inf
        %11013 = vmax.xlane.f32.xlu0 %v11012
        %v11014 = vpop.xlane.xlu0 %11013
        %v11015 = vsel %vm10990, %v10970, -inf
        %11016 = vmax.xlane.f32.xlu0 %v11015
        %v11017 = vpop.xlane.xlu0 %11016
        %v11018 = vsel %vm10990, %v10971, -inf
        %11019 = vmax.xlane.f32.xlu0 %v11018
        %v11020 = vpop.xlane.xlu0 %11019
        %v11021 = vsel %vm10990, %v10972, -inf
        %11022 = vmax.xlane.f32.xlu0 %v11021
        %v11023 = vpop.xlane.xlu0 %11022
        %v11024 = vsel %vm10990, %v10973, -inf
        %11025 = vmax.xlane.f32.xlu0 %v11024
        %v11026 = vpop.xlane.xlu0 %11025
        %v11027 = vsel %vm10990, %v10974, -inf
        %11028 = vmax.xlane.f32.xlu0 %v11027
        %v11029 = vpop.xlane.xlu0 %11028
        %v11030 = vsel %vm10990, %v10975, -inf
        %11031 = vmax.xlane.f32.xlu0 %v11030
        %v11032 = vpop.xlane.xlu0 %11031
        %v11033 = vsel %vm10990, %v10976, -inf
        %11034 = vmax.xlane.f32.xlu0 %v11033
        %v11035 = vpop.xlane.xlu0 %11034
        %v11036 = vsel %vm10990, %v10977, -inf
        %11037 = vmax.xlane.f32.xlu0 %v11036
        %v11038 = vpop.xlane.xlu0 %11037
        %v11039 = vsel %vm10990, %v10978, -inf
        %11040 = vmax.xlane.f32.xlu0 %v11039
        %v11041 = vpop.xlane.xlu0 %11040
        %v11042 = vsel %vm10990, %v10979, -inf
        %11043 = vmax.xlane.f32.xlu0 %v11042
        %v11044 = vpop.xlane.xlu0 %11043
        %v11045 = vsel %vm10990, %v10980, -inf
        %11046 = vmax.xlane.f32.xlu0 %v11045
        %v11047 = vpop.xlane.xlu0 %11046
        %v11048 = vsel %vm10990, %v10981, -inf
        %11049 = vmax.xlane.f32.xlu0 %v11048
        %v11050 = vpop.xlane.xlu0 %11049
        %v11051 = vsel %vm10990, %v10982, -inf
        %11052 = vmax.xlane.f32.xlu0 %v11051
        %v11053 = vpop.xlane.xlu0 %11052
        %v11054 = vsel %vm10990, %v10983, -inf
        %11055 = vmax.xlane.f32.xlu0 %v11054
        %v11056 = vpop.xlane.xlu0 %11055
        %v11057 = vsel %vm10990, %v10984, -inf
        %11058 = vmax.xlane.f32.xlu0 %v11057
        %v11059 = vpop.xlane.xlu0 %11058
        %v11060 = vsel %vm10990, %v10985, -inf
        %11061 = vmax.xlane.f32.xlu0 %v11060
        %v11062 = vpop.xlane.xlu0 %11061
        %v11063 = vsel %vm10990, %v10986, -inf
        %11064 = vmax.xlane.f32.xlu0 %v11063
        %v11065 = vpop.xlane.xlu0 %11064
        %v11066 = vsel %vm10990, %v10987, -inf
        %11067 = vmax.xlane.f32.xlu0 %v11066
        %v11068 = vpop.xlane.xlu0 %11067
        %v11069 = vsel %vm10990, %v10988, -inf
        %11070 = vmax.xlane.f32.xlu0 %v11069
        %v11071 = vpop.xlane.xlu0 %11070
        %v11072 = vsel %vm10990, %v10989, -inf
        %11073 = vmax.xlane.f32.xlu0 %v11072
        %v11074 = vpop.xlane.xlu0 %11073
        %v11075 = vsub.f32 %v10962, %v10993
        %v11076 = vsub.f32 %v10963, %v10996
        %v11077 = vsub.f32 %v10964, %v10999
        %v11078 = vsub.f32 %v10965, %v11002
        %v11079 = vsub.f32 %v10966, %v11005
        %v11080 = vsub.f32 %v10967, %v11008
        %v11081 = vsub.f32 %v10968, %v11011
        %v11082 = vsub.f32 %v10969, %v11014
        %v11083 = vsub.f32 %v10970, %v11017
        %v11084 = vsub.f32 %v10971, %v11020
        %v11085 = vsub.f32 %v10972, %v11023
        %v11086 = vsub.f32 %v10973, %v11026
        %v11087 = vsub.f32 %v10974, %v11029
        %v11088 = vsub.f32 %v10975, %v11032
        %v11089 = vsub.f32 %v10976, %v11035
        %v11090 = vsub.f32 %v10977, %v11038
        %v11091 = vsub.f32 %v10978, %v11041
        %v11092 = vsub.f32 %v10979, %v11044
        %v11093 = vsub.f32 %v10980, %v11047
        %v11094 = vsub.f32 %v10981, %v11050
        %v11095 = vsub.f32 %v10982, %v11053
        %v11096 = vsub.f32 %v10983, %v11056
        %v11097 = vsub.f32 %v10984, %v11059
        %v11098 = vsub.f32 %v10985, %v11062
        %v11099 = vsub.f32 %v10986, %v11065
        %v11100 = vsub.f32 %v10987, %v11068
        %v11101 = vsub.f32 %v10988, %v11071
        %v11102 = vsub.f32 %v10989, %v11074
        %v11103 = vmul.f32 %v11075, 1.442695
        %v11104 = vpow.pop %v11103
        %v11105 = vmul.f32 %v11076, 1.442695
        %v11106 = vpow.pop %v11105
        %v11107 = vmul.f32 %v11077, 1.442695
        %v11108 = vpow.pop %v11107
        %v11109 = vmul.f32 %v11078, 1.442695
        %v11110 = vpow.pop %v11109
        %v11111 = vmul.f32 %v11079, 1.442695
        %v11112 = vpow.pop %v11111
        %v11113 = vmul.f32 %v11080, 1.442695
        %v11114 = vpow.pop %v11113
        %v11115 = vmul.f32 %v11081, 1.442695
        %v11116 = vpow.pop %v11115
        %v11117 = vmul.f32 %v11082, 1.442695
        %v11118 = vpow.pop %v11117
        %v11119 = vmul.f32 %v11083, 1.442695
        %v11120 = vpow.pop %v11119
        %v11121 = vmul.f32 %v11084, 1.442695
        %v11122 = vpow.pop %v11121
        %v11123 = vmul.f32 %v11085, 1.442695
        %v11124 = vpow.pop %v11123
        %v11125 = vmul.f32 %v11086, 1.442695
        %v11126 = vpow.pop %v11125
        %v11127 = vmul.f32 %v11087, 1.442695
        %v11128 = vpow.pop %v11127
        %v11129 = vmul.f32 %v11088, 1.442695
        %v11130 = vpow.pop %v11129
        %v11131 = vmul.f32 %v11089, 1.442695
        %v11132 = vpow.pop %v11131
        %v11133 = vmul.f32 %v11090, 1.442695
        %v11134 = vpow.pop %v11133
        %v11135 = vmul.f32 %v11091, 1.442695
        %v11136 = vpow.pop %v11135
        %v11137 = vmul.f32 %v11092, 1.442695
        %v11138 = vpow.pop %v11137
        %v11139 = vmul.f32 %v11093, 1.442695
        %v11140 = vpow.pop %v11139
        %v11141 = vmul.f32 %v11094, 1.442695
        %v11142 = vpow.pop %v11141
        %v11143 = vmul.f32 %v11095, 1.442695
        %v11144 = vpow.pop %v11143
        %v11145 = vmul.f32 %v11096, 1.442695
        %v11146 = vpow.pop %v11145
        %v11147 = vmul.f32 %v11097, 1.442695
        %v11148 = vpow.pop %v11147
        %v11149 = vmul.f32 %v11098, 1.442695
        %v11150 = vpow.pop %v11149
        %v11151 = vmul.f32 %v11099, 1.442695
        %v11152 = vpow.pop %v11151
        %v11153 = vmul.f32 %v11100, 1.442695
        %v11154 = vpow.pop %v11153
        %v11155 = vmul.f32 %v11101, 1.442695
        %v11156 = vpow.pop %v11155
        %v11157 = vmul.f32 %v11102, 1.442695
        %v11158 = vpow.pop %v11157
        %v11159 = vsel %vm10990, %v11104, 0.0
        %11160 = vadd.xlane.f32.xlu0 %v11159
        %v11161 = vpop.xlane.xlu0 %11160
        %v11162 = vsel %vm10990, %v11106, 0.0
        %11163 = vadd.xlane.f32.xlu0 %v11162
        %v11164 = vpop.xlane.xlu0 %11163
        %v11165 = vsel %vm10990, %v11108, 0.0
        %11166 = vadd.xlane.f32.xlu0 %v11165
        %v11167 = vpop.xlane.xlu0 %11166
        %v11168 = vsel %vm10990, %v11110, 0.0
        %11169 = vadd.xlane.f32.xlu0 %v11168
        %v11170 = vpop.xlane.xlu0 %11169
        %v11171 = vsel %vm10990, %v11112, 0.0
        %11172 = vadd.xlane.f32.xlu0 %v11171
        %v11173 = vpop.xlane.xlu0 %11172
        %v11174 = vsel %vm10990, %v11114, 0.0
        %11175 = vadd.xlane.f32.xlu0 %v11174
        %v11176 = vpop.xlane.xlu0 %11175
        %v11177 = vsel %vm10990, %v11116, 0.0
        %11178 = vadd.xlane.f32.xlu0 %v11177
        %v11179 = vpop.xlane.xlu0 %11178
        %v11180 = vsel %vm10990, %v11118, 0.0
        %11181 = vadd.xlane.f32.xlu0 %v11180
        %v11182 = vpop.xlane.xlu0 %11181
        %v11183 = vsel %vm10990, %v11120, 0.0
        %11184 = vadd.xlane.f32.xlu0 %v11183
        %v11185 = vpop.xlane.xlu0 %11184
        %v11186 = vsel %vm10990, %v11122, 0.0
        %11187 = vadd.xlane.f32.xlu0 %v11186
        %v11188 = vpop.xlane.xlu0 %11187
        %v11189 = vsel %vm10990, %v11124, 0.0
        %11190 = vadd.xlane.f32.xlu0 %v11189
        %v11191 = vpop.xlane.xlu0 %11190
        %v11192 = vsel %vm10990, %v11126, 0.0
        %11193 = vadd.xlane.f32.xlu0 %v11192
        %v11194 = vpop.xlane.xlu0 %11193
        %v11195 = vsel %vm10990, %v11128, 0.0
        %11196 = vadd.xlane.f32.xlu0 %v11195
        %v11197 = vpop.xlane.xlu0 %11196
        %v11198 = vsel %vm10990, %v11130, 0.0
        %11199 = vadd.xlane.f32.xlu0 %v11198
        %v11200 = vpop.xlane.xlu0 %11199
        %v11201 = vsel %vm10990, %v11132, 0.0
        %11202 = vadd.xlane.f32.xlu0 %v11201
        %v11203 = vpop.xlane.xlu0 %11202
        %v11204 = vsel %vm10990, %v11134, 0.0
        %11205 = vadd.xlane.f32.xlu0 %v11204
        %v11206 = vpop.xlane.xlu0 %11205
        %v11207 = vsel %vm10990, %v11136, 0.0
        %11208 = vadd.xlane.f32.xlu0 %v11207
        %v11209 = vpop.xlane.xlu0 %11208
        %v11210 = vsel %vm10990, %v11138, 0.0
        %11211 = vadd.xlane.f32.xlu0 %v11210
        %v11212 = vpop.xlane.xlu0 %11211
        %v11213 = vsel %vm10990, %v11140, 0.0
        %11214 = vadd.xlane.f32.xlu0 %v11213
        %v11215 = vpop.xlane.xlu0 %11214
        %v11216 = vsel %vm10990, %v11142, 0.0
        %11217 = vadd.xlane.f32.xlu0 %v11216
        %v11218 = vpop.xlane.xlu0 %11217
        %v11219 = vsel %vm10990, %v11144, 0.0
        %11220 = vadd.xlane.f32.xlu0 %v11219
        %v11221 = vpop.xlane.xlu0 %11220
        %v11222 = vsel %vm10990, %v11146, 0.0
        %11223 = vadd.xlane.f32.xlu0 %v11222
        %v11224 = vpop.xlane.xlu0 %11223
        %v11225 = vsel %vm10990, %v11148, 0.0
        %11226 = vadd.xlane.f32.xlu0 %v11225
        %v11227 = vpop.xlane.xlu0 %11226
        %v11228 = vsel %vm10990, %v11150, 0.0
        %11229 = vadd.xlane.f32.xlu0 %v11228
        %v11230 = vpop.xlane.xlu0 %11229
        %v11231 = vsel %vm10990, %v11152, 0.0
        %11232 = vadd.xlane.f32.xlu0 %v11231
        %v11233 = vpop.xlane.xlu0 %11232
        %v11234 = vsel %vm10990, %v11154, 0.0
        %11235 = vadd.xlane.f32.xlu0 %v11234
        %v11236 = vpop.xlane.xlu0 %11235
        %v11237 = vsel %vm10990, %v11156, 0.0
        %11238 = vadd.xlane.f32.xlu0 %v11237
        %v11239 = vpop.xlane.xlu0 %11238
        %v11240 = vsel %vm10990, %v11158, 0.0
        %11241 = vadd.xlane.f32.xlu0 %v11240
        %v11242 = vpop.xlane.xlu0 %11241
        %v11243 = vrcp.pop %v11161
        %v11244 = vrcp.pop %v11164
        %v11245 = vrcp.pop %v11167
        %v11246 = vrcp.pop %v11170
        %v11247 = vrcp.pop %v11173
        %v11248 = vrcp.pop %v11176
        %v11249 = vrcp.pop %v11179
        %v11250 = vrcp.pop %v11182
        %v11251 = vrcp.pop %v11185
        %v11252 = vrcp.pop %v11188
        %v11253 = vrcp.pop %v11191
        %v11254 = vrcp.pop %v11194
        %v11255 = vrcp.pop %v11197
        %v11256 = vrcp.pop %v11200
        %v11257 = vrcp.pop %v11203
        %v11258 = vrcp.pop %v11206
        %v11259 = vrcp.pop %v11209
        %v11260 = vrcp.pop %v11212
        %v11261 = vrcp.pop %v11215
        %v11262 = vrcp.pop %v11218
        %v11263 = vrcp.pop %v11221
        %v11264 = vrcp.pop %v11224
        %v11265 = vrcp.pop %v11227
        %v11266 = vrcp.pop %v11230
        %v11267 = vrcp.pop %v11233
        %v11268 = vrcp.pop %v11236
        %v11269 = vrcp.pop %v11239
        %v11270 = vrcp.pop %v11242
        %v11271 = vmul.f32 %v11161, %v11243
        %v11272 = vmul.f32 %v11164, %v11244
        %v11273 = vmul.f32 %v11167, %v11245
        %v11274 = vmul.f32 %v11170, %v11246
        %v11275 = vmul.f32 %v11173, %v11247
        %v11276 = vmul.f32 %v11176, %v11248
        %v11277 = vmul.f32 %v11179, %v11249
        %v11278 = vmul.f32 %v11182, %v11250
        %v11279 = vmul.f32 %v11185, %v11251
        %v11280 = vmul.f32 %v11188, %v11252
        %v11281 = vmul.f32 %v11191, %v11253
        %v11282 = vmul.f32 %v11194, %v11254
        %v11283 = vmul.f32 %v11197, %v11255
        %v11284 = vmul.f32 %v11200, %v11256
        %v11285 = vmul.f32 %v11203, %v11257
        %v11286 = vmul.f32 %v11206, %v11258
        %v11287 = vmul.f32 %v11209, %v11259
        %v11288 = vmul.f32 %v11212, %v11260
        %v11289 = vmul.f32 %v11215, %v11261
        %v11290 = vmul.f32 %v11218, %v11262
        %v11291 = vmul.f32 %v11221, %v11263
        %v11292 = vmul.f32 %v11224, %v11264
        %v11293 = vmul.f32 %v11227, %v11265
        %v11294 = vmul.f32 %v11230, %v11266
        %v11295 = vmul.f32 %v11233, %v11267
        %v11296 = vmul.f32 %v11236, %v11268
        %v11297 = vmul.f32 %v11239, %v11269
        %v11298 = vmul.f32 %v11242, %v11270
        %v11299 = vsub.f32 2.0, %v11271
        %v11300 = vsub.f32 2.0, %v11272
        %v11301 = vsub.f32 2.0, %v11273
        %v11302 = vsub.f32 2.0, %v11274
        %v11303 = vsub.f32 2.0, %v11275
        %v11304 = vsub.f32 2.0, %v11276
        %v11305 = vsub.f32 2.0, %v11277
        %v11306 = vsub.f32 2.0, %v11278
        %v11307 = vsub.f32 2.0, %v11279
        %v11308 = vsub.f32 2.0, %v11280
        %v11309 = vsub.f32 2.0, %v11281
        %v11310 = vsub.f32 2.0, %v11282
        %v11311 = vsub.f32 2.0, %v11283
        %v11312 = vsub.f32 2.0, %v11284
        %v11313 = vsub.f32 2.0, %v11285
        %v11314 = vsub.f32 2.0, %v11286
        %v11315 = vsub.f32 2.0, %v11287
        %v11316 = vsub.f32 2.0, %v11288
        %v11317 = vsub.f32 2.0, %v11289
        %v11318 = vsub.f32 2.0, %v11290
        %v11319 = vsub.f32 2.0, %v11291
        %v11320 = vsub.f32 2.0, %v11292
        %v11321 = vsub.f32 2.0, %v11293
        %v11322 = vsub.f32 2.0, %v11294
        %v11323 = vsub.f32 2.0, %v11295
        %v11324 = vsub.f32 2.0, %v11296
        %v11325 = vsub.f32 2.0, %v11297
        %v11326 = vsub.f32 2.0, %v11298
        %v11327 = vmul.f32 %v11243, %v11299
        %v11328 = vmul.f32 %v11244, %v11300
        %v11329 = vmul.f32 %v11245, %v11301
        %v11330 = vmul.f32 %v11246, %v11302
        %v11331 = vmul.f32 %v11247, %v11303
        %v11332 = vmul.f32 %v11248, %v11304
        %v11333 = vmul.f32 %v11249, %v11305
        %v11334 = vmul.f32 %v11250, %v11306
        %v11335 = vmul.f32 %v11251, %v11307
        %v11336 = vmul.f32 %v11252, %v11308
        %v11337 = vmul.f32 %v11253, %v11309
        %v11338 = vmul.f32 %v11254, %v11310
        %v11339 = vmul.f32 %v11255, %v11311
        %v11340 = vmul.f32 %v11256, %v11312
        %v11341 = vmul.f32 %v11257, %v11313
        %v11342 = vmul.f32 %v11258, %v11314
        %v11343 = vmul.f32 %v11259, %v11315
        %v11344 = vmul.f32 %v11260, %v11316
        %v11345 = vmul.f32 %v11261, %v11317
        %v11346 = vmul.f32 %v11262, %v11318
        %v11347 = vmul.f32 %v11263, %v11319
        %v11348 = vmul.f32 %v11264, %v11320
        %v11349 = vmul.f32 %v11265, %v11321
        %v11350 = vmul.f32 %v11266, %v11322
        %v11351 = vmul.f32 %v11267, %v11323
        %v11352 = vmul.f32 %v11268, %v11324
        %v11353 = vmul.f32 %v11269, %v11325
        %v11354 = vmul.f32 %v11270, %v11326
        %v11355 = vmul.f32 %v11104, %v11327
        %v11356 = vmul.f32 %v11106, %v11328
        %v11357 = vmul.f32 %v11108, %v11329
        %v11358 = vmul.f32 %v11110, %v11330
        %v11359 = vmul.f32 %v11112, %v11331
        %v11360 = vmul.f32 %v11114, %v11332
        %v11361 = vmul.f32 %v11116, %v11333
        %v11362 = vmul.f32 %v11118, %v11334
        %v11363 = vmul.f32 %v11120, %v11335
        %v11364 = vmul.f32 %v11122, %v11336
        %v11365 = vmul.f32 %v11124, %v11337
        %v11366 = vmul.f32 %v11126, %v11338
        %v11367 = vmul.f32 %v11128, %v11339
        %v11368 = vmul.f32 %v11130, %v11340
        %v11369 = vmul.f32 %v11132, %v11341
        %v11370 = vmul.f32 %v11134, %v11342
        %v11371 = vmul.f32 %v11136, %v11343
        %v11372 = vmul.f32 %v11138, %v11344
        %v11373 = vmul.f32 %v11140, %v11345
        %v11374 = vmul.f32 %v11142, %v11346
        %v11375 = vmul.f32 %v11144, %v11347
        %v11376 = vmul.f32 %v11146, %v11348
        %v11377 = vmul.f32 %v11148, %v11349
        %v11378 = vmul.f32 %v11150, %v11350
        %v11379 = vmul.f32 %v11152, %v11351
        %v11380 = vmul.f32 %v11154, %v11352
        %v11381 = vmul.f32 %v11156, %v11353
        %v11382 = vmul.f32 %v11158, %v11354
        %11383 = vst.msk [vmem:[%s314] sm:$0xff] %vm10990, %v11355
        %11384 = vst.msk [vmem:[%s314 + $0x8] sm:$0xff] %vm10990, %v11356
        %11385 = vst.msk [vmem:[%s314 + $0x10] sm:$0xff] %vm10990, %v11357
        %11386 = vst.msk [vmem:[%s314 + $0x18] sm:$0xff] %vm10990, %v11358
        %11387 = vst.msk [vmem:[%s314 + $0x20] sm:$0xff] %vm10990, %v11359
        %11388 = vst.msk [vmem:[%s314 + $0x28] sm:$0xff] %vm10990, %v11360
        %11389 = vst.msk [vmem:[%s314 + $0x30] sm:$0xff] %vm10990, %v11361
        %11390 = vst.msk [vmem:[%s314 + $0x38] sm:$0xff] %vm10990, %v11362
        %11391 = vst.msk [vmem:[%s314 + $0x40] sm:$0xff] %vm10990, %v11363
        %11392 = vst.msk [vmem:[%s314 + $0x48] sm:$0xff] %vm10990, %v11364
        %11393 = vst.msk [vmem:[%s314 + $0x50] sm:$0xff] %vm10990, %v11365
        %11394 = vst.msk [vmem:[%s314 + $0x58] sm:$0xff] %vm10990, %v11366
        %11395 = vst.msk [vmem:[%s314 + $0x60] sm:$0xff] %vm10990, %v11367
        %11396 = vst.msk [vmem:[%s314 + $0x68] sm:$0xff] %vm10990, %v11368
        %11397 = vst.msk [vmem:[%s314 + $0x70] sm:$0xff] %vm10990, %v11369
        %11398 = vst.msk [vmem:[%s314 + $0x78] sm:$0xff] %vm10990, %v11370
        %11399 = vst.msk [vmem:[%s314 + $0x80] sm:$0xff] %vm10990, %v11371
        %11400 = vst.msk [vmem:[%s314 + $0x88] sm:$0xff] %vm10990, %v11372
        %11401 = vst.msk [vmem:[%s314 + $0x90] sm:$0xff] %vm10990, %v11373
        %11402 = vst.msk [vmem:[%s314 + $0x98] sm:$0xff] %vm10990, %v11374
        %11403 = vst.msk [vmem:[%s314 + $0xa0] sm:$0xff] %vm10990, %v11375
        %11404 = vst.msk [vmem:[%s314 + $0xa8] sm:$0xff] %vm10990, %v11376
        %11405 = vst.msk [vmem:[%s314 + $0xb0] sm:$0xff] %vm10990, %v11377
        %11406 = vst.msk [vmem:[%s314 + $0xb8] sm:$0xff] %vm10990, %v11378
        %11407 = vst.msk [vmem:[%s314 + $0xc0] sm:$0xff] %vm10990, %v11379
        %11408 = vst.msk [vmem:[%s314 + $0xc8] sm:$0xff] %vm10990, %v11380
        %11409 = vst.msk [vmem:[%s314 + $0xd0] sm:$0xff] %vm10990, %v11381
        %11410 = vst.msk [vmem:[%s314 + $0xd8] sm:$0xff] %vm10990, %v11382
        %s11411 = smul.u32 28, %s22
        %p11412 = scmp.lt.s32.totalorder %s11411, 55
        %s11413 = scalar_select %p11412, %s11411, 55
        %s11414 = smul.addr %s11413, 8
        %s11415 = scalar_lea.vmem %s7, %s11414
        // Predicated region
        $region57: #{net_forward.1} parent=47 // pred_check
          %p11416 = pneg %p192
        $region58: #{net_forward.1} parent=47 // pred_check_branch
          %11418 = sbr.rel (%p11416) target = $region60
        $region59: #{net_forward.1} parent=47 // pred_region
          %s11419 = smul.u32 28, %s22
        $region60: #{net_forward.1} parent=47 // pred_fallthru
          _
      $region48: #{net_forward.1} parent=5 // pred_fallthru
        _
      %p11420 = scmp.le.s32.totalorder 2, %s17
      // Predicated region
      $region61: #{net_forward.1} parent=5 // pred_check
        %p11421 = pneg %p11420
      $region62: #{net_forward.1} parent=5 // pred_check_branch
        %11423 = sbr.rel (%p11421) target = $region64
      $region63: #{net_forward.1} parent=5 // pred_region
        %s11424 = ssub.s32 %s17, 2
        // Predicated region
        $region65: #{net_forward.1} parent=63 // pred_check
          %p11425 = pneg %p198
        $region66: #{net_forward.1} parent=63 // pred_check_branch
          %11427 = sbr.rel (%p11425) target = $region68
        $region67: #{net_forward.1} parent=63 // pred_region
          %s11428 = smul.u32 28, %s23
          %p11429 = scmp.lt.s32.totalorder %s11428, 55
          %s11430 = scalar_select %p11429, %s11428, 55
          %s11431 = smul.addr %s11430, 8
          %s11432 = scalar_lea.vmem %s7, %s11431
        $region68: #{net_forward.1} parent=63 // pred_fallthru
          _
      $region64: #{net_forward.1} parent=5 // pred_fallthru
        _
    $region6: #{net_forward.1} parent=1 // loop_footer
      %s21 = sadd.s32 1, %s17
    $region7: #{net_forward.1} parent=1 // loop_footer_branch
      %16 = sbr.rel target = $region3
    $region8: #{net_forward.1} parent=1 // loop_exit
      _
    %11433 = vsyncpa [#allocation3], 1
    %s11434 = scalar_lea.sflag [#allocation3], 1
    %11435 = vsyncpa %s11434, 1
    %11436 = vsyncpa [#allocation5], 1

</llo_original>
